<compile_context>
chip_gen: v7x
topology: tpu7x:2x2x1
jax: 0.10.0
libtpu: 0.0.40
codegen_flags: <defaults>
</compile_context>

<pallas_src>
import functools
import math

import jax
import jax.numpy as jnp
import numpy as np
from jax.experimental import pallas as pl
from jax.experimental.pallas import tpu as pltpu

IN_SIZE = 4
OUT_SIZE = 8
EPS = 1e-5


def _dot(a, b):
    return jnp.dot(a, b, precision=jax.lax.Precision.HIGHEST,
                   preferred_element_type=jnp.float32)


# ---------------------------------------------------------------------------
# Fused Pallas kernel
# ---------------------------------------------------------------------------
def fused_block_kernel(x_ref, l_ref, w1_ref, b1_ref, g1_ref, be1_ref,
                       w2_ref, b2_ref, g2_ref, be2_ref, p_ref, o_ref,
                       *, n_rows, m_total):
    """conv1+ReLU+BN1+conv2+ReLU+BN2 on a (n_rows, W*C) lane-merged slab, all in VMEM."""
    x = x_ref[...]                                   # (NH, W*Cin)
    pool = p_ref[...]                                # (W*Cout, W*Cout) channel-pooling matrix
    ones_row = jnp.ones((1, n_rows), jnp.float32)    # MXU row-reduction vector
    inv_m = 1.0 / float(m_total)                     # 1 / (N*H*W)

    def conv_relu(y, w_ref, bias_lane):
        # kh = 1 is the identity row shift; kh = 0 / 2 go through the L matrices.
        acc = _dot(y, w_ref[1])
        acc = acc + _dot(_dot(l_ref[0], y), w_ref[0])
        acc = acc + _dot(_dot(l_ref[2], y), w_ref[2])
        return jnp.maximum(acc + bias_lane, 0.0)

    def batchnorm(y, gamma_lane, beta_lane):
        # Per-channel batch stats via MXU: row-sum then pool lanes of the same channel.
        mean_lane = _dot(_dot(ones_row, y), pool) * inv_m          # (1, W*Cout)
        d = y - mean_lane
        var_lane = _dot(_dot(ones_row, d * d), pool) * inv_m       # biased variance
        inv_std = jax.lax.rsqrt(var_lane + EPS)
        return d * (inv_std * gamma_lane) + beta_lane

    y1 = batchnorm(conv_relu(x, w1_ref, b1_ref[...]), g1_ref[...], be1_ref[...])
    y2 = batchnorm(conv_relu(y1, w2_ref, b2_ref[...]), g2_ref[...], be2_ref[...])
    o_ref[...] = y2


# ---------------------------------------------------------------------------
# Host-side constant builders (trace-time, tiny)
# ---------------------------------------------------------------------------
def row_shift_mats(N, H):
    """L[kh][(n,h_out), (n,h_in)] = 1 iff h_in = h_out + kh - 1 within the same image (zero pad)."""
    NH = N * H
    r = np.arange(NH)
    n, h = r // H, r % H
    L = np.zeros((3, NH, NH), np.float32)
    for kh in range(3):
        h_in = h + kh - 1
        valid = (h_in >= 0) & (h_in < H)
        L[kh, r[valid], n[valid] * H + h_in[valid]] = 1.0
    return jnp.asarray(L)


def channel_pool_mat(W, Cout):
    """P[l1, l2] = 1 iff lanes l1, l2 (= w*Cout + c) belong to the same channel c."""
    lane = np.arange(W * Cout)
    return jnp.asarray((lane[:, None] % Cout == lane[None, :] % Cout).astype(np.float32))


def banded_conv_weight(w_oihw, W):
    """(Cout, Cin, 3, 3) -> (3, W*Cin, W*Cout) banded matrices implementing the kw taps + W padding.

    big[kh, w_in*Cin + ci, w_out*Cout + co] = w[co, ci, kh, w_in - w_out + 1] if the tap is in-range.
    """
    Cout, Cin, _, _ = w_oihw.shape
    w = jnp.transpose(w_oihw, (2, 3, 1, 0))                       # (kh, kw, Cin, Cout)
    w_in = np.arange(W)[:, None]
    w_out = np.arange(W)[None, :]
    kw = w_in - w_out + 1                                         # (W, W)
    mask = ((kw >= 0) & (kw <= 2)).astype(np.float32)
    kw_c = np.clip(kw, 0, 2)
    band = w[:, kw_c, :, :] * mask[None, :, :, None, None]        # (3, W, W, Cin, Cout)
    return jnp.transpose(band, (0, 1, 3, 2, 4)).reshape(3, W * Cin, W * Cout)


# ---------------------------------------------------------------------------
# Wrapper
# ---------------------------------------------------------------------------
def unet_conv_block(x_nchw, params):
    """Forward of UNetConvBlock. Input/output NCHW; single fused pallas_call internally."""
    N, Cin, H, W = x_nchw.shape
    Cout = params["w1"].shape[0]
    NH = N * H

    # NCHW -> lane-merged (N*H, W*Cin) slab.
    x2d = jnp.transpose(x_nchw, (0, 2, 3, 1)).reshape(NH, W * Cin).astype(jnp.float32)

    L = row_shift_mats(N, H)
    P = channel_pool_mat(W, Cout)
    w1b = banded_conv_weight(params["w1"], W)
    w2b = banded_conv_weight(params["w2"], W)

    def lanes(v):  # per-channel vector -> lane-merged (1, W*Cout) layout
        return jnp.tile(v, W).reshape(1, W * Cout).astype(jnp.float32)

    b1l, g1l, be1l = lanes(params["b1"]), lanes(params["g1"]), lanes(params["be1"])
    b2l, g2l, be2l = lanes(params["b2"]), lanes(params["g2"]), lanes(params["be2"])

    def full(shape):
        n = len(shape)
        return pl.BlockSpec(shape, lambda i, n=n: (0,) * n)

    out2d = pl.pallas_call(
        functools.partial(fused_block_kernel, n_rows=NH, m_total=N * H * W),
        out_shape=jax.ShapeDtypeStruct((NH, W * Cout), jnp.float32),
        grid=(1,),
        in_specs=[
            full((NH, W * Cin)),             # x slab
            full((3, NH, NH)),               # row-shift matrices
            full((3, W * Cin, W * Cout)),    # conv1 banded weights
            full((1, W * Cout)),             # b1 (lane layout)
            full((1, W * Cout)),             # gamma1
            full((1, W * Cout)),             # beta1
            full((3, W * Cout, W * Cout)),   # conv2 banded weights
            full((1, W * Cout)),             # b2
            full((1, W * Cout)),             # gamma2
            full((1, W * Cout)),             # beta2
            full((W * Cout, W * Cout)),      # channel pooling matrix
        ],
        out_specs=full((NH, W * Cout)),
        compiler_params=pltpu.CompilerParams(dimension_semantics=("arbitrary",)),
    )(x2d, L, w1b, b1l, g1l, be1l, w2b, b2l, g2l, be2l, P)

    return jnp.transpose(out2d.reshape(N, H, W, Cout), (0, 3, 1, 2))


# ---------------------------------------------------------------------------
# Deterministic parameter init (shapes per nn.Conv2d / nn.BatchNorm2d in __init__)
# ---------------------------------------------------------------------------
def init_params(key):
    k1, k2, k3, k4 = jax.random.split(key, 4)
    fan1 = IN_SIZE * 9
    fan2 = OUT_SIZE * 9
    return {
        "w1": jax.random.uniform(k1, (OUT_SIZE, IN_SIZE, 3, 3), jnp.float32,
                                 -1.0, 1.0) / math.sqrt(fan1),
        "b1": jax.random.uniform(k2, (OUT_SIZE,), jnp.float32, -1.0, 1.0) / math.sqrt(fan1),
        "g1": jnp.ones((OUT_SIZE,), jnp.float32),
        "be1": jnp.zeros((OUT_SIZE,), jnp.float32),
        "w2": jax.random.uniform(k3, (OUT_SIZE, OUT_SIZE, 3, 3), jnp.float32,
                                 -1.0, 1.0) / math.sqrt(fan2),
        "b2": jax.random.uniform(k4, (OUT_SIZE,), jnp.float32, -1.0, 1.0) / math.sqrt(fan2),
        "g2": jnp.ones((OUT_SIZE,), jnp.float32),
        "be2": jnp.zeros((OUT_SIZE,), jnp.float32),
    }


# ---------------------------------------------------------------------------
# Pure-JAX reference (sanity check)
# ---------------------------------------------------------------------------
def reference(x_nchw, p):
    def conv(x, w, b):
        y = jax.lax.conv_general_dilated(
            x, w, (1, 1), "SAME",
            dimension_numbers=("NCHW", "OIHW", "NCHW"),
            precision=jax.lax.Precision.HIGHEST)
        return jax.nn.relu(y + b.reshape(1, -1, 1, 1))

    def bn(x, g, be):
        mean = jnp.mean(x, axis=(0, 2, 3), keepdims=True)
        var = jnp.mean(jnp.square(x - mean), axis=(0, 2, 3), keepdims=True)
        return (x - mean) * jax.lax.rsqrt(var + EPS) * g.reshape(1, -1, 1, 1) \
            + be.reshape(1, -1, 1, 1)

    y = bn(conv(x_nchw, p["w1"], p["b1"]), p["g1"], p["be1"])
    y = bn(conv(y, p["w2"], p["b2"]), p["g2"], p["be2"])
    return y


if __name__ == "__main__":
    key = jax.random.PRNGKey(0)
    kx, kp = jax.random.split(key)
    x = jax.random.normal(kx, (2, IN_SIZE, 16, 16), dtype=jnp.float32)
    params = init_params(kp)

    out = jax.jit(unet_conv_block)(x, params)
    out = jax.block_until_ready(out)

    assert out.shape == (2, OUT_SIZE, 16, 16)
    ref = reference(x, params)
    np.testing.assert_allclose(np.asarray(out), np.asarray(ref), atol=1e-2, rtol=1e-2)

    print("KERNEL_OK")
</pallas_src>

<mosaic_0001>
module attributes {stable_mosaic.version = 11 : i64} {
  func.func @fused_block_kernel(%arg0: i32, %arg1: memref<32x64xf32, #tpu.memory_space<vmem>>, %arg2: memref<3x32x32xf32, #tpu.memory_space<vmem>>, %arg3: memref<3x64x128xf32, #tpu.memory_space<vmem>>, %arg4: memref<1x128xf32, #tpu.memory_space<vmem>>, %arg5: memref<1x128xf32, #tpu.memory_space<vmem>>, %arg6: memref<1x128xf32, #tpu.memory_space<vmem>>, %arg7: memref<3x128x128xf32, #tpu.memory_space<vmem>>, %arg8: memref<1x128xf32, #tpu.memory_space<vmem>>, %arg9: memref<1x128xf32, #tpu.memory_space<vmem>>, %arg10: memref<1x128xf32, #tpu.memory_space<vmem>>, %arg11: memref<128x128xf32, #tpu.memory_space<vmem>>, %arg12: memref<32x128xf32, #tpu.memory_space<vmem>>) attributes {dimension_semantics = [#tpu.dimension_semantics<arbitrary>], iteration_bounds = array<i64: 1>, scalar_prefetch = 0 : i64, scratch_operands = 0 : i64, tpu.core_type = #tpu.core_type<tc>, window_params = [{pipeline_mode = #tpu.pipeline_mode<synchronous>, transform_indices = @transform_0, window_bounds = array<i64: 32, 64>}, {pipeline_mode = #tpu.pipeline_mode<synchronous>, transform_indices = @transform_1, window_bounds = array<i64: 3, 32, 32>}, {pipeline_mode = #tpu.pipeline_mode<synchronous>, transform_indices = @transform_2, window_bounds = array<i64: 3, 64, 128>}, {pipeline_mode = #tpu.pipeline_mode<synchronous>, transform_indices = @transform_3, window_bounds = array<i64: 1, 128>}, {pipeline_mode = #tpu.pipeline_mode<synchronous>, transform_indices = @transform_4, window_bounds = array<i64: 1, 128>}, {pipeline_mode = #tpu.pipeline_mode<synchronous>, transform_indices = @transform_5, window_bounds = array<i64: 1, 128>}, {pipeline_mode = #tpu.pipeline_mode<synchronous>, transform_indices = @transform_6, window_bounds = array<i64: 3, 128, 128>}, {pipeline_mode = #tpu.pipeline_mode<synchronous>, transform_indices = @transform_7, window_bounds = array<i64: 1, 128>}, {pipeline_mode = #tpu.pipeline_mode<synchronous>, transform_indices = @transform_8, window_bounds = array<i64: 1, 128>}, {pipeline_mode = #tpu.pipeline_mode<synchronous>, transform_indices = @transform_9, window_bounds = array<i64: 1, 128>}, {pipeline_mode = #tpu.pipeline_mode<synchronous>, transform_indices = @transform_10, window_bounds = array<i64: 128, 128>}, {pipeline_mode = #tpu.pipeline_mode<synchronous>, transform_indices = @transform_11, window_bounds = array<i64: 32, 128>}]} {
    %c0 = arith.constant 0 : index
    %c0_0 = arith.constant 0 : index
    %0 = vector.load %arg1[%c0, %c0_0] : memref<32x64xf32, #tpu.memory_space<vmem>>, vector<32x64xf32>
    %c0_1 = arith.constant 0 : index
    %c0_2 = arith.constant 0 : index
    %1 = vector.load %arg11[%c0_1, %c0_2] : memref<128x128xf32, #tpu.memory_space<vmem>>, vector<128x128xf32>
    %cst = arith.constant 1.000000e+00 : f32
    %2 = vector.broadcast %cst : f32 to vector<1x32xf32>
    %c0_3 = arith.constant 0 : index
    %c0_4 = arith.constant 0 : index
    %3 = vector.load %arg4[%c0_3, %c0_4] : memref<1x128xf32, #tpu.memory_space<vmem>>, vector<1x128xf32>
    %c1 = arith.constant 1 : index
    %c0_5 = arith.constant 0 : index
    %c0_6 = arith.constant 0 : index
    %4 = vector.load %arg3[%c1, %c0_5, %c0_6] : memref<3x64x128xf32, #tpu.memory_space<vmem>>, vector<1x64x128xf32>
    %5 = vector.shape_cast %4 : vector<1x64x128xf32> to vector<64x128xf32>
    %cst_7 = arith.constant dense<0.000000e+00> : vector<32x128xf32>
    %6 = tpu.matmul %0, %5, %cst_7 {dimension_numbers = #tpu.dot_dimension_numbers<[1], [0], [0], [1], [0, 0, 1, 1], [], []>, precision = #tpu.contract_precision<fp32>} : vector<32x64xf32>, vector<64x128xf32>, vector<32x128xf32> -> vector<32x128xf32>
    %c0_8 = arith.constant 0 : index
    %c0_9 = arith.constant 0 : index
    %c0_10 = arith.constant 0 : index
    %7 = vector.load %arg2[%c0_8, %c0_9, %c0_10] : memref<3x32x32xf32, #tpu.memory_space<vmem>>, vector<1x32x32xf32>
    %8 = vector.shape_cast %7 : vector<1x32x32xf32> to vector<32x32xf32>
    %cst_11 = arith.constant dense<0.000000e+00> : vector<32x64xf32>
    %9 = tpu.matmul %8, %0, %cst_11 {dimension_numbers = #tpu.dot_dimension_numbers<[1], [0], [0], [1], [0, 0, 1, 1], [], []>, precision = #tpu.contract_precision<fp32>} : vector<32x32xf32>, vector<32x64xf32>, vector<32x64xf32> -> vector<32x64xf32>
    %c0_12 = arith.constant 0 : index
    %c0_13 = arith.constant 0 : index
    %c0_14 = arith.constant 0 : index
    %10 = vector.load %arg3[%c0_12, %c0_13, %c0_14] : memref<3x64x128xf32, #tpu.memory_space<vmem>>, vector<1x64x128xf32>
    %11 = vector.shape_cast %10 : vector<1x64x128xf32> to vector<64x128xf32>
    %cst_15 = arith.constant dense<0.000000e+00> : vector<32x128xf32>
    %12 = tpu.matmul %9, %11, %cst_15 {dimension_numbers = #tpu.dot_dimension_numbers<[1], [0], [0], [1], [0, 0, 1, 1], [], []>, precision = #tpu.contract_precision<fp32>} : vector<32x64xf32>, vector<64x128xf32>, vector<32x128xf32> -> vector<32x128xf32>
    %13 = arith.addf %6, %12 : vector<32x128xf32>
    %c2 = arith.constant 2 : index
    %c0_16 = arith.constant 0 : index
    %c0_17 = arith.constant 0 : index
    %14 = vector.load %arg2[%c2, %c0_16, %c0_17] : memref<3x32x32xf32, #tpu.memory_space<vmem>>, vector<1x32x32xf32>
    %15 = vector.shape_cast %14 : vector<1x32x32xf32> to vector<32x32xf32>
    %cst_18 = arith.constant dense<0.000000e+00> : vector<32x64xf32>
    %16 = tpu.matmul %15, %0, %cst_18 {dimension_numbers = #tpu.dot_dimension_numbers<[1], [0], [0], [1], [0, 0, 1, 1], [], []>, precision = #tpu.contract_precision<fp32>} : vector<32x32xf32>, vector<32x64xf32>, vector<32x64xf32> -> vector<32x64xf32>
    %c2_19 = arith.constant 2 : index
    %c0_20 = arith.constant 0 : index
    %c0_21 = arith.constant 0 : index
    %17 = vector.load %arg3[%c2_19, %c0_20, %c0_21] : memref<3x64x128xf32, #tpu.memory_space<vmem>>, vector<1x64x128xf32>
    %18 = vector.shape_cast %17 : vector<1x64x128xf32> to vector<64x128xf32>
    %cst_22 = arith.constant dense<0.000000e+00> : vector<32x128xf32>
    %19 = tpu.matmul %16, %18, %cst_22 {dimension_numbers = #tpu.dot_dimension_numbers<[1], [0], [0], [1], [0, 0, 1, 1], [], []>, precision = #tpu.contract_precision<fp32>} : vector<32x64xf32>, vector<64x128xf32>, vector<32x128xf32> -> vector<32x128xf32>
    %20 = arith.addf %13, %19 : vector<32x128xf32>
    %21 = vector.broadcast %3 : vector<1x128xf32> to vector<32x128xf32>
    %22 = arith.addf %20, %21 : vector<32x128xf32>
    %cst_23 = arith.constant 0.000000e+00 : f32
    %23 = vector.broadcast %cst_23 : f32 to vector<32x128xf32>
    %24 = arith.maximumf %22, %23 : vector<32x128xf32>
    %c0_24 = arith.constant 0 : index
    %c0_25 = arith.constant 0 : index
    %25 = vector.load %arg5[%c0_24, %c0_25] : memref<1x128xf32, #tpu.memory_space<vmem>>, vector<1x128xf32>
    %c0_26 = arith.constant 0 : index
    %c0_27 = arith.constant 0 : index
    %26 = vector.load %arg6[%c0_26, %c0_27] : memref<1x128xf32, #tpu.memory_space<vmem>>, vector<1x128xf32>
    %cst_28 = arith.constant dense<0.000000e+00> : vector<1x128xf32>
    %27 = tpu.matmul %2, %24, %cst_28 {dimension_numbers = #tpu.dot_dimension_numbers<[1], [0], [0], [1], [0, 0, 1, 1], [], []>, precision = #tpu.contract_precision<fp32>} : vector<1x32xf32>, vector<32x128xf32>, vector<1x128xf32> -> vector<1x128xf32>
    %cst_29 = arith.constant dense<0.000000e+00> : vector<1x128xf32>
    %28 = tpu.matmul %27, %1, %cst_29 {dimension_numbers = #tpu.dot_dimension_numbers<[1], [0], [0], [1], [0, 0, 1, 1], [], []>, precision = #tpu.contract_precision<fp32>} : vector<1x128xf32>, vector<128x128xf32>, vector<1x128xf32> -> vector<1x128xf32>
    %cst_30 = arith.constant 0.001953125 : f32
    %29 = vector.broadcast %cst_30 : f32 to vector<1x128xf32>
    %30 = arith.mulf %28, %29 : vector<1x128xf32>
    %31 = vector.broadcast %30 : vector<1x128xf32> to vector<32x128xf32>
    %32 = arith.subf %24, %31 : vector<32x128xf32>
    %33 = arith.mulf %32, %32 : vector<32x128xf32>
    %cst_31 = arith.constant dense<0.000000e+00> : vector<1x128xf32>
    %34 = tpu.matmul %2, %33, %cst_31 {dimension_numbers = #tpu.dot_dimension_numbers<[1], [0], [0], [1], [0, 0, 1, 1], [], []>, precision = #tpu.contract_precision<fp32>} : vector<1x32xf32>, vector<32x128xf32>, vector<1x128xf32> -> vector<1x128xf32>
    %cst_32 = arith.constant dense<0.000000e+00> : vector<1x128xf32>
    %35 = tpu.matmul %34, %1, %cst_32 {dimension_numbers = #tpu.dot_dimension_numbers<[1], [0], [0], [1], [0, 0, 1, 1], [], []>, precision = #tpu.contract_precision<fp32>} : vector<1x128xf32>, vector<128x128xf32>, vector<1x128xf32> -> vector<1x128xf32>
    %cst_33 = arith.constant 0.001953125 : f32
    %36 = vector.broadcast %cst_33 : f32 to vector<1x128xf32>
    %37 = arith.mulf %35, %36 : vector<1x128xf32>
    %cst_34 = arith.constant 9.99999974E-6 : f32
    %38 = vector.broadcast %cst_34 : f32 to vector<1x128xf32>
    %39 = arith.addf %37, %38 : vector<1x128xf32>
    %40 = math.rsqrt %39 : vector<1x128xf32>
    %41 = arith.mulf %40, %25 : vector<1x128xf32>
    %42 = vector.broadcast %41 : vector<1x128xf32> to vector<32x128xf32>
    %43 = arith.mulf %32, %42 : vector<32x128xf32>
    %44 = vector.broadcast %26 : vector<1x128xf32> to vector<32x128xf32>
    %45 = arith.addf %43, %44 : vector<32x128xf32>
    %c0_35 = arith.constant 0 : index
    %c0_36 = arith.constant 0 : index
    %46 = vector.load %arg8[%c0_35, %c0_36] : memref<1x128xf32, #tpu.memory_space<vmem>>, vector<1x128xf32>
    %c1_37 = arith.constant 1 : index
    %c0_38 = arith.constant 0 : index
    %c0_39 = arith.constant 0 : index
    %47 = vector.load %arg7[%c1_37, %c0_38, %c0_39] : memref<3x128x128xf32, #tpu.memory_space<vmem>>, vector<1x128x128xf32>
    %48 = vector.shape_cast %47 : vector<1x128x128xf32> to vector<128x128xf32>
    %cst_40 = arith.constant dense<0.000000e+00> : vector<32x128xf32>
    %49 = tpu.matmul %45, %48, %cst_40 {dimension_numbers = #tpu.dot_dimension_numbers<[1], [0], [0], [1], [0, 0, 1, 1], [], []>, precision = #tpu.contract_precision<fp32>} : vector<32x128xf32>, vector<128x128xf32>, vector<32x128xf32> -> vector<32x128xf32>
    %c0_41 = arith.constant 0 : index
    %c0_42 = arith.constant 0 : index
    %c0_43 = arith.constant 0 : index
    %50 = vector.load %arg2[%c0_41, %c0_42, %c0_43] : memref<3x32x32xf32, #tpu.memory_space<vmem>>, vector<1x32x32xf32>
    %51 = vector.shape_cast %50 : vector<1x32x32xf32> to vector<32x32xf32>
    %cst_44 = arith.constant dense<0.000000e+00> : vector<32x128xf32>
    %52 = tpu.matmul %51, %45, %cst_44 {dimension_numbers = #tpu.dot_dimension_numbers<[1], [0], [0], [1], [0, 0, 1, 1], [], []>, precision = #tpu.contract_precision<fp32>} : vector<32x32xf32>, vector<32x128xf32>, vector<32x128xf32> -> vector<32x128xf32>
    %c0_45 = arith.constant 0 : index
    %c0_46 = arith.constant 0 : index
    %c0_47 = arith.constant 0 : index
    %53 = vector.load %arg7[%c0_45, %c0_46, %c0_47] : memref<3x128x128xf32, #tpu.memory_space<vmem>>, vector<1x128x128xf32>
    %54 = vector.shape_cast %53 : vector<1x128x128xf32> to vector<128x128xf32>
    %cst_48 = arith.constant dense<0.000000e+00> : vector<32x128xf32>
    %55 = tpu.matmul %52, %54, %cst_48 {dimension_numbers = #tpu.dot_dimension_numbers<[1], [0], [0], [1], [0, 0, 1, 1], [], []>, precision = #tpu.contract_precision<fp32>} : vector<32x128xf32>, vector<128x128xf32>, vector<32x128xf32> -> vector<32x128xf32>
    %56 = arith.addf %49, %55 : vector<32x128xf32>
    %c2_49 = arith.constant 2 : index
    %c0_50 = arith.constant 0 : index
    %c0_51 = arith.constant 0 : index
    %57 = vector.load %arg2[%c2_49, %c0_50, %c0_51] : memref<3x32x32xf32, #tpu.memory_space<vmem>>, vector<1x32x32xf32>
    %58 = vector.shape_cast %57 : vector<1x32x32xf32> to vector<32x32xf32>
    %cst_52 = arith.constant dense<0.000000e+00> : vector<32x128xf32>
    %59 = tpu.matmul %58, %45, %cst_52 {dimension_numbers = #tpu.dot_dimension_numbers<[1], [0], [0], [1], [0, 0, 1, 1], [], []>, precision = #tpu.contract_precision<fp32>} : vector<32x32xf32>, vector<32x128xf32>, vector<32x128xf32> -> vector<32x128xf32>
    %c2_53 = arith.constant 2 : index
    %c0_54 = arith.constant 0 : index
    %c0_55 = arith.constant 0 : index
    %60 = vector.load %arg7[%c2_53, %c0_54, %c0_55] : memref<3x128x128xf32, #tpu.memory_space<vmem>>, vector<1x128x128xf32>
    %61 = vector.shape_cast %60 : vector<1x128x128xf32> to vector<128x128xf32>
    %cst_56 = arith.constant dense<0.000000e+00> : vector<32x128xf32>
    %62 = tpu.matmul %59, %61, %cst_56 {dimension_numbers = #tpu.dot_dimension_numbers<[1], [0], [0], [1], [0, 0, 1, 1], [], []>, precision = #tpu.contract_precision<fp32>} : vector<32x128xf32>, vector<128x128xf32>, vector<32x128xf32> -> vector<32x128xf32>
    %63 = arith.addf %56, %62 : vector<32x128xf32>
    %64 = vector.broadcast %46 : vector<1x128xf32> to vector<32x128xf32>
    %65 = arith.addf %63, %64 : vector<32x128xf32>
    %cst_57 = arith.constant 0.000000e+00 : f32
    %66 = vector.broadcast %cst_57 : f32 to vector<32x128xf32>
    %67 = arith.maximumf %65, %66 : vector<32x128xf32>
    %c0_58 = arith.constant 0 : index
    %c0_59 = arith.constant 0 : index
    %68 = vector.load %arg9[%c0_58, %c0_59] : memref<1x128xf32, #tpu.memory_space<vmem>>, vector<1x128xf32>
    %c0_60 = arith.constant 0 : index
    %c0_61 = arith.constant 0 : index
    %69 = vector.load %arg10[%c0_60, %c0_61] : memref<1x128xf32, #tpu.memory_space<vmem>>, vector<1x128xf32>
    %cst_62 = arith.constant dense<0.000000e+00> : vector<1x128xf32>
    %70 = tpu.matmul %2, %67, %cst_62 {dimension_numbers = #tpu.dot_dimension_numbers<[1], [0], [0], [1], [0, 0, 1, 1], [], []>, precision = #tpu.contract_precision<fp32>} : vector<1x32xf32>, vector<32x128xf32>, vector<1x128xf32> -> vector<1x128xf32>
    %cst_63 = arith.constant dense<0.000000e+00> : vector<1x128xf32>
    %71 = tpu.matmul %70, %1, %cst_63 {dimension_numbers = #tpu.dot_dimension_numbers<[1], [0], [0], [1], [0, 0, 1, 1], [], []>, precision = #tpu.contract_precision<fp32>} : vector<1x128xf32>, vector<128x128xf32>, vector<1x128xf32> -> vector<1x128xf32>
    %cst_64 = arith.constant 0.001953125 : f32
    %72 = vector.broadcast %cst_64 : f32 to vector<1x128xf32>
    %73 = arith.mulf %71, %72 : vector<1x128xf32>
    %74 = vector.broadcast %73 : vector<1x128xf32> to vector<32x128xf32>
    %75 = arith.subf %67, %74 : vector<32x128xf32>
    %76 = arith.mulf %75, %75 : vector<32x128xf32>
    %cst_65 = arith.constant dense<0.000000e+00> : vector<1x128xf32>
    %77 = tpu.matmul %2, %76, %cst_65 {dimension_numbers = #tpu.dot_dimension_numbers<[1], [0], [0], [1], [0, 0, 1, 1], [], []>, precision = #tpu.contract_precision<fp32>} : vector<1x32xf32>, vector<32x128xf32>, vector<1x128xf32> -> vector<1x128xf32>
    %cst_66 = arith.constant dense<0.000000e+00> : vector<1x128xf32>
    %78 = tpu.matmul %77, %1, %cst_66 {dimension_numbers = #tpu.dot_dimension_numbers<[1], [0], [0], [1], [0, 0, 1, 1], [], []>, precision = #tpu.contract_precision<fp32>} : vector<1x128xf32>, vector<128x128xf32>, vector<1x128xf32> -> vector<1x128xf32>
    %cst_67 = arith.constant 0.001953125 : f32
    %79 = vector.broadcast %cst_67 : f32 to vector<1x128xf32>
    %80 = arith.mulf %78, %79 : vector<1x128xf32>
    %cst_68 = arith.constant 9.99999974E-6 : f32
    %81 = vector.broadcast %cst_68 : f32 to vector<1x128xf32>
    %82 = arith.addf %80, %81 : vector<1x128xf32>
    %83 = math.rsqrt %82 : vector<1x128xf32>
    %84 = arith.mulf %83, %68 : vector<1x128xf32>
    %85 = vector.broadcast %84 : vector<1x128xf32> to vector<32x128xf32>
    %86 = arith.mulf %75, %85 : vector<32x128xf32>
    %87 = vector.broadcast %69 : vector<1x128xf32> to vector<32x128xf32>
    %88 = arith.addf %86, %87 : vector<32x128xf32>
    %c0_69 = arith.constant 0 : index
    %c0_70 = arith.constant 0 : index
    %89 = vector.load %arg12[%c0_69, %c0_70] : memref<32x128xf32, #tpu.memory_space<vmem>>, vector<32x128xf32>
    tpu.vector_store %arg12[%c0_69, %c0_70], %88 {strides = array<i32>} : memref<32x128xf32, #tpu.memory_space<vmem>>, vector<32x128xf32>,
    return
  }
  func.func @transform_0(%arg0: i32) -> (i32, i32) {
    %c0_i32 = arith.constant 0 : i32
    %c0_i32_0 = arith.constant 0 : i32
    %c0_i32_1 = arith.constant 0 : i32
    return %c0_i32, %c0_i32_0 : i32, i32
  }
  func.func @transform_1(%arg0: i32) -> (i32, i32, i32) {
    %c0_i32 = arith.constant 0 : i32
    %c0_i32_0 = arith.constant 0 : i32
    %c0_i32_1 = arith.constant 0 : i32
    %c0_i32_2 = arith.constant 0 : i32
    return %c0_i32, %c0_i32_0, %c0_i32_1 : i32, i32, i32
  }
  func.func @transform_2(%arg0: i32) -> (i32, i32, i32) {
    %c0_i32 = arith.constant 0 : i32
    %c0_i32_0 = arith.constant 0 : i32
    %c0_i32_1 = arith.constant 0 : i32
    %c0_i32_2 = arith.constant 0 : i32
    return %c0_i32, %c0_i32_0, %c0_i32_1 : i32, i32, i32
  }
  func.func @transform_3(%arg0: i32) -> (i32, i32) {
    %c0_i32 = arith.constant 0 : i32
    %c0_i32_0 = arith.constant 0 : i32
    %c0_i32_1 = arith.constant 0 : i32
    return %c0_i32, %c0_i32_0 : i32, i32
  }
  func.func @transform_4(%arg0: i32) -> (i32, i32) {
    %c0_i32 = arith.constant 0 : i32
    %c0_i32_0 = arith.constant 0 : i32
    %c0_i32_1 = arith.constant 0 : i32
    return %c0_i32, %c0_i32_0 : i32, i32
  }
  func.func @transform_5(%arg0: i32) -> (i32, i32) {
    %c0_i32 = arith.constant 0 : i32
    %c0_i32_0 = arith.constant 0 : i32
    %c0_i32_1 = arith.constant 0 : i32
    return %c0_i32, %c0_i32_0 : i32, i32
  }
  func.func @transform_6(%arg0: i32) -> (i32, i32, i32) {
    %c0_i32 = arith.constant 0 : i32
    %c0_i32_0 = arith.constant 0 : i32
    %c0_i32_1 = arith.constant 0 : i32
    %c0_i32_2 = arith.constant 0 : i32
    return %c0_i32, %c0_i32_0, %c0_i32_1 : i32, i32, i32
  }
  func.func @transform_7(%arg0: i32) -> (i32, i32) {
    %c0_i32 = arith.constant 0 : i32
    %c0_i32_0 = arith.constant 0 : i32
    %c0_i32_1 = arith.constant 0 : i32
    return %c0_i32, %c0_i32_0 : i32, i32
  }
  func.func @transform_8(%arg0: i32) -> (i32, i32) {
    %c0_i32 = arith.constant 0 : i32
    %c0_i32_0 = arith.constant 0 : i32
    %c0_i32_1 = arith.constant 0 : i32
    return %c0_i32, %c0_i32_0 : i32, i32
  }
  func.func @transform_9(%arg0: i32) -> (i32, i32) {
    %c0_i32 = arith.constant 0 : i32
    %c0_i32_0 = arith.constant 0 : i32
    %c0_i32_1 = arith.constant 0 : i32
    return %c0_i32, %c0_i32_0 : i32, i32
  }
  func.func @transform_10(%arg0: i32) -> (i32, i32) {
    %c0_i32 = arith.constant 0 : i32
    %c0_i32_0 = arith.constant 0 : i32
    %c0_i32_1 = arith.constant 0 : i32
    return %c0_i32, %c0_i32_0 : i32, i32
  }
  func.func @transform_11(%arg0: i32) -> (i32, i32) {
    %c0_i32 = arith.constant 0 : i32
    %c0_i32_0 = arith.constant 0 : i32
    %c0_i32_1 = arith.constant 0 : i32
    return %c0_i32, %c0_i32_0 : i32, i32
  }
}

</mosaic_0001>

<llo_original>
// kernel: tile.33
$region0: #{tile.33}
  #allocation0 [shape = 's32[1]{0}', space=sflag, size = 0x4, scoped, tag = 'scoped memory for tile.33']
  %s0 = inlined_call_operand.vmem [shape: f32[8], index: 0, kind: input, shape index: {}]
  %s1 = inlined_call_operand.vmem [shape: f32[16,8], index: 1, kind: output, shape index: {}]
  // Predicated region
  $region2: #{tile.33} parent=0 // pred_check
    _
  $region3: #{tile.33} parent=0 // pred_check_branch
    %3 = sbr.rel (0) target = $region5
  $region4: #{tile.33} parent=0 // pred_region
    _
  $region5: #{tile.33} parent=0 // pred_fallthru
    _
  %v4 = vld [vmem:[%s0] ss:$0 sm:$0xff]
  %5 = vst [vmem:[%s1] sm:$0xff] %v4
  %s6 = scalar_lea.vmem %s1, 8
  %7 = vst [vmem:[%s6] sm:$0xff] %v4

// kernel: tile.34
$region0: #{tile.34}
  %s0 = inlined_call_operand.vmem [shape: f32[16,8], index: 0, kind: input, shape index: {}]
  %s1 = inlined_call_operand.vmem [shape: f32[1,128], index: 1, kind: output, shape index: {}]
  $region1: #{tile.34} parent=0
    #allocation0 [shape = 'u8[4096]{0}', space=vmem, size = 0x1000, scoped, tag = 'scoped mem for output reshape']
    %v2 = vld [vmem:[%s0] sm:$0x1]
    %vm3 = vcmask 64512
    %4 = vst.msk [vmem:[#allocation0] sm:$0x1] %vm3, %v2
    %s5 = scalar_lea.vmem %s0, 15
    %v6 = vld [vmem:[%s5] sm:$0x1]
    %7 = vrot.lane.b32.xlu0 %v6, 120
    %v8 = vpop.permute.xlu0 %7
    %vm9 = vcmask 1048512
    %10 = vst.msk [vmem:[#allocation0] sm:$0x1] %vm9, %v8
    %s11 = scalar_lea.vmem %s0, 14
    %v12 = vld [vmem:[%s11] sm:$0x1]
    %13 = vrot.lane.b32.xlu0 %v12, 112
    %v14 = vpop.permute.xlu0 %13
    %vm15 = vcmask 982912
    %16 = vst.msk [vmem:[#allocation0] sm:$0x1] %vm15, %v14
    %s17 = scalar_lea.vmem %s0, 13
    %v18 = vld [vmem:[%s17] sm:$0x1]
    %19 = vrot.lane.b32.xlu0 %v18, 104
    %v20 = vpop.permute.xlu0 %19
    %vm21 = vcmask 917312
    %22 = vst.msk [vmem:[#allocation0] sm:$0x1] %vm21, %v20
    %s23 = scalar_lea.vmem %s0, 12
    %v24 = vld [vmem:[%s23] sm:$0x1]
    %25 = vrot.lane.b32.xlu0 %v24, 96
    %v26 = vpop.permute.xlu0 %25
    %vm27 = vcmask 851712
    %28 = vst.msk [vmem:[#allocation0] sm:$0x1] %vm27, %v26
    %s29 = scalar_lea.vmem %s0, 11
    %v30 = vld [vmem:[%s29] sm:$0x1]
    %31 = vrot.lane.b32.xlu0 %v30, 88
    %v32 = vpop.permute.xlu0 %31
    %vm33 = vcmask 786112
    %34 = vst.msk [vmem:[#allocation0] sm:$0x1] %vm33, %v32
    %s35 = scalar_lea.vmem %s0, 10
    %v36 = vld [vmem:[%s35] sm:$0x1]
    %37 = vrot.lane.b32.xlu0 %v36, 80
    %v38 = vpop.permute.xlu0 %37
    %vm39 = vcmask 720512
    %40 = vst.msk [vmem:[#allocation0] sm:$0x1] %vm39, %v38
    %s41 = scalar_lea.vmem %s0, 9
    %v42 = vld [vmem:[%s41] sm:$0x1]
    %43 = vrot.lane.b32.xlu0 %v42, 72
    %v44 = vpop.permute.xlu0 %43
    %vm45 = vcmask 654912
    %46 = vst.msk [vmem:[#allocation0] sm:$0x1] %vm45, %v44
    %s47 = scalar_lea.vmem %s0, 8
    %v48 = vld [vmem:[%s47] sm:$0x1]
    %49 = vrot.lane.b32.xlu0 %v48, 64
    %v50 = vpop.permute.xlu0 %49
    %vm51 = vcmask 589312
    %52 = vst.msk [vmem:[#allocation0] sm:$0x1] %vm51, %v50
    %s53 = scalar_lea.vmem %s0, 7
    %v54 = vld [vmem:[%s53] sm:$0x1]
    %55 = vrot.lane.b32.xlu0 %v54, 56
    %v56 = vpop.permute.xlu0 %55
    %vm57 = vcmask 523712
    %58 = vst.msk [vmem:[#allocation0] sm:$0x1] %vm57, %v56
    %s59 = scalar_lea.vmem %s0, 6
    %v60 = vld [vmem:[%s59] sm:$0x1]
    %61 = vrot.lane.b32.xlu0 %v60, 48
    %v62 = vpop.permute.xlu0 %61
    %vm63 = vcmask 458112
    %64 = vst.msk [vmem:[#allocation0] sm:$0x1] %vm63, %v62
    %s65 = scalar_lea.vmem %s0, 5
    %v66 = vld [vmem:[%s65] sm:$0x1]
    %67 = vrot.lane.b32.xlu0 %v66, 40
    %v68 = vpop.permute.xlu0 %67
    %vm69 = vcmask 392512
    %70 = vst.msk [vmem:[#allocation0] sm:$0x1] %vm69, %v68
    %s71 = scalar_lea.vmem %s0, 4
    %v72 = vld [vmem:[%s71] sm:$0x1]
    %73 = vrot.lane.b32.xlu0 %v72, 32
    %v74 = vpop.permute.xlu0 %73
    %vm75 = vcmask 326912
    %76 = vst.msk [vmem:[#allocation0] sm:$0x1] %vm75, %v74
    %s77 = scalar_lea.vmem %s0, 3
    %v78 = vld [vmem:[%s77] sm:$0x1]
    %79 = vrot.lane.b32.xlu0 %v78, 24
    %v80 = vpop.permute.xlu0 %79
    %vm81 = vcmask 261312
    %82 = vst.msk [vmem:[#allocation0] sm:$0x1] %vm81, %v80
    %s83 = scalar_lea.vmem %s0, 2
    %v84 = vld [vmem:[%s83] sm:$0x1]
    %85 = vrot.lane.b32.xlu0 %v84, 16
    %v86 = vpop.permute.xlu0 %85
    %vm87 = vcmask 195712
    %88 = vst.msk [vmem:[#allocation0] sm:$0x1] %vm87, %v86
    %s89 = scalar_lea.vmem %s0, 1
    %v90 = vld [vmem:[%s89] sm:$0x1]
    %91 = vrot.lane.b32.xlu0 %v90, 8
    %v92 = vpop.permute.xlu0 %91
    %vm93 = vcmask 130112
    %94 = vst.msk [vmem:[#allocation0] sm:$0x1] %vm93, %v92
    %s96 = sshllo.u32 0, 1
    %v98 = vld [vmem:[#allocation0] sm:%s96]
    %s99 = sshllo.u32 0, 1
    %100 = vst [vmem:[%s1] sm:%s99] %v98

// kernel: unet_conv_block.1
$region0: #{unet_conv_block.1}
  #allocation0 [shape = 'u32[]', space=smem, size = 0x4, offset = 0x4, fixed_abs, tag = 'smem constant byte address 0x4 - core index']
  #allocation1 [shape = 'u32[144,128]{1,0:T(1,128)}', space=vmem, size = 0x12000, scoped, tag = 'internal scratch']
  %s0 = inlined_call_operand.vmem [shape: f32[32,64], index: 0, kind: input, shape index: {}]
  %s1 = inlined_call_operand.vmem [shape: f32[3,32,32], index: 1, kind: input, shape index: {}]
  %s2 = inlined_call_operand.vmem [shape: f32[3,64,128], index: 2, kind: input, shape index: {}]
  %s3 = inlined_call_operand.vmem [shape: f32[1,128], index: 3, kind: input, shape index: {}]
  %s4 = inlined_call_operand.vmem [shape: f32[1,128], index: 4, kind: input, shape index: {}]
  %s5 = inlined_call_operand.vmem [shape: f32[1,128], index: 5, kind: input, shape index: {}]
  %s6 = inlined_call_operand.vmem [shape: f32[3,128,128], index: 6, kind: input, shape index: {}]
  %s7 = inlined_call_operand.vmem [shape: f32[1,128], index: 7, kind: input, shape index: {}]
  %s8 = inlined_call_operand.vmem [shape: f32[1,128], index: 8, kind: input, shape index: {}]
  %s9 = inlined_call_operand.vmem [shape: f32[1,128], index: 9, kind: input, shape index: {}]
  %s10 = inlined_call_operand.vmem [shape: f32[128,128], index: 10, kind: input, shape index: {}]
  %s11 = inlined_call_operand.vmem [shape: f32[32,128], index: 11, kind: output, shape index: {}]
  %s12 = sld [smem:[#allocation0]]
  $region54: #{unet_conv_block.1} parent=0
    _
  %s14 = ssub.s32 1, %s12
  %s15 = scalar_select 0, %s14, %s12
  // Predicated region
  $region2: #{unet_conv_block.1} parent=0 // pred_check
    _
  $region3: #{unet_conv_block.1} parent=0 // pred_check_branch
    %17 = sbr.rel (0) target = $region5
  $region4: #{unet_conv_block.1} parent=0 // pred_region
    _
  $region5: #{unet_conv_block.1} parent=0 // pred_fallthru
    _
  // Predicated region
  $region6: #{unet_conv_block.1} parent=0 // pred_check
    _
  $region7: #{unet_conv_block.1} parent=0 // pred_check_branch
    %19 = sbr.rel (0) target = $region9
  $region8: #{unet_conv_block.1} parent=0 // pred_region
    _
  $region9: #{unet_conv_block.1} parent=0 // pred_fallthru
    _
  // Predicated region
  $region10: #{unet_conv_block.1} parent=0 // pred_check
    _
  $region11: #{unet_conv_block.1} parent=0 // pred_check_branch
    %21 = sbr.rel (0) target = $region13
  $region12: #{unet_conv_block.1} parent=0 // pred_region
    _
  $region13: #{unet_conv_block.1} parent=0 // pred_fallthru
    _
  // Predicated region
  $region14: #{unet_conv_block.1} parent=0 // pred_check
    _
  $region15: #{unet_conv_block.1} parent=0 // pred_check_branch
    %23 = sbr.rel (0) target = $region17
  $region16: #{unet_conv_block.1} parent=0 // pred_region
    _
  $region17: #{unet_conv_block.1} parent=0 // pred_fallthru
    _
  // Predicated region
  $region18: #{unet_conv_block.1} parent=0 // pred_check
    _
  $region19: #{unet_conv_block.1} parent=0 // pred_check_branch
    %25 = sbr.rel (0) target = $region21
  $region20: #{unet_conv_block.1} parent=0 // pred_region
    _
  $region21: #{unet_conv_block.1} parent=0 // pred_fallthru
    _
  // Predicated region
  $region22: #{unet_conv_block.1} parent=0 // pred_check
    _
  $region23: #{unet_conv_block.1} parent=0 // pred_check_branch
    %27 = sbr.rel (0) target = $region25
  $region24: #{unet_conv_block.1} parent=0 // pred_region
    _
  $region25: #{unet_conv_block.1} parent=0 // pred_fallthru
    _
  // Predicated region
  $region26: #{unet_conv_block.1} parent=0 // pred_check
    _
  $region27: #{unet_conv_block.1} parent=0 // pred_check_branch
    %29 = sbr.rel (0) target = $region29
  $region28: #{unet_conv_block.1} parent=0 // pred_region
    _
  $region29: #{unet_conv_block.1} parent=0 // pred_fallthru
    _
  // Predicated region
  $region30: #{unet_conv_block.1} parent=0 // pred_check
    _
  $region31: #{unet_conv_block.1} parent=0 // pred_check_branch
    %31 = sbr.rel (0) target = $region33
  $region32: #{unet_conv_block.1} parent=0 // pred_region
    _
  $region33: #{unet_conv_block.1} parent=0 // pred_fallthru
    _
  // Predicated region
  $region34: #{unet_conv_block.1} parent=0 // pred_check
    _
  $region35: #{unet_conv_block.1} parent=0 // pred_check_branch
    %33 = sbr.rel (0) target = $region37
  $region36: #{unet_conv_block.1} parent=0 // pred_region
    _
  $region37: #{unet_conv_block.1} parent=0 // pred_fallthru
    _
  // Predicated region
  $region38: #{unet_conv_block.1} parent=0 // pred_check
    _
  $region39: #{unet_conv_block.1} parent=0 // pred_check_branch
    %35 = sbr.rel (0) target = $region41
  $region40: #{unet_conv_block.1} parent=0 // pred_region
    _
  $region41: #{unet_conv_block.1} parent=0 // pred_fallthru
    _
  // Predicated region
  $region42: #{unet_conv_block.1} parent=0 // pred_check
    _
  $region43: #{unet_conv_block.1} parent=0 // pred_check_branch
    %37 = sbr.rel (0) target = $region45
  $region44: #{unet_conv_block.1} parent=0 // pred_region
    _
  $region45: #{unet_conv_block.1} parent=0 // pred_fallthru
    _
  %v38 = vld [vmem:[%s0] sm:$0xff]
  %v39 = vld [vmem:[%s0 + $0x8] sm:$0xff]
  %v40 = vld [vmem:[%s0 + $0x10] sm:$0xff]
  %v41 = vld [vmem:[%s0 + $0x18] sm:$0xff]
  %v42 = vld [vmem:[%s10] sm:$0xff]
  %v43 = vld [vmem:[%s10 + $0x8] sm:$0xff]
  %v44 = vld [vmem:[%s10 + $0x10] sm:$0xff]
  %v45 = vld [vmem:[%s10 + $0x18] sm:$0xff]
  %v46 = vld [vmem:[%s10 + $0x20] sm:$0xff]
  %v47 = vld [vmem:[%s10 + $0x28] sm:$0xff]
  %v48 = vld [vmem:[%s10 + $0x30] sm:$0xff]
  %v49 = vld [vmem:[%s10 + $0x38] sm:$0xff]
  %v50 = vld [vmem:[%s10 + $0x40] sm:$0xff]
  %v51 = vld [vmem:[%s10 + $0x48] sm:$0xff]
  %v52 = vld [vmem:[%s10 + $0x50] sm:$0xff]
  %v53 = vld [vmem:[%s10 + $0x58] sm:$0xff]
  %v54 = vld [vmem:[%s10 + $0x60] sm:$0xff]
  %v55 = vld [vmem:[%s10 + $0x68] sm:$0xff]
  %v56 = vld [vmem:[%s10 + $0x70] sm:$0xff]
  %v57 = vld [vmem:[%s10 + $0x78] sm:$0xff]
  %v58 = vld [vmem:[%s3] sm:$0x1]
  %s59 = scalar_lea.vmem %s2, 64
  %v60 = vld [vmem:[%s59] sm:$0xff]
  %v61 = vld [vmem:[%s59 + $0x8] sm:$0xff]
  %v62 = vld [vmem:[%s59 + $0x10] sm:$0xff]
  %v63 = vld [vmem:[%s59 + $0x18] sm:$0xff]
  %v64 = vld [vmem:[%s59 + $0x20] sm:$0xff]
  %v65 = vld [vmem:[%s59 + $0x28] sm:$0xff]
  %v66 = vld [vmem:[%s59 + $0x30] sm:$0xff]
  %v67 = vld [vmem:[%s59 + $0x38] sm:$0xff]
  %v68 = vld [vmem:[%s1] sm:$0xff]
  %v69 = vld [vmem:[%s1 + $0x8] sm:$0xff]
  %v70 = vld [vmem:[%s1 + $0x10] sm:$0xff]
  %v71 = vld [vmem:[%s1 + $0x18] sm:$0xff]
  %vm72 = vcmask 261120
  %v74 = vsel %vm72, %v68, 0
  %v77 = vsel %vm72, %v69, 0
  %v80 = vsel %vm72, %v70, 0
  %v83 = vsel %vm72, %v71, 0
  %85 = vmatprep.subr.mxu0 0.0
  %v86 = vand.u32 %v38, 4294901760
  %87 = vmatpush1.msra.mxu0 %v86
  %88 = vmatprep.subr.mxu0 0.0
  %v89 = vand.u32 %v39, 4294901760
  %90 = vmatpush1.msra.mxu0 %v89
  %91 = vmatprep.subr.mxu0 0.0
  %v92 = vand.u32 %v40, 4294901760
  %93 = vmatpush1.msra.mxu0 %v92
  %94 = vmatprep.subr.mxu0 0.0
  %v95 = vand.u32 %v41, 4294901760
  %96 = vmatpush1.msra.mxu0 %v95
  %97 = vmatprep.subr.mxu0 0.0
  %98 = vmatpush1.msra.mxu0 0.0
  %99 = vmatprep.subr.mxu0 0.0
  %100 = vmatpush1.msra.mxu0 0.0
  %101 = vmatprep.subr.mxu0 0.0
  %102 = vmatpush1.msra.mxu0 0.0
  %103 = vmatprep.subr.mxu0 0.0
  %104 = vmatpush1.msra.mxu0 0.0
  %105 = vmatprep.subr.mxu0 0.0
  %106 = vmatpush1.msra.mxu0 0.0
  %107 = vmatprep.subr.mxu0 0.0
  %108 = vmatpush1.msra.mxu0 0.0
  %109 = vmatprep.subr.mxu0 0.0
  %110 = vmatpush1.msra.mxu0 0.0
  %111 = vmatprep.subr.mxu0 0.0
  %112 = vmatpush1.msra.mxu0 0.0
  %113 = vmatprep.subr.mxu0 0.0
  %114 = vmatpush1.msra.mxu0 0.0
  %115 = vmatprep.subr.mxu0 0.0
  %116 = vmatpush1.msra.mxu0 0.0
  %117 = vmatprep.subr.mxu0 0.0
  %118 = vmatpush1.msra.mxu0 0.0
  %119 = vmatprep.subr.mxu0 0.0
  %120 = vmatpush1.msra.mxu0 0.0
  %121 = vmatprep.subr.mxu0 0.0
  %122 = vmatpush1.msra.mxu0 0.0
  %123 = vmatprep.subr.mxu0 0.0
  %124 = vmatpush1.msra.mxu0 0.0
  %125 = vmatprep.subr.mxu0 0.0
  %126 = vmatpush1.msra.mxu0 0.0
  %127 = vmatprep.subr.mxu0 0.0
  %128 = vmatpush1.msra.mxu0 0.0
  %129 = vmatprep.subr.mxu0 0.0
  %130 = vmatpush1.msra.mxu0 0.0
  %131 = vmatprep.subr.mxu0 0.0
  %132 = vmatpush1.msra.mxu0 0.0
  %133 = vmatprep.subr.mxu0 0.0
  %134 = vmatpush1.msra.mxu0 0.0
  %135 = vmatprep.subr.mxu0 0.0
  %136 = vmatpush1.msra.mxu0 0.0
  %137 = vmatprep.subr.mxu0 0.0
  %138 = vmatpush1.msra.mxu0 0.0
  %139 = vmatprep.subr.mxu0 0.0
  %140 = vmatpush1.msra.mxu0 0.0
  %141 = vmatprep.subr.mxu0 0.0
  %142 = vmatpush1.msra.mxu0 0.0
  %143 = vmatprep.subr.mxu0 0.0
  %144 = vmatpush1.msra.mxu0 0.0
  %145 = vmatprep.subr.mxu0 0.0
  %146 = vmatpush1.msra.mxu0 0.0
  %147 = vmatprep.subr.mxu0 0.0
  %148 = vmatpush1.msra.mxu0 0.0
  %149 = vmatprep.subr.mxu0 0.0
  %150 = vmatpush1.msra.mxu0 0.0
  %151 = vmatprep.subr.mxu0 0.0
  %152 = vmatpush1.msra.mxu0 0.0
  %153 = vmatprep.mubr.f32.mxu0 0.0
  %v154 = vand.u32 %v74, 4294901760
  %v155 = vsub.f32 %v74, %v154
  %v156 = vand.u32 %v155, 4294901760
  %v157 = vsub.f32 %v155, %v156
  %v158 = vand.u32 %v157, 4294901760
  %159 = vmatmul.mubr.f32.gmra.mrb[0].mxu0 %v158
  %v160 = vpop.f32.mrb[0].mxu0
  %v161 = vadd.f32 0.0, %v160
  %v162 = vpop.f32.mrb[0].mxu0
  %163 = vmatprep.mubr.f32.mxu0 0.0
  %v164 = vand.u32 %v77, 4294901760
  %v165 = vsub.f32 %v77, %v164
  %v166 = vand.u32 %v165, 4294901760
  %v167 = vsub.f32 %v165, %v166
  %v168 = vand.u32 %v167, 4294901760
  %169 = vmatmul.mubr.f32.gmra.mrb[0].mxu0 %v168
  %v170 = vpop.f32.mrb[0].mxu0
  %v171 = vadd.f32 0.0, %v170
  %v172 = vpop.f32.mrb[0].mxu0
  %173 = vmatprep.mubr.f32.mxu0 0.0
  %v174 = vand.u32 %v80, 4294901760
  %v175 = vsub.f32 %v80, %v174
  %v176 = vand.u32 %v175, 4294901760
  %v177 = vsub.f32 %v175, %v176
  %v178 = vand.u32 %v177, 4294901760
  %179 = vmatmul.mubr.f32.gmra.mrb[0].mxu0 %v178
  %v180 = vpop.f32.mrb[0].mxu0
  %v181 = vadd.f32 0.0, %v180
  %v182 = vpop.f32.mrb[0].mxu0
  %183 = vmatprep.mubr.f32.mxu0 0.0
  %v184 = vand.u32 %v83, 4294901760
  %v185 = vsub.f32 %v83, %v184
  %v186 = vand.u32 %v185, 4294901760
  %v187 = vsub.f32 %v185, %v186
  %v188 = vand.u32 %v187, 4294901760
  %189 = vmatmul.mubr.f32.gmra.mrb[0].mxu0 %v188
  %v190 = vpop.f32.mrb[0].mxu0
  %v191 = vadd.f32 0.0, %v190
  %v192 = vpop.f32.mrb[0].mxu0
  %193 = vdwg.mxu0
  %194 = vmatprep.subr.mxu0 0.0
  %v195 = vand.u32 %v38, 4294901760
  %v196 = vsub.f32 %v38, %v195
  %v197 = vand.u32 %v196, 4294901760
  %v198 = vsub.f32 %v196, %v197
  %v199 = vand.u32 %v198, 4294901760
  %200 = vmatpush1.msra.mxu0 %v199
  %201 = vmatprep.subr.mxu0 0.0
  %v202 = vand.u32 %v39, 4294901760
  %v203 = vsub.f32 %v39, %v202
  %v204 = vand.u32 %v203, 4294901760
  %v205 = vsub.f32 %v203, %v204
  %v206 = vand.u32 %v205, 4294901760
  %207 = vmatpush1.msra.mxu0 %v206
  %208 = vmatprep.subr.mxu0 0.0
  %v209 = vand.u32 %v40, 4294901760
  %v210 = vsub.f32 %v40, %v209
  %v211 = vand.u32 %v210, 4294901760
  %v212 = vsub.f32 %v210, %v211
  %v213 = vand.u32 %v212, 4294901760
  %214 = vmatpush1.msra.mxu0 %v213
  %215 = vmatprep.subr.mxu0 0.0
  %v216 = vand.u32 %v41, 4294901760
  %v217 = vsub.f32 %v41, %v216
  %v218 = vand.u32 %v217, 4294901760
  %v219 = vsub.f32 %v217, %v218
  %v220 = vand.u32 %v219, 4294901760
  %221 = vmatpush1.msra.mxu0 %v220
  %222 = vmatprep.subr.mxu0 0.0
  %223 = vmatpush1.msra.mxu0 0.0
  %224 = vmatprep.subr.mxu0 0.0
  %225 = vmatpush1.msra.mxu0 0.0
  %226 = vmatprep.subr.mxu0 0.0
  %227 = vmatpush1.msra.mxu0 0.0
  %228 = vmatprep.subr.mxu0 0.0
  %229 = vmatpush1.msra.mxu0 0.0
  %230 = vmatprep.subr.mxu0 0.0
  %231 = vmatpush1.msra.mxu0 0.0
  %232 = vmatprep.subr.mxu0 0.0
  %233 = vmatpush1.msra.mxu0 0.0
  %234 = vmatprep.subr.mxu0 0.0
  %235 = vmatpush1.msra.mxu0 0.0
  %236 = vmatprep.subr.mxu0 0.0
  %237 = vmatpush1.msra.mxu0 0.0
  %238 = vmatprep.subr.mxu0 0.0
  %239 = vmatpush1.msra.mxu0 0.0
  %240 = vmatprep.subr.mxu0 0.0
  %241 = vmatpush1.msra.mxu0 0.0
  %242 = vmatprep.subr.mxu0 0.0
  %243 = vmatpush1.msra.mxu0 0.0
  %244 = vmatprep.subr.mxu0 0.0
  %245 = vmatpush1.msra.mxu0 0.0
  %246 = vmatprep.subr.mxu0 0.0
  %247 = vmatpush1.msra.mxu0 0.0
  %248 = vmatprep.subr.mxu0 0.0
  %249 = vmatpush1.msra.mxu0 0.0
  %250 = vmatprep.subr.mxu0 0.0
  %251 = vmatpush1.msra.mxu0 0.0
  %252 = vmatprep.subr.mxu0 0.0
  %253 = vmatpush1.msra.mxu0 0.0
  %254 = vmatprep.subr.mxu0 0.0
  %255 = vmatpush1.msra.mxu0 0.0
  %256 = vmatprep.subr.mxu0 0.0
  %257 = vmatpush1.msra.mxu0 0.0
  %258 = vmatprep.subr.mxu0 0.0
  %259 = vmatpush1.msra.mxu0 0.0
  %260 = vmatprep.subr.mxu0 0.0
  %261 = vmatpush1.msra.mxu0 0.0
  %262 = vmatprep.subr.mxu0 0.0
  %263 = vmatpush1.msra.mxu0 0.0
  %264 = vmatprep.subr.mxu0 0.0
  %265 = vmatpush1.msra.mxu0 0.0
  %266 = vmatprep.subr.mxu0 0.0
  %267 = vmatpush1.msra.mxu0 0.0
  %268 = vmatprep.subr.mxu0 0.0
  %269 = vmatpush1.msra.mxu0 0.0
  %270 = vmatprep.subr.mxu0 0.0
  %271 = vmatpush1.msra.mxu0 0.0
  %272 = vmatprep.subr.mxu0 0.0
  %273 = vmatpush1.msra.mxu0 0.0
  %274 = vmatprep.subr.mxu0 0.0
  %275 = vmatpush1.msra.mxu0 0.0
  %276 = vmatprep.subr.mxu0 0.0
  %277 = vmatpush1.msra.mxu0 0.0
  %278 = vmatprep.mubr.f32.mxu0 0.0
  %v279 = vand.u32 %v74, 4294901760
  %280 = vmatmul.mubr.f32.gmra.mrb[0].mxu0 %v279
  %v281 = vpop.f32.mrb[0].mxu0
  %v282 = vadd.f32 %v161, %v281
  %v283 = vpop.f32.mrb[0].mxu0
  %284 = vmatprep.mubr.f32.mxu0 0.0
  %v285 = vand.u32 %v77, 4294901760
  %286 = vmatmul.mubr.f32.gmra.mrb[0].mxu0 %v285
  %v287 = vpop.f32.mrb[0].mxu0
  %v288 = vadd.f32 %v171, %v287
  %v289 = vpop.f32.mrb[0].mxu0
  %290 = vmatprep.mubr.f32.mxu0 0.0
  %v291 = vand.u32 %v80, 4294901760
  %292 = vmatmul.mubr.f32.gmra.mrb[0].mxu0 %v291
  %v293 = vpop.f32.mrb[0].mxu0
  %v294 = vadd.f32 %v181, %v293
  %v295 = vpop.f32.mrb[0].mxu0
  %296 = vmatprep.mubr.f32.mxu0 0.0
  %v297 = vand.u32 %v83, 4294901760
  %298 = vmatmul.mubr.f32.gmra.mrb[0].mxu0 %v297
  %v299 = vpop.f32.mrb[0].mxu0
  %v300 = vadd.f32 %v191, %v299
  %v301 = vpop.f32.mrb[0].mxu0
  %302 = vdwg.mxu0
  %303 = vmatprep.subr.mxu0 0.0
  %v304 = vand.u32 %v38, 4294901760
  %v305 = vsub.f32 %v38, %v304
  %306 = vmatpush1.msra.mxu0 %v305
  %307 = vmatprep.subr.mxu0 0.0
  %v308 = vand.u32 %v39, 4294901760
  %v309 = vsub.f32 %v39, %v308
  %310 = vmatpush1.msra.mxu0 %v309
  %311 = vmatprep.subr.mxu0 0.0
  %v312 = vand.u32 %v40, 4294901760
  %v313 = vsub.f32 %v40, %v312
  %314 = vmatpush1.msra.mxu0 %v313
  %315 = vmatprep.subr.mxu0 0.0
  %v316 = vand.u32 %v41, 4294901760
  %v317 = vsub.f32 %v41, %v316
  %318 = vmatpush1.msra.mxu0 %v317
  %319 = vmatprep.subr.mxu0 0.0
  %320 = vmatpush1.msra.mxu0 0.0
  %321 = vmatprep.subr.mxu0 0.0
  %322 = vmatpush1.msra.mxu0 0.0
  %323 = vmatprep.subr.mxu0 0.0
  %324 = vmatpush1.msra.mxu0 0.0
  %325 = vmatprep.subr.mxu0 0.0
  %326 = vmatpush1.msra.mxu0 0.0
  %327 = vmatprep.subr.mxu0 0.0
  %328 = vmatpush1.msra.mxu0 0.0
  %329 = vmatprep.subr.mxu0 0.0
  %330 = vmatpush1.msra.mxu0 0.0
  %331 = vmatprep.subr.mxu0 0.0
  %332 = vmatpush1.msra.mxu0 0.0
  %333 = vmatprep.subr.mxu0 0.0
  %334 = vmatpush1.msra.mxu0 0.0
  %335 = vmatprep.subr.mxu0 0.0
  %336 = vmatpush1.msra.mxu0 0.0
  %337 = vmatprep.subr.mxu0 0.0
  %338 = vmatpush1.msra.mxu0 0.0
  %339 = vmatprep.subr.mxu0 0.0
  %340 = vmatpush1.msra.mxu0 0.0
  %341 = vmatprep.subr.mxu0 0.0
  %342 = vmatpush1.msra.mxu0 0.0
  %343 = vmatprep.subr.mxu0 0.0
  %344 = vmatpush1.msra.mxu0 0.0
  %345 = vmatprep.subr.mxu0 0.0
  %346 = vmatpush1.msra.mxu0 0.0
  %347 = vmatprep.subr.mxu0 0.0
  %348 = vmatpush1.msra.mxu0 0.0
  %349 = vmatprep.subr.mxu0 0.0
  %350 = vmatpush1.msra.mxu0 0.0
  %351 = vmatprep.subr.mxu0 0.0
  %352 = vmatpush1.msra.mxu0 0.0
  %353 = vmatprep.subr.mxu0 0.0
  %354 = vmatpush1.msra.mxu0 0.0
  %355 = vmatprep.subr.mxu0 0.0
  %356 = vmatpush1.msra.mxu0 0.0
  %357 = vmatprep.subr.mxu0 0.0
  %358 = vmatpush1.msra.mxu0 0.0
  %359 = vmatprep.subr.mxu0 0.0
  %360 = vmatpush1.msra.mxu0 0.0
  %361 = vmatprep.subr.mxu0 0.0
  %362 = vmatpush1.msra.mxu0 0.0
  %363 = vmatprep.subr.mxu0 0.0
  %364 = vmatpush1.msra.mxu0 0.0
  %365 = vmatprep.subr.mxu0 0.0
  %366 = vmatpush1.msra.mxu0 0.0
  %367 = vmatprep.subr.mxu0 0.0
  %368 = vmatpush1.msra.mxu0 0.0
  %369 = vmatprep.subr.mxu0 0.0
  %370 = vmatpush1.msra.mxu0 0.0
  %371 = vmatprep.subr.mxu0 0.0
  %372 = vmatpush1.msra.mxu0 0.0
  %373 = vmatprep.subr.mxu0 0.0
  %374 = vmatpush1.msra.mxu0 0.0
  %375 = vmatprep.mubr.f32.mxu0 0.0
  %v376 = vand.u32 %v74, 4294901760
  %v377 = vsub.f32 %v74, %v376
  %378 = vmatmul.mubr.f32.gmra.mrb[0].mxu0 %v377
  %v379 = vpop.f32.mrb[0].mxu0
  %v380 = vadd.f32 %v282, %v379
  %v381 = vpop.f32.mrb[0].mxu0
  %382 = vmatprep.mubr.f32.mxu0 0.0
  %v383 = vand.u32 %v77, 4294901760
  %v384 = vsub.f32 %v77, %v383
  %385 = vmatmul.mubr.f32.gmra.mrb[0].mxu0 %v384
  %v386 = vpop.f32.mrb[0].mxu0
  %v387 = vadd.f32 %v288, %v386
  %v388 = vpop.f32.mrb[0].mxu0
  %389 = vmatprep.mubr.f32.mxu0 0.0
  %v390 = vand.u32 %v80, 4294901760
  %v391 = vsub.f32 %v80, %v390
  %392 = vmatmul.mubr.f32.gmra.mrb[0].mxu0 %v391
  %v393 = vpop.f32.mrb[0].mxu0
  %v394 = vadd.f32 %v294, %v393
  %v395 = vpop.f32.mrb[0].mxu0
  %396 = vmatprep.mubr.f32.mxu0 0.0
  %v397 = vand.u32 %v83, 4294901760
  %v398 = vsub.f32 %v83, %v397
  %399 = vmatmul.mubr.f32.gmra.mrb[0].mxu0 %v398
  %v400 = vpop.f32.mrb[0].mxu0
  %v401 = vadd.f32 %v300, %v400
  %v402 = vpop.f32.mrb[0].mxu0
  %403 = vdwg.mxu0
  %404 = vmatprep.subr.mxu0 0.0
  %v405 = vand.u32 %v38, 4294901760
  %406 = vmatpush1.msra.mxu0 %v405
  %407 = vmatprep.subr.mxu0 0.0
  %v408 = vand.u32 %v39, 4294901760
  %409 = vmatpush1.msra.mxu0 %v408
  %410 = vmatprep.subr.mxu0 0.0
  %v411 = vand.u32 %v40, 4294901760
  %412 = vmatpush1.msra.mxu0 %v411
  %413 = vmatprep.subr.mxu0 0.0
  %v414 = vand.u32 %v41, 4294901760
  %415 = vmatpush1.msra.mxu0 %v414
  %416 = vmatprep.subr.mxu0 0.0
  %417 = vmatpush1.msra.mxu0 0.0
  %418 = vmatprep.subr.mxu0 0.0
  %419 = vmatpush1.msra.mxu0 0.0
  %420 = vmatprep.subr.mxu0 0.0
  %421 = vmatpush1.msra.mxu0 0.0
  %422 = vmatprep.subr.mxu0 0.0
  %423 = vmatpush1.msra.mxu0 0.0
  %424 = vmatprep.subr.mxu0 0.0
  %425 = vmatpush1.msra.mxu0 0.0
  %426 = vmatprep.subr.mxu0 0.0
  %427 = vmatpush1.msra.mxu0 0.0
  %428 = vmatprep.subr.mxu0 0.0
  %429 = vmatpush1.msra.mxu0 0.0
  %430 = vmatprep.subr.mxu0 0.0
  %431 = vmatpush1.msra.mxu0 0.0
  %432 = vmatprep.subr.mxu0 0.0
  %433 = vmatpush1.msra.mxu0 0.0
  %434 = vmatprep.subr.mxu0 0.0
  %435 = vmatpush1.msra.mxu0 0.0
  %436 = vmatprep.subr.mxu0 0.0
  %437 = vmatpush1.msra.mxu0 0.0
  %438 = vmatprep.subr.mxu0 0.0
  %439 = vmatpush1.msra.mxu0 0.0
  %440 = vmatprep.subr.mxu0 0.0
  %441 = vmatpush1.msra.mxu0 0.0
  %442 = vmatprep.subr.mxu0 0.0
  %443 = vmatpush1.msra.mxu0 0.0
  %444 = vmatprep.subr.mxu0 0.0
  %445 = vmatpush1.msra.mxu0 0.0
  %446 = vmatprep.subr.mxu0 0.0
  %447 = vmatpush1.msra.mxu0 0.0
  %448 = vmatprep.subr.mxu0 0.0
  %449 = vmatpush1.msra.mxu0 0.0
  %450 = vmatprep.subr.mxu0 0.0
  %451 = vmatpush1.msra.mxu0 0.0
  %452 = vmatprep.subr.mxu0 0.0
  %453 = vmatpush1.msra.mxu0 0.0
  %454 = vmatprep.subr.mxu0 0.0
  %455 = vmatpush1.msra.mxu0 0.0
  %456 = vmatprep.subr.mxu0 0.0
  %457 = vmatpush1.msra.mxu0 0.0
  %458 = vmatprep.subr.mxu0 0.0
  %459 = vmatpush1.msra.mxu0 0.0
  %460 = vmatprep.subr.mxu0 0.0
  %461 = vmatpush1.msra.mxu0 0.0
  %462 = vmatprep.subr.mxu0 0.0
  %463 = vmatpush1.msra.mxu0 0.0
  %464 = vmatprep.subr.mxu0 0.0
  %465 = vmatpush1.msra.mxu0 0.0
  %466 = vmatprep.subr.mxu0 0.0
  %467 = vmatpush1.msra.mxu0 0.0
  %468 = vmatprep.subr.mxu0 0.0
  %469 = vmatpush1.msra.mxu0 0.0
  %470 = vmatprep.subr.mxu0 0.0
  %471 = vmatpush1.msra.mxu0 0.0
  %472 = vmatprep.mubr.f32.mxu0 0.0
  %v473 = vand.u32 %v74, 4294901760
  %v474 = vsub.f32 %v74, %v473
  %v475 = vand.u32 %v474, 4294901760
  %476 = vmatmul.mubr.f32.gmra.mrb[0].mxu0 %v475
  %v477 = vpop.f32.mrb[0].mxu0
  %v478 = vadd.f32 %v380, %v477
  %v479 = vpop.f32.mrb[0].mxu0
  %480 = vmatprep.mubr.f32.mxu0 0.0
  %v481 = vand.u32 %v77, 4294901760
  %v482 = vsub.f32 %v77, %v481
  %v483 = vand.u32 %v482, 4294901760
  %484 = vmatmul.mubr.f32.gmra.mrb[0].mxu0 %v483
  %v485 = vpop.f32.mrb[0].mxu0
  %v486 = vadd.f32 %v387, %v485
  %v487 = vpop.f32.mrb[0].mxu0
  %488 = vmatprep.mubr.f32.mxu0 0.0
  %v489 = vand.u32 %v80, 4294901760
  %v490 = vsub.f32 %v80, %v489
  %v491 = vand.u32 %v490, 4294901760
  %492 = vmatmul.mubr.f32.gmra.mrb[0].mxu0 %v491
  %v493 = vpop.f32.mrb[0].mxu0
  %v494 = vadd.f32 %v394, %v493
  %v495 = vpop.f32.mrb[0].mxu0
  %496 = vmatprep.mubr.f32.mxu0 0.0
  %v497 = vand.u32 %v83, 4294901760
  %v498 = vsub.f32 %v83, %v497
  %v499 = vand.u32 %v498, 4294901760
  %500 = vmatmul.mubr.f32.gmra.mrb[0].mxu0 %v499
  %v501 = vpop.f32.mrb[0].mxu0
  %v502 = vadd.f32 %v401, %v501
  %v503 = vpop.f32.mrb[0].mxu0
  %504 = vdwg.mxu0
  %505 = vmatprep.subr.mxu0 0.0
  %v506 = vand.u32 %v38, 4294901760
  %v507 = vsub.f32 %v38, %v506
  %v508 = vand.u32 %v507, 4294901760
  %509 = vmatpush1.msra.mxu0 %v508
  %510 = vmatprep.subr.mxu0 0.0
  %v511 = vand.u32 %v39, 4294901760
  %v512 = vsub.f32 %v39, %v511
  %v513 = vand.u32 %v512, 4294901760
  %514 = vmatpush1.msra.mxu0 %v513
  %515 = vmatprep.subr.mxu0 0.0
  %v516 = vand.u32 %v40, 4294901760
  %v517 = vsub.f32 %v40, %v516
  %v518 = vand.u32 %v517, 4294901760
  %519 = vmatpush1.msra.mxu0 %v518
  %520 = vmatprep.subr.mxu0 0.0
  %v521 = vand.u32 %v41, 4294901760
  %v522 = vsub.f32 %v41, %v521
  %v523 = vand.u32 %v522, 4294901760
  %524 = vmatpush1.msra.mxu0 %v523
  %525 = vmatprep.subr.mxu0 0.0
  %526 = vmatpush1.msra.mxu0 0.0
  %527 = vmatprep.subr.mxu0 0.0
  %528 = vmatpush1.msra.mxu0 0.0
  %529 = vmatprep.subr.mxu0 0.0
  %530 = vmatpush1.msra.mxu0 0.0
  %531 = vmatprep.subr.mxu0 0.0
  %532 = vmatpush1.msra.mxu0 0.0
  %533 = vmatprep.subr.mxu0 0.0
  %534 = vmatpush1.msra.mxu0 0.0
  %535 = vmatprep.subr.mxu0 0.0
  %536 = vmatpush1.msra.mxu0 0.0
  %537 = vmatprep.subr.mxu0 0.0
  %538 = vmatpush1.msra.mxu0 0.0
  %539 = vmatprep.subr.mxu0 0.0
  %540 = vmatpush1.msra.mxu0 0.0
  %541 = vmatprep.subr.mxu0 0.0
  %542 = vmatpush1.msra.mxu0 0.0
  %543 = vmatprep.subr.mxu0 0.0
  %544 = vmatpush1.msra.mxu0 0.0
  %545 = vmatprep.subr.mxu0 0.0
  %546 = vmatpush1.msra.mxu0 0.0
  %547 = vmatprep.subr.mxu0 0.0
  %548 = vmatpush1.msra.mxu0 0.0
  %549 = vmatprep.subr.mxu0 0.0
  %550 = vmatpush1.msra.mxu0 0.0
  %551 = vmatprep.subr.mxu0 0.0
  %552 = vmatpush1.msra.mxu0 0.0
  %553 = vmatprep.subr.mxu0 0.0
  %554 = vmatpush1.msra.mxu0 0.0
  %555 = vmatprep.subr.mxu0 0.0
  %556 = vmatpush1.msra.mxu0 0.0
  %557 = vmatprep.subr.mxu0 0.0
  %558 = vmatpush1.msra.mxu0 0.0
  %559 = vmatprep.subr.mxu0 0.0
  %560 = vmatpush1.msra.mxu0 0.0
  %561 = vmatprep.subr.mxu0 0.0
  %562 = vmatpush1.msra.mxu0 0.0
  %563 = vmatprep.subr.mxu0 0.0
  %564 = vmatpush1.msra.mxu0 0.0
  %565 = vmatprep.subr.mxu0 0.0
  %566 = vmatpush1.msra.mxu0 0.0
  %567 = vmatprep.subr.mxu0 0.0
  %568 = vmatpush1.msra.mxu0 0.0
  %569 = vmatprep.subr.mxu0 0.0
  %570 = vmatpush1.msra.mxu0 0.0
  %571 = vmatprep.subr.mxu0 0.0
  %572 = vmatpush1.msra.mxu0 0.0
  %573 = vmatprep.subr.mxu0 0.0
  %574 = vmatpush1.msra.mxu0 0.0
  %575 = vmatprep.subr.mxu0 0.0
  %576 = vmatpush1.msra.mxu0 0.0
  %577 = vmatprep.subr.mxu0 0.0
  %578 = vmatpush1.msra.mxu0 0.0
  %579 = vmatprep.subr.mxu0 0.0
  %580 = vmatpush1.msra.mxu0 0.0
  %581 = vmatprep.mubr.f32.mxu0 0.0
  %v582 = vand.u32 %v74, 4294901760
  %583 = vmatmul.mubr.f32.gmra.mrb[0].mxu0 %v582
  %v584 = vpop.f32.mrb[0].mxu0
  %v585 = vadd.f32 %v478, %v584
  %v586 = vpop.f32.mrb[0].mxu0
  %587 = vmatprep.mubr.f32.mxu0 0.0
  %v588 = vand.u32 %v77, 4294901760
  %589 = vmatmul.mubr.f32.gmra.mrb[0].mxu0 %v588
  %v590 = vpop.f32.mrb[0].mxu0
  %v591 = vadd.f32 %v486, %v590
  %v592 = vpop.f32.mrb[0].mxu0
  %593 = vmatprep.mubr.f32.mxu0 0.0
  %v594 = vand.u32 %v80, 4294901760
  %595 = vmatmul.mubr.f32.gmra.mrb[0].mxu0 %v594
  %v596 = vpop.f32.mrb[0].mxu0
  %v597 = vadd.f32 %v494, %v596
  %v598 = vpop.f32.mrb[0].mxu0
  %599 = vmatprep.mubr.f32.mxu0 0.0
  %v600 = vand.u32 %v83, 4294901760
  %601 = vmatmul.mubr.f32.gmra.mrb[0].mxu0 %v600
  %v602 = vpop.f32.mrb[0].mxu0
  %v603 = vadd.f32 %v502, %v602
  %v604 = vpop.f32.mrb[0].mxu0
  %605 = vdwg.mxu0
  %606 = vmatprep.subr.mxu0 0.0
  %v607 = vand.u32 %v38, 4294901760
  %608 = vmatpush1.msra.mxu0 %v607
  %609 = vmatprep.subr.mxu0 0.0
  %v610 = vand.u32 %v39, 4294901760
  %611 = vmatpush1.msra.mxu0 %v610
  %612 = vmatprep.subr.mxu0 0.0
  %v613 = vand.u32 %v40, 4294901760
  %614 = vmatpush1.msra.mxu0 %v613
  %615 = vmatprep.subr.mxu0 0.0
  %v616 = vand.u32 %v41, 4294901760
  %617 = vmatpush1.msra.mxu0 %v616
  %618 = vmatprep.subr.mxu0 0.0
  %619 = vmatpush1.msra.mxu0 0.0
  %620 = vmatprep.subr.mxu0 0.0
  %621 = vmatpush1.msra.mxu0 0.0
  %622 = vmatprep.subr.mxu0 0.0
  %623 = vmatpush1.msra.mxu0 0.0
  %624 = vmatprep.subr.mxu0 0.0
  %625 = vmatpush1.msra.mxu0 0.0
  %626 = vmatprep.subr.mxu0 0.0
  %627 = vmatpush1.msra.mxu0 0.0
  %628 = vmatprep.subr.mxu0 0.0
  %629 = vmatpush1.msra.mxu0 0.0
  %630 = vmatprep.subr.mxu0 0.0
  %631 = vmatpush1.msra.mxu0 0.0
  %632 = vmatprep.subr.mxu0 0.0
  %633 = vmatpush1.msra.mxu0 0.0
  %634 = vmatprep.subr.mxu0 0.0
  %635 = vmatpush1.msra.mxu0 0.0
  %636 = vmatprep.subr.mxu0 0.0
  %637 = vmatpush1.msra.mxu0 0.0
  %638 = vmatprep.subr.mxu0 0.0
  %639 = vmatpush1.msra.mxu0 0.0
  %640 = vmatprep.subr.mxu0 0.0
  %641 = vmatpush1.msra.mxu0 0.0
  %642 = vmatprep.subr.mxu0 0.0
  %643 = vmatpush1.msra.mxu0 0.0
  %644 = vmatprep.subr.mxu0 0.0
  %645 = vmatpush1.msra.mxu0 0.0
  %646 = vmatprep.subr.mxu0 0.0
  %647 = vmatpush1.msra.mxu0 0.0
  %648 = vmatprep.subr.mxu0 0.0
  %649 = vmatpush1.msra.mxu0 0.0
  %650 = vmatprep.subr.mxu0 0.0
  %651 = vmatpush1.msra.mxu0 0.0
  %652 = vmatprep.subr.mxu0 0.0
  %653 = vmatpush1.msra.mxu0 0.0
  %654 = vmatprep.subr.mxu0 0.0
  %655 = vmatpush1.msra.mxu0 0.0
  %656 = vmatprep.subr.mxu0 0.0
  %657 = vmatpush1.msra.mxu0 0.0
  %658 = vmatprep.subr.mxu0 0.0
  %659 = vmatpush1.msra.mxu0 0.0
  %660 = vmatprep.subr.mxu0 0.0
  %661 = vmatpush1.msra.mxu0 0.0
  %662 = vmatprep.subr.mxu0 0.0
  %663 = vmatpush1.msra.mxu0 0.0
  %664 = vmatprep.subr.mxu0 0.0
  %665 = vmatpush1.msra.mxu0 0.0
  %666 = vmatprep.subr.mxu0 0.0
  %667 = vmatpush1.msra.mxu0 0.0
  %668 = vmatprep.subr.mxu0 0.0
  %669 = vmatpush1.msra.mxu0 0.0
  %670 = vmatprep.subr.mxu0 0.0
  %671 = vmatpush1.msra.mxu0 0.0
  %672 = vmatprep.subr.mxu0 0.0
  %673 = vmatpush1.msra.mxu0 0.0
  %674 = vmatprep.mubr.f32.mxu0 0.0
  %v675 = vand.u32 %v74, 4294901760
  %676 = vmatmul.mubr.f32.gmra.mrb[0].mxu0 %v675
  %v677 = vpop.f32.mrb[0].mxu0
  %v678 = vadd.f32 %v585, %v677
  %v679 = vpop.f32.mrb[0].mxu0
  %680 = vmatprep.mubr.f32.mxu0 0.0
  %v681 = vand.u32 %v77, 4294901760
  %682 = vmatmul.mubr.f32.gmra.mrb[0].mxu0 %v681
  %v683 = vpop.f32.mrb[0].mxu0
  %v684 = vadd.f32 %v591, %v683
  %v685 = vpop.f32.mrb[0].mxu0
  %686 = vmatprep.mubr.f32.mxu0 0.0
  %v687 = vand.u32 %v80, 4294901760
  %688 = vmatmul.mubr.f32.gmra.mrb[0].mxu0 %v687
  %v689 = vpop.f32.mrb[0].mxu0
  %v690 = vadd.f32 %v597, %v689
  %v691 = vpop.f32.mrb[0].mxu0
  %692 = vmatprep.mubr.f32.mxu0 0.0
  %v693 = vand.u32 %v83, 4294901760
  %694 = vmatmul.mubr.f32.gmra.mrb[0].mxu0 %v693
  %v695 = vpop.f32.mrb[0].mxu0
  %v696 = vadd.f32 %v603, %v695
  %v697 = vpop.f32.mrb[0].mxu0
  %698 = vdwg.mxu0
  %v699 = vld [vmem:[%s2] sm:$0xff]
  %v700 = vld [vmem:[%s2 + $0x8] sm:$0xff]
  %v701 = vld [vmem:[%s2 + $0x10] sm:$0xff]
  %v702 = vld [vmem:[%s2 + $0x18] sm:$0xff]
  %v703 = vld [vmem:[%s2 + $0x20] sm:$0xff]
  %v704 = vld [vmem:[%s2 + $0x28] sm:$0xff]
  %v705 = vld [vmem:[%s2 + $0x30] sm:$0xff]
  %v706 = vld [vmem:[%s2 + $0x38] sm:$0xff]
  %vm707 = vcmask 523264
  %v709 = vsel %vm707, %v678, 0
  %v712 = vsel %vm707, %v684, 0
  %v715 = vsel %vm707, %v690, 0
  %v718 = vsel %vm707, %v696, 0
  %720 = vmatprep.subr.mxu0 0.0
  %v721 = vand.u32 %v699, 4294901760
  %722 = vmatpush1.msra.mxu0 %v721
  %723 = vmatprep.subr.mxu0 0.0
  %v724 = vand.u32 %v700, 4294901760
  %725 = vmatpush1.msra.mxu0 %v724
  %726 = vmatprep.subr.mxu0 0.0
  %v727 = vand.u32 %v701, 4294901760
  %728 = vmatpush1.msra.mxu0 %v727
  %729 = vmatprep.subr.mxu0 0.0
  %v730 = vand.u32 %v702, 4294901760
  %731 = vmatpush1.msra.mxu0 %v730
  %732 = vmatprep.subr.mxu0 0.0
  %v733 = vand.u32 %v703, 4294901760
  %734 = vmatpush1.msra.mxu0 %v733
  %735 = vmatprep.subr.mxu0 0.0
  %v736 = vand.u32 %v704, 4294901760
  %737 = vmatpush1.msra.mxu0 %v736
  %738 = vmatprep.subr.mxu0 0.0
  %v739 = vand.u32 %v705, 4294901760
  %740 = vmatpush1.msra.mxu0 %v739
  %741 = vmatprep.subr.mxu0 0.0
  %v742 = vand.u32 %v706, 4294901760
  %743 = vmatpush1.msra.mxu0 %v742
  %744 = vmatprep.subr.mxu0 0.0
  %745 = vmatpush1.msra.mxu0 0.0
  %746 = vmatprep.subr.mxu0 0.0
  %747 = vmatpush1.msra.mxu0 0.0
  %748 = vmatprep.subr.mxu0 0.0
  %749 = vmatpush1.msra.mxu0 0.0
  %750 = vmatprep.subr.mxu0 0.0
  %751 = vmatpush1.msra.mxu0 0.0
  %752 = vmatprep.subr.mxu0 0.0
  %753 = vmatpush1.msra.mxu0 0.0
  %754 = vmatprep.subr.mxu0 0.0
  %755 = vmatpush1.msra.mxu0 0.0
  %756 = vmatprep.subr.mxu0 0.0
  %757 = vmatpush1.msra.mxu0 0.0
  %758 = vmatprep.subr.mxu0 0.0
  %759 = vmatpush1.msra.mxu0 0.0
  %760 = vmatprep.subr.mxu0 0.0
  %761 = vmatpush1.msra.mxu0 0.0
  %762 = vmatprep.subr.mxu0 0.0
  %763 = vmatpush1.msra.mxu0 0.0
  %764 = vmatprep.subr.mxu0 0.0
  %765 = vmatpush1.msra.mxu0 0.0
  %766 = vmatprep.subr.mxu0 0.0
  %767 = vmatpush1.msra.mxu0 0.0
  %768 = vmatprep.subr.mxu0 0.0
  %769 = vmatpush1.msra.mxu0 0.0
  %770 = vmatprep.subr.mxu0 0.0
  %771 = vmatpush1.msra.mxu0 0.0
  %772 = vmatprep.subr.mxu0 0.0
  %773 = vmatpush1.msra.mxu0 0.0
  %774 = vmatprep.subr.mxu0 0.0
  %775 = vmatpush1.msra.mxu0 0.0
  %776 = vmatprep.subr.mxu0 0.0
  %777 = vmatpush1.msra.mxu0 0.0
  %778 = vmatprep.subr.mxu0 0.0
  %779 = vmatpush1.msra.mxu0 0.0
  %780 = vmatprep.subr.mxu0 0.0
  %781 = vmatpush1.msra.mxu0 0.0
  %782 = vmatprep.subr.mxu0 0.0
  %783 = vmatpush1.msra.mxu0 0.0
  %784 = vmatprep.subr.mxu0 0.0
  %785 = vmatpush1.msra.mxu0 0.0
  %786 = vmatprep.subr.mxu0 0.0
  %787 = vmatpush1.msra.mxu0 0.0
  %788 = vmatprep.subr.mxu0 0.0
  %789 = vmatpush1.msra.mxu0 0.0
  %790 = vmatprep.subr.mxu0 0.0
  %791 = vmatpush1.msra.mxu0 0.0
  %792 = vmatprep.mubr.f32.mxu0 0.0
  %v793 = vand.u32 %v709, 4294901760
  %v794 = vsub.f32 %v709, %v793
  %v795 = vand.u32 %v794, 4294901760
  %v796 = vsub.f32 %v794, %v795
  %v797 = vand.u32 %v796, 4294901760
  %798 = vmatmul.mubr.f32.gmra.mrb[0].mxu0 %v797
  %v799 = vpop.f32.mrb[0].mxu0
  %v800 = vadd.f32 0.0, %v799
  %v801 = vpop.f32.mrb[0].mxu0
  %802 = vmatprep.mubr.f32.mxu0 0.0
  %v803 = vand.u32 %v712, 4294901760
  %v804 = vsub.f32 %v712, %v803
  %v805 = vand.u32 %v804, 4294901760
  %v806 = vsub.f32 %v804, %v805
  %v807 = vand.u32 %v806, 4294901760
  %808 = vmatmul.mubr.f32.gmra.mrb[0].mxu0 %v807
  %v809 = vpop.f32.mrb[0].mxu0
  %v810 = vadd.f32 0.0, %v809
  %v811 = vpop.f32.mrb[0].mxu0
  %812 = vmatprep.mubr.f32.mxu0 0.0
  %v813 = vand.u32 %v715, 4294901760
  %v814 = vsub.f32 %v715, %v813
  %v815 = vand.u32 %v814, 4294901760
  %v816 = vsub.f32 %v814, %v815
  %v817 = vand.u32 %v816, 4294901760
  %818 = vmatmul.mubr.f32.gmra.mrb[0].mxu0 %v817
  %v819 = vpop.f32.mrb[0].mxu0
  %v820 = vadd.f32 0.0, %v819
  %v821 = vpop.f32.mrb[0].mxu0
  %822 = vmatprep.mubr.f32.mxu0 0.0
  %v823 = vand.u32 %v718, 4294901760
  %v824 = vsub.f32 %v718, %v823
  %v825 = vand.u32 %v824, 4294901760
  %v826 = vsub.f32 %v824, %v825
  %v827 = vand.u32 %v826, 4294901760
  %828 = vmatmul.mubr.f32.gmra.mrb[0].mxu0 %v827
  %v829 = vpop.f32.mrb[0].mxu0
  %v830 = vadd.f32 0.0, %v829
  %v831 = vpop.f32.mrb[0].mxu0
  %832 = vdwg.mxu0
  %833 = vmatprep.subr.mxu0 0.0
  %v834 = vand.u32 %v699, 4294901760
  %v835 = vsub.f32 %v699, %v834
  %v836 = vand.u32 %v835, 4294901760
  %v837 = vsub.f32 %v835, %v836
  %v838 = vand.u32 %v837, 4294901760
  %839 = vmatpush1.msra.mxu0 %v838
  %840 = vmatprep.subr.mxu0 0.0
  %v841 = vand.u32 %v700, 4294901760
  %v842 = vsub.f32 %v700, %v841
  %v843 = vand.u32 %v842, 4294901760
  %v844 = vsub.f32 %v842, %v843
  %v845 = vand.u32 %v844, 4294901760
  %846 = vmatpush1.msra.mxu0 %v845
  %847 = vmatprep.subr.mxu0 0.0
  %v848 = vand.u32 %v701, 4294901760
  %v849 = vsub.f32 %v701, %v848
  %v850 = vand.u32 %v849, 4294901760
  %v851 = vsub.f32 %v849, %v850
  %v852 = vand.u32 %v851, 4294901760
  %853 = vmatpush1.msra.mxu0 %v852
  %854 = vmatprep.subr.mxu0 0.0
  %v855 = vand.u32 %v702, 4294901760
  %v856 = vsub.f32 %v702, %v855
  %v857 = vand.u32 %v856, 4294901760
  %v858 = vsub.f32 %v856, %v857
  %v859 = vand.u32 %v858, 4294901760
  %860 = vmatpush1.msra.mxu0 %v859
  %861 = vmatprep.subr.mxu0 0.0
  %v862 = vand.u32 %v703, 4294901760
  %v863 = vsub.f32 %v703, %v862
  %v864 = vand.u32 %v863, 4294901760
  %v865 = vsub.f32 %v863, %v864
  %v866 = vand.u32 %v865, 4294901760
  %867 = vmatpush1.msra.mxu0 %v866
  %868 = vmatprep.subr.mxu0 0.0
  %v869 = vand.u32 %v704, 4294901760
  %v870 = vsub.f32 %v704, %v869
  %v871 = vand.u32 %v870, 4294901760
  %v872 = vsub.f32 %v870, %v871
  %v873 = vand.u32 %v872, 4294901760
  %874 = vmatpush1.msra.mxu0 %v873
  %875 = vmatprep.subr.mxu0 0.0
  %v876 = vand.u32 %v705, 4294901760
  %v877 = vsub.f32 %v705, %v876
  %v878 = vand.u32 %v877, 4294901760
  %v879 = vsub.f32 %v877, %v878
  %v880 = vand.u32 %v879, 4294901760
  %881 = vmatpush1.msra.mxu0 %v880
  %882 = vmatprep.subr.mxu0 0.0
  %v883 = vand.u32 %v706, 4294901760
  %v884 = vsub.f32 %v706, %v883
  %v885 = vand.u32 %v884, 4294901760
  %v886 = vsub.f32 %v884, %v885
  %v887 = vand.u32 %v886, 4294901760
  %888 = vmatpush1.msra.mxu0 %v887
  %889 = vmatprep.subr.mxu0 0.0
  %890 = vmatpush1.msra.mxu0 0.0
  %891 = vmatprep.subr.mxu0 0.0
  %892 = vmatpush1.msra.mxu0 0.0
  %893 = vmatprep.subr.mxu0 0.0
  %894 = vmatpush1.msra.mxu0 0.0
  %895 = vmatprep.subr.mxu0 0.0
  %896 = vmatpush1.msra.mxu0 0.0
  %897 = vmatprep.subr.mxu0 0.0
  %898 = vmatpush1.msra.mxu0 0.0
  %899 = vmatprep.subr.mxu0 0.0
  %900 = vmatpush1.msra.mxu0 0.0
  %901 = vmatprep.subr.mxu0 0.0
  %902 = vmatpush1.msra.mxu0 0.0
  %903 = vmatprep.subr.mxu0 0.0
  %904 = vmatpush1.msra.mxu0 0.0
  %905 = vmatprep.subr.mxu0 0.0
  %906 = vmatpush1.msra.mxu0 0.0
  %907 = vmatprep.subr.mxu0 0.0
  %908 = vmatpush1.msra.mxu0 0.0
  %909 = vmatprep.subr.mxu0 0.0
  %910 = vmatpush1.msra.mxu0 0.0
  %911 = vmatprep.subr.mxu0 0.0
  %912 = vmatpush1.msra.mxu0 0.0
  %913 = vmatprep.subr.mxu0 0.0
  %914 = vmatpush1.msra.mxu0 0.0
  %915 = vmatprep.subr.mxu0 0.0
  %916 = vmatpush1.msra.mxu0 0.0
  %917 = vmatprep.subr.mxu0 0.0
  %918 = vmatpush1.msra.mxu0 0.0
  %919 = vmatprep.subr.mxu0 0.0
  %920 = vmatpush1.msra.mxu0 0.0
  %921 = vmatprep.subr.mxu0 0.0
  %922 = vmatpush1.msra.mxu0 0.0
  %923 = vmatprep.subr.mxu0 0.0
  %924 = vmatpush1.msra.mxu0 0.0
  %925 = vmatprep.subr.mxu0 0.0
  %926 = vmatpush1.msra.mxu0 0.0
  %927 = vmatprep.subr.mxu0 0.0
  %928 = vmatpush1.msra.mxu0 0.0
  %929 = vmatprep.subr.mxu0 0.0
  %930 = vmatpush1.msra.mxu0 0.0
  %931 = vmatprep.subr.mxu0 0.0
  %932 = vmatpush1.msra.mxu0 0.0
  %933 = vmatprep.subr.mxu0 0.0
  %934 = vmatpush1.msra.mxu0 0.0
  %935 = vmatprep.subr.mxu0 0.0
  %936 = vmatpush1.msra.mxu0 0.0
  %937 = vmatprep.mubr.f32.mxu0 0.0
  %v938 = vand.u32 %v709, 4294901760
  %939 = vmatmul.mubr.f32.gmra.mrb[0].mxu0 %v938
  %v940 = vpop.f32.mrb[0].mxu0
  %v941 = vadd.f32 %v800, %v940
  %v942 = vpop.f32.mrb[0].mxu0
  %943 = vmatprep.mubr.f32.mxu0 0.0
  %v944 = vand.u32 %v712, 4294901760
  %945 = vmatmul.mubr.f32.gmra.mrb[0].mxu0 %v944
  %v946 = vpop.f32.mrb[0].mxu0
  %v947 = vadd.f32 %v810, %v946
  %v948 = vpop.f32.mrb[0].mxu0
  %949 = vmatprep.mubr.f32.mxu0 0.0
  %v950 = vand.u32 %v715, 4294901760
  %951 = vmatmul.mubr.f32.gmra.mrb[0].mxu0 %v950
  %v952 = vpop.f32.mrb[0].mxu0
  %v953 = vadd.f32 %v820, %v952
  %v954 = vpop.f32.mrb[0].mxu0
  %955 = vmatprep.mubr.f32.mxu0 0.0
  %v956 = vand.u32 %v718, 4294901760
  %957 = vmatmul.mubr.f32.gmra.mrb[0].mxu0 %v956
  %v958 = vpop.f32.mrb[0].mxu0
  %v959 = vadd.f32 %v830, %v958
  %v960 = vpop.f32.mrb[0].mxu0
  %961 = vdwg.mxu0
  %962 = vmatprep.subr.mxu0 0.0
  %v963 = vand.u32 %v699, 4294901760
  %v964 = vsub.f32 %v699, %v963
  %965 = vmatpush1.msra.mxu0 %v964
  %966 = vmatprep.subr.mxu0 0.0
  %v967 = vand.u32 %v700, 4294901760
  %v968 = vsub.f32 %v700, %v967
  %969 = vmatpush1.msra.mxu0 %v968
  %970 = vmatprep.subr.mxu0 0.0
  %v971 = vand.u32 %v701, 4294901760
  %v972 = vsub.f32 %v701, %v971
  %973 = vmatpush1.msra.mxu0 %v972
  %974 = vmatprep.subr.mxu0 0.0
  %v975 = vand.u32 %v702, 4294901760
  %v976 = vsub.f32 %v702, %v975
  %977 = vmatpush1.msra.mxu0 %v976
  %978 = vmatprep.subr.mxu0 0.0
  %v979 = vand.u32 %v703, 4294901760
  %v980 = vsub.f32 %v703, %v979
  %981 = vmatpush1.msra.mxu0 %v980
  %982 = vmatprep.subr.mxu0 0.0
  %v983 = vand.u32 %v704, 4294901760
  %v984 = vsub.f32 %v704, %v983
  %985 = vmatpush1.msra.mxu0 %v984
  %986 = vmatprep.subr.mxu0 0.0
  %v987 = vand.u32 %v705, 4294901760
  %v988 = vsub.f32 %v705, %v987
  %989 = vmatpush1.msra.mxu0 %v988
  %990 = vmatprep.subr.mxu0 0.0
  %v991 = vand.u32 %v706, 4294901760
  %v992 = vsub.f32 %v706, %v991
  %993 = vmatpush1.msra.mxu0 %v992
  %994 = vmatprep.subr.mxu0 0.0
  %995 = vmatpush1.msra.mxu0 0.0
  %996 = vmatprep.subr.mxu0 0.0
  %997 = vmatpush1.msra.mxu0 0.0
  %998 = vmatprep.subr.mxu0 0.0
  %999 = vmatpush1.msra.mxu0 0.0
  %1000 = vmatprep.subr.mxu0 0.0
  %1001 = vmatpush1.msra.mxu0 0.0
  %1002 = vmatprep.subr.mxu0 0.0
  %1003 = vmatpush1.msra.mxu0 0.0
  %1004 = vmatprep.subr.mxu0 0.0
  %1005 = vmatpush1.msra.mxu0 0.0
  %1006 = vmatprep.subr.mxu0 0.0
  %1007 = vmatpush1.msra.mxu0 0.0
  %1008 = vmatprep.subr.mxu0 0.0
  %1009 = vmatpush1.msra.mxu0 0.0
  %1010 = vmatprep.subr.mxu0 0.0
  %1011 = vmatpush1.msra.mxu0 0.0
  %1012 = vmatprep.subr.mxu0 0.0
  %1013 = vmatpush1.msra.mxu0 0.0
  %1014 = vmatprep.subr.mxu0 0.0
  %1015 = vmatpush1.msra.mxu0 0.0
  %1016 = vmatprep.subr.mxu0 0.0
  %1017 = vmatpush1.msra.mxu0 0.0
  %1018 = vmatprep.subr.mxu0 0.0
  %1019 = vmatpush1.msra.mxu0 0.0
  %1020 = vmatprep.subr.mxu0 0.0
  %1021 = vmatpush1.msra.mxu0 0.0
  %1022 = vmatprep.subr.mxu0 0.0
  %1023 = vmatpush1.msra.mxu0 0.0
  %1024 = vmatprep.subr.mxu0 0.0
  %1025 = vmatpush1.msra.mxu0 0.0
  %1026 = vmatprep.subr.mxu0 0.0
  %1027 = vmatpush1.msra.mxu0 0.0
  %1028 = vmatprep.subr.mxu0 0.0
  %1029 = vmatpush1.msra.mxu0 0.0
  %1030 = vmatprep.subr.mxu0 0.0
  %1031 = vmatpush1.msra.mxu0 0.0
  %1032 = vmatprep.subr.mxu0 0.0
  %1033 = vmatpush1.msra.mxu0 0.0
  %1034 = vmatprep.subr.mxu0 0.0
  %1035 = vmatpush1.msra.mxu0 0.0
  %1036 = vmatprep.subr.mxu0 0.0
  %1037 = vmatpush1.msra.mxu0 0.0
  %1038 = vmatprep.subr.mxu0 0.0
  %1039 = vmatpush1.msra.mxu0 0.0
  %1040 = vmatprep.subr.mxu0 0.0
  %1041 = vmatpush1.msra.mxu0 0.0
  %1042 = vmatprep.mubr.f32.mxu0 0.0
  %v1043 = vand.u32 %v709, 4294901760
  %v1044 = vsub.f32 %v709, %v1043
  %1045 = vmatmul.mubr.f32.gmra.mrb[0].mxu0 %v1044
  %v1046 = vpop.f32.mrb[0].mxu0
  %v1047 = vadd.f32 %v941, %v1046
  %v1048 = vpop.f32.mrb[0].mxu0
  %1049 = vmatprep.mubr.f32.mxu0 0.0
  %v1050 = vand.u32 %v712, 4294901760
  %v1051 = vsub.f32 %v712, %v1050
  %1052 = vmatmul.mubr.f32.gmra.mrb[0].mxu0 %v1051
  %v1053 = vpop.f32.mrb[0].mxu0
  %v1054 = vadd.f32 %v947, %v1053
  %v1055 = vpop.f32.mrb[0].mxu0
  %1056 = vmatprep.mubr.f32.mxu0 0.0
  %v1057 = vand.u32 %v715, 4294901760
  %v1058 = vsub.f32 %v715, %v1057
  %1059 = vmatmul.mubr.f32.gmra.mrb[0].mxu0 %v1058
  %v1060 = vpop.f32.mrb[0].mxu0
  %v1061 = vadd.f32 %v953, %v1060
  %v1062 = vpop.f32.mrb[0].mxu0
  %1063 = vmatprep.mubr.f32.mxu0 0.0
  %v1064 = vand.u32 %v718, 4294901760
  %v1065 = vsub.f32 %v718, %v1064
  %1066 = vmatmul.mubr.f32.gmra.mrb[0].mxu0 %v1065
  %v1067 = vpop.f32.mrb[0].mxu0
  %v1068 = vadd.f32 %v959, %v1067
  %v1069 = vpop.f32.mrb[0].mxu0
  %1070 = vdwg.mxu0
  %1071 = vmatprep.subr.mxu0 0.0
  %v1072 = vand.u32 %v699, 4294901760
  %1073 = vmatpush1.msra.mxu0 %v1072
  %1074 = vmatprep.subr.mxu0 0.0
  %v1075 = vand.u32 %v700, 4294901760
  %1076 = vmatpush1.msra.mxu0 %v1075
  %1077 = vmatprep.subr.mxu0 0.0
  %v1078 = vand.u32 %v701, 4294901760
  %1079 = vmatpush1.msra.mxu0 %v1078
  %1080 = vmatprep.subr.mxu0 0.0
  %v1081 = vand.u32 %v702, 4294901760
  %1082 = vmatpush1.msra.mxu0 %v1081
  %1083 = vmatprep.subr.mxu0 0.0
  %v1084 = vand.u32 %v703, 4294901760
  %1085 = vmatpush1.msra.mxu0 %v1084
  %1086 = vmatprep.subr.mxu0 0.0
  %v1087 = vand.u32 %v704, 4294901760
  %1088 = vmatpush1.msra.mxu0 %v1087
  %1089 = vmatprep.subr.mxu0 0.0
  %v1090 = vand.u32 %v705, 4294901760
  %1091 = vmatpush1.msra.mxu0 %v1090
  %1092 = vmatprep.subr.mxu0 0.0
  %v1093 = vand.u32 %v706, 4294901760
  %1094 = vmatpush1.msra.mxu0 %v1093
  %1095 = vmatprep.subr.mxu0 0.0
  %1096 = vmatpush1.msra.mxu0 0.0
  %1097 = vmatprep.subr.mxu0 0.0
  %1098 = vmatpush1.msra.mxu0 0.0
  %1099 = vmatprep.subr.mxu0 0.0
  %1100 = vmatpush1.msra.mxu0 0.0
  %1101 = vmatprep.subr.mxu0 0.0
  %1102 = vmatpush1.msra.mxu0 0.0
  %1103 = vmatprep.subr.mxu0 0.0
  %1104 = vmatpush1.msra.mxu0 0.0
  %1105 = vmatprep.subr.mxu0 0.0
  %1106 = vmatpush1.msra.mxu0 0.0
  %1107 = vmatprep.subr.mxu0 0.0
  %1108 = vmatpush1.msra.mxu0 0.0
  %1109 = vmatprep.subr.mxu0 0.0
  %1110 = vmatpush1.msra.mxu0 0.0
  %1111 = vmatprep.subr.mxu0 0.0
  %1112 = vmatpush1.msra.mxu0 0.0
  %1113 = vmatprep.subr.mxu0 0.0
  %1114 = vmatpush1.msra.mxu0 0.0
  %1115 = vmatprep.subr.mxu0 0.0
  %1116 = vmatpush1.msra.mxu0 0.0
  %1117 = vmatprep.subr.mxu0 0.0
  %1118 = vmatpush1.msra.mxu0 0.0
  %1119 = vmatprep.subr.mxu0 0.0
  %1120 = vmatpush1.msra.mxu0 0.0
  %1121 = vmatprep.subr.mxu0 0.0
  %1122 = vmatpush1.msra.mxu0 0.0
  %1123 = vmatprep.subr.mxu0 0.0
  %1124 = vmatpush1.msra.mxu0 0.0
  %1125 = vmatprep.subr.mxu0 0.0
  %1126 = vmatpush1.msra.mxu0 0.0
  %1127 = vmatprep.subr.mxu0 0.0
  %1128 = vmatpush1.msra.mxu0 0.0
  %1129 = vmatprep.subr.mxu0 0.0
  %1130 = vmatpush1.msra.mxu0 0.0
  %1131 = vmatprep.subr.mxu0 0.0
  %1132 = vmatpush1.msra.mxu0 0.0
  %1133 = vmatprep.subr.mxu0 0.0
  %1134 = vmatpush1.msra.mxu0 0.0
  %1135 = vmatprep.subr.mxu0 0.0
  %1136 = vmatpush1.msra.mxu0 0.0
  %1137 = vmatprep.subr.mxu0 0.0
  %1138 = vmatpush1.msra.mxu0 0.0
  %1139 = vmatprep.subr.mxu0 0.0
  %1140 = vmatpush1.msra.mxu0 0.0
  %1141 = vmatprep.subr.mxu0 0.0
  %1142 = vmatpush1.msra.mxu0 0.0
  %1143 = vmatprep.mubr.f32.mxu0 0.0
  %v1144 = vand.u32 %v709, 4294901760
  %v1145 = vsub.f32 %v709, %v1144
  %v1146 = vand.u32 %v1145, 4294901760
  %1147 = vmatmul.mubr.f32.gmra.mrb[0].mxu0 %v1146
  %v1148 = vpop.f32.mrb[0].mxu0
  %v1149 = vadd.f32 %v1047, %v1148
  %v1150 = vpop.f32.mrb[0].mxu0
  %1151 = vmatprep.mubr.f32.mxu0 0.0
  %v1152 = vand.u32 %v712, 4294901760
  %v1153 = vsub.f32 %v712, %v1152
  %v1154 = vand.u32 %v1153, 4294901760
  %1155 = vmatmul.mubr.f32.gmra.mrb[0].mxu0 %v1154
  %v1156 = vpop.f32.mrb[0].mxu0
  %v1157 = vadd.f32 %v1054, %v1156
  %v1158 = vpop.f32.mrb[0].mxu0
  %1159 = vmatprep.mubr.f32.mxu0 0.0
  %v1160 = vand.u32 %v715, 4294901760
  %v1161 = vsub.f32 %v715, %v1160
  %v1162 = vand.u32 %v1161, 4294901760
  %1163 = vmatmul.mubr.f32.gmra.mrb[0].mxu0 %v1162
  %v1164 = vpop.f32.mrb[0].mxu0
  %v1165 = vadd.f32 %v1061, %v1164
  %v1166 = vpop.f32.mrb[0].mxu0
  %1167 = vmatprep.mubr.f32.mxu0 0.0
  %v1168 = vand.u32 %v718, 4294901760
  %v1169 = vsub.f32 %v718, %v1168
  %v1170 = vand.u32 %v1169, 4294901760
  %1171 = vmatmul.mubr.f32.gmra.mrb[0].mxu0 %v1170
  %v1172 = vpop.f32.mrb[0].mxu0
  %v1173 = vadd.f32 %v1068, %v1172
  %v1174 = vpop.f32.mrb[0].mxu0
  %1175 = vdwg.mxu0
  %1176 = vmatprep.subr.mxu0 0.0
  %v1177 = vand.u32 %v699, 4294901760
  %v1178 = vsub.f32 %v699, %v1177
  %v1179 = vand.u32 %v1178, 4294901760
  %1180 = vmatpush1.msra.mxu0 %v1179
  %1181 = vmatprep.subr.mxu0 0.0
  %v1182 = vand.u32 %v700, 4294901760
  %v1183 = vsub.f32 %v700, %v1182
  %v1184 = vand.u32 %v1183, 4294901760
  %1185 = vmatpush1.msra.mxu0 %v1184
  %1186 = vmatprep.subr.mxu0 0.0
  %v1187 = vand.u32 %v701, 4294901760
  %v1188 = vsub.f32 %v701, %v1187
  %v1189 = vand.u32 %v1188, 4294901760
  %1190 = vmatpush1.msra.mxu0 %v1189
  %1191 = vmatprep.subr.mxu0 0.0
  %v1192 = vand.u32 %v702, 4294901760
  %v1193 = vsub.f32 %v702, %v1192
  %v1194 = vand.u32 %v1193, 4294901760
  %1195 = vmatpush1.msra.mxu0 %v1194
  %1196 = vmatprep.subr.mxu0 0.0
  %v1197 = vand.u32 %v703, 4294901760
  %v1198 = vsub.f32 %v703, %v1197
  %v1199 = vand.u32 %v1198, 4294901760
  %1200 = vmatpush1.msra.mxu0 %v1199
  %1201 = vmatprep.subr.mxu0 0.0
  %v1202 = vand.u32 %v704, 4294901760
  %v1203 = vsub.f32 %v704, %v1202
  %v1204 = vand.u32 %v1203, 4294901760
  %1205 = vmatpush1.msra.mxu0 %v1204
  %1206 = vmatprep.subr.mxu0 0.0
  %v1207 = vand.u32 %v705, 4294901760
  %v1208 = vsub.f32 %v705, %v1207
  %v1209 = vand.u32 %v1208, 4294901760
  %1210 = vmatpush1.msra.mxu0 %v1209
  %1211 = vmatprep.subr.mxu0 0.0
  %v1212 = vand.u32 %v706, 4294901760
  %v1213 = vsub.f32 %v706, %v1212
  %v1214 = vand.u32 %v1213, 4294901760
  %1215 = vmatpush1.msra.mxu0 %v1214
  %1216 = vmatprep.subr.mxu0 0.0
  %1217 = vmatpush1.msra.mxu0 0.0
  %1218 = vmatprep.subr.mxu0 0.0
  %1219 = vmatpush1.msra.mxu0 0.0
  %1220 = vmatprep.subr.mxu0 0.0
  %1221 = vmatpush1.msra.mxu0 0.0
  %1222 = vmatprep.subr.mxu0 0.0
  %1223 = vmatpush1.msra.mxu0 0.0
  %1224 = vmatprep.subr.mxu0 0.0
  %1225 = vmatpush1.msra.mxu0 0.0
  %1226 = vmatprep.subr.mxu0 0.0
  %1227 = vmatpush1.msra.mxu0 0.0
  %1228 = vmatprep.subr.mxu0 0.0
  %1229 = vmatpush1.msra.mxu0 0.0
  %1230 = vmatprep.subr.mxu0 0.0
  %1231 = vmatpush1.msra.mxu0 0.0
  %1232 = vmatprep.subr.mxu0 0.0
  %1233 = vmatpush1.msra.mxu0 0.0
  %1234 = vmatprep.subr.mxu0 0.0
  %1235 = vmatpush1.msra.mxu0 0.0
  %1236 = vmatprep.subr.mxu0 0.0
  %1237 = vmatpush1.msra.mxu0 0.0
  %1238 = vmatprep.subr.mxu0 0.0
  %1239 = vmatpush1.msra.mxu0 0.0
  %1240 = vmatprep.subr.mxu0 0.0
  %1241 = vmatpush1.msra.mxu0 0.0
  %1242 = vmatprep.subr.mxu0 0.0
  %1243 = vmatpush1.msra.mxu0 0.0
  %1244 = vmatprep.subr.mxu0 0.0
  %1245 = vmatpush1.msra.mxu0 0.0
  %1246 = vmatprep.subr.mxu0 0.0
  %1247 = vmatpush1.msra.mxu0 0.0
  %1248 = vmatprep.subr.mxu0 0.0
  %1249 = vmatpush1.msra.mxu0 0.0
  %1250 = vmatprep.subr.mxu0 0.0
  %1251 = vmatpush1.msra.mxu0 0.0
  %1252 = vmatprep.subr.mxu0 0.0
  %1253 = vmatpush1.msra.mxu0 0.0
  %1254 = vmatprep.subr.mxu0 0.0
  %1255 = vmatpush1.msra.mxu0 0.0
  %1256 = vmatprep.subr.mxu0 0.0
  %1257 = vmatpush1.msra.mxu0 0.0
  %1258 = vmatprep.subr.mxu0 0.0
  %1259 = vmatpush1.msra.mxu0 0.0
  %1260 = vmatprep.subr.mxu0 0.0
  %1261 = vmatpush1.msra.mxu0 0.0
  %1262 = vmatprep.subr.mxu0 0.0
  %1263 = vmatpush1.msra.mxu0 0.0
  %1264 = vmatprep.mubr.f32.mxu0 0.0
  %v1265 = vand.u32 %v709, 4294901760
  %1266 = vmatmul.mubr.f32.gmra.mrb[0].mxu0 %v1265
  %v1267 = vpop.f32.mrb[0].mxu0
  %v1268 = vadd.f32 %v1149, %v1267
  %v1269 = vpop.f32.mrb[0].mxu0
  %1270 = vmatprep.mubr.f32.mxu0 0.0
  %v1271 = vand.u32 %v712, 4294901760
  %1272 = vmatmul.mubr.f32.gmra.mrb[0].mxu0 %v1271
  %v1273 = vpop.f32.mrb[0].mxu0
  %v1274 = vadd.f32 %v1157, %v1273
  %v1275 = vpop.f32.mrb[0].mxu0
  %1276 = vmatprep.mubr.f32.mxu0 0.0
  %v1277 = vand.u32 %v715, 4294901760
  %1278 = vmatmul.mubr.f32.gmra.mrb[0].mxu0 %v1277
  %v1279 = vpop.f32.mrb[0].mxu0
  %v1280 = vadd.f32 %v1165, %v1279
  %v1281 = vpop.f32.mrb[0].mxu0
  %1282 = vmatprep.mubr.f32.mxu0 0.0
  %v1283 = vand.u32 %v718, 4294901760
  %1284 = vmatmul.mubr.f32.gmra.mrb[0].mxu0 %v1283
  %v1285 = vpop.f32.mrb[0].mxu0
  %v1286 = vadd.f32 %v1173, %v1285
  %v1287 = vpop.f32.mrb[0].mxu0
  %1288 = vdwg.mxu0
  %1289 = vmatprep.subr.mxu0 0.0
  %v1290 = vand.u32 %v699, 4294901760
  %1291 = vmatpush1.msra.mxu0 %v1290
  %1292 = vmatprep.subr.mxu0 0.0
  %v1293 = vand.u32 %v700, 4294901760
  %1294 = vmatpush1.msra.mxu0 %v1293
  %1295 = vmatprep.subr.mxu0 0.0
  %v1296 = vand.u32 %v701, 4294901760
  %1297 = vmatpush1.msra.mxu0 %v1296
  %1298 = vmatprep.subr.mxu0 0.0
  %v1299 = vand.u32 %v702, 4294901760
  %1300 = vmatpush1.msra.mxu0 %v1299
  %1301 = vmatprep.subr.mxu0 0.0
  %v1302 = vand.u32 %v703, 4294901760
  %1303 = vmatpush1.msra.mxu0 %v1302
  %1304 = vmatprep.subr.mxu0 0.0
  %v1305 = vand.u32 %v704, 4294901760
  %1306 = vmatpush1.msra.mxu0 %v1305
  %1307 = vmatprep.subr.mxu0 0.0
  %v1308 = vand.u32 %v705, 4294901760
  %1309 = vmatpush1.msra.mxu0 %v1308
  %1310 = vmatprep.subr.mxu0 0.0
  %v1311 = vand.u32 %v706, 4294901760
  %1312 = vmatpush1.msra.mxu0 %v1311
  %1313 = vmatprep.subr.mxu0 0.0
  %1314 = vmatpush1.msra.mxu0 0.0
  %1315 = vmatprep.subr.mxu0 0.0
  %1316 = vmatpush1.msra.mxu0 0.0
  %1317 = vmatprep.subr.mxu0 0.0
  %1318 = vmatpush1.msra.mxu0 0.0
  %1319 = vmatprep.subr.mxu0 0.0
  %1320 = vmatpush1.msra.mxu0 0.0
  %1321 = vmatprep.subr.mxu0 0.0
  %1322 = vmatpush1.msra.mxu0 0.0
  %1323 = vmatprep.subr.mxu0 0.0
  %1324 = vmatpush1.msra.mxu0 0.0
  %1325 = vmatprep.subr.mxu0 0.0
  %1326 = vmatpush1.msra.mxu0 0.0
  %1327 = vmatprep.subr.mxu0 0.0
  %1328 = vmatpush1.msra.mxu0 0.0
  %1329 = vmatprep.subr.mxu0 0.0
  %1330 = vmatpush1.msra.mxu0 0.0
  %1331 = vmatprep.subr.mxu0 0.0
  %1332 = vmatpush1.msra.mxu0 0.0
  %1333 = vmatprep.subr.mxu0 0.0
  %1334 = vmatpush1.msra.mxu0 0.0
  %1335 = vmatprep.subr.mxu0 0.0
  %1336 = vmatpush1.msra.mxu0 0.0
  %1337 = vmatprep.subr.mxu0 0.0
  %1338 = vmatpush1.msra.mxu0 0.0
  %1339 = vmatprep.subr.mxu0 0.0
  %1340 = vmatpush1.msra.mxu0 0.0
  %1341 = vmatprep.subr.mxu0 0.0
  %1342 = vmatpush1.msra.mxu0 0.0
  %1343 = vmatprep.subr.mxu0 0.0
  %1344 = vmatpush1.msra.mxu0 0.0
  %1345 = vmatprep.subr.mxu0 0.0
  %1346 = vmatpush1.msra.mxu0 0.0
  %1347 = vmatprep.subr.mxu0 0.0
  %1348 = vmatpush1.msra.mxu0 0.0
  %1349 = vmatprep.subr.mxu0 0.0
  %1350 = vmatpush1.msra.mxu0 0.0
  %1351 = vmatprep.subr.mxu0 0.0
  %1352 = vmatpush1.msra.mxu0 0.0
  %1353 = vmatprep.subr.mxu0 0.0
  %1354 = vmatpush1.msra.mxu0 0.0
  %1355 = vmatprep.subr.mxu0 0.0
  %1356 = vmatpush1.msra.mxu0 0.0
  %1357 = vmatprep.subr.mxu0 0.0
  %1358 = vmatpush1.msra.mxu0 0.0
  %1359 = vmatprep.subr.mxu0 0.0
  %1360 = vmatpush1.msra.mxu0 0.0
  %1361 = vmatprep.mubr.f32.mxu0 0.0
  %v1362 = vand.u32 %v709, 4294901760
  %1363 = vmatmul.mubr.f32.gmra.mrb[0].mxu0 %v1362
  %v1364 = vpop.f32.mrb[0].mxu0
  %v1365 = vadd.f32 %v1268, %v1364
  %v1366 = vpop.f32.mrb[0].mxu0
  %1367 = vmatprep.mubr.f32.mxu0 0.0
  %v1368 = vand.u32 %v712, 4294901760
  %1369 = vmatmul.mubr.f32.gmra.mrb[0].mxu0 %v1368
  %v1370 = vpop.f32.mrb[0].mxu0
  %v1371 = vadd.f32 %v1274, %v1370
  %v1372 = vpop.f32.mrb[0].mxu0
  %1373 = vmatprep.mubr.f32.mxu0 0.0
  %v1374 = vand.u32 %v715, 4294901760
  %1375 = vmatmul.mubr.f32.gmra.mrb[0].mxu0 %v1374
  %v1376 = vpop.f32.mrb[0].mxu0
  %v1377 = vadd.f32 %v1280, %v1376
  %v1378 = vpop.f32.mrb[0].mxu0
  %1379 = vmatprep.mubr.f32.mxu0 0.0
  %v1380 = vand.u32 %v718, 4294901760
  %1381 = vmatmul.mubr.f32.gmra.mrb[0].mxu0 %v1380
  %v1382 = vpop.f32.mrb[0].mxu0
  %v1383 = vadd.f32 %v1286, %v1382
  %v1384 = vpop.f32.mrb[0].mxu0
  %1385 = vdwg.mxu0
  %v1387 = vsel %vm707, %v38, 0
  %v1390 = vsel %vm707, %v39, 0
  %v1393 = vsel %vm707, %v40, 0
  %v1396 = vsel %vm707, %v41, 0
  %1398 = vmatprep.subr.mxu0 0.0
  %v1399 = vand.u32 %v60, 4294901760
  %1400 = vmatpush1.msra.mxu0 %v1399
  %1401 = vmatprep.subr.mxu0 0.0
  %v1402 = vand.u32 %v61, 4294901760
  %1403 = vmatpush1.msra.mxu0 %v1402
  %1404 = vmatprep.subr.mxu0 0.0
  %v1405 = vand.u32 %v62, 4294901760
  %1406 = vmatpush1.msra.mxu0 %v1405
  %1407 = vmatprep.subr.mxu0 0.0
  %v1408 = vand.u32 %v63, 4294901760
  %1409 = vmatpush1.msra.mxu0 %v1408
  %1410 = vmatprep.subr.mxu0 0.0
  %v1411 = vand.u32 %v64, 4294901760
  %1412 = vmatpush1.msra.mxu0 %v1411
  %1413 = vmatprep.subr.mxu0 0.0
  %v1414 = vand.u32 %v65, 4294901760
  %1415 = vmatpush1.msra.mxu0 %v1414
  %1416 = vmatprep.subr.mxu0 0.0
  %v1417 = vand.u32 %v66, 4294901760
  %1418 = vmatpush1.msra.mxu0 %v1417
  %1419 = vmatprep.subr.mxu0 0.0
  %v1420 = vand.u32 %v67, 4294901760
  %1421 = vmatpush1.msra.mxu0 %v1420
  %1422 = vmatprep.subr.mxu0 0.0
  %1423 = vmatpush1.msra.mxu0 0.0
  %1424 = vmatprep.subr.mxu0 0.0
  %1425 = vmatpush1.msra.mxu0 0.0
  %1426 = vmatprep.subr.mxu0 0.0
  %1427 = vmatpush1.msra.mxu0 0.0
  %1428 = vmatprep.subr.mxu0 0.0
  %1429 = vmatpush1.msra.mxu0 0.0
  %1430 = vmatprep.subr.mxu0 0.0
  %1431 = vmatpush1.msra.mxu0 0.0
  %1432 = vmatprep.subr.mxu0 0.0
  %1433 = vmatpush1.msra.mxu0 0.0
  %1434 = vmatprep.subr.mxu0 0.0
  %1435 = vmatpush1.msra.mxu0 0.0
  %1436 = vmatprep.subr.mxu0 0.0
  %1437 = vmatpush1.msra.mxu0 0.0
  %1438 = vmatprep.subr.mxu0 0.0
  %1439 = vmatpush1.msra.mxu0 0.0
  %1440 = vmatprep.subr.mxu0 0.0
  %1441 = vmatpush1.msra.mxu0 0.0
  %1442 = vmatprep.subr.mxu0 0.0
  %1443 = vmatpush1.msra.mxu0 0.0
  %1444 = vmatprep.subr.mxu0 0.0
  %1445 = vmatpush1.msra.mxu0 0.0
  %1446 = vmatprep.subr.mxu0 0.0
  %1447 = vmatpush1.msra.mxu0 0.0
  %1448 = vmatprep.subr.mxu0 0.0
  %1449 = vmatpush1.msra.mxu0 0.0
  %1450 = vmatprep.subr.mxu0 0.0
  %1451 = vmatpush1.msra.mxu0 0.0
  %1452 = vmatprep.subr.mxu0 0.0
  %1453 = vmatpush1.msra.mxu0 0.0
  %1454 = vmatprep.subr.mxu0 0.0
  %1455 = vmatpush1.msra.mxu0 0.0
  %1456 = vmatprep.subr.mxu0 0.0
  %1457 = vmatpush1.msra.mxu0 0.0
  %1458 = vmatprep.subr.mxu0 0.0
  %1459 = vmatpush1.msra.mxu0 0.0
  %1460 = vmatprep.subr.mxu0 0.0
  %1461 = vmatpush1.msra.mxu0 0.0
  %1462 = vmatprep.subr.mxu0 0.0
  %1463 = vmatpush1.msra.mxu0 0.0
  %1464 = vmatprep.subr.mxu0 0.0
  %1465 = vmatpush1.msra.mxu0 0.0
  %1466 = vmatprep.subr.mxu0 0.0
  %1467 = vmatpush1.msra.mxu0 0.0
  %1468 = vmatprep.subr.mxu0 0.0
  %1469 = vmatpush1.msra.mxu0 0.0
  %1470 = vmatprep.mubr.f32.mxu0 0.0
  %v1471 = vand.u32 %v1387, 4294901760
  %v1472 = vsub.f32 %v1387, %v1471
  %v1473 = vand.u32 %v1472, 4294901760
  %v1474 = vsub.f32 %v1472, %v1473
  %v1475 = vand.u32 %v1474, 4294901760
  %1476 = vmatmul.mubr.f32.gmra.mrb[0].mxu0 %v1475
  %v1477 = vpop.f32.mrb[0].mxu0
  %v1478 = vadd.f32 %v1365, %v1477
  %v1479 = vpop.f32.mrb[0].mxu0
  %1480 = vmatprep.mubr.f32.mxu0 0.0
  %v1481 = vand.u32 %v1390, 4294901760
  %v1482 = vsub.f32 %v1390, %v1481
  %v1483 = vand.u32 %v1482, 4294901760
  %v1484 = vsub.f32 %v1482, %v1483
  %v1485 = vand.u32 %v1484, 4294901760
  %1486 = vmatmul.mubr.f32.gmra.mrb[0].mxu0 %v1485
  %v1487 = vpop.f32.mrb[0].mxu0
  %v1488 = vadd.f32 %v1371, %v1487
  %v1489 = vpop.f32.mrb[0].mxu0
  %1490 = vmatprep.mubr.f32.mxu0 0.0
  %v1491 = vand.u32 %v1393, 4294901760
  %v1492 = vsub.f32 %v1393, %v1491
  %v1493 = vand.u32 %v1492, 4294901760
  %v1494 = vsub.f32 %v1492, %v1493
  %v1495 = vand.u32 %v1494, 4294901760
  %1496 = vmatmul.mubr.f32.gmra.mrb[0].mxu0 %v1495
  %v1497 = vpop.f32.mrb[0].mxu0
  %v1498 = vadd.f32 %v1377, %v1497
  %v1499 = vpop.f32.mrb[0].mxu0
  %1500 = vmatprep.mubr.f32.mxu0 0.0
  %v1501 = vand.u32 %v1396, 4294901760
  %v1502 = vsub.f32 %v1396, %v1501
  %v1503 = vand.u32 %v1502, 4294901760
  %v1504 = vsub.f32 %v1502, %v1503
  %v1505 = vand.u32 %v1504, 4294901760
  %1506 = vmatmul.mubr.f32.gmra.mrb[0].mxu0 %v1505
  %v1507 = vpop.f32.mrb[0].mxu0
  %v1508 = vadd.f32 %v1383, %v1507
  %v1509 = vpop.f32.mrb[0].mxu0
  %1510 = vdwg.mxu0
  %1511 = vmatprep.subr.mxu0 0.0
  %v1512 = vand.u32 %v60, 4294901760
  %v1513 = vsub.f32 %v60, %v1512
  %v1514 = vand.u32 %v1513, 4294901760
  %v1515 = vsub.f32 %v1513, %v1514
  %v1516 = vand.u32 %v1515, 4294901760
  %1517 = vmatpush1.msra.mxu0 %v1516
  %1518 = vmatprep.subr.mxu0 0.0
  %v1519 = vand.u32 %v61, 4294901760
  %v1520 = vsub.f32 %v61, %v1519
  %v1521 = vand.u32 %v1520, 4294901760
  %v1522 = vsub.f32 %v1520, %v1521
  %v1523 = vand.u32 %v1522, 4294901760
  %1524 = vmatpush1.msra.mxu0 %v1523
  %1525 = vmatprep.subr.mxu0 0.0
  %v1526 = vand.u32 %v62, 4294901760
  %v1527 = vsub.f32 %v62, %v1526
  %v1528 = vand.u32 %v1527, 4294901760
  %v1529 = vsub.f32 %v1527, %v1528
  %v1530 = vand.u32 %v1529, 4294901760
  %1531 = vmatpush1.msra.mxu0 %v1530
  %1532 = vmatprep.subr.mxu0 0.0
  %v1533 = vand.u32 %v63, 4294901760
  %v1534 = vsub.f32 %v63, %v1533
  %v1535 = vand.u32 %v1534, 4294901760
  %v1536 = vsub.f32 %v1534, %v1535
  %v1537 = vand.u32 %v1536, 4294901760
  %1538 = vmatpush1.msra.mxu0 %v1537
  %1539 = vmatprep.subr.mxu0 0.0
  %v1540 = vand.u32 %v64, 4294901760
  %v1541 = vsub.f32 %v64, %v1540
  %v1542 = vand.u32 %v1541, 4294901760
  %v1543 = vsub.f32 %v1541, %v1542
  %v1544 = vand.u32 %v1543, 4294901760
  %1545 = vmatpush1.msra.mxu0 %v1544
  %1546 = vmatprep.subr.mxu0 0.0
  %v1547 = vand.u32 %v65, 4294901760
  %v1548 = vsub.f32 %v65, %v1547
  %v1549 = vand.u32 %v1548, 4294901760
  %v1550 = vsub.f32 %v1548, %v1549
  %v1551 = vand.u32 %v1550, 4294901760
  %1552 = vmatpush1.msra.mxu0 %v1551
  %1553 = vmatprep.subr.mxu0 0.0
  %v1554 = vand.u32 %v66, 4294901760
  %v1555 = vsub.f32 %v66, %v1554
  %v1556 = vand.u32 %v1555, 4294901760
  %v1557 = vsub.f32 %v1555, %v1556
  %v1558 = vand.u32 %v1557, 4294901760
  %1559 = vmatpush1.msra.mxu0 %v1558
  %1560 = vmatprep.subr.mxu0 0.0
  %v1561 = vand.u32 %v67, 4294901760
  %v1562 = vsub.f32 %v67, %v1561
  %v1563 = vand.u32 %v1562, 4294901760
  %v1564 = vsub.f32 %v1562, %v1563
  %v1565 = vand.u32 %v1564, 4294901760
  %1566 = vmatpush1.msra.mxu0 %v1565
  %1567 = vmatprep.subr.mxu0 0.0
  %1568 = vmatpush1.msra.mxu0 0.0
  %1569 = vmatprep.subr.mxu0 0.0
  %1570 = vmatpush1.msra.mxu0 0.0
  %1571 = vmatprep.subr.mxu0 0.0
  %1572 = vmatpush1.msra.mxu0 0.0
  %1573 = vmatprep.subr.mxu0 0.0
  %1574 = vmatpush1.msra.mxu0 0.0
  %1575 = vmatprep.subr.mxu0 0.0
  %1576 = vmatpush1.msra.mxu0 0.0
  %1577 = vmatprep.subr.mxu0 0.0
  %1578 = vmatpush1.msra.mxu0 0.0
  %1579 = vmatprep.subr.mxu0 0.0
  %1580 = vmatpush1.msra.mxu0 0.0
  %1581 = vmatprep.subr.mxu0 0.0
  %1582 = vmatpush1.msra.mxu0 0.0
  %1583 = vmatprep.subr.mxu0 0.0
  %1584 = vmatpush1.msra.mxu0 0.0
  %1585 = vmatprep.subr.mxu0 0.0
  %1586 = vmatpush1.msra.mxu0 0.0
  %1587 = vmatprep.subr.mxu0 0.0
  %1588 = vmatpush1.msra.mxu0 0.0
  %1589 = vmatprep.subr.mxu0 0.0
  %1590 = vmatpush1.msra.mxu0 0.0
  %1591 = vmatprep.subr.mxu0 0.0
  %1592 = vmatpush1.msra.mxu0 0.0
  %1593 = vmatprep.subr.mxu0 0.0
  %1594 = vmatpush1.msra.mxu0 0.0
  %1595 = vmatprep.subr.mxu0 0.0
  %1596 = vmatpush1.msra.mxu0 0.0
  %1597 = vmatprep.subr.mxu0 0.0
  %1598 = vmatpush1.msra.mxu0 0.0
  %1599 = vmatprep.subr.mxu0 0.0
  %1600 = vmatpush1.msra.mxu0 0.0
  %1601 = vmatprep.subr.mxu0 0.0
  %1602 = vmatpush1.msra.mxu0 0.0
  %1603 = vmatprep.subr.mxu0 0.0
  %1604 = vmatpush1.msra.mxu0 0.0
  %1605 = vmatprep.subr.mxu0 0.0
  %1606 = vmatpush1.msra.mxu0 0.0
  %1607 = vmatprep.subr.mxu0 0.0
  %1608 = vmatpush1.msra.mxu0 0.0
  %1609 = vmatprep.subr.mxu0 0.0
  %1610 = vmatpush1.msra.mxu0 0.0
  %1611 = vmatprep.subr.mxu0 0.0
  %1612 = vmatpush1.msra.mxu0 0.0
  %1613 = vmatprep.subr.mxu0 0.0
  %1614 = vmatpush1.msra.mxu0 0.0
  %1615 = vmatprep.mubr.f32.mxu0 0.0
  %v1616 = vand.u32 %v1387, 4294901760
  %1617 = vmatmul.mubr.f32.gmra.mrb[0].mxu0 %v1616
  %v1618 = vpop.f32.mrb[0].mxu0
  %v1619 = vadd.f32 %v1478, %v1618
  %v1620 = vpop.f32.mrb[0].mxu0
  %1621 = vmatprep.mubr.f32.mxu0 0.0
  %v1622 = vand.u32 %v1390, 4294901760
  %1623 = vmatmul.mubr.f32.gmra.mrb[0].mxu0 %v1622
  %v1624 = vpop.f32.mrb[0].mxu0
  %v1625 = vadd.f32 %v1488, %v1624
  %v1626 = vpop.f32.mrb[0].mxu0
  %1627 = vmatprep.mubr.f32.mxu0 0.0
  %v1628 = vand.u32 %v1393, 4294901760
  %1629 = vmatmul.mubr.f32.gmra.mrb[0].mxu0 %v1628
  %v1630 = vpop.f32.mrb[0].mxu0
  %v1631 = vadd.f32 %v1498, %v1630
  %v1632 = vpop.f32.mrb[0].mxu0
  %1633 = vmatprep.mubr.f32.mxu0 0.0
  %v1634 = vand.u32 %v1396, 4294901760
  %1635 = vmatmul.mubr.f32.gmra.mrb[0].mxu0 %v1634
  %v1636 = vpop.f32.mrb[0].mxu0
  %v1637 = vadd.f32 %v1508, %v1636
  %v1638 = vpop.f32.mrb[0].mxu0
  %1639 = vdwg.mxu0
  %1640 = vmatprep.subr.mxu0 0.0
  %v1641 = vand.u32 %v60, 4294901760
  %v1642 = vsub.f32 %v60, %v1641
  %1643 = vmatpush1.msra.mxu0 %v1642
  %1644 = vmatprep.subr.mxu0 0.0
  %v1645 = vand.u32 %v61, 4294901760
  %v1646 = vsub.f32 %v61, %v1645
  %1647 = vmatpush1.msra.mxu0 %v1646
  %1648 = vmatprep.subr.mxu0 0.0
  %v1649 = vand.u32 %v62, 4294901760
  %v1650 = vsub.f32 %v62, %v1649
  %1651 = vmatpush1.msra.mxu0 %v1650
  %1652 = vmatprep.subr.mxu0 0.0
  %v1653 = vand.u32 %v63, 4294901760
  %v1654 = vsub.f32 %v63, %v1653
  %1655 = vmatpush1.msra.mxu0 %v1654
  %1656 = vmatprep.subr.mxu0 0.0
  %v1657 = vand.u32 %v64, 4294901760
  %v1658 = vsub.f32 %v64, %v1657
  %1659 = vmatpush1.msra.mxu0 %v1658
  %1660 = vmatprep.subr.mxu0 0.0
  %v1661 = vand.u32 %v65, 4294901760
  %v1662 = vsub.f32 %v65, %v1661
  %1663 = vmatpush1.msra.mxu0 %v1662
  %1664 = vmatprep.subr.mxu0 0.0
  %v1665 = vand.u32 %v66, 4294901760
  %v1666 = vsub.f32 %v66, %v1665
  %1667 = vmatpush1.msra.mxu0 %v1666
  %1668 = vmatprep.subr.mxu0 0.0
  %v1669 = vand.u32 %v67, 4294901760
  %v1670 = vsub.f32 %v67, %v1669
  %1671 = vmatpush1.msra.mxu0 %v1670
  %1672 = vmatprep.subr.mxu0 0.0
  %1673 = vmatpush1.msra.mxu0 0.0
  %1674 = vmatprep.subr.mxu0 0.0
  %1675 = vmatpush1.msra.mxu0 0.0
  %1676 = vmatprep.subr.mxu0 0.0
  %1677 = vmatpush1.msra.mxu0 0.0
  %1678 = vmatprep.subr.mxu0 0.0
  %1679 = vmatpush1.msra.mxu0 0.0
  %1680 = vmatprep.subr.mxu0 0.0
  %1681 = vmatpush1.msra.mxu0 0.0
  %1682 = vmatprep.subr.mxu0 0.0
  %1683 = vmatpush1.msra.mxu0 0.0
  %1684 = vmatprep.subr.mxu0 0.0
  %1685 = vmatpush1.msra.mxu0 0.0
  %1686 = vmatprep.subr.mxu0 0.0
  %1687 = vmatpush1.msra.mxu0 0.0
  %1688 = vmatprep.subr.mxu0 0.0
  %1689 = vmatpush1.msra.mxu0 0.0
  %1690 = vmatprep.subr.mxu0 0.0
  %1691 = vmatpush1.msra.mxu0 0.0
  %1692 = vmatprep.subr.mxu0 0.0
  %1693 = vmatpush1.msra.mxu0 0.0
  %1694 = vmatprep.subr.mxu0 0.0
  %1695 = vmatpush1.msra.mxu0 0.0
  %1696 = vmatprep.subr.mxu0 0.0
  %1697 = vmatpush1.msra.mxu0 0.0
  %1698 = vmatprep.subr.mxu0 0.0
  %1699 = vmatpush1.msra.mxu0 0.0
  %1700 = vmatprep.subr.mxu0 0.0
  %1701 = vmatpush1.msra.mxu0 0.0
  %1702 = vmatprep.subr.mxu0 0.0
  %1703 = vmatpush1.msra.mxu0 0.0
  %1704 = vmatprep.subr.mxu0 0.0
  %1705 = vmatpush1.msra.mxu0 0.0
  %1706 = vmatprep.subr.mxu0 0.0
  %1707 = vmatpush1.msra.mxu0 0.0
  %1708 = vmatprep.subr.mxu0 0.0
  %1709 = vmatpush1.msra.mxu0 0.0
  %1710 = vmatprep.subr.mxu0 0.0
  %1711 = vmatpush1.msra.mxu0 0.0
  %1712 = vmatprep.subr.mxu0 0.0
  %1713 = vmatpush1.msra.mxu0 0.0
  %1714 = vmatprep.subr.mxu0 0.0
  %1715 = vmatpush1.msra.mxu0 0.0
  %1716 = vmatprep.subr.mxu0 0.0
  %1717 = vmatpush1.msra.mxu0 0.0
  %1718 = vmatprep.subr.mxu0 0.0
  %1719 = vmatpush1.msra.mxu0 0.0
  %1720 = vmatprep.mubr.f32.mxu0 0.0
  %v1721 = vand.u32 %v1387, 4294901760
  %v1722 = vsub.f32 %v1387, %v1721
  %1723 = vmatmul.mubr.f32.gmra.mrb[0].mxu0 %v1722
  %v1724 = vpop.f32.mrb[0].mxu0
  %v1725 = vadd.f32 %v1619, %v1724
  %v1726 = vpop.f32.mrb[0].mxu0
  %1727 = vmatprep.mubr.f32.mxu0 0.0
  %v1728 = vand.u32 %v1390, 4294901760
  %v1729 = vsub.f32 %v1390, %v1728
  %1730 = vmatmul.mubr.f32.gmra.mrb[0].mxu0 %v1729
  %v1731 = vpop.f32.mrb[0].mxu0
  %v1732 = vadd.f32 %v1625, %v1731
  %v1733 = vpop.f32.mrb[0].mxu0
  %1734 = vmatprep.mubr.f32.mxu0 0.0
  %v1735 = vand.u32 %v1393, 4294901760
  %v1736 = vsub.f32 %v1393, %v1735
  %1737 = vmatmul.mubr.f32.gmra.mrb[0].mxu0 %v1736
  %v1738 = vpop.f32.mrb[0].mxu0
  %v1739 = vadd.f32 %v1631, %v1738
  %v1740 = vpop.f32.mrb[0].mxu0
  %1741 = vmatprep.mubr.f32.mxu0 0.0
  %v1742 = vand.u32 %v1396, 4294901760
  %v1743 = vsub.f32 %v1396, %v1742
  %1744 = vmatmul.mubr.f32.gmra.mrb[0].mxu0 %v1743
  %v1745 = vpop.f32.mrb[0].mxu0
  %v1746 = vadd.f32 %v1637, %v1745
  %v1747 = vpop.f32.mrb[0].mxu0
  %1748 = vdwg.mxu0
  %1749 = vmatprep.subr.mxu0 0.0
  %v1750 = vand.u32 %v60, 4294901760
  %1751 = vmatpush1.msra.mxu0 %v1750
  %1752 = vmatprep.subr.mxu0 0.0
  %v1753 = vand.u32 %v61, 4294901760
  %1754 = vmatpush1.msra.mxu0 %v1753
  %1755 = vmatprep.subr.mxu0 0.0
  %v1756 = vand.u32 %v62, 4294901760
  %1757 = vmatpush1.msra.mxu0 %v1756
  %1758 = vmatprep.subr.mxu0 0.0
  %v1759 = vand.u32 %v63, 4294901760
  %1760 = vmatpush1.msra.mxu0 %v1759
  %1761 = vmatprep.subr.mxu0 0.0
  %v1762 = vand.u32 %v64, 4294901760
  %1763 = vmatpush1.msra.mxu0 %v1762
  %1764 = vmatprep.subr.mxu0 0.0
  %v1765 = vand.u32 %v65, 4294901760
  %1766 = vmatpush1.msra.mxu0 %v1765
  %1767 = vmatprep.subr.mxu0 0.0
  %v1768 = vand.u32 %v66, 4294901760
  %1769 = vmatpush1.msra.mxu0 %v1768
  %1770 = vmatprep.subr.mxu0 0.0
  %v1771 = vand.u32 %v67, 4294901760
  %1772 = vmatpush1.msra.mxu0 %v1771
  %1773 = vmatprep.subr.mxu0 0.0
  %1774 = vmatpush1.msra.mxu0 0.0
  %1775 = vmatprep.subr.mxu0 0.0
  %1776 = vmatpush1.msra.mxu0 0.0
  %1777 = vmatprep.subr.mxu0 0.0
  %1778 = vmatpush1.msra.mxu0 0.0
  %1779 = vmatprep.subr.mxu0 0.0
  %1780 = vmatpush1.msra.mxu0 0.0
  %1781 = vmatprep.subr.mxu0 0.0
  %1782 = vmatpush1.msra.mxu0 0.0
  %1783 = vmatprep.subr.mxu0 0.0
  %1784 = vmatpush1.msra.mxu0 0.0
  %1785 = vmatprep.subr.mxu0 0.0
  %1786 = vmatpush1.msra.mxu0 0.0
  %1787 = vmatprep.subr.mxu0 0.0
  %1788 = vmatpush1.msra.mxu0 0.0
  %1789 = vmatprep.subr.mxu0 0.0
  %1790 = vmatpush1.msra.mxu0 0.0
  %1791 = vmatprep.subr.mxu0 0.0
  %1792 = vmatpush1.msra.mxu0 0.0
  %1793 = vmatprep.subr.mxu0 0.0
  %1794 = vmatpush1.msra.mxu0 0.0
  %1795 = vmatprep.subr.mxu0 0.0
  %1796 = vmatpush1.msra.mxu0 0.0
  %1797 = vmatprep.subr.mxu0 0.0
  %1798 = vmatpush1.msra.mxu0 0.0
  %1799 = vmatprep.subr.mxu0 0.0
  %1800 = vmatpush1.msra.mxu0 0.0
  %1801 = vmatprep.subr.mxu0 0.0
  %1802 = vmatpush1.msra.mxu0 0.0
  %1803 = vmatprep.subr.mxu0 0.0
  %1804 = vmatpush1.msra.mxu0 0.0
  %1805 = vmatprep.subr.mxu0 0.0
  %1806 = vmatpush1.msra.mxu0 0.0
  %1807 = vmatprep.subr.mxu0 0.0
  %1808 = vmatpush1.msra.mxu0 0.0
  %1809 = vmatprep.subr.mxu0 0.0
  %1810 = vmatpush1.msra.mxu0 0.0
  %1811 = vmatprep.subr.mxu0 0.0
  %1812 = vmatpush1.msra.mxu0 0.0
  %1813 = vmatprep.subr.mxu0 0.0
  %1814 = vmatpush1.msra.mxu0 0.0
  %1815 = vmatprep.subr.mxu0 0.0
  %1816 = vmatpush1.msra.mxu0 0.0
  %1817 = vmatprep.subr.mxu0 0.0
  %1818 = vmatpush1.msra.mxu0 0.0
  %1819 = vmatprep.subr.mxu0 0.0
  %1820 = vmatpush1.msra.mxu0 0.0
  %1821 = vmatprep.mubr.f32.mxu0 0.0
  %v1822 = vand.u32 %v1387, 4294901760
  %v1823 = vsub.f32 %v1387, %v1822
  %v1824 = vand.u32 %v1823, 4294901760
  %1825 = vmatmul.mubr.f32.gmra.mrb[0].mxu0 %v1824
  %v1826 = vpop.f32.mrb[0].mxu0
  %v1827 = vadd.f32 %v1725, %v1826
  %v1828 = vpop.f32.mrb[0].mxu0
  %1829 = vmatprep.mubr.f32.mxu0 0.0
  %v1830 = vand.u32 %v1390, 4294901760
  %v1831 = vsub.f32 %v1390, %v1830
  %v1832 = vand.u32 %v1831, 4294901760
  %1833 = vmatmul.mubr.f32.gmra.mrb[0].mxu0 %v1832
  %v1834 = vpop.f32.mrb[0].mxu0
  %v1835 = vadd.f32 %v1732, %v1834
  %v1836 = vpop.f32.mrb[0].mxu0
  %1837 = vmatprep.mubr.f32.mxu0 0.0
  %v1838 = vand.u32 %v1393, 4294901760
  %v1839 = vsub.f32 %v1393, %v1838
  %v1840 = vand.u32 %v1839, 4294901760
  %1841 = vmatmul.mubr.f32.gmra.mrb[0].mxu0 %v1840
  %v1842 = vpop.f32.mrb[0].mxu0
  %v1843 = vadd.f32 %v1739, %v1842
  %v1844 = vpop.f32.mrb[0].mxu0
  %1845 = vmatprep.mubr.f32.mxu0 0.0
  %v1846 = vand.u32 %v1396, 4294901760
  %v1847 = vsub.f32 %v1396, %v1846
  %v1848 = vand.u32 %v1847, 4294901760
  %1849 = vmatmul.mubr.f32.gmra.mrb[0].mxu0 %v1848
  %v1850 = vpop.f32.mrb[0].mxu0
  %v1851 = vadd.f32 %v1746, %v1850
  %v1852 = vpop.f32.mrb[0].mxu0
  %1853 = vdwg.mxu0
  %1854 = vmatprep.subr.mxu0 0.0
  %v1855 = vand.u32 %v60, 4294901760
  %v1856 = vsub.f32 %v60, %v1855
  %v1857 = vand.u32 %v1856, 4294901760
  %1858 = vmatpush1.msra.mxu0 %v1857
  %1859 = vmatprep.subr.mxu0 0.0
  %v1860 = vand.u32 %v61, 4294901760
  %v1861 = vsub.f32 %v61, %v1860
  %v1862 = vand.u32 %v1861, 4294901760
  %1863 = vmatpush1.msra.mxu0 %v1862
  %1864 = vmatprep.subr.mxu0 0.0
  %v1865 = vand.u32 %v62, 4294901760
  %v1866 = vsub.f32 %v62, %v1865
  %v1867 = vand.u32 %v1866, 4294901760
  %1868 = vmatpush1.msra.mxu0 %v1867
  %1869 = vmatprep.subr.mxu0 0.0
  %v1870 = vand.u32 %v63, 4294901760
  %v1871 = vsub.f32 %v63, %v1870
  %v1872 = vand.u32 %v1871, 4294901760
  %1873 = vmatpush1.msra.mxu0 %v1872
  %1874 = vmatprep.subr.mxu0 0.0
  %v1875 = vand.u32 %v64, 4294901760
  %v1876 = vsub.f32 %v64, %v1875
  %v1877 = vand.u32 %v1876, 4294901760
  %1878 = vmatpush1.msra.mxu0 %v1877
  %1879 = vmatprep.subr.mxu0 0.0
  %v1880 = vand.u32 %v65, 4294901760
  %v1881 = vsub.f32 %v65, %v1880
  %v1882 = vand.u32 %v1881, 4294901760
  %1883 = vmatpush1.msra.mxu0 %v1882
  %1884 = vmatprep.subr.mxu0 0.0
  %v1885 = vand.u32 %v66, 4294901760
  %v1886 = vsub.f32 %v66, %v1885
  %v1887 = vand.u32 %v1886, 4294901760
  %1888 = vmatpush1.msra.mxu0 %v1887
  %1889 = vmatprep.subr.mxu0 0.0
  %v1890 = vand.u32 %v67, 4294901760
  %v1891 = vsub.f32 %v67, %v1890
  %v1892 = vand.u32 %v1891, 4294901760
  %1893 = vmatpush1.msra.mxu0 %v1892
  %1894 = vmatprep.subr.mxu0 0.0
  %1895 = vmatpush1.msra.mxu0 0.0
  %1896 = vmatprep.subr.mxu0 0.0
  %1897 = vmatpush1.msra.mxu0 0.0
  %1898 = vmatprep.subr.mxu0 0.0
  %1899 = vmatpush1.msra.mxu0 0.0
  %1900 = vmatprep.subr.mxu0 0.0
  %1901 = vmatpush1.msra.mxu0 0.0
  %1902 = vmatprep.subr.mxu0 0.0
  %1903 = vmatpush1.msra.mxu0 0.0
  %1904 = vmatprep.subr.mxu0 0.0
  %1905 = vmatpush1.msra.mxu0 0.0
  %1906 = vmatprep.subr.mxu0 0.0
  %1907 = vmatpush1.msra.mxu0 0.0
  %1908 = vmatprep.subr.mxu0 0.0
  %1909 = vmatpush1.msra.mxu0 0.0
  %1910 = vmatprep.subr.mxu0 0.0
  %1911 = vmatpush1.msra.mxu0 0.0
  %1912 = vmatprep.subr.mxu0 0.0
  %1913 = vmatpush1.msra.mxu0 0.0
  %1914 = vmatprep.subr.mxu0 0.0
  %1915 = vmatpush1.msra.mxu0 0.0
  %1916 = vmatprep.subr.mxu0 0.0
  %1917 = vmatpush1.msra.mxu0 0.0
  %1918 = vmatprep.subr.mxu0 0.0
  %1919 = vmatpush1.msra.mxu0 0.0
  %1920 = vmatprep.subr.mxu0 0.0
  %1921 = vmatpush1.msra.mxu0 0.0
  %1922 = vmatprep.subr.mxu0 0.0
  %1923 = vmatpush1.msra.mxu0 0.0
  %1924 = vmatprep.subr.mxu0 0.0
  %1925 = vmatpush1.msra.mxu0 0.0
  %1926 = vmatprep.subr.mxu0 0.0
  %1927 = vmatpush1.msra.mxu0 0.0
  %1928 = vmatprep.subr.mxu0 0.0
  %1929 = vmatpush1.msra.mxu0 0.0
  %1930 = vmatprep.subr.mxu0 0.0
  %1931 = vmatpush1.msra.mxu0 0.0
  %1932 = vmatprep.subr.mxu0 0.0
  %1933 = vmatpush1.msra.mxu0 0.0
  %1934 = vmatprep.subr.mxu0 0.0
  %1935 = vmatpush1.msra.mxu0 0.0
  %1936 = vmatprep.subr.mxu0 0.0
  %1937 = vmatpush1.msra.mxu0 0.0
  %1938 = vmatprep.subr.mxu0 0.0
  %1939 = vmatpush1.msra.mxu0 0.0
  %1940 = vmatprep.subr.mxu0 0.0
  %1941 = vmatpush1.msra.mxu0 0.0
  %1942 = vmatprep.mubr.f32.mxu0 0.0
  %v1943 = vand.u32 %v1387, 4294901760
  %1944 = vmatmul.mubr.f32.gmra.mrb[0].mxu0 %v1943
  %v1945 = vpop.f32.mrb[0].mxu0
  %v1946 = vadd.f32 %v1827, %v1945
  %v1947 = vpop.f32.mrb[0].mxu0
  %1948 = vmatprep.mubr.f32.mxu0 0.0
  %v1949 = vand.u32 %v1390, 4294901760
  %1950 = vmatmul.mubr.f32.gmra.mrb[0].mxu0 %v1949
  %v1951 = vpop.f32.mrb[0].mxu0
  %v1952 = vadd.f32 %v1835, %v1951
  %v1953 = vpop.f32.mrb[0].mxu0
  %1954 = vmatprep.mubr.f32.mxu0 0.0
  %v1955 = vand.u32 %v1393, 4294901760
  %1956 = vmatmul.mubr.f32.gmra.mrb[0].mxu0 %v1955
  %v1957 = vpop.f32.mrb[0].mxu0
  %v1958 = vadd.f32 %v1843, %v1957
  %v1959 = vpop.f32.mrb[0].mxu0
  %1960 = vmatprep.mubr.f32.mxu0 0.0
  %v1961 = vand.u32 %v1396, 4294901760
  %1962 = vmatmul.mubr.f32.gmra.mrb[0].mxu0 %v1961
  %v1963 = vpop.f32.mrb[0].mxu0
  %v1964 = vadd.f32 %v1851, %v1963
  %v1965 = vpop.f32.mrb[0].mxu0
  %1966 = vdwg.mxu0
  %1967 = vmatprep.subr.mxu0 0.0
  %v1968 = vand.u32 %v60, 4294901760
  %1969 = vmatpush1.msra.mxu0 %v1968
  %1970 = vmatprep.subr.mxu0 0.0
  %v1971 = vand.u32 %v61, 4294901760
  %1972 = vmatpush1.msra.mxu0 %v1971
  %1973 = vmatprep.subr.mxu0 0.0
  %v1974 = vand.u32 %v62, 4294901760
  %1975 = vmatpush1.msra.mxu0 %v1974
  %1976 = vmatprep.subr.mxu0 0.0
  %v1977 = vand.u32 %v63, 4294901760
  %1978 = vmatpush1.msra.mxu0 %v1977
  %1979 = vmatprep.subr.mxu0 0.0
  %v1980 = vand.u32 %v64, 4294901760
  %1981 = vmatpush1.msra.mxu0 %v1980
  %1982 = vmatprep.subr.mxu0 0.0
  %v1983 = vand.u32 %v65, 4294901760
  %1984 = vmatpush1.msra.mxu0 %v1983
  %1985 = vmatprep.subr.mxu0 0.0
  %v1986 = vand.u32 %v66, 4294901760
  %1987 = vmatpush1.msra.mxu0 %v1986
  %1988 = vmatprep.subr.mxu0 0.0
  %v1989 = vand.u32 %v67, 4294901760
  %1990 = vmatpush1.msra.mxu0 %v1989
  %1991 = vmatprep.subr.mxu0 0.0
  %1992 = vmatpush1.msra.mxu0 0.0
  %1993 = vmatprep.subr.mxu0 0.0
  %1994 = vmatpush1.msra.mxu0 0.0
  %1995 = vmatprep.subr.mxu0 0.0
  %1996 = vmatpush1.msra.mxu0 0.0
  %1997 = vmatprep.subr.mxu0 0.0
  %1998 = vmatpush1.msra.mxu0 0.0
  %1999 = vmatprep.subr.mxu0 0.0
  %2000 = vmatpush1.msra.mxu0 0.0
  %2001 = vmatprep.subr.mxu0 0.0
  %2002 = vmatpush1.msra.mxu0 0.0
  %2003 = vmatprep.subr.mxu0 0.0
  %2004 = vmatpush1.msra.mxu0 0.0
  %2005 = vmatprep.subr.mxu0 0.0
  %2006 = vmatpush1.msra.mxu0 0.0
  %2007 = vmatprep.subr.mxu0 0.0
  %2008 = vmatpush1.msra.mxu0 0.0
  %2009 = vmatprep.subr.mxu0 0.0
  %2010 = vmatpush1.msra.mxu0 0.0
  %2011 = vmatprep.subr.mxu0 0.0
  %2012 = vmatpush1.msra.mxu0 0.0
  %2013 = vmatprep.subr.mxu0 0.0
  %2014 = vmatpush1.msra.mxu0 0.0
  %2015 = vmatprep.subr.mxu0 0.0
  %2016 = vmatpush1.msra.mxu0 0.0
  %2017 = vmatprep.subr.mxu0 0.0
  %2018 = vmatpush1.msra.mxu0 0.0
  %2019 = vmatprep.subr.mxu0 0.0
  %2020 = vmatpush1.msra.mxu0 0.0
  %2021 = vmatprep.subr.mxu0 0.0
  %2022 = vmatpush1.msra.mxu0 0.0
  %2023 = vmatprep.subr.mxu0 0.0
  %2024 = vmatpush1.msra.mxu0 0.0
  %2025 = vmatprep.subr.mxu0 0.0
  %2026 = vmatpush1.msra.mxu0 0.0
  %2027 = vmatprep.subr.mxu0 0.0
  %2028 = vmatpush1.msra.mxu0 0.0
  %2029 = vmatprep.subr.mxu0 0.0
  %2030 = vmatpush1.msra.mxu0 0.0
  %2031 = vmatprep.subr.mxu0 0.0
  %2032 = vmatpush1.msra.mxu0 0.0
  %2033 = vmatprep.subr.mxu0 0.0
  %2034 = vmatpush1.msra.mxu0 0.0
  %2035 = vmatprep.subr.mxu0 0.0
  %2036 = vmatpush1.msra.mxu0 0.0
  %2037 = vmatprep.subr.mxu0 0.0
  %2038 = vmatpush1.msra.mxu0 0.0
  %2039 = vmatprep.mubr.f32.mxu0 0.0
  %v2040 = vand.u32 %v1387, 4294901760
  %2041 = vmatmul.mubr.f32.gmra.mrb[0].mxu0 %v2040
  %v2042 = vpop.f32.mrb[0].mxu0
  %v2043 = vadd.f32 %v1946, %v2042
  %v2044 = vpop.f32.mrb[0].mxu0
  %2045 = vmatprep.mubr.f32.mxu0 0.0
  %v2046 = vand.u32 %v1390, 4294901760
  %2047 = vmatmul.mubr.f32.gmra.mrb[0].mxu0 %v2046
  %v2048 = vpop.f32.mrb[0].mxu0
  %v2049 = vadd.f32 %v1952, %v2048
  %v2050 = vpop.f32.mrb[0].mxu0
  %2051 = vmatprep.mubr.f32.mxu0 0.0
  %v2052 = vand.u32 %v1393, 4294901760
  %2053 = vmatmul.mubr.f32.gmra.mrb[0].mxu0 %v2052
  %v2054 = vpop.f32.mrb[0].mxu0
  %v2055 = vadd.f32 %v1958, %v2054
  %v2056 = vpop.f32.mrb[0].mxu0
  %2057 = vmatprep.mubr.f32.mxu0 0.0
  %v2058 = vand.u32 %v1396, 4294901760
  %2059 = vmatmul.mubr.f32.gmra.mrb[0].mxu0 %v2058
  %v2060 = vpop.f32.mrb[0].mxu0
  %v2061 = vadd.f32 %v1964, %v2060
  %v2062 = vpop.f32.mrb[0].mxu0
  %2063 = vdwg.mxu0
  %s2064 = scalar_lea.vmem %s1, 64
  %v2065 = vld [vmem:[%s2064] sm:$0xff]
  %v2066 = vld [vmem:[%s2064 + $0x8] sm:$0xff]
  %v2067 = vld [vmem:[%s2064 + $0x10] sm:$0xff]
  %v2068 = vld [vmem:[%s2064 + $0x18] sm:$0xff]
  %v2070 = vsel %vm72, %v2065, 0
  %v2073 = vsel %vm72, %v2066, 0
  %v2076 = vsel %vm72, %v2067, 0
  %v2079 = vsel %vm72, %v2068, 0
  %2081 = vmatprep.subr.mxu0 0.0
  %v2082 = vand.u32 %v38, 4294901760
  %2083 = vmatpush1.msra.mxu0 %v2082
  %2084 = vmatprep.subr.mxu0 0.0
  %v2085 = vand.u32 %v39, 4294901760
  %2086 = vmatpush1.msra.mxu0 %v2085
  %2087 = vmatprep.subr.mxu0 0.0
  %v2088 = vand.u32 %v40, 4294901760
  %2089 = vmatpush1.msra.mxu0 %v2088
  %2090 = vmatprep.subr.mxu0 0.0
  %v2091 = vand.u32 %v41, 4294901760
  %2092 = vmatpush1.msra.mxu0 %v2091
  %2093 = vmatprep.subr.mxu0 0.0
  %2094 = vmatpush1.msra.mxu0 0.0
  %2095 = vmatprep.subr.mxu0 0.0
  %2096 = vmatpush1.msra.mxu0 0.0
  %2097 = vmatprep.subr.mxu0 0.0
  %2098 = vmatpush1.msra.mxu0 0.0
  %2099 = vmatprep.subr.mxu0 0.0
  %2100 = vmatpush1.msra.mxu0 0.0
  %2101 = vmatprep.subr.mxu0 0.0
  %2102 = vmatpush1.msra.mxu0 0.0
  %2103 = vmatprep.subr.mxu0 0.0
  %2104 = vmatpush1.msra.mxu0 0.0
  %2105 = vmatprep.subr.mxu0 0.0
  %2106 = vmatpush1.msra.mxu0 0.0
  %2107 = vmatprep.subr.mxu0 0.0
  %2108 = vmatpush1.msra.mxu0 0.0
  %2109 = vmatprep.subr.mxu0 0.0
  %2110 = vmatpush1.msra.mxu0 0.0
  %2111 = vmatprep.subr.mxu0 0.0
  %2112 = vmatpush1.msra.mxu0 0.0
  %2113 = vmatprep.subr.mxu0 0.0
  %2114 = vmatpush1.msra.mxu0 0.0
  %2115 = vmatprep.subr.mxu0 0.0
  %2116 = vmatpush1.msra.mxu0 0.0
  %2117 = vmatprep.subr.mxu0 0.0
  %2118 = vmatpush1.msra.mxu0 0.0
  %2119 = vmatprep.subr.mxu0 0.0
  %2120 = vmatpush1.msra.mxu0 0.0
  %2121 = vmatprep.subr.mxu0 0.0
  %2122 = vmatpush1.msra.mxu0 0.0
  %2123 = vmatprep.subr.mxu0 0.0
  %2124 = vmatpush1.msra.mxu0 0.0
  %2125 = vmatprep.subr.mxu0 0.0
  %2126 = vmatpush1.msra.mxu0 0.0
  %2127 = vmatprep.subr.mxu0 0.0
  %2128 = vmatpush1.msra.mxu0 0.0
  %2129 = vmatprep.subr.mxu0 0.0
  %2130 = vmatpush1.msra.mxu0 0.0
  %2131 = vmatprep.subr.mxu0 0.0
  %2132 = vmatpush1.msra.mxu0 0.0
  %2133 = vmatprep.subr.mxu0 0.0
  %2134 = vmatpush1.msra.mxu0 0.0
  %2135 = vmatprep.subr.mxu0 0.0
  %2136 = vmatpush1.msra.mxu0 0.0
  %2137 = vmatprep.subr.mxu0 0.0
  %2138 = vmatpush1.msra.mxu0 0.0
  %2139 = vmatprep.subr.mxu0 0.0
  %2140 = vmatpush1.msra.mxu0 0.0
  %2141 = vmatprep.subr.mxu0 0.0
  %2142 = vmatpush1.msra.mxu0 0.0
  %2143 = vmatprep.subr.mxu0 0.0
  %2144 = vmatpush1.msra.mxu0 0.0
  %2145 = vmatprep.subr.mxu0 0.0
  %2146 = vmatpush1.msra.mxu0 0.0
  %2147 = vmatprep.subr.mxu0 0.0
  %2148 = vmatpush1.msra.mxu0 0.0
  %2149 = vmatprep.mubr.f32.mxu0 0.0
  %v2150 = vand.u32 %v2070, 4294901760
  %v2151 = vsub.f32 %v2070, %v2150
  %v2152 = vand.u32 %v2151, 4294901760
  %v2153 = vsub.f32 %v2151, %v2152
  %v2154 = vand.u32 %v2153, 4294901760
  %2155 = vmatmul.mubr.f32.gmra.mrb[0].mxu0 %v2154
  %v2156 = vpop.f32.mrb[0].mxu0
  %v2157 = vadd.f32 0.0, %v2156
  %v2158 = vpop.f32.mrb[0].mxu0
  %2159 = vmatprep.mubr.f32.mxu0 0.0
  %v2160 = vand.u32 %v2073, 4294901760
  %v2161 = vsub.f32 %v2073, %v2160
  %v2162 = vand.u32 %v2161, 4294901760
  %v2163 = vsub.f32 %v2161, %v2162
  %v2164 = vand.u32 %v2163, 4294901760
  %2165 = vmatmul.mubr.f32.gmra.mrb[0].mxu0 %v2164
  %v2166 = vpop.f32.mrb[0].mxu0
  %v2167 = vadd.f32 0.0, %v2166
  %v2168 = vpop.f32.mrb[0].mxu0
  %2169 = vmatprep.mubr.f32.mxu0 0.0
  %v2170 = vand.u32 %v2076, 4294901760
  %v2171 = vsub.f32 %v2076, %v2170
  %v2172 = vand.u32 %v2171, 4294901760
  %v2173 = vsub.f32 %v2171, %v2172
  %v2174 = vand.u32 %v2173, 4294901760
  %2175 = vmatmul.mubr.f32.gmra.mrb[0].mxu0 %v2174
  %v2176 = vpop.f32.mrb[0].mxu0
  %v2177 = vadd.f32 0.0, %v2176
  %v2178 = vpop.f32.mrb[0].mxu0
  %2179 = vmatprep.mubr.f32.mxu0 0.0
  %v2180 = vand.u32 %v2079, 4294901760
  %v2181 = vsub.f32 %v2079, %v2180
  %v2182 = vand.u32 %v2181, 4294901760
  %v2183 = vsub.f32 %v2181, %v2182
  %v2184 = vand.u32 %v2183, 4294901760
  %2185 = vmatmul.mubr.f32.gmra.mrb[0].mxu0 %v2184
  %v2186 = vpop.f32.mrb[0].mxu0
  %v2187 = vadd.f32 0.0, %v2186
  %v2188 = vpop.f32.mrb[0].mxu0
  %2189 = vdwg.mxu0
  %2190 = vmatprep.subr.mxu0 0.0
  %v2191 = vand.u32 %v38, 4294901760
  %v2192 = vsub.f32 %v38, %v2191
  %v2193 = vand.u32 %v2192, 4294901760
  %v2194 = vsub.f32 %v2192, %v2193
  %v2195 = vand.u32 %v2194, 4294901760
  %2196 = vmatpush1.msra.mxu0 %v2195
  %2197 = vmatprep.subr.mxu0 0.0
  %v2198 = vand.u32 %v39, 4294901760
  %v2199 = vsub.f32 %v39, %v2198
  %v2200 = vand.u32 %v2199, 4294901760
  %v2201 = vsub.f32 %v2199, %v2200
  %v2202 = vand.u32 %v2201, 4294901760
  %2203 = vmatpush1.msra.mxu0 %v2202
  %2204 = vmatprep.subr.mxu0 0.0
  %v2205 = vand.u32 %v40, 4294901760
  %v2206 = vsub.f32 %v40, %v2205
  %v2207 = vand.u32 %v2206, 4294901760
  %v2208 = vsub.f32 %v2206, %v2207
  %v2209 = vand.u32 %v2208, 4294901760
  %2210 = vmatpush1.msra.mxu0 %v2209
  %2211 = vmatprep.subr.mxu0 0.0
  %v2212 = vand.u32 %v41, 4294901760
  %v2213 = vsub.f32 %v41, %v2212
  %v2214 = vand.u32 %v2213, 4294901760
  %v2215 = vsub.f32 %v2213, %v2214
  %v2216 = vand.u32 %v2215, 4294901760
  %2217 = vmatpush1.msra.mxu0 %v2216
  %2218 = vmatprep.subr.mxu0 0.0
  %2219 = vmatpush1.msra.mxu0 0.0
  %2220 = vmatprep.subr.mxu0 0.0
  %2221 = vmatpush1.msra.mxu0 0.0
  %2222 = vmatprep.subr.mxu0 0.0
  %2223 = vmatpush1.msra.mxu0 0.0
  %2224 = vmatprep.subr.mxu0 0.0
  %2225 = vmatpush1.msra.mxu0 0.0
  %2226 = vmatprep.subr.mxu0 0.0
  %2227 = vmatpush1.msra.mxu0 0.0
  %2228 = vmatprep.subr.mxu0 0.0
  %2229 = vmatpush1.msra.mxu0 0.0
  %2230 = vmatprep.subr.mxu0 0.0
  %2231 = vmatpush1.msra.mxu0 0.0
  %2232 = vmatprep.subr.mxu0 0.0
  %2233 = vmatpush1.msra.mxu0 0.0
  %2234 = vmatprep.subr.mxu0 0.0
  %2235 = vmatpush1.msra.mxu0 0.0
  %2236 = vmatprep.subr.mxu0 0.0
  %2237 = vmatpush1.msra.mxu0 0.0
  %2238 = vmatprep.subr.mxu0 0.0
  %2239 = vmatpush1.msra.mxu0 0.0
  %2240 = vmatprep.subr.mxu0 0.0
  %2241 = vmatpush1.msra.mxu0 0.0
  %2242 = vmatprep.subr.mxu0 0.0
  %2243 = vmatpush1.msra.mxu0 0.0
  %2244 = vmatprep.subr.mxu0 0.0
  %2245 = vmatpush1.msra.mxu0 0.0
  %2246 = vmatprep.subr.mxu0 0.0
  %2247 = vmatpush1.msra.mxu0 0.0
  %2248 = vmatprep.subr.mxu0 0.0
  %2249 = vmatpush1.msra.mxu0 0.0
  %2250 = vmatprep.subr.mxu0 0.0
  %2251 = vmatpush1.msra.mxu0 0.0
  %2252 = vmatprep.subr.mxu0 0.0
  %2253 = vmatpush1.msra.mxu0 0.0
  %2254 = vmatprep.subr.mxu0 0.0
  %2255 = vmatpush1.msra.mxu0 0.0
  %2256 = vmatprep.subr.mxu0 0.0
  %2257 = vmatpush1.msra.mxu0 0.0
  %2258 = vmatprep.subr.mxu0 0.0
  %2259 = vmatpush1.msra.mxu0 0.0
  %2260 = vmatprep.subr.mxu0 0.0
  %2261 = vmatpush1.msra.mxu0 0.0
  %2262 = vmatprep.subr.mxu0 0.0
  %2263 = vmatpush1.msra.mxu0 0.0
  %2264 = vmatprep.subr.mxu0 0.0
  %2265 = vmatpush1.msra.mxu0 0.0
  %2266 = vmatprep.subr.mxu0 0.0
  %2267 = vmatpush1.msra.mxu0 0.0
  %2268 = vmatprep.subr.mxu0 0.0
  %2269 = vmatpush1.msra.mxu0 0.0
  %2270 = vmatprep.subr.mxu0 0.0
  %2271 = vmatpush1.msra.mxu0 0.0
  %2272 = vmatprep.subr.mxu0 0.0
  %2273 = vmatpush1.msra.mxu0 0.0
  %2274 = vmatprep.mubr.f32.mxu0 0.0
  %v2275 = vand.u32 %v2070, 4294901760
  %2276 = vmatmul.mubr.f32.gmra.mrb[0].mxu0 %v2275
  %v2277 = vpop.f32.mrb[0].mxu0
  %v2278 = vadd.f32 %v2157, %v2277
  %v2279 = vpop.f32.mrb[0].mxu0
  %2280 = vmatprep.mubr.f32.mxu0 0.0
  %v2281 = vand.u32 %v2073, 4294901760
  %2282 = vmatmul.mubr.f32.gmra.mrb[0].mxu0 %v2281
  %v2283 = vpop.f32.mrb[0].mxu0
  %v2284 = vadd.f32 %v2167, %v2283
  %v2285 = vpop.f32.mrb[0].mxu0
  %2286 = vmatprep.mubr.f32.mxu0 0.0
  %v2287 = vand.u32 %v2076, 4294901760
  %2288 = vmatmul.mubr.f32.gmra.mrb[0].mxu0 %v2287
  %v2289 = vpop.f32.mrb[0].mxu0
  %v2290 = vadd.f32 %v2177, %v2289
  %v2291 = vpop.f32.mrb[0].mxu0
  %2292 = vmatprep.mubr.f32.mxu0 0.0
  %v2293 = vand.u32 %v2079, 4294901760
  %2294 = vmatmul.mubr.f32.gmra.mrb[0].mxu0 %v2293
  %v2295 = vpop.f32.mrb[0].mxu0
  %v2296 = vadd.f32 %v2187, %v2295
  %v2297 = vpop.f32.mrb[0].mxu0
  %2298 = vdwg.mxu0
  %2299 = vmatprep.subr.mxu0 0.0
  %v2300 = vand.u32 %v38, 4294901760
  %v2301 = vsub.f32 %v38, %v2300
  %2302 = vmatpush1.msra.mxu0 %v2301
  %2303 = vmatprep.subr.mxu0 0.0
  %v2304 = vand.u32 %v39, 4294901760
  %v2305 = vsub.f32 %v39, %v2304
  %2306 = vmatpush1.msra.mxu0 %v2305
  %2307 = vmatprep.subr.mxu0 0.0
  %v2308 = vand.u32 %v40, 4294901760
  %v2309 = vsub.f32 %v40, %v2308
  %2310 = vmatpush1.msra.mxu0 %v2309
  %2311 = vmatprep.subr.mxu0 0.0
  %v2312 = vand.u32 %v41, 4294901760
  %v2313 = vsub.f32 %v41, %v2312
  %2314 = vmatpush1.msra.mxu0 %v2313
  %2315 = vmatprep.subr.mxu0 0.0
  %2316 = vmatpush1.msra.mxu0 0.0
  %2317 = vmatprep.subr.mxu0 0.0
  %2318 = vmatpush1.msra.mxu0 0.0
  %2319 = vmatprep.subr.mxu0 0.0
  %2320 = vmatpush1.msra.mxu0 0.0
  %2321 = vmatprep.subr.mxu0 0.0
  %2322 = vmatpush1.msra.mxu0 0.0
  %2323 = vmatprep.subr.mxu0 0.0
  %2324 = vmatpush1.msra.mxu0 0.0
  %2325 = vmatprep.subr.mxu0 0.0
  %2326 = vmatpush1.msra.mxu0 0.0
  %2327 = vmatprep.subr.mxu0 0.0
  %2328 = vmatpush1.msra.mxu0 0.0
  %2329 = vmatprep.subr.mxu0 0.0
  %2330 = vmatpush1.msra.mxu0 0.0
  %2331 = vmatprep.subr.mxu0 0.0
  %2332 = vmatpush1.msra.mxu0 0.0
  %2333 = vmatprep.subr.mxu0 0.0
  %2334 = vmatpush1.msra.mxu0 0.0
  %2335 = vmatprep.subr.mxu0 0.0
  %2336 = vmatpush1.msra.mxu0 0.0
  %2337 = vmatprep.subr.mxu0 0.0
  %2338 = vmatpush1.msra.mxu0 0.0
  %2339 = vmatprep.subr.mxu0 0.0
  %2340 = vmatpush1.msra.mxu0 0.0
  %2341 = vmatprep.subr.mxu0 0.0
  %2342 = vmatpush1.msra.mxu0 0.0
  %2343 = vmatprep.subr.mxu0 0.0
  %2344 = vmatpush1.msra.mxu0 0.0
  %2345 = vmatprep.subr.mxu0 0.0
  %2346 = vmatpush1.msra.mxu0 0.0
  %2347 = vmatprep.subr.mxu0 0.0
  %2348 = vmatpush1.msra.mxu0 0.0
  %2349 = vmatprep.subr.mxu0 0.0
  %2350 = vmatpush1.msra.mxu0 0.0
  %2351 = vmatprep.subr.mxu0 0.0
  %2352 = vmatpush1.msra.mxu0 0.0
  %2353 = vmatprep.subr.mxu0 0.0
  %2354 = vmatpush1.msra.mxu0 0.0
  %2355 = vmatprep.subr.mxu0 0.0
  %2356 = vmatpush1.msra.mxu0 0.0
  %2357 = vmatprep.subr.mxu0 0.0
  %2358 = vmatpush1.msra.mxu0 0.0
  %2359 = vmatprep.subr.mxu0 0.0
  %2360 = vmatpush1.msra.mxu0 0.0
  %2361 = vmatprep.subr.mxu0 0.0
  %2362 = vmatpush1.msra.mxu0 0.0
  %2363 = vmatprep.subr.mxu0 0.0
  %2364 = vmatpush1.msra.mxu0 0.0
  %2365 = vmatprep.subr.mxu0 0.0
  %2366 = vmatpush1.msra.mxu0 0.0
  %2367 = vmatprep.subr.mxu0 0.0
  %2368 = vmatpush1.msra.mxu0 0.0
  %2369 = vmatprep.subr.mxu0 0.0
  %2370 = vmatpush1.msra.mxu0 0.0
  %2371 = vmatprep.mubr.f32.mxu0 0.0
  %v2372 = vand.u32 %v2070, 4294901760
  %v2373 = vsub.f32 %v2070, %v2372
  %2374 = vmatmul.mubr.f32.gmra.mrb[0].mxu0 %v2373
  %v2375 = vpop.f32.mrb[0].mxu0
  %v2376 = vadd.f32 %v2278, %v2375
  %v2377 = vpop.f32.mrb[0].mxu0
  %2378 = vmatprep.mubr.f32.mxu0 0.0
  %v2379 = vand.u32 %v2073, 4294901760
  %v2380 = vsub.f32 %v2073, %v2379
  %2381 = vmatmul.mubr.f32.gmra.mrb[0].mxu0 %v2380
  %v2382 = vpop.f32.mrb[0].mxu0
  %v2383 = vadd.f32 %v2284, %v2382
  %v2384 = vpop.f32.mrb[0].mxu0
  %2385 = vmatprep.mubr.f32.mxu0 0.0
  %v2386 = vand.u32 %v2076, 4294901760
  %v2387 = vsub.f32 %v2076, %v2386
  %2388 = vmatmul.mubr.f32.gmra.mrb[0].mxu0 %v2387
  %v2389 = vpop.f32.mrb[0].mxu0
  %v2390 = vadd.f32 %v2290, %v2389
  %v2391 = vpop.f32.mrb[0].mxu0
  %2392 = vmatprep.mubr.f32.mxu0 0.0
  %v2393 = vand.u32 %v2079, 4294901760
  %v2394 = vsub.f32 %v2079, %v2393
  %2395 = vmatmul.mubr.f32.gmra.mrb[0].mxu0 %v2394
  %v2396 = vpop.f32.mrb[0].mxu0
  %v2397 = vadd.f32 %v2296, %v2396
  %v2398 = vpop.f32.mrb[0].mxu0
  %2399 = vdwg.mxu0
  %2400 = vmatprep.subr.mxu0 0.0
  %v2401 = vand.u32 %v38, 4294901760
  %2402 = vmatpush1.msra.mxu0 %v2401
  %2403 = vmatprep.subr.mxu0 0.0
  %v2404 = vand.u32 %v39, 4294901760
  %2405 = vmatpush1.msra.mxu0 %v2404
  %2406 = vmatprep.subr.mxu0 0.0
  %v2407 = vand.u32 %v40, 4294901760
  %2408 = vmatpush1.msra.mxu0 %v2407
  %2409 = vmatprep.subr.mxu0 0.0
  %v2410 = vand.u32 %v41, 4294901760
  %2411 = vmatpush1.msra.mxu0 %v2410
  %2412 = vmatprep.subr.mxu0 0.0
  %2413 = vmatpush1.msra.mxu0 0.0
  %2414 = vmatprep.subr.mxu0 0.0
  %2415 = vmatpush1.msra.mxu0 0.0
  %2416 = vmatprep.subr.mxu0 0.0
  %2417 = vmatpush1.msra.mxu0 0.0
  %2418 = vmatprep.subr.mxu0 0.0
  %2419 = vmatpush1.msra.mxu0 0.0
  %2420 = vmatprep.subr.mxu0 0.0
  %2421 = vmatpush1.msra.mxu0 0.0
  %2422 = vmatprep.subr.mxu0 0.0
  %2423 = vmatpush1.msra.mxu0 0.0
  %2424 = vmatprep.subr.mxu0 0.0
  %2425 = vmatpush1.msra.mxu0 0.0
  %2426 = vmatprep.subr.mxu0 0.0
  %2427 = vmatpush1.msra.mxu0 0.0
  %2428 = vmatprep.subr.mxu0 0.0
  %2429 = vmatpush1.msra.mxu0 0.0
  %2430 = vmatprep.subr.mxu0 0.0
  %2431 = vmatpush1.msra.mxu0 0.0
  %2432 = vmatprep.subr.mxu0 0.0
  %2433 = vmatpush1.msra.mxu0 0.0
  %2434 = vmatprep.subr.mxu0 0.0
  %2435 = vmatpush1.msra.mxu0 0.0
  %2436 = vmatprep.subr.mxu0 0.0
  %2437 = vmatpush1.msra.mxu0 0.0
  %2438 = vmatprep.subr.mxu0 0.0
  %2439 = vmatpush1.msra.mxu0 0.0
  %2440 = vmatprep.subr.mxu0 0.0
  %2441 = vmatpush1.msra.mxu0 0.0
  %2442 = vmatprep.subr.mxu0 0.0
  %2443 = vmatpush1.msra.mxu0 0.0
  %2444 = vmatprep.subr.mxu0 0.0
  %2445 = vmatpush1.msra.mxu0 0.0
  %2446 = vmatprep.subr.mxu0 0.0
  %2447 = vmatpush1.msra.mxu0 0.0
  %2448 = vmatprep.subr.mxu0 0.0
  %2449 = vmatpush1.msra.mxu0 0.0
  %2450 = vmatprep.subr.mxu0 0.0
  %2451 = vmatpush1.msra.mxu0 0.0
  %2452 = vmatprep.subr.mxu0 0.0
  %2453 = vmatpush1.msra.mxu0 0.0
  %2454 = vmatprep.subr.mxu0 0.0
  %2455 = vmatpush1.msra.mxu0 0.0
  %2456 = vmatprep.subr.mxu0 0.0
  %2457 = vmatpush1.msra.mxu0 0.0
  %2458 = vmatprep.subr.mxu0 0.0
  %2459 = vmatpush1.msra.mxu0 0.0
  %2460 = vmatprep.subr.mxu0 0.0
  %2461 = vmatpush1.msra.mxu0 0.0
  %2462 = vmatprep.subr.mxu0 0.0
  %2463 = vmatpush1.msra.mxu0 0.0
  %2464 = vmatprep.subr.mxu0 0.0
  %2465 = vmatpush1.msra.mxu0 0.0
  %2466 = vmatprep.subr.mxu0 0.0
  %2467 = vmatpush1.msra.mxu0 0.0
  %2468 = vmatprep.mubr.f32.mxu0 0.0
  %v2469 = vand.u32 %v2070, 4294901760
  %v2470 = vsub.f32 %v2070, %v2469
  %v2471 = vand.u32 %v2470, 4294901760
  %2472 = vmatmul.mubr.f32.gmra.mrb[0].mxu0 %v2471
  %v2473 = vpop.f32.mrb[0].mxu0
  %v2474 = vadd.f32 %v2376, %v2473
  %v2475 = vpop.f32.mrb[0].mxu0
  %2476 = vmatprep.mubr.f32.mxu0 0.0
  %v2477 = vand.u32 %v2073, 4294901760
  %v2478 = vsub.f32 %v2073, %v2477
  %v2479 = vand.u32 %v2478, 4294901760
  %2480 = vmatmul.mubr.f32.gmra.mrb[0].mxu0 %v2479
  %v2481 = vpop.f32.mrb[0].mxu0
  %v2482 = vadd.f32 %v2383, %v2481
  %v2483 = vpop.f32.mrb[0].mxu0
  %2484 = vmatprep.mubr.f32.mxu0 0.0
  %v2485 = vand.u32 %v2076, 4294901760
  %v2486 = vsub.f32 %v2076, %v2485
  %v2487 = vand.u32 %v2486, 4294901760
  %2488 = vmatmul.mubr.f32.gmra.mrb[0].mxu0 %v2487
  %v2489 = vpop.f32.mrb[0].mxu0
  %v2490 = vadd.f32 %v2390, %v2489
  %v2491 = vpop.f32.mrb[0].mxu0
  %2492 = vmatprep.mubr.f32.mxu0 0.0
  %v2493 = vand.u32 %v2079, 4294901760
  %v2494 = vsub.f32 %v2079, %v2493
  %v2495 = vand.u32 %v2494, 4294901760
  %2496 = vmatmul.mubr.f32.gmra.mrb[0].mxu0 %v2495
  %v2497 = vpop.f32.mrb[0].mxu0
  %v2498 = vadd.f32 %v2397, %v2497
  %v2499 = vpop.f32.mrb[0].mxu0
  %2500 = vdwg.mxu0
  %2501 = vmatprep.subr.mxu0 0.0
  %v2502 = vand.u32 %v38, 4294901760
  %v2503 = vsub.f32 %v38, %v2502
  %v2504 = vand.u32 %v2503, 4294901760
  %2505 = vmatpush1.msra.mxu0 %v2504
  %2506 = vmatprep.subr.mxu0 0.0
  %v2507 = vand.u32 %v39, 4294901760
  %v2508 = vsub.f32 %v39, %v2507
  %v2509 = vand.u32 %v2508, 4294901760
  %2510 = vmatpush1.msra.mxu0 %v2509
  %2511 = vmatprep.subr.mxu0 0.0
  %v2512 = vand.u32 %v40, 4294901760
  %v2513 = vsub.f32 %v40, %v2512
  %v2514 = vand.u32 %v2513, 4294901760
  %2515 = vmatpush1.msra.mxu0 %v2514
  %2516 = vmatprep.subr.mxu0 0.0
  %v2517 = vand.u32 %v41, 4294901760
  %v2518 = vsub.f32 %v41, %v2517
  %v2519 = vand.u32 %v2518, 4294901760
  %2520 = vmatpush1.msra.mxu0 %v2519
  %2521 = vmatprep.subr.mxu0 0.0
  %2522 = vmatpush1.msra.mxu0 0.0
  %2523 = vmatprep.subr.mxu0 0.0
  %2524 = vmatpush1.msra.mxu0 0.0
  %2525 = vmatprep.subr.mxu0 0.0
  %2526 = vmatpush1.msra.mxu0 0.0
  %2527 = vmatprep.subr.mxu0 0.0
  %2528 = vmatpush1.msra.mxu0 0.0
  %2529 = vmatprep.subr.mxu0 0.0
  %2530 = vmatpush1.msra.mxu0 0.0
  %2531 = vmatprep.subr.mxu0 0.0
  %2532 = vmatpush1.msra.mxu0 0.0
  %2533 = vmatprep.subr.mxu0 0.0
  %2534 = vmatpush1.msra.mxu0 0.0
  %2535 = vmatprep.subr.mxu0 0.0
  %2536 = vmatpush1.msra.mxu0 0.0
  %2537 = vmatprep.subr.mxu0 0.0
  %2538 = vmatpush1.msra.mxu0 0.0
  %2539 = vmatprep.subr.mxu0 0.0
  %2540 = vmatpush1.msra.mxu0 0.0
  %2541 = vmatprep.subr.mxu0 0.0
  %2542 = vmatpush1.msra.mxu0 0.0
  %2543 = vmatprep.subr.mxu0 0.0
  %2544 = vmatpush1.msra.mxu0 0.0
  %2545 = vmatprep.subr.mxu0 0.0
  %2546 = vmatpush1.msra.mxu0 0.0
  %2547 = vmatprep.subr.mxu0 0.0
  %2548 = vmatpush1.msra.mxu0 0.0
  %2549 = vmatprep.subr.mxu0 0.0
  %2550 = vmatpush1.msra.mxu0 0.0
  %2551 = vmatprep.subr.mxu0 0.0
  %2552 = vmatpush1.msra.mxu0 0.0
  %2553 = vmatprep.subr.mxu0 0.0
  %2554 = vmatpush1.msra.mxu0 0.0
  %2555 = vmatprep.subr.mxu0 0.0
  %2556 = vmatpush1.msra.mxu0 0.0
  %2557 = vmatprep.subr.mxu0 0.0
  %2558 = vmatpush1.msra.mxu0 0.0
  %2559 = vmatprep.subr.mxu0 0.0
  %2560 = vmatpush1.msra.mxu0 0.0
  %2561 = vmatprep.subr.mxu0 0.0
  %2562 = vmatpush1.msra.mxu0 0.0
  %2563 = vmatprep.subr.mxu0 0.0
  %2564 = vmatpush1.msra.mxu0 0.0
  %2565 = vmatprep.subr.mxu0 0.0
  %2566 = vmatpush1.msra.mxu0 0.0
  %2567 = vmatprep.subr.mxu0 0.0
  %2568 = vmatpush1.msra.mxu0 0.0
  %2569 = vmatprep.subr.mxu0 0.0
  %2570 = vmatpush1.msra.mxu0 0.0
  %2571 = vmatprep.subr.mxu0 0.0
  %2572 = vmatpush1.msra.mxu0 0.0
  %2573 = vmatprep.subr.mxu0 0.0
  %2574 = vmatpush1.msra.mxu0 0.0
  %2575 = vmatprep.subr.mxu0 0.0
  %2576 = vmatpush1.msra.mxu0 0.0
  %2577 = vmatprep.mubr.f32.mxu0 0.0
  %v2578 = vand.u32 %v2070, 4294901760
  %2579 = vmatmul.mubr.f32.gmra.mrb[0].mxu0 %v2578
  %v2580 = vpop.f32.mrb[0].mxu0
  %v2581 = vadd.f32 %v2474, %v2580
  %v2582 = vpop.f32.mrb[0].mxu0
  %2583 = vmatprep.mubr.f32.mxu0 0.0
  %v2584 = vand.u32 %v2073, 4294901760
  %2585 = vmatmul.mubr.f32.gmra.mrb[0].mxu0 %v2584
  %v2586 = vpop.f32.mrb[0].mxu0
  %v2587 = vadd.f32 %v2482, %v2586
  %v2588 = vpop.f32.mrb[0].mxu0
  %2589 = vmatprep.mubr.f32.mxu0 0.0
  %v2590 = vand.u32 %v2076, 4294901760
  %2591 = vmatmul.mubr.f32.gmra.mrb[0].mxu0 %v2590
  %v2592 = vpop.f32.mrb[0].mxu0
  %v2593 = vadd.f32 %v2490, %v2592
  %v2594 = vpop.f32.mrb[0].mxu0
  %2595 = vmatprep.mubr.f32.mxu0 0.0
  %v2596 = vand.u32 %v2079, 4294901760
  %2597 = vmatmul.mubr.f32.gmra.mrb[0].mxu0 %v2596
  %v2598 = vpop.f32.mrb[0].mxu0
  %v2599 = vadd.f32 %v2498, %v2598
  %v2600 = vpop.f32.mrb[0].mxu0
  %2601 = vdwg.mxu0
  %2602 = vmatprep.subr.mxu0 0.0
  %v2603 = vand.u32 %v38, 4294901760
  %2604 = vmatpush1.msra.mxu0 %v2603
  %2605 = vmatprep.subr.mxu0 0.0
  %v2606 = vand.u32 %v39, 4294901760
  %2607 = vmatpush1.msra.mxu0 %v2606
  %2608 = vmatprep.subr.mxu0 0.0
  %v2609 = vand.u32 %v40, 4294901760
  %2610 = vmatpush1.msra.mxu0 %v2609
  %2611 = vmatprep.subr.mxu0 0.0
  %v2612 = vand.u32 %v41, 4294901760
  %2613 = vmatpush1.msra.mxu0 %v2612
  %2614 = vmatprep.subr.mxu0 0.0
  %2615 = vmatpush1.msra.mxu0 0.0
  %2616 = vmatprep.subr.mxu0 0.0
  %2617 = vmatpush1.msra.mxu0 0.0
  %2618 = vmatprep.subr.mxu0 0.0
  %2619 = vmatpush1.msra.mxu0 0.0
  %2620 = vmatprep.subr.mxu0 0.0
  %2621 = vmatpush1.msra.mxu0 0.0
  %2622 = vmatprep.subr.mxu0 0.0
  %2623 = vmatpush1.msra.mxu0 0.0
  %2624 = vmatprep.subr.mxu0 0.0
  %2625 = vmatpush1.msra.mxu0 0.0
  %2626 = vmatprep.subr.mxu0 0.0
  %2627 = vmatpush1.msra.mxu0 0.0
  %2628 = vmatprep.subr.mxu0 0.0
  %2629 = vmatpush1.msra.mxu0 0.0
  %2630 = vmatprep.subr.mxu0 0.0
  %2631 = vmatpush1.msra.mxu0 0.0
  %2632 = vmatprep.subr.mxu0 0.0
  %2633 = vmatpush1.msra.mxu0 0.0
  %2634 = vmatprep.subr.mxu0 0.0
  %2635 = vmatpush1.msra.mxu0 0.0
  %2636 = vmatprep.subr.mxu0 0.0
  %2637 = vmatpush1.msra.mxu0 0.0
  %2638 = vmatprep.subr.mxu0 0.0
  %2639 = vmatpush1.msra.mxu0 0.0
  %2640 = vmatprep.subr.mxu0 0.0
  %2641 = vmatpush1.msra.mxu0 0.0
  %2642 = vmatprep.subr.mxu0 0.0
  %2643 = vmatpush1.msra.mxu0 0.0
  %2644 = vmatprep.subr.mxu0 0.0
  %2645 = vmatpush1.msra.mxu0 0.0
  %2646 = vmatprep.subr.mxu0 0.0
  %2647 = vmatpush1.msra.mxu0 0.0
  %2648 = vmatprep.subr.mxu0 0.0
  %2649 = vmatpush1.msra.mxu0 0.0
  %2650 = vmatprep.subr.mxu0 0.0
  %2651 = vmatpush1.msra.mxu0 0.0
  %2652 = vmatprep.subr.mxu0 0.0
  %2653 = vmatpush1.msra.mxu0 0.0
  %2654 = vmatprep.subr.mxu0 0.0
  %2655 = vmatpush1.msra.mxu0 0.0
  %2656 = vmatprep.subr.mxu0 0.0
  %2657 = vmatpush1.msra.mxu0 0.0
  %2658 = vmatprep.subr.mxu0 0.0
  %2659 = vmatpush1.msra.mxu0 0.0
  %2660 = vmatprep.subr.mxu0 0.0
  %2661 = vmatpush1.msra.mxu0 0.0
  %2662 = vmatprep.subr.mxu0 0.0
  %2663 = vmatpush1.msra.mxu0 0.0
  %2664 = vmatprep.subr.mxu0 0.0
  %2665 = vmatpush1.msra.mxu0 0.0
  %2666 = vmatprep.subr.mxu0 0.0
  %2667 = vmatpush1.msra.mxu0 0.0
  %2668 = vmatprep.subr.mxu0 0.0
  %2669 = vmatpush1.msra.mxu0 0.0
  %2670 = vmatprep.mubr.f32.mxu0 0.0
  %v2671 = vand.u32 %v2070, 4294901760
  %2672 = vmatmul.mubr.f32.gmra.mrb[0].mxu0 %v2671
  %v2673 = vpop.f32.mrb[0].mxu0
  %v2674 = vadd.f32 %v2581, %v2673
  %v2675 = vpop.f32.mrb[0].mxu0
  %2676 = vmatprep.mubr.f32.mxu0 0.0
  %v2677 = vand.u32 %v2073, 4294901760
  %2678 = vmatmul.mubr.f32.gmra.mrb[0].mxu0 %v2677
  %v2679 = vpop.f32.mrb[0].mxu0
  %v2680 = vadd.f32 %v2587, %v2679
  %v2681 = vpop.f32.mrb[0].mxu0
  %2682 = vmatprep.mubr.f32.mxu0 0.0
  %v2683 = vand.u32 %v2076, 4294901760
  %2684 = vmatmul.mubr.f32.gmra.mrb[0].mxu0 %v2683
  %v2685 = vpop.f32.mrb[0].mxu0
  %v2686 = vadd.f32 %v2593, %v2685
  %v2687 = vpop.f32.mrb[0].mxu0
  %2688 = vmatprep.mubr.f32.mxu0 0.0
  %v2689 = vand.u32 %v2079, 4294901760
  %2690 = vmatmul.mubr.f32.gmra.mrb[0].mxu0 %v2689
  %v2691 = vpop.f32.mrb[0].mxu0
  %v2692 = vadd.f32 %v2599, %v2691
  %v2693 = vpop.f32.mrb[0].mxu0
  %2694 = vdwg.mxu0
  %s2695 = scalar_lea.vmem %s2, 128
  %v2696 = vld [vmem:[%s2695] sm:$0xff]
  %v2697 = vld [vmem:[%s2695 + $0x8] sm:$0xff]
  %v2698 = vld [vmem:[%s2695 + $0x10] sm:$0xff]
  %v2699 = vld [vmem:[%s2695 + $0x18] sm:$0xff]
  %v2700 = vld [vmem:[%s2695 + $0x20] sm:$0xff]
  %v2701 = vld [vmem:[%s2695 + $0x28] sm:$0xff]
  %v2702 = vld [vmem:[%s2695 + $0x30] sm:$0xff]
  %v2703 = vld [vmem:[%s2695 + $0x38] sm:$0xff]
  %v2705 = vsel %vm707, %v2674, 0
  %v2708 = vsel %vm707, %v2680, 0
  %v2711 = vsel %vm707, %v2686, 0
  %v2714 = vsel %vm707, %v2692, 0
  %2716 = vmatprep.subr.mxu0 0.0
  %v2717 = vand.u32 %v2696, 4294901760
  %2718 = vmatpush1.msra.mxu0 %v2717
  %2719 = vmatprep.subr.mxu0 0.0
  %v2720 = vand.u32 %v2697, 4294901760
  %2721 = vmatpush1.msra.mxu0 %v2720
  %2722 = vmatprep.subr.mxu0 0.0
  %v2723 = vand.u32 %v2698, 4294901760
  %2724 = vmatpush1.msra.mxu0 %v2723
  %2725 = vmatprep.subr.mxu0 0.0
  %v2726 = vand.u32 %v2699, 4294901760
  %2727 = vmatpush1.msra.mxu0 %v2726
  %2728 = vmatprep.subr.mxu0 0.0
  %v2729 = vand.u32 %v2700, 4294901760
  %2730 = vmatpush1.msra.mxu0 %v2729
  %2731 = vmatprep.subr.mxu0 0.0
  %v2732 = vand.u32 %v2701, 4294901760
  %2733 = vmatpush1.msra.mxu0 %v2732
  %2734 = vmatprep.subr.mxu0 0.0
  %v2735 = vand.u32 %v2702, 4294901760
  %2736 = vmatpush1.msra.mxu0 %v2735
  %2737 = vmatprep.subr.mxu0 0.0
  %v2738 = vand.u32 %v2703, 4294901760
  %2739 = vmatpush1.msra.mxu0 %v2738
  %2740 = vmatprep.subr.mxu0 0.0
  %2741 = vmatpush1.msra.mxu0 0.0
  %2742 = vmatprep.subr.mxu0 0.0
  %2743 = vmatpush1.msra.mxu0 0.0
  %2744 = vmatprep.subr.mxu0 0.0
  %2745 = vmatpush1.msra.mxu0 0.0
  %2746 = vmatprep.subr.mxu0 0.0
  %2747 = vmatpush1.msra.mxu0 0.0
  %2748 = vmatprep.subr.mxu0 0.0
  %2749 = vmatpush1.msra.mxu0 0.0
  %2750 = vmatprep.subr.mxu0 0.0
  %2751 = vmatpush1.msra.mxu0 0.0
  %2752 = vmatprep.subr.mxu0 0.0
  %2753 = vmatpush1.msra.mxu0 0.0
  %2754 = vmatprep.subr.mxu0 0.0
  %2755 = vmatpush1.msra.mxu0 0.0
  %2756 = vmatprep.subr.mxu0 0.0
  %2757 = vmatpush1.msra.mxu0 0.0
  %2758 = vmatprep.subr.mxu0 0.0
  %2759 = vmatpush1.msra.mxu0 0.0
  %2760 = vmatprep.subr.mxu0 0.0
  %2761 = vmatpush1.msra.mxu0 0.0
  %2762 = vmatprep.subr.mxu0 0.0
  %2763 = vmatpush1.msra.mxu0 0.0
  %2764 = vmatprep.subr.mxu0 0.0
  %2765 = vmatpush1.msra.mxu0 0.0
  %2766 = vmatprep.subr.mxu0 0.0
  %2767 = vmatpush1.msra.mxu0 0.0
  %2768 = vmatprep.subr.mxu0 0.0
  %2769 = vmatpush1.msra.mxu0 0.0
  %2770 = vmatprep.subr.mxu0 0.0
  %2771 = vmatpush1.msra.mxu0 0.0
  %2772 = vmatprep.subr.mxu0 0.0
  %2773 = vmatpush1.msra.mxu0 0.0
  %2774 = vmatprep.subr.mxu0 0.0
  %2775 = vmatpush1.msra.mxu0 0.0
  %2776 = vmatprep.subr.mxu0 0.0
  %2777 = vmatpush1.msra.mxu0 0.0
  %2778 = vmatprep.subr.mxu0 0.0
  %2779 = vmatpush1.msra.mxu0 0.0
  %2780 = vmatprep.subr.mxu0 0.0
  %2781 = vmatpush1.msra.mxu0 0.0
  %2782 = vmatprep.subr.mxu0 0.0
  %2783 = vmatpush1.msra.mxu0 0.0
  %2784 = vmatprep.subr.mxu0 0.0
  %2785 = vmatpush1.msra.mxu0 0.0
  %2786 = vmatprep.subr.mxu0 0.0
  %2787 = vmatpush1.msra.mxu0 0.0
  %2788 = vmatprep.mubr.f32.mxu0 0.0
  %v2789 = vand.u32 %v2705, 4294901760
  %v2790 = vsub.f32 %v2705, %v2789
  %v2791 = vand.u32 %v2790, 4294901760
  %v2792 = vsub.f32 %v2790, %v2791
  %v2793 = vand.u32 %v2792, 4294901760
  %2794 = vmatmul.mubr.f32.gmra.mrb[0].mxu0 %v2793
  %v2795 = vpop.f32.mrb[0].mxu0
  %v2796 = vadd.f32 0.0, %v2795
  %v2797 = vpop.f32.mrb[0].mxu0
  %2798 = vmatprep.mubr.f32.mxu0 0.0
  %v2799 = vand.u32 %v2708, 4294901760
  %v2800 = vsub.f32 %v2708, %v2799
  %v2801 = vand.u32 %v2800, 4294901760
  %v2802 = vsub.f32 %v2800, %v2801
  %v2803 = vand.u32 %v2802, 4294901760
  %2804 = vmatmul.mubr.f32.gmra.mrb[0].mxu0 %v2803
  %v2805 = vpop.f32.mrb[0].mxu0
  %v2806 = vadd.f32 0.0, %v2805
  %v2807 = vpop.f32.mrb[0].mxu0
  %2808 = vmatprep.mubr.f32.mxu0 0.0
  %v2809 = vand.u32 %v2711, 4294901760
  %v2810 = vsub.f32 %v2711, %v2809
  %v2811 = vand.u32 %v2810, 4294901760
  %v2812 = vsub.f32 %v2810, %v2811
  %v2813 = vand.u32 %v2812, 4294901760
  %2814 = vmatmul.mubr.f32.gmra.mrb[0].mxu0 %v2813
  %v2815 = vpop.f32.mrb[0].mxu0
  %v2816 = vadd.f32 0.0, %v2815
  %v2817 = vpop.f32.mrb[0].mxu0
  %2818 = vmatprep.mubr.f32.mxu0 0.0
  %v2819 = vand.u32 %v2714, 4294901760
  %v2820 = vsub.f32 %v2714, %v2819
  %v2821 = vand.u32 %v2820, 4294901760
  %v2822 = vsub.f32 %v2820, %v2821
  %v2823 = vand.u32 %v2822, 4294901760
  %2824 = vmatmul.mubr.f32.gmra.mrb[0].mxu0 %v2823
  %v2825 = vpop.f32.mrb[0].mxu0
  %v2826 = vadd.f32 0.0, %v2825
  %v2827 = vpop.f32.mrb[0].mxu0
  %2828 = vdwg.mxu0
  %2829 = vmatprep.subr.mxu0 0.0
  %v2830 = vand.u32 %v2696, 4294901760
  %v2831 = vsub.f32 %v2696, %v2830
  %v2832 = vand.u32 %v2831, 4294901760
  %v2833 = vsub.f32 %v2831, %v2832
  %v2834 = vand.u32 %v2833, 4294901760
  %2835 = vmatpush1.msra.mxu0 %v2834
  %2836 = vmatprep.subr.mxu0 0.0
  %v2837 = vand.u32 %v2697, 4294901760
  %v2838 = vsub.f32 %v2697, %v2837
  %v2839 = vand.u32 %v2838, 4294901760
  %v2840 = vsub.f32 %v2838, %v2839
  %v2841 = vand.u32 %v2840, 4294901760
  %2842 = vmatpush1.msra.mxu0 %v2841
  %2843 = vmatprep.subr.mxu0 0.0
  %v2844 = vand.u32 %v2698, 4294901760
  %v2845 = vsub.f32 %v2698, %v2844
  %v2846 = vand.u32 %v2845, 4294901760
  %v2847 = vsub.f32 %v2845, %v2846
  %v2848 = vand.u32 %v2847, 4294901760
  %2849 = vmatpush1.msra.mxu0 %v2848
  %2850 = vmatprep.subr.mxu0 0.0
  %v2851 = vand.u32 %v2699, 4294901760
  %v2852 = vsub.f32 %v2699, %v2851
  %v2853 = vand.u32 %v2852, 4294901760
  %v2854 = vsub.f32 %v2852, %v2853
  %v2855 = vand.u32 %v2854, 4294901760
  %2856 = vmatpush1.msra.mxu0 %v2855
  %2857 = vmatprep.subr.mxu0 0.0
  %v2858 = vand.u32 %v2700, 4294901760
  %v2859 = vsub.f32 %v2700, %v2858
  %v2860 = vand.u32 %v2859, 4294901760
  %v2861 = vsub.f32 %v2859, %v2860
  %v2862 = vand.u32 %v2861, 4294901760
  %2863 = vmatpush1.msra.mxu0 %v2862
  %2864 = vmatprep.subr.mxu0 0.0
  %v2865 = vand.u32 %v2701, 4294901760
  %v2866 = vsub.f32 %v2701, %v2865
  %v2867 = vand.u32 %v2866, 4294901760
  %v2868 = vsub.f32 %v2866, %v2867
  %v2869 = vand.u32 %v2868, 4294901760
  %2870 = vmatpush1.msra.mxu0 %v2869
  %2871 = vmatprep.subr.mxu0 0.0
  %v2872 = vand.u32 %v2702, 4294901760
  %v2873 = vsub.f32 %v2702, %v2872
  %v2874 = vand.u32 %v2873, 4294901760
  %v2875 = vsub.f32 %v2873, %v2874
  %v2876 = vand.u32 %v2875, 4294901760
  %2877 = vmatpush1.msra.mxu0 %v2876
  %2878 = vmatprep.subr.mxu0 0.0
  %v2879 = vand.u32 %v2703, 4294901760
  %v2880 = vsub.f32 %v2703, %v2879
  %v2881 = vand.u32 %v2880, 4294901760
  %v2882 = vsub.f32 %v2880, %v2881
  %v2883 = vand.u32 %v2882, 4294901760
  %2884 = vmatpush1.msra.mxu0 %v2883
  %2885 = vmatprep.subr.mxu0 0.0
  %2886 = vmatpush1.msra.mxu0 0.0
  %2887 = vmatprep.subr.mxu0 0.0
  %2888 = vmatpush1.msra.mxu0 0.0
  %2889 = vmatprep.subr.mxu0 0.0
  %2890 = vmatpush1.msra.mxu0 0.0
  %2891 = vmatprep.subr.mxu0 0.0
  %2892 = vmatpush1.msra.mxu0 0.0
  %2893 = vmatprep.subr.mxu0 0.0
  %2894 = vmatpush1.msra.mxu0 0.0
  %2895 = vmatprep.subr.mxu0 0.0
  %2896 = vmatpush1.msra.mxu0 0.0
  %2897 = vmatprep.subr.mxu0 0.0
  %2898 = vmatpush1.msra.mxu0 0.0
  %2899 = vmatprep.subr.mxu0 0.0
  %2900 = vmatpush1.msra.mxu0 0.0
  %2901 = vmatprep.subr.mxu0 0.0
  %2902 = vmatpush1.msra.mxu0 0.0
  %2903 = vmatprep.subr.mxu0 0.0
  %2904 = vmatpush1.msra.mxu0 0.0
  %2905 = vmatprep.subr.mxu0 0.0
  %2906 = vmatpush1.msra.mxu0 0.0
  %2907 = vmatprep.subr.mxu0 0.0
  %2908 = vmatpush1.msra.mxu0 0.0
  %2909 = vmatprep.subr.mxu0 0.0
  %2910 = vmatpush1.msra.mxu0 0.0
  %2911 = vmatprep.subr.mxu0 0.0
  %2912 = vmatpush1.msra.mxu0 0.0
  %2913 = vmatprep.subr.mxu0 0.0
  %2914 = vmatpush1.msra.mxu0 0.0
  %2915 = vmatprep.subr.mxu0 0.0
  %2916 = vmatpush1.msra.mxu0 0.0
  %2917 = vmatprep.subr.mxu0 0.0
  %2918 = vmatpush1.msra.mxu0 0.0
  %2919 = vmatprep.subr.mxu0 0.0
  %2920 = vmatpush1.msra.mxu0 0.0
  %2921 = vmatprep.subr.mxu0 0.0
  %2922 = vmatpush1.msra.mxu0 0.0
  %2923 = vmatprep.subr.mxu0 0.0
  %2924 = vmatpush1.msra.mxu0 0.0
  %2925 = vmatprep.subr.mxu0 0.0
  %2926 = vmatpush1.msra.mxu0 0.0
  %2927 = vmatprep.subr.mxu0 0.0
  %2928 = vmatpush1.msra.mxu0 0.0
  %2929 = vmatprep.subr.mxu0 0.0
  %2930 = vmatpush1.msra.mxu0 0.0
  %2931 = vmatprep.subr.mxu0 0.0
  %2932 = vmatpush1.msra.mxu0 0.0
  %2933 = vmatprep.mubr.f32.mxu0 0.0
  %v2934 = vand.u32 %v2705, 4294901760
  %2935 = vmatmul.mubr.f32.gmra.mrb[0].mxu0 %v2934
  %v2936 = vpop.f32.mrb[0].mxu0
  %v2937 = vadd.f32 %v2796, %v2936
  %v2938 = vpop.f32.mrb[0].mxu0
  %2939 = vmatprep.mubr.f32.mxu0 0.0
  %v2940 = vand.u32 %v2708, 4294901760
  %2941 = vmatmul.mubr.f32.gmra.mrb[0].mxu0 %v2940
  %v2942 = vpop.f32.mrb[0].mxu0
  %v2943 = vadd.f32 %v2806, %v2942
  %v2944 = vpop.f32.mrb[0].mxu0
  %2945 = vmatprep.mubr.f32.mxu0 0.0
  %v2946 = vand.u32 %v2711, 4294901760
  %2947 = vmatmul.mubr.f32.gmra.mrb[0].mxu0 %v2946
  %v2948 = vpop.f32.mrb[0].mxu0
  %v2949 = vadd.f32 %v2816, %v2948
  %v2950 = vpop.f32.mrb[0].mxu0
  %2951 = vmatprep.mubr.f32.mxu0 0.0
  %v2952 = vand.u32 %v2714, 4294901760
  %2953 = vmatmul.mubr.f32.gmra.mrb[0].mxu0 %v2952
  %v2954 = vpop.f32.mrb[0].mxu0
  %v2955 = vadd.f32 %v2826, %v2954
  %v2956 = vpop.f32.mrb[0].mxu0
  %2957 = vdwg.mxu0
  %2958 = vmatprep.subr.mxu0 0.0
  %v2959 = vand.u32 %v2696, 4294901760
  %v2960 = vsub.f32 %v2696, %v2959
  %2961 = vmatpush1.msra.mxu0 %v2960
  %2962 = vmatprep.subr.mxu0 0.0
  %v2963 = vand.u32 %v2697, 4294901760
  %v2964 = vsub.f32 %v2697, %v2963
  %2965 = vmatpush1.msra.mxu0 %v2964
  %2966 = vmatprep.subr.mxu0 0.0
  %v2967 = vand.u32 %v2698, 4294901760
  %v2968 = vsub.f32 %v2698, %v2967
  %2969 = vmatpush1.msra.mxu0 %v2968
  %2970 = vmatprep.subr.mxu0 0.0
  %v2971 = vand.u32 %v2699, 4294901760
  %v2972 = vsub.f32 %v2699, %v2971
  %2973 = vmatpush1.msra.mxu0 %v2972
  %2974 = vmatprep.subr.mxu0 0.0
  %v2975 = vand.u32 %v2700, 4294901760
  %v2976 = vsub.f32 %v2700, %v2975
  %2977 = vmatpush1.msra.mxu0 %v2976
  %2978 = vmatprep.subr.mxu0 0.0
  %v2979 = vand.u32 %v2701, 4294901760
  %v2980 = vsub.f32 %v2701, %v2979
  %2981 = vmatpush1.msra.mxu0 %v2980
  %2982 = vmatprep.subr.mxu0 0.0
  %v2983 = vand.u32 %v2702, 4294901760
  %v2984 = vsub.f32 %v2702, %v2983
  %2985 = vmatpush1.msra.mxu0 %v2984
  %2986 = vmatprep.subr.mxu0 0.0
  %v2987 = vand.u32 %v2703, 4294901760
  %v2988 = vsub.f32 %v2703, %v2987
  %2989 = vmatpush1.msra.mxu0 %v2988
  %2990 = vmatprep.subr.mxu0 0.0
  %2991 = vmatpush1.msra.mxu0 0.0
  %2992 = vmatprep.subr.mxu0 0.0
  %2993 = vmatpush1.msra.mxu0 0.0
  %2994 = vmatprep.subr.mxu0 0.0
  %2995 = vmatpush1.msra.mxu0 0.0
  %2996 = vmatprep.subr.mxu0 0.0
  %2997 = vmatpush1.msra.mxu0 0.0
  %2998 = vmatprep.subr.mxu0 0.0
  %2999 = vmatpush1.msra.mxu0 0.0
  %3000 = vmatprep.subr.mxu0 0.0
  %3001 = vmatpush1.msra.mxu0 0.0
  %3002 = vmatprep.subr.mxu0 0.0
  %3003 = vmatpush1.msra.mxu0 0.0
  %3004 = vmatprep.subr.mxu0 0.0
  %3005 = vmatpush1.msra.mxu0 0.0
  %3006 = vmatprep.subr.mxu0 0.0
  %3007 = vmatpush1.msra.mxu0 0.0
  %3008 = vmatprep.subr.mxu0 0.0
  %3009 = vmatpush1.msra.mxu0 0.0
  %3010 = vmatprep.subr.mxu0 0.0
  %3011 = vmatpush1.msra.mxu0 0.0
  %3012 = vmatprep.subr.mxu0 0.0
  %3013 = vmatpush1.msra.mxu0 0.0
  %3014 = vmatprep.subr.mxu0 0.0
  %3015 = vmatpush1.msra.mxu0 0.0
  %3016 = vmatprep.subr.mxu0 0.0
  %3017 = vmatpush1.msra.mxu0 0.0
  %3018 = vmatprep.subr.mxu0 0.0
  %3019 = vmatpush1.msra.mxu0 0.0
  %3020 = vmatprep.subr.mxu0 0.0
  %3021 = vmatpush1.msra.mxu0 0.0
  %3022 = vmatprep.subr.mxu0 0.0
  %3023 = vmatpush1.msra.mxu0 0.0
  %3024 = vmatprep.subr.mxu0 0.0
  %3025 = vmatpush1.msra.mxu0 0.0
  %3026 = vmatprep.subr.mxu0 0.0
  %3027 = vmatpush1.msra.mxu0 0.0
  %3028 = vmatprep.subr.mxu0 0.0
  %3029 = vmatpush1.msra.mxu0 0.0
  %3030 = vmatprep.subr.mxu0 0.0
  %3031 = vmatpush1.msra.mxu0 0.0
  %3032 = vmatprep.subr.mxu0 0.0
  %3033 = vmatpush1.msra.mxu0 0.0
  %3034 = vmatprep.subr.mxu0 0.0
  %3035 = vmatpush1.msra.mxu0 0.0
  %3036 = vmatprep.subr.mxu0 0.0
  %3037 = vmatpush1.msra.mxu0 0.0
  %3038 = vmatprep.mubr.f32.mxu0 0.0
  %v3039 = vand.u32 %v2705, 4294901760
  %v3040 = vsub.f32 %v2705, %v3039
  %3041 = vmatmul.mubr.f32.gmra.mrb[0].mxu0 %v3040
  %v3042 = vpop.f32.mrb[0].mxu0
  %v3043 = vadd.f32 %v2937, %v3042
  %v3044 = vpop.f32.mrb[0].mxu0
  %3045 = vmatprep.mubr.f32.mxu0 0.0
  %v3046 = vand.u32 %v2708, 4294901760
  %v3047 = vsub.f32 %v2708, %v3046
  %3048 = vmatmul.mubr.f32.gmra.mrb[0].mxu0 %v3047
  %v3049 = vpop.f32.mrb[0].mxu0
  %v3050 = vadd.f32 %v2943, %v3049
  %v3051 = vpop.f32.mrb[0].mxu0
  %3052 = vmatprep.mubr.f32.mxu0 0.0
  %v3053 = vand.u32 %v2711, 4294901760
  %v3054 = vsub.f32 %v2711, %v3053
  %3055 = vmatmul.mubr.f32.gmra.mrb[0].mxu0 %v3054
  %v3056 = vpop.f32.mrb[0].mxu0
  %v3057 = vadd.f32 %v2949, %v3056
  %v3058 = vpop.f32.mrb[0].mxu0
  %3059 = vmatprep.mubr.f32.mxu0 0.0
  %v3060 = vand.u32 %v2714, 4294901760
  %v3061 = vsub.f32 %v2714, %v3060
  %3062 = vmatmul.mubr.f32.gmra.mrb[0].mxu0 %v3061
  %v3063 = vpop.f32.mrb[0].mxu0
  %v3064 = vadd.f32 %v2955, %v3063
  %v3065 = vpop.f32.mrb[0].mxu0
  %3066 = vdwg.mxu0
  %3067 = vmatprep.subr.mxu0 0.0
  %v3068 = vand.u32 %v2696, 4294901760
  %3069 = vmatpush1.msra.mxu0 %v3068
  %3070 = vmatprep.subr.mxu0 0.0
  %v3071 = vand.u32 %v2697, 4294901760
  %3072 = vmatpush1.msra.mxu0 %v3071
  %3073 = vmatprep.subr.mxu0 0.0
  %v3074 = vand.u32 %v2698, 4294901760
  %3075 = vmatpush1.msra.mxu0 %v3074
  %3076 = vmatprep.subr.mxu0 0.0
  %v3077 = vand.u32 %v2699, 4294901760
  %3078 = vmatpush1.msra.mxu0 %v3077
  %3079 = vmatprep.subr.mxu0 0.0
  %v3080 = vand.u32 %v2700, 4294901760
  %3081 = vmatpush1.msra.mxu0 %v3080
  %3082 = vmatprep.subr.mxu0 0.0
  %v3083 = vand.u32 %v2701, 4294901760
  %3084 = vmatpush1.msra.mxu0 %v3083
  %3085 = vmatprep.subr.mxu0 0.0
  %v3086 = vand.u32 %v2702, 4294901760
  %3087 = vmatpush1.msra.mxu0 %v3086
  %3088 = vmatprep.subr.mxu0 0.0
  %v3089 = vand.u32 %v2703, 4294901760
  %3090 = vmatpush1.msra.mxu0 %v3089
  %3091 = vmatprep.subr.mxu0 0.0
  %3092 = vmatpush1.msra.mxu0 0.0
  %3093 = vmatprep.subr.mxu0 0.0
  %3094 = vmatpush1.msra.mxu0 0.0
  %3095 = vmatprep.subr.mxu0 0.0
  %3096 = vmatpush1.msra.mxu0 0.0
  %3097 = vmatprep.subr.mxu0 0.0
  %3098 = vmatpush1.msra.mxu0 0.0
  %3099 = vmatprep.subr.mxu0 0.0
  %3100 = vmatpush1.msra.mxu0 0.0
  %3101 = vmatprep.subr.mxu0 0.0
  %3102 = vmatpush1.msra.mxu0 0.0
  %3103 = vmatprep.subr.mxu0 0.0
  %3104 = vmatpush1.msra.mxu0 0.0
  %3105 = vmatprep.subr.mxu0 0.0
  %3106 = vmatpush1.msra.mxu0 0.0
  %3107 = vmatprep.subr.mxu0 0.0
  %3108 = vmatpush1.msra.mxu0 0.0
  %3109 = vmatprep.subr.mxu0 0.0
  %3110 = vmatpush1.msra.mxu0 0.0
  %3111 = vmatprep.subr.mxu0 0.0
  %3112 = vmatpush1.msra.mxu0 0.0
  %3113 = vmatprep.subr.mxu0 0.0
  %3114 = vmatpush1.msra.mxu0 0.0
  %3115 = vmatprep.subr.mxu0 0.0
  %3116 = vmatpush1.msra.mxu0 0.0
  %3117 = vmatprep.subr.mxu0 0.0
  %3118 = vmatpush1.msra.mxu0 0.0
  %3119 = vmatprep.subr.mxu0 0.0
  %3120 = vmatpush1.msra.mxu0 0.0
  %3121 = vmatprep.subr.mxu0 0.0
  %3122 = vmatpush1.msra.mxu0 0.0
  %3123 = vmatprep.subr.mxu0 0.0
  %3124 = vmatpush1.msra.mxu0 0.0
  %3125 = vmatprep.subr.mxu0 0.0
  %3126 = vmatpush1.msra.mxu0 0.0
  %3127 = vmatprep.subr.mxu0 0.0
  %3128 = vmatpush1.msra.mxu0 0.0
  %3129 = vmatprep.subr.mxu0 0.0
  %3130 = vmatpush1.msra.mxu0 0.0
  %3131 = vmatprep.subr.mxu0 0.0
  %3132 = vmatpush1.msra.mxu0 0.0
  %3133 = vmatprep.subr.mxu0 0.0
  %3134 = vmatpush1.msra.mxu0 0.0
  %3135 = vmatprep.subr.mxu0 0.0
  %3136 = vmatpush1.msra.mxu0 0.0
  %3137 = vmatprep.subr.mxu0 0.0
  %3138 = vmatpush1.msra.mxu0 0.0
  %3139 = vmatprep.mubr.f32.mxu0 0.0
  %v3140 = vand.u32 %v2705, 4294901760
  %v3141 = vsub.f32 %v2705, %v3140
  %v3142 = vand.u32 %v3141, 4294901760
  %3143 = vmatmul.mubr.f32.gmra.mrb[0].mxu0 %v3142
  %v3144 = vpop.f32.mrb[0].mxu0
  %v3145 = vadd.f32 %v3043, %v3144
  %v3146 = vpop.f32.mrb[0].mxu0
  %3147 = vmatprep.mubr.f32.mxu0 0.0
  %v3148 = vand.u32 %v2708, 4294901760
  %v3149 = vsub.f32 %v2708, %v3148
  %v3150 = vand.u32 %v3149, 4294901760
  %3151 = vmatmul.mubr.f32.gmra.mrb[0].mxu0 %v3150
  %v3152 = vpop.f32.mrb[0].mxu0
  %v3153 = vadd.f32 %v3050, %v3152
  %v3154 = vpop.f32.mrb[0].mxu0
  %3155 = vmatprep.mubr.f32.mxu0 0.0
  %v3156 = vand.u32 %v2711, 4294901760
  %v3157 = vsub.f32 %v2711, %v3156
  %v3158 = vand.u32 %v3157, 4294901760
  %3159 = vmatmul.mubr.f32.gmra.mrb[0].mxu0 %v3158
  %v3160 = vpop.f32.mrb[0].mxu0
  %v3161 = vadd.f32 %v3057, %v3160
  %v3162 = vpop.f32.mrb[0].mxu0
  %3163 = vmatprep.mubr.f32.mxu0 0.0
  %v3164 = vand.u32 %v2714, 4294901760
  %v3165 = vsub.f32 %v2714, %v3164
  %v3166 = vand.u32 %v3165, 4294901760
  %3167 = vmatmul.mubr.f32.gmra.mrb[0].mxu0 %v3166
  %v3168 = vpop.f32.mrb[0].mxu0
  %v3169 = vadd.f32 %v3064, %v3168
  %v3170 = vpop.f32.mrb[0].mxu0
  %3171 = vdwg.mxu0
  %3172 = vmatprep.subr.mxu0 0.0
  %v3173 = vand.u32 %v2696, 4294901760
  %v3174 = vsub.f32 %v2696, %v3173
  %v3175 = vand.u32 %v3174, 4294901760
  %3176 = vmatpush1.msra.mxu0 %v3175
  %3177 = vmatprep.subr.mxu0 0.0
  %v3178 = vand.u32 %v2697, 4294901760
  %v3179 = vsub.f32 %v2697, %v3178
  %v3180 = vand.u32 %v3179, 4294901760
  %3181 = vmatpush1.msra.mxu0 %v3180
  %3182 = vmatprep.subr.mxu0 0.0
  %v3183 = vand.u32 %v2698, 4294901760
  %v3184 = vsub.f32 %v2698, %v3183
  %v3185 = vand.u32 %v3184, 4294901760
  %3186 = vmatpush1.msra.mxu0 %v3185
  %3187 = vmatprep.subr.mxu0 0.0
  %v3188 = vand.u32 %v2699, 4294901760
  %v3189 = vsub.f32 %v2699, %v3188
  %v3190 = vand.u32 %v3189, 4294901760
  %3191 = vmatpush1.msra.mxu0 %v3190
  %3192 = vmatprep.subr.mxu0 0.0
  %v3193 = vand.u32 %v2700, 4294901760
  %v3194 = vsub.f32 %v2700, %v3193
  %v3195 = vand.u32 %v3194, 4294901760
  %3196 = vmatpush1.msra.mxu0 %v3195
  %3197 = vmatprep.subr.mxu0 0.0
  %v3198 = vand.u32 %v2701, 4294901760
  %v3199 = vsub.f32 %v2701, %v3198
  %v3200 = vand.u32 %v3199, 4294901760
  %3201 = vmatpush1.msra.mxu0 %v3200
  %3202 = vmatprep.subr.mxu0 0.0
  %v3203 = vand.u32 %v2702, 4294901760
  %v3204 = vsub.f32 %v2702, %v3203
  %v3205 = vand.u32 %v3204, 4294901760
  %3206 = vmatpush1.msra.mxu0 %v3205
  %3207 = vmatprep.subr.mxu0 0.0
  %v3208 = vand.u32 %v2703, 4294901760
  %v3209 = vsub.f32 %v2703, %v3208
  %v3210 = vand.u32 %v3209, 4294901760
  %3211 = vmatpush1.msra.mxu0 %v3210
  %3212 = vmatprep.subr.mxu0 0.0
  %3213 = vmatpush1.msra.mxu0 0.0
  %3214 = vmatprep.subr.mxu0 0.0
  %3215 = vmatpush1.msra.mxu0 0.0
  %3216 = vmatprep.subr.mxu0 0.0
  %3217 = vmatpush1.msra.mxu0 0.0
  %3218 = vmatprep.subr.mxu0 0.0
  %3219 = vmatpush1.msra.mxu0 0.0
  %3220 = vmatprep.subr.mxu0 0.0
  %3221 = vmatpush1.msra.mxu0 0.0
  %3222 = vmatprep.subr.mxu0 0.0
  %3223 = vmatpush1.msra.mxu0 0.0
  %3224 = vmatprep.subr.mxu0 0.0
  %3225 = vmatpush1.msra.mxu0 0.0
  %3226 = vmatprep.subr.mxu0 0.0
  %3227 = vmatpush1.msra.mxu0 0.0
  %3228 = vmatprep.subr.mxu0 0.0
  %3229 = vmatpush1.msra.mxu0 0.0
  %3230 = vmatprep.subr.mxu0 0.0
  %3231 = vmatpush1.msra.mxu0 0.0
  %3232 = vmatprep.subr.mxu0 0.0
  %3233 = vmatpush1.msra.mxu0 0.0
  %3234 = vmatprep.subr.mxu0 0.0
  %3235 = vmatpush1.msra.mxu0 0.0
  %3236 = vmatprep.subr.mxu0 0.0
  %3237 = vmatpush1.msra.mxu0 0.0
  %3238 = vmatprep.subr.mxu0 0.0
  %3239 = vmatpush1.msra.mxu0 0.0
  %3240 = vmatprep.subr.mxu0 0.0
  %3241 = vmatpush1.msra.mxu0 0.0
  %3242 = vmatprep.subr.mxu0 0.0
  %3243 = vmatpush1.msra.mxu0 0.0
  %3244 = vmatprep.subr.mxu0 0.0
  %3245 = vmatpush1.msra.mxu0 0.0
  %3246 = vmatprep.subr.mxu0 0.0
  %3247 = vmatpush1.msra.mxu0 0.0
  %3248 = vmatprep.subr.mxu0 0.0
  %3249 = vmatpush1.msra.mxu0 0.0
  %3250 = vmatprep.subr.mxu0 0.0
  %3251 = vmatpush1.msra.mxu0 0.0
  %3252 = vmatprep.subr.mxu0 0.0
  %3253 = vmatpush1.msra.mxu0 0.0
  %3254 = vmatprep.subr.mxu0 0.0
  %3255 = vmatpush1.msra.mxu0 0.0
  %3256 = vmatprep.subr.mxu0 0.0
  %3257 = vmatpush1.msra.mxu0 0.0
  %3258 = vmatprep.subr.mxu0 0.0
  %3259 = vmatpush1.msra.mxu0 0.0
  %3260 = vmatprep.mubr.f32.mxu0 0.0
  %v3261 = vand.u32 %v2705, 4294901760
  %3262 = vmatmul.mubr.f32.gmra.mrb[0].mxu0 %v3261
  %v3263 = vpop.f32.mrb[0].mxu0
  %v3264 = vadd.f32 %v3145, %v3263
  %v3265 = vpop.f32.mrb[0].mxu0
  %3266 = vmatprep.mubr.f32.mxu0 0.0
  %v3267 = vand.u32 %v2708, 4294901760
  %3268 = vmatmul.mubr.f32.gmra.mrb[0].mxu0 %v3267
  %v3269 = vpop.f32.mrb[0].mxu0
  %v3270 = vadd.f32 %v3153, %v3269
  %v3271 = vpop.f32.mrb[0].mxu0
  %3272 = vmatprep.mubr.f32.mxu0 0.0
  %v3273 = vand.u32 %v2711, 4294901760
  %3274 = vmatmul.mubr.f32.gmra.mrb[0].mxu0 %v3273
  %v3275 = vpop.f32.mrb[0].mxu0
  %v3276 = vadd.f32 %v3161, %v3275
  %v3277 = vpop.f32.mrb[0].mxu0
  %3278 = vmatprep.mubr.f32.mxu0 0.0
  %v3279 = vand.u32 %v2714, 4294901760
  %3280 = vmatmul.mubr.f32.gmra.mrb[0].mxu0 %v3279
  %v3281 = vpop.f32.mrb[0].mxu0
  %v3282 = vadd.f32 %v3169, %v3281
  %v3283 = vpop.f32.mrb[0].mxu0
  %3284 = vdwg.mxu0
  %3285 = vmatprep.subr.mxu0 0.0
  %v3286 = vand.u32 %v2696, 4294901760
  %3287 = vmatpush1.msra.mxu0 %v3286
  %3288 = vmatprep.subr.mxu0 0.0
  %v3289 = vand.u32 %v2697, 4294901760
  %3290 = vmatpush1.msra.mxu0 %v3289
  %3291 = vmatprep.subr.mxu0 0.0
  %v3292 = vand.u32 %v2698, 4294901760
  %3293 = vmatpush1.msra.mxu0 %v3292
  %3294 = vmatprep.subr.mxu0 0.0
  %v3295 = vand.u32 %v2699, 4294901760
  %3296 = vmatpush1.msra.mxu0 %v3295
  %3297 = vmatprep.subr.mxu0 0.0
  %v3298 = vand.u32 %v2700, 4294901760
  %3299 = vmatpush1.msra.mxu0 %v3298
  %3300 = vmatprep.subr.mxu0 0.0
  %v3301 = vand.u32 %v2701, 4294901760
  %3302 = vmatpush1.msra.mxu0 %v3301
  %3303 = vmatprep.subr.mxu0 0.0
  %v3304 = vand.u32 %v2702, 4294901760
  %3305 = vmatpush1.msra.mxu0 %v3304
  %3306 = vmatprep.subr.mxu0 0.0
  %v3307 = vand.u32 %v2703, 4294901760
  %3308 = vmatpush1.msra.mxu0 %v3307
  %3309 = vmatprep.subr.mxu0 0.0
  %3310 = vmatpush1.msra.mxu0 0.0
  %3311 = vmatprep.subr.mxu0 0.0
  %3312 = vmatpush1.msra.mxu0 0.0
  %3313 = vmatprep.subr.mxu0 0.0
  %3314 = vmatpush1.msra.mxu0 0.0
  %3315 = vmatprep.subr.mxu0 0.0
  %3316 = vmatpush1.msra.mxu0 0.0
  %3317 = vmatprep.subr.mxu0 0.0
  %3318 = vmatpush1.msra.mxu0 0.0
  %3319 = vmatprep.subr.mxu0 0.0
  %3320 = vmatpush1.msra.mxu0 0.0
  %3321 = vmatprep.subr.mxu0 0.0
  %3322 = vmatpush1.msra.mxu0 0.0
  %3323 = vmatprep.subr.mxu0 0.0
  %3324 = vmatpush1.msra.mxu0 0.0
  %3325 = vmatprep.subr.mxu0 0.0
  %3326 = vmatpush1.msra.mxu0 0.0
  %3327 = vmatprep.subr.mxu0 0.0
  %3328 = vmatpush1.msra.mxu0 0.0
  %3329 = vmatprep.subr.mxu0 0.0
  %3330 = vmatpush1.msra.mxu0 0.0
  %3331 = vmatprep.subr.mxu0 0.0
  %3332 = vmatpush1.msra.mxu0 0.0
  %3333 = vmatprep.subr.mxu0 0.0
  %3334 = vmatpush1.msra.mxu0 0.0
  %3335 = vmatprep.subr.mxu0 0.0
  %3336 = vmatpush1.msra.mxu0 0.0
  %3337 = vmatprep.subr.mxu0 0.0
  %3338 = vmatpush1.msra.mxu0 0.0
  %3339 = vmatprep.subr.mxu0 0.0
  %3340 = vmatpush1.msra.mxu0 0.0
  %3341 = vmatprep.subr.mxu0 0.0
  %3342 = vmatpush1.msra.mxu0 0.0
  %3343 = vmatprep.subr.mxu0 0.0
  %3344 = vmatpush1.msra.mxu0 0.0
  %3345 = vmatprep.subr.mxu0 0.0
  %3346 = vmatpush1.msra.mxu0 0.0
  %3347 = vmatprep.subr.mxu0 0.0
  %3348 = vmatpush1.msra.mxu0 0.0
  %3349 = vmatprep.subr.mxu0 0.0
  %3350 = vmatpush1.msra.mxu0 0.0
  %3351 = vmatprep.subr.mxu0 0.0
  %3352 = vmatpush1.msra.mxu0 0.0
  %3353 = vmatprep.subr.mxu0 0.0
  %3354 = vmatpush1.msra.mxu0 0.0
  %3355 = vmatprep.subr.mxu0 0.0
  %3356 = vmatpush1.msra.mxu0 0.0
  %3357 = vmatprep.mubr.f32.mxu0 0.0
  %v3358 = vand.u32 %v2705, 4294901760
  %3359 = vmatmul.mubr.f32.gmra.mrb[0].mxu0 %v3358
  %v3360 = vpop.f32.mrb[0].mxu0
  %v3361 = vadd.f32 %v3264, %v3360
  %v3362 = vpop.f32.mrb[0].mxu0
  %3363 = vmatprep.mubr.f32.mxu0 0.0
  %v3364 = vand.u32 %v2708, 4294901760
  %3365 = vmatmul.mubr.f32.gmra.mrb[0].mxu0 %v3364
  %v3366 = vpop.f32.mrb[0].mxu0
  %v3367 = vadd.f32 %v3270, %v3366
  %v3368 = vpop.f32.mrb[0].mxu0
  %3369 = vmatprep.mubr.f32.mxu0 0.0
  %v3370 = vand.u32 %v2711, 4294901760
  %3371 = vmatmul.mubr.f32.gmra.mrb[0].mxu0 %v3370
  %v3372 = vpop.f32.mrb[0].mxu0
  %v3373 = vadd.f32 %v3276, %v3372
  %v3374 = vpop.f32.mrb[0].mxu0
  %3375 = vmatprep.mubr.f32.mxu0 0.0
  %v3376 = vand.u32 %v2714, 4294901760
  %3377 = vmatmul.mubr.f32.gmra.mrb[0].mxu0 %v3376
  %v3378 = vpop.f32.mrb[0].mxu0
  %v3379 = vadd.f32 %v3282, %v3378
  %v3380 = vpop.f32.mrb[0].mxu0
  %3381 = vdwg.mxu0
  %v3382 = vadd.f32 %v2043, %v3361
  %v3383 = vadd.f32 %v2049, %v3367
  %v3384 = vadd.f32 %v2055, %v3373
  %v3385 = vadd.f32 %v2061, %v3379
  %v3387 = vlaneseq
  %v3388 = vshrl.u32 %v3387, 7
  %v3389 = vsub.s32 0, %v3388
  %v3390 = vrot.slane %v58, %v3389
  %v3392 = vadd.f32 %v3382, %v3390
  %v3393 = vadd.f32 %v3383, %v3390
  %v3394 = vadd.f32 %v3384, %v3390
  %v3395 = vadd.f32 %v3385, %v3390
  %v3396 = vmax.f32 %v3392, 0.0
  %v3397 = vmax.f32 %v3393, 0.0
  %v3398 = vmax.f32 %v3394, 0.0
  %v3399 = vmax.f32 %v3395, 0.0
  %v3400 = vld [vmem:[%s4] sm:$0x1]
  %v3401 = vld [vmem:[%s5] sm:$0x1]
  %v3403 = vsel %vm72, 1.0, 0
  %3405 = vmatprep.subr.mxu0 0.0
  %v3406 = vand.u32 %v3396, 4294901760
  %3407 = vmatpush1.msra.mxu0 %v3406
  %3408 = vmatprep.subr.mxu0 0.0
  %v3409 = vand.u32 %v3397, 4294901760
  %3410 = vmatpush1.msra.mxu0 %v3409
  %3411 = vmatprep.subr.mxu0 0.0
  %v3412 = vand.u32 %v3398, 4294901760
  %3413 = vmatpush1.msra.mxu0 %v3412
  %3414 = vmatprep.subr.mxu0 0.0
  %v3415 = vand.u32 %v3399, 4294901760
  %3416 = vmatpush1.msra.mxu0 %v3415
  %3417 = vmatprep.subr.mxu0 0.0
  %3418 = vmatpush1.msra.mxu0 0.0
  %3419 = vmatprep.subr.mxu0 0.0
  %3420 = vmatpush1.msra.mxu0 0.0
  %3421 = vmatprep.subr.mxu0 0.0
  %3422 = vmatpush1.msra.mxu0 0.0
  %3423 = vmatprep.subr.mxu0 0.0
  %3424 = vmatpush1.msra.mxu0 0.0
  %3425 = vmatprep.subr.mxu0 0.0
  %3426 = vmatpush1.msra.mxu0 0.0
  %3427 = vmatprep.subr.mxu0 0.0
  %3428 = vmatpush1.msra.mxu0 0.0
  %3429 = vmatprep.subr.mxu0 0.0
  %3430 = vmatpush1.msra.mxu0 0.0
  %3431 = vmatprep.subr.mxu0 0.0
  %3432 = vmatpush1.msra.mxu0 0.0
  %3433 = vmatprep.subr.mxu0 0.0
  %3434 = vmatpush1.msra.mxu0 0.0
  %3435 = vmatprep.subr.mxu0 0.0
  %3436 = vmatpush1.msra.mxu0 0.0
  %3437 = vmatprep.subr.mxu0 0.0
  %3438 = vmatpush1.msra.mxu0 0.0
  %3439 = vmatprep.subr.mxu0 0.0
  %3440 = vmatpush1.msra.mxu0 0.0
  %3441 = vmatprep.subr.mxu0 0.0
  %3442 = vmatpush1.msra.mxu0 0.0
  %3443 = vmatprep.subr.mxu0 0.0
  %3444 = vmatpush1.msra.mxu0 0.0
  %3445 = vmatprep.subr.mxu0 0.0
  %3446 = vmatpush1.msra.mxu0 0.0
  %3447 = vmatprep.subr.mxu0 0.0
  %3448 = vmatpush1.msra.mxu0 0.0
  %3449 = vmatprep.subr.mxu0 0.0
  %3450 = vmatpush1.msra.mxu0 0.0
  %3451 = vmatprep.subr.mxu0 0.0
  %3452 = vmatpush1.msra.mxu0 0.0
  %3453 = vmatprep.subr.mxu0 0.0
  %3454 = vmatpush1.msra.mxu0 0.0
  %3455 = vmatprep.subr.mxu0 0.0
  %3456 = vmatpush1.msra.mxu0 0.0
  %3457 = vmatprep.subr.mxu0 0.0
  %3458 = vmatpush1.msra.mxu0 0.0
  %3459 = vmatprep.subr.mxu0 0.0
  %3460 = vmatpush1.msra.mxu0 0.0
  %3461 = vmatprep.subr.mxu0 0.0
  %3462 = vmatpush1.msra.mxu0 0.0
  %3463 = vmatprep.subr.mxu0 0.0
  %3464 = vmatpush1.msra.mxu0 0.0
  %3465 = vmatprep.subr.mxu0 0.0
  %3466 = vmatpush1.msra.mxu0 0.0
  %3467 = vmatprep.subr.mxu0 0.0
  %3468 = vmatpush1.msra.mxu0 0.0
  %3469 = vmatprep.subr.mxu0 0.0
  %3470 = vmatpush1.msra.mxu0 0.0
  %3471 = vmatprep.subr.mxu0 0.0
  %3472 = vmatpush1.msra.mxu0 0.0
  %3473 = vmatprep.mubr.f32.mxu0 0.0
  %v3474 = vand.u32 %v3403, 4294901760
  %v3475 = vsub.f32 %v3403, %v3474
  %v3476 = vand.u32 %v3475, 4294901760
  %v3477 = vsub.f32 %v3475, %v3476
  %v3478 = vand.u32 %v3477, 4294901760
  %3479 = vmatmul.mubr.f32.gmra.mrb[0].mxu0 %v3478
  %v3480 = vpop.f32.mrb[0].mxu0
  %v3481 = vadd.f32 0.0, %v3480
  %v3482 = vpop.f32.mrb[0].mxu0
  %3483 = vdwg.mxu0
  %3484 = vmatprep.subr.mxu0 0.0
  %v3485 = vand.u32 %v3396, 4294901760
  %v3486 = vsub.f32 %v3396, %v3485
  %v3487 = vand.u32 %v3486, 4294901760
  %v3488 = vsub.f32 %v3486, %v3487
  %v3489 = vand.u32 %v3488, 4294901760
  %3490 = vmatpush1.msra.mxu0 %v3489
  %3491 = vmatprep.subr.mxu0 0.0
  %v3492 = vand.u32 %v3397, 4294901760
  %v3493 = vsub.f32 %v3397, %v3492
  %v3494 = vand.u32 %v3493, 4294901760
  %v3495 = vsub.f32 %v3493, %v3494
  %v3496 = vand.u32 %v3495, 4294901760
  %3497 = vmatpush1.msra.mxu0 %v3496
  %3498 = vmatprep.subr.mxu0 0.0
  %v3499 = vand.u32 %v3398, 4294901760
  %v3500 = vsub.f32 %v3398, %v3499
  %v3501 = vand.u32 %v3500, 4294901760
  %v3502 = vsub.f32 %v3500, %v3501
  %v3503 = vand.u32 %v3502, 4294901760
  %3504 = vmatpush1.msra.mxu0 %v3503
  %3505 = vmatprep.subr.mxu0 0.0
  %v3506 = vand.u32 %v3399, 4294901760
  %v3507 = vsub.f32 %v3399, %v3506
  %v3508 = vand.u32 %v3507, 4294901760
  %v3509 = vsub.f32 %v3507, %v3508
  %v3510 = vand.u32 %v3509, 4294901760
  %3511 = vmatpush1.msra.mxu0 %v3510
  %3512 = vmatprep.subr.mxu0 0.0
  %3513 = vmatpush1.msra.mxu0 0.0
  %3514 = vmatprep.subr.mxu0 0.0
  %3515 = vmatpush1.msra.mxu0 0.0
  %3516 = vmatprep.subr.mxu0 0.0
  %3517 = vmatpush1.msra.mxu0 0.0
  %3518 = vmatprep.subr.mxu0 0.0
  %3519 = vmatpush1.msra.mxu0 0.0
  %3520 = vmatprep.subr.mxu0 0.0
  %3521 = vmatpush1.msra.mxu0 0.0
  %3522 = vmatprep.subr.mxu0 0.0
  %3523 = vmatpush1.msra.mxu0 0.0
  %3524 = vmatprep.subr.mxu0 0.0
  %3525 = vmatpush1.msra.mxu0 0.0
  %3526 = vmatprep.subr.mxu0 0.0
  %3527 = vmatpush1.msra.mxu0 0.0
  %3528 = vmatprep.subr.mxu0 0.0
  %3529 = vmatpush1.msra.mxu0 0.0
  %3530 = vmatprep.subr.mxu0 0.0
  %3531 = vmatpush1.msra.mxu0 0.0
  %3532 = vmatprep.subr.mxu0 0.0
  %3533 = vmatpush1.msra.mxu0 0.0
  %3534 = vmatprep.subr.mxu0 0.0
  %3535 = vmatpush1.msra.mxu0 0.0
  %3536 = vmatprep.subr.mxu0 0.0
  %3537 = vmatpush1.msra.mxu0 0.0
  %3538 = vmatprep.subr.mxu0 0.0
  %3539 = vmatpush1.msra.mxu0 0.0
  %3540 = vmatprep.subr.mxu0 0.0
  %3541 = vmatpush1.msra.mxu0 0.0
  %3542 = vmatprep.subr.mxu0 0.0
  %3543 = vmatpush1.msra.mxu0 0.0
  %3544 = vmatprep.subr.mxu0 0.0
  %3545 = vmatpush1.msra.mxu0 0.0
  %3546 = vmatprep.subr.mxu0 0.0
  %3547 = vmatpush1.msra.mxu0 0.0
  %3548 = vmatprep.subr.mxu0 0.0
  %3549 = vmatpush1.msra.mxu0 0.0
  %3550 = vmatprep.subr.mxu0 0.0
  %3551 = vmatpush1.msra.mxu0 0.0
  %3552 = vmatprep.subr.mxu0 0.0
  %3553 = vmatpush1.msra.mxu0 0.0
  %3554 = vmatprep.subr.mxu0 0.0
  %3555 = vmatpush1.msra.mxu0 0.0
  %3556 = vmatprep.subr.mxu0 0.0
  %3557 = vmatpush1.msra.mxu0 0.0
  %3558 = vmatprep.subr.mxu0 0.0
  %3559 = vmatpush1.msra.mxu0 0.0
  %3560 = vmatprep.subr.mxu0 0.0
  %3561 = vmatpush1.msra.mxu0 0.0
  %3562 = vmatprep.subr.mxu0 0.0
  %3563 = vmatpush1.msra.mxu0 0.0
  %3564 = vmatprep.subr.mxu0 0.0
  %3565 = vmatpush1.msra.mxu0 0.0
  %3566 = vmatprep.subr.mxu0 0.0
  %3567 = vmatpush1.msra.mxu0 0.0
  %3568 = vmatprep.mubr.f32.mxu0 0.0
  %v3569 = vand.u32 %v3403, 4294901760
  %3570 = vmatmul.mubr.f32.gmra.mrb[0].mxu0 %v3569
  %v3571 = vpop.f32.mrb[0].mxu0
  %v3572 = vadd.f32 %v3481, %v3571
  %v3573 = vpop.f32.mrb[0].mxu0
  %3574 = vdwg.mxu0
  %3575 = vmatprep.subr.mxu0 0.0
  %v3576 = vand.u32 %v3396, 4294901760
  %v3577 = vsub.f32 %v3396, %v3576
  %3578 = vmatpush1.msra.mxu0 %v3577
  %3579 = vmatprep.subr.mxu0 0.0
  %v3580 = vand.u32 %v3397, 4294901760
  %v3581 = vsub.f32 %v3397, %v3580
  %3582 = vmatpush1.msra.mxu0 %v3581
  %3583 = vmatprep.subr.mxu0 0.0
  %v3584 = vand.u32 %v3398, 4294901760
  %v3585 = vsub.f32 %v3398, %v3584
  %3586 = vmatpush1.msra.mxu0 %v3585
  %3587 = vmatprep.subr.mxu0 0.0
  %v3588 = vand.u32 %v3399, 4294901760
  %v3589 = vsub.f32 %v3399, %v3588
  %3590 = vmatpush1.msra.mxu0 %v3589
  %3591 = vmatprep.subr.mxu0 0.0
  %3592 = vmatpush1.msra.mxu0 0.0
  %3593 = vmatprep.subr.mxu0 0.0
  %3594 = vmatpush1.msra.mxu0 0.0
  %3595 = vmatprep.subr.mxu0 0.0
  %3596 = vmatpush1.msra.mxu0 0.0
  %3597 = vmatprep.subr.mxu0 0.0
  %3598 = vmatpush1.msra.mxu0 0.0
  %3599 = vmatprep.subr.mxu0 0.0
  %3600 = vmatpush1.msra.mxu0 0.0
  %3601 = vmatprep.subr.mxu0 0.0
  %3602 = vmatpush1.msra.mxu0 0.0
  %3603 = vmatprep.subr.mxu0 0.0
  %3604 = vmatpush1.msra.mxu0 0.0
  %3605 = vmatprep.subr.mxu0 0.0
  %3606 = vmatpush1.msra.mxu0 0.0
  %3607 = vmatprep.subr.mxu0 0.0
  %3608 = vmatpush1.msra.mxu0 0.0
  %3609 = vmatprep.subr.mxu0 0.0
  %3610 = vmatpush1.msra.mxu0 0.0
  %3611 = vmatprep.subr.mxu0 0.0
  %3612 = vmatpush1.msra.mxu0 0.0
  %3613 = vmatprep.subr.mxu0 0.0
  %3614 = vmatpush1.msra.mxu0 0.0
  %3615 = vmatprep.subr.mxu0 0.0
  %3616 = vmatpush1.msra.mxu0 0.0
  %3617 = vmatprep.subr.mxu0 0.0
  %3618 = vmatpush1.msra.mxu0 0.0
  %3619 = vmatprep.subr.mxu0 0.0
  %3620 = vmatpush1.msra.mxu0 0.0
  %3621 = vmatprep.subr.mxu0 0.0
  %3622 = vmatpush1.msra.mxu0 0.0
  %3623 = vmatprep.subr.mxu0 0.0
  %3624 = vmatpush1.msra.mxu0 0.0
  %3625 = vmatprep.subr.mxu0 0.0
  %3626 = vmatpush1.msra.mxu0 0.0
  %3627 = vmatprep.subr.mxu0 0.0
  %3628 = vmatpush1.msra.mxu0 0.0
  %3629 = vmatprep.subr.mxu0 0.0
  %3630 = vmatpush1.msra.mxu0 0.0
  %3631 = vmatprep.subr.mxu0 0.0
  %3632 = vmatpush1.msra.mxu0 0.0
  %3633 = vmatprep.subr.mxu0 0.0
  %3634 = vmatpush1.msra.mxu0 0.0
  %3635 = vmatprep.subr.mxu0 0.0
  %3636 = vmatpush1.msra.mxu0 0.0
  %3637 = vmatprep.subr.mxu0 0.0
  %3638 = vmatpush1.msra.mxu0 0.0
  %3639 = vmatprep.subr.mxu0 0.0
  %3640 = vmatpush1.msra.mxu0 0.0
  %3641 = vmatprep.subr.mxu0 0.0
  %3642 = vmatpush1.msra.mxu0 0.0
  %3643 = vmatprep.subr.mxu0 0.0
  %3644 = vmatpush1.msra.mxu0 0.0
  %3645 = vmatprep.subr.mxu0 0.0
  %3646 = vmatpush1.msra.mxu0 0.0
  %3647 = vmatprep.mubr.f32.mxu0 0.0
  %v3648 = vand.u32 %v3403, 4294901760
  %v3649 = vsub.f32 %v3403, %v3648
  %3650 = vmatmul.mubr.f32.gmra.mrb[0].mxu0 %v3649
  %v3651 = vpop.f32.mrb[0].mxu0
  %v3652 = vadd.f32 %v3572, %v3651
  %v3653 = vpop.f32.mrb[0].mxu0
  %3654 = vdwg.mxu0
  %3655 = vmatprep.subr.mxu0 0.0
  %v3656 = vand.u32 %v3396, 4294901760
  %3657 = vmatpush1.msra.mxu0 %v3656
  %3658 = vmatprep.subr.mxu0 0.0
  %v3659 = vand.u32 %v3397, 4294901760
  %3660 = vmatpush1.msra.mxu0 %v3659
  %3661 = vmatprep.subr.mxu0 0.0
  %v3662 = vand.u32 %v3398, 4294901760
  %3663 = vmatpush1.msra.mxu0 %v3662
  %3664 = vmatprep.subr.mxu0 0.0
  %v3665 = vand.u32 %v3399, 4294901760
  %3666 = vmatpush1.msra.mxu0 %v3665
  %3667 = vmatprep.subr.mxu0 0.0
  %3668 = vmatpush1.msra.mxu0 0.0
  %3669 = vmatprep.subr.mxu0 0.0
  %3670 = vmatpush1.msra.mxu0 0.0
  %3671 = vmatprep.subr.mxu0 0.0
  %3672 = vmatpush1.msra.mxu0 0.0
  %3673 = vmatprep.subr.mxu0 0.0
  %3674 = vmatpush1.msra.mxu0 0.0
  %3675 = vmatprep.subr.mxu0 0.0
  %3676 = vmatpush1.msra.mxu0 0.0
  %3677 = vmatprep.subr.mxu0 0.0
  %3678 = vmatpush1.msra.mxu0 0.0
  %3679 = vmatprep.subr.mxu0 0.0
  %3680 = vmatpush1.msra.mxu0 0.0
  %3681 = vmatprep.subr.mxu0 0.0
  %3682 = vmatpush1.msra.mxu0 0.0
  %3683 = vmatprep.subr.mxu0 0.0
  %3684 = vmatpush1.msra.mxu0 0.0
  %3685 = vmatprep.subr.mxu0 0.0
  %3686 = vmatpush1.msra.mxu0 0.0
  %3687 = vmatprep.subr.mxu0 0.0
  %3688 = vmatpush1.msra.mxu0 0.0
  %3689 = vmatprep.subr.mxu0 0.0
  %3690 = vmatpush1.msra.mxu0 0.0
  %3691 = vmatprep.subr.mxu0 0.0
  %3692 = vmatpush1.msra.mxu0 0.0
  %3693 = vmatprep.subr.mxu0 0.0
  %3694 = vmatpush1.msra.mxu0 0.0
  %3695 = vmatprep.subr.mxu0 0.0
  %3696 = vmatpush1.msra.mxu0 0.0
  %3697 = vmatprep.subr.mxu0 0.0
  %3698 = vmatpush1.msra.mxu0 0.0
  %3699 = vmatprep.subr.mxu0 0.0
  %3700 = vmatpush1.msra.mxu0 0.0
  %3701 = vmatprep.subr.mxu0 0.0
  %3702 = vmatpush1.msra.mxu0 0.0
  %3703 = vmatprep.subr.mxu0 0.0
  %3704 = vmatpush1.msra.mxu0 0.0
  %3705 = vmatprep.subr.mxu0 0.0
  %3706 = vmatpush1.msra.mxu0 0.0
  %3707 = vmatprep.subr.mxu0 0.0
  %3708 = vmatpush1.msra.mxu0 0.0
  %3709 = vmatprep.subr.mxu0 0.0
  %3710 = vmatpush1.msra.mxu0 0.0
  %3711 = vmatprep.subr.mxu0 0.0
  %3712 = vmatpush1.msra.mxu0 0.0
  %3713 = vmatprep.subr.mxu0 0.0
  %3714 = vmatpush1.msra.mxu0 0.0
  %3715 = vmatprep.subr.mxu0 0.0
  %3716 = vmatpush1.msra.mxu0 0.0
  %3717 = vmatprep.subr.mxu0 0.0
  %3718 = vmatpush1.msra.mxu0 0.0
  %3719 = vmatprep.subr.mxu0 0.0
  %3720 = vmatpush1.msra.mxu0 0.0
  %3721 = vmatprep.subr.mxu0 0.0
  %3722 = vmatpush1.msra.mxu0 0.0
  %3723 = vmatprep.mubr.f32.mxu0 0.0
  %v3724 = vand.u32 %v3403, 4294901760
  %v3725 = vsub.f32 %v3403, %v3724
  %v3726 = vand.u32 %v3725, 4294901760
  %3727 = vmatmul.mubr.f32.gmra.mrb[0].mxu0 %v3726
  %v3728 = vpop.f32.mrb[0].mxu0
  %v3729 = vadd.f32 %v3652, %v3728
  %v3730 = vpop.f32.mrb[0].mxu0
  %3731 = vdwg.mxu0
  %3732 = vmatprep.subr.mxu0 0.0
  %v3733 = vand.u32 %v3396, 4294901760
  %v3734 = vsub.f32 %v3396, %v3733
  %v3735 = vand.u32 %v3734, 4294901760
  %3736 = vmatpush1.msra.mxu0 %v3735
  %3737 = vmatprep.subr.mxu0 0.0
  %v3738 = vand.u32 %v3397, 4294901760
  %v3739 = vsub.f32 %v3397, %v3738
  %v3740 = vand.u32 %v3739, 4294901760
  %3741 = vmatpush1.msra.mxu0 %v3740
  %3742 = vmatprep.subr.mxu0 0.0
  %v3743 = vand.u32 %v3398, 4294901760
  %v3744 = vsub.f32 %v3398, %v3743
  %v3745 = vand.u32 %v3744, 4294901760
  %3746 = vmatpush1.msra.mxu0 %v3745
  %3747 = vmatprep.subr.mxu0 0.0
  %v3748 = vand.u32 %v3399, 4294901760
  %v3749 = vsub.f32 %v3399, %v3748
  %v3750 = vand.u32 %v3749, 4294901760
  %3751 = vmatpush1.msra.mxu0 %v3750
  %3752 = vmatprep.subr.mxu0 0.0
  %3753 = vmatpush1.msra.mxu0 0.0
  %3754 = vmatprep.subr.mxu0 0.0
  %3755 = vmatpush1.msra.mxu0 0.0
  %3756 = vmatprep.subr.mxu0 0.0
  %3757 = vmatpush1.msra.mxu0 0.0
  %3758 = vmatprep.subr.mxu0 0.0
  %3759 = vmatpush1.msra.mxu0 0.0
  %3760 = vmatprep.subr.mxu0 0.0
  %3761 = vmatpush1.msra.mxu0 0.0
  %3762 = vmatprep.subr.mxu0 0.0
  %3763 = vmatpush1.msra.mxu0 0.0
  %3764 = vmatprep.subr.mxu0 0.0
  %3765 = vmatpush1.msra.mxu0 0.0
  %3766 = vmatprep.subr.mxu0 0.0
  %3767 = vmatpush1.msra.mxu0 0.0
  %3768 = vmatprep.subr.mxu0 0.0
  %3769 = vmatpush1.msra.mxu0 0.0
  %3770 = vmatprep.subr.mxu0 0.0
  %3771 = vmatpush1.msra.mxu0 0.0
  %3772 = vmatprep.subr.mxu0 0.0
  %3773 = vmatpush1.msra.mxu0 0.0
  %3774 = vmatprep.subr.mxu0 0.0
  %3775 = vmatpush1.msra.mxu0 0.0
  %3776 = vmatprep.subr.mxu0 0.0
  %3777 = vmatpush1.msra.mxu0 0.0
  %3778 = vmatprep.subr.mxu0 0.0
  %3779 = vmatpush1.msra.mxu0 0.0
  %3780 = vmatprep.subr.mxu0 0.0
  %3781 = vmatpush1.msra.mxu0 0.0
  %3782 = vmatprep.subr.mxu0 0.0
  %3783 = vmatpush1.msra.mxu0 0.0
  %3784 = vmatprep.subr.mxu0 0.0
  %3785 = vmatpush1.msra.mxu0 0.0
  %3786 = vmatprep.subr.mxu0 0.0
  %3787 = vmatpush1.msra.mxu0 0.0
  %3788 = vmatprep.subr.mxu0 0.0
  %3789 = vmatpush1.msra.mxu0 0.0
  %3790 = vmatprep.subr.mxu0 0.0
  %3791 = vmatpush1.msra.mxu0 0.0
  %3792 = vmatprep.subr.mxu0 0.0
  %3793 = vmatpush1.msra.mxu0 0.0
  %3794 = vmatprep.subr.mxu0 0.0
  %3795 = vmatpush1.msra.mxu0 0.0
  %3796 = vmatprep.subr.mxu0 0.0
  %3797 = vmatpush1.msra.mxu0 0.0
  %3798 = vmatprep.subr.mxu0 0.0
  %3799 = vmatpush1.msra.mxu0 0.0
  %3800 = vmatprep.subr.mxu0 0.0
  %3801 = vmatpush1.msra.mxu0 0.0
  %3802 = vmatprep.subr.mxu0 0.0
  %3803 = vmatpush1.msra.mxu0 0.0
  %3804 = vmatprep.subr.mxu0 0.0
  %3805 = vmatpush1.msra.mxu0 0.0
  %3806 = vmatprep.subr.mxu0 0.0
  %3807 = vmatpush1.msra.mxu0 0.0
  %3808 = vmatprep.mubr.f32.mxu0 0.0
  %v3809 = vand.u32 %v3403, 4294901760
  %3810 = vmatmul.mubr.f32.gmra.mrb[0].mxu0 %v3809
  %v3811 = vpop.f32.mrb[0].mxu0
  %v3812 = vadd.f32 %v3729, %v3811
  %v3813 = vpop.f32.mrb[0].mxu0
  %3814 = vdwg.mxu0
  %3815 = vmatprep.subr.mxu0 0.0
  %v3816 = vand.u32 %v3396, 4294901760
  %3817 = vmatpush1.msra.mxu0 %v3816
  %3818 = vmatprep.subr.mxu0 0.0
  %v3819 = vand.u32 %v3397, 4294901760
  %3820 = vmatpush1.msra.mxu0 %v3819
  %3821 = vmatprep.subr.mxu0 0.0
  %v3822 = vand.u32 %v3398, 4294901760
  %3823 = vmatpush1.msra.mxu0 %v3822
  %3824 = vmatprep.subr.mxu0 0.0
  %v3825 = vand.u32 %v3399, 4294901760
  %3826 = vmatpush1.msra.mxu0 %v3825
  %3827 = vmatprep.subr.mxu0 0.0
  %3828 = vmatpush1.msra.mxu0 0.0
  %3829 = vmatprep.subr.mxu0 0.0
  %3830 = vmatpush1.msra.mxu0 0.0
  %3831 = vmatprep.subr.mxu0 0.0
  %3832 = vmatpush1.msra.mxu0 0.0
  %3833 = vmatprep.subr.mxu0 0.0
  %3834 = vmatpush1.msra.mxu0 0.0
  %3835 = vmatprep.subr.mxu0 0.0
  %3836 = vmatpush1.msra.mxu0 0.0
  %3837 = vmatprep.subr.mxu0 0.0
  %3838 = vmatpush1.msra.mxu0 0.0
  %3839 = vmatprep.subr.mxu0 0.0
  %3840 = vmatpush1.msra.mxu0 0.0
  %3841 = vmatprep.subr.mxu0 0.0
  %3842 = vmatpush1.msra.mxu0 0.0
  %3843 = vmatprep.subr.mxu0 0.0
  %3844 = vmatpush1.msra.mxu0 0.0
  %3845 = vmatprep.subr.mxu0 0.0
  %3846 = vmatpush1.msra.mxu0 0.0
  %3847 = vmatprep.subr.mxu0 0.0
  %3848 = vmatpush1.msra.mxu0 0.0
  %3849 = vmatprep.subr.mxu0 0.0
  %3850 = vmatpush1.msra.mxu0 0.0
  %3851 = vmatprep.subr.mxu0 0.0
  %3852 = vmatpush1.msra.mxu0 0.0
  %3853 = vmatprep.subr.mxu0 0.0
  %3854 = vmatpush1.msra.mxu0 0.0
  %3855 = vmatprep.subr.mxu0 0.0
  %3856 = vmatpush1.msra.mxu0 0.0
  %3857 = vmatprep.subr.mxu0 0.0
  %3858 = vmatpush1.msra.mxu0 0.0
  %3859 = vmatprep.subr.mxu0 0.0
  %3860 = vmatpush1.msra.mxu0 0.0
  %3861 = vmatprep.subr.mxu0 0.0
  %3862 = vmatpush1.msra.mxu0 0.0
  %3863 = vmatprep.subr.mxu0 0.0
  %3864 = vmatpush1.msra.mxu0 0.0
  %3865 = vmatprep.subr.mxu0 0.0
  %3866 = vmatpush1.msra.mxu0 0.0
  %3867 = vmatprep.subr.mxu0 0.0
  %3868 = vmatpush1.msra.mxu0 0.0
  %3869 = vmatprep.subr.mxu0 0.0
  %3870 = vmatpush1.msra.mxu0 0.0
  %3871 = vmatprep.subr.mxu0 0.0
  %3872 = vmatpush1.msra.mxu0 0.0
  %3873 = vmatprep.subr.mxu0 0.0
  %3874 = vmatpush1.msra.mxu0 0.0
  %3875 = vmatprep.subr.mxu0 0.0
  %3876 = vmatpush1.msra.mxu0 0.0
  %3877 = vmatprep.subr.mxu0 0.0
  %3878 = vmatpush1.msra.mxu0 0.0
  %3879 = vmatprep.subr.mxu0 0.0
  %3880 = vmatpush1.msra.mxu0 0.0
  %3881 = vmatprep.subr.mxu0 0.0
  %3882 = vmatpush1.msra.mxu0 0.0
  %3883 = vmatprep.mubr.f32.mxu0 0.0
  %v3884 = vand.u32 %v3403, 4294901760
  %3885 = vmatmul.mubr.f32.gmra.mrb[0].mxu0 %v3884
  %v3886 = vpop.f32.mrb[0].mxu0
  %v3887 = vadd.f32 %v3812, %v3886
  %v3888 = vpop.f32.mrb[0].mxu0
  %3889 = vdwg.mxu0
  %3890 = vmatprep.subr.mxu0 0.0
  %v3891 = vand.u32 %v42, 4294901760
  %3892 = vmatpush1.msra.mxu0 %v3891
  %3893 = vmatprep.subr.mxu0 0.0
  %v3894 = vand.u32 %v43, 4294901760
  %3895 = vmatpush1.msra.mxu0 %v3894
  %3896 = vmatprep.subr.mxu0 0.0
  %v3897 = vand.u32 %v44, 4294901760
  %3898 = vmatpush1.msra.mxu0 %v3897
  %3899 = vmatprep.subr.mxu0 0.0
  %v3900 = vand.u32 %v45, 4294901760
  %3901 = vmatpush1.msra.mxu0 %v3900
  %3902 = vmatprep.subr.mxu0 0.0
  %v3903 = vand.u32 %v46, 4294901760
  %3904 = vmatpush1.msra.mxu0 %v3903
  %3905 = vmatprep.subr.mxu0 0.0
  %v3906 = vand.u32 %v47, 4294901760
  %3907 = vmatpush1.msra.mxu0 %v3906
  %3908 = vmatprep.subr.mxu0 0.0
  %v3909 = vand.u32 %v48, 4294901760
  %3910 = vmatpush1.msra.mxu0 %v3909
  %3911 = vmatprep.subr.mxu0 0.0
  %v3912 = vand.u32 %v49, 4294901760
  %3913 = vmatpush1.msra.mxu0 %v3912
  %3914 = vmatprep.subr.mxu0 0.0
  %v3915 = vand.u32 %v50, 4294901760
  %3916 = vmatpush1.msra.mxu0 %v3915
  %3917 = vmatprep.subr.mxu0 0.0
  %v3918 = vand.u32 %v51, 4294901760
  %3919 = vmatpush1.msra.mxu0 %v3918
  %3920 = vmatprep.subr.mxu0 0.0
  %v3921 = vand.u32 %v52, 4294901760
  %3922 = vmatpush1.msra.mxu0 %v3921
  %3923 = vmatprep.subr.mxu0 0.0
  %v3924 = vand.u32 %v53, 4294901760
  %3925 = vmatpush1.msra.mxu0 %v3924
  %3926 = vmatprep.subr.mxu0 0.0
  %v3927 = vand.u32 %v54, 4294901760
  %3928 = vmatpush1.msra.mxu0 %v3927
  %3929 = vmatprep.subr.mxu0 0.0
  %v3930 = vand.u32 %v55, 4294901760
  %3931 = vmatpush1.msra.mxu0 %v3930
  %3932 = vmatprep.subr.mxu0 0.0
  %v3933 = vand.u32 %v56, 4294901760
  %3934 = vmatpush1.msra.mxu0 %v3933
  %3935 = vmatprep.subr.mxu0 0.0
  %v3936 = vand.u32 %v57, 4294901760
  %3937 = vmatpush1.msra.mxu0 %v3936
  %3938 = vmatprep.subr.mxu0 0.0
  %3939 = vmatpush1.msra.mxu0 0.0
  %3940 = vmatprep.subr.mxu0 0.0
  %3941 = vmatpush1.msra.mxu0 0.0
  %3942 = vmatprep.subr.mxu0 0.0
  %3943 = vmatpush1.msra.mxu0 0.0
  %3944 = vmatprep.subr.mxu0 0.0
  %3945 = vmatpush1.msra.mxu0 0.0
  %3946 = vmatprep.subr.mxu0 0.0
  %3947 = vmatpush1.msra.mxu0 0.0
  %3948 = vmatprep.subr.mxu0 0.0
  %3949 = vmatpush1.msra.mxu0 0.0
  %3950 = vmatprep.subr.mxu0 0.0
  %3951 = vmatpush1.msra.mxu0 0.0
  %3952 = vmatprep.subr.mxu0 0.0
  %3953 = vmatpush1.msra.mxu0 0.0
  %3954 = vmatprep.subr.mxu0 0.0
  %3955 = vmatpush1.msra.mxu0 0.0
  %3956 = vmatprep.subr.mxu0 0.0
  %3957 = vmatpush1.msra.mxu0 0.0
  %3958 = vmatprep.subr.mxu0 0.0
  %3959 = vmatpush1.msra.mxu0 0.0
  %3960 = vmatprep.subr.mxu0 0.0
  %3961 = vmatpush1.msra.mxu0 0.0
  %3962 = vmatprep.subr.mxu0 0.0
  %3963 = vmatpush1.msra.mxu0 0.0
  %3964 = vmatprep.subr.mxu0 0.0
  %3965 = vmatpush1.msra.mxu0 0.0
  %3966 = vmatprep.subr.mxu0 0.0
  %3967 = vmatpush1.msra.mxu0 0.0
  %3968 = vmatprep.subr.mxu0 0.0
  %3969 = vmatpush1.msra.mxu0 0.0
  %3970 = vmatprep.mubr.f32.mxu0 0.0
  %v3971 = vand.u32 %v3887, 4294901760
  %v3972 = vsub.f32 %v3887, %v3971
  %v3973 = vand.u32 %v3972, 4294901760
  %v3974 = vsub.f32 %v3972, %v3973
  %v3975 = vand.u32 %v3974, 4294901760
  %3976 = vmatmul.mubr.f32.gmra.mrb[0].mxu0 %v3975
  %v3977 = vpop.f32.mrb[0].mxu0
  %v3978 = vadd.f32 0.0, %v3977
  %v3979 = vpop.f32.mrb[0].mxu0
  %3980 = vdwg.mxu0
  %3981 = vmatprep.subr.mxu0 0.0
  %v3982 = vand.u32 %v42, 4294901760
  %v3983 = vsub.f32 %v42, %v3982
  %v3984 = vand.u32 %v3983, 4294901760
  %v3985 = vsub.f32 %v3983, %v3984
  %v3986 = vand.u32 %v3985, 4294901760
  %3987 = vmatpush1.msra.mxu0 %v3986
  %3988 = vmatprep.subr.mxu0 0.0
  %v3989 = vand.u32 %v43, 4294901760
  %v3990 = vsub.f32 %v43, %v3989
  %v3991 = vand.u32 %v3990, 4294901760
  %v3992 = vsub.f32 %v3990, %v3991
  %v3993 = vand.u32 %v3992, 4294901760
  %3994 = vmatpush1.msra.mxu0 %v3993
  %3995 = vmatprep.subr.mxu0 0.0
  %v3996 = vand.u32 %v44, 4294901760
  %v3997 = vsub.f32 %v44, %v3996
  %v3998 = vand.u32 %v3997, 4294901760
  %v3999 = vsub.f32 %v3997, %v3998
  %v4000 = vand.u32 %v3999, 4294901760
  %4001 = vmatpush1.msra.mxu0 %v4000
  %4002 = vmatprep.subr.mxu0 0.0
  %v4003 = vand.u32 %v45, 4294901760
  %v4004 = vsub.f32 %v45, %v4003
  %v4005 = vand.u32 %v4004, 4294901760
  %v4006 = vsub.f32 %v4004, %v4005
  %v4007 = vand.u32 %v4006, 4294901760
  %4008 = vmatpush1.msra.mxu0 %v4007
  %4009 = vmatprep.subr.mxu0 0.0
  %v4010 = vand.u32 %v46, 4294901760
  %v4011 = vsub.f32 %v46, %v4010
  %v4012 = vand.u32 %v4011, 4294901760
  %v4013 = vsub.f32 %v4011, %v4012
  %v4014 = vand.u32 %v4013, 4294901760
  %4015 = vmatpush1.msra.mxu0 %v4014
  %4016 = vmatprep.subr.mxu0 0.0
  %v4017 = vand.u32 %v47, 4294901760
  %v4018 = vsub.f32 %v47, %v4017
  %v4019 = vand.u32 %v4018, 4294901760
  %v4020 = vsub.f32 %v4018, %v4019
  %v4021 = vand.u32 %v4020, 4294901760
  %4022 = vmatpush1.msra.mxu0 %v4021
  %4023 = vmatprep.subr.mxu0 0.0
  %v4024 = vand.u32 %v48, 4294901760
  %v4025 = vsub.f32 %v48, %v4024
  %v4026 = vand.u32 %v4025, 4294901760
  %v4027 = vsub.f32 %v4025, %v4026
  %v4028 = vand.u32 %v4027, 4294901760
  %4029 = vmatpush1.msra.mxu0 %v4028
  %4030 = vmatprep.subr.mxu0 0.0
  %v4031 = vand.u32 %v49, 4294901760
  %v4032 = vsub.f32 %v49, %v4031
  %v4033 = vand.u32 %v4032, 4294901760
  %v4034 = vsub.f32 %v4032, %v4033
  %v4035 = vand.u32 %v4034, 4294901760
  %4036 = vmatpush1.msra.mxu0 %v4035
  %4037 = vmatprep.subr.mxu0 0.0
  %v4038 = vand.u32 %v50, 4294901760
  %v4039 = vsub.f32 %v50, %v4038
  %v4040 = vand.u32 %v4039, 4294901760
  %v4041 = vsub.f32 %v4039, %v4040
  %v4042 = vand.u32 %v4041, 4294901760
  %4043 = vmatpush1.msra.mxu0 %v4042
  %4044 = vmatprep.subr.mxu0 0.0
  %v4045 = vand.u32 %v51, 4294901760
  %v4046 = vsub.f32 %v51, %v4045
  %v4047 = vand.u32 %v4046, 4294901760
  %v4048 = vsub.f32 %v4046, %v4047
  %v4049 = vand.u32 %v4048, 4294901760
  %4050 = vmatpush1.msra.mxu0 %v4049
  %4051 = vmatprep.subr.mxu0 0.0
  %v4052 = vand.u32 %v52, 4294901760
  %v4053 = vsub.f32 %v52, %v4052
  %v4054 = vand.u32 %v4053, 4294901760
  %v4055 = vsub.f32 %v4053, %v4054
  %v4056 = vand.u32 %v4055, 4294901760
  %4057 = vmatpush1.msra.mxu0 %v4056
  %4058 = vmatprep.subr.mxu0 0.0
  %v4059 = vand.u32 %v53, 4294901760
  %v4060 = vsub.f32 %v53, %v4059
  %v4061 = vand.u32 %v4060, 4294901760
  %v4062 = vsub.f32 %v4060, %v4061
  %v4063 = vand.u32 %v4062, 4294901760
  %4064 = vmatpush1.msra.mxu0 %v4063
  %4065 = vmatprep.subr.mxu0 0.0
  %v4066 = vand.u32 %v54, 4294901760
  %v4067 = vsub.f32 %v54, %v4066
  %v4068 = vand.u32 %v4067, 4294901760
  %v4069 = vsub.f32 %v4067, %v4068
  %v4070 = vand.u32 %v4069, 4294901760
  %4071 = vmatpush1.msra.mxu0 %v4070
  %4072 = vmatprep.subr.mxu0 0.0
  %v4073 = vand.u32 %v55, 4294901760
  %v4074 = vsub.f32 %v55, %v4073
  %v4075 = vand.u32 %v4074, 4294901760
  %v4076 = vsub.f32 %v4074, %v4075
  %v4077 = vand.u32 %v4076, 4294901760
  %4078 = vmatpush1.msra.mxu0 %v4077
  %4079 = vmatprep.subr.mxu0 0.0
  %v4080 = vand.u32 %v56, 4294901760
  %v4081 = vsub.f32 %v56, %v4080
  %v4082 = vand.u32 %v4081, 4294901760
  %v4083 = vsub.f32 %v4081, %v4082
  %v4084 = vand.u32 %v4083, 4294901760
  %4085 = vmatpush1.msra.mxu0 %v4084
  %4086 = vmatprep.subr.mxu0 0.0
  %v4087 = vand.u32 %v57, 4294901760
  %v4088 = vsub.f32 %v57, %v4087
  %v4089 = vand.u32 %v4088, 4294901760
  %v4090 = vsub.f32 %v4088, %v4089
  %v4091 = vand.u32 %v4090, 4294901760
  %4092 = vmatpush1.msra.mxu0 %v4091
  %4093 = vmatprep.subr.mxu0 0.0
  %4094 = vmatpush1.msra.mxu0 0.0
  %4095 = vmatprep.subr.mxu0 0.0
  %4096 = vmatpush1.msra.mxu0 0.0
  %4097 = vmatprep.subr.mxu0 0.0
  %4098 = vmatpush1.msra.mxu0 0.0
  %4099 = vmatprep.subr.mxu0 0.0
  %4100 = vmatpush1.msra.mxu0 0.0
  %4101 = vmatprep.subr.mxu0 0.0
  %4102 = vmatpush1.msra.mxu0 0.0
  %4103 = vmatprep.subr.mxu0 0.0
  %4104 = vmatpush1.msra.mxu0 0.0
  %4105 = vmatprep.subr.mxu0 0.0
  %4106 = vmatpush1.msra.mxu0 0.0
  %4107 = vmatprep.subr.mxu0 0.0
  %4108 = vmatpush1.msra.mxu0 0.0
  %4109 = vmatprep.subr.mxu0 0.0
  %4110 = vmatpush1.msra.mxu0 0.0
  %4111 = vmatprep.subr.mxu0 0.0
  %4112 = vmatpush1.msra.mxu0 0.0
  %4113 = vmatprep.subr.mxu0 0.0
  %4114 = vmatpush1.msra.mxu0 0.0
  %4115 = vmatprep.subr.mxu0 0.0
  %4116 = vmatpush1.msra.mxu0 0.0
  %4117 = vmatprep.subr.mxu0 0.0
  %4118 = vmatpush1.msra.mxu0 0.0
  %4119 = vmatprep.subr.mxu0 0.0
  %4120 = vmatpush1.msra.mxu0 0.0
  %4121 = vmatprep.subr.mxu0 0.0
  %4122 = vmatpush1.msra.mxu0 0.0
  %4123 = vmatprep.subr.mxu0 0.0
  %4124 = vmatpush1.msra.mxu0 0.0
  %4125 = vmatprep.mubr.f32.mxu0 0.0
  %v4126 = vand.u32 %v3887, 4294901760
  %4127 = vmatmul.mubr.f32.gmra.mrb[0].mxu0 %v4126
  %v4128 = vpop.f32.mrb[0].mxu0
  %v4129 = vadd.f32 %v3978, %v4128
  %v4130 = vpop.f32.mrb[0].mxu0
  %4131 = vdwg.mxu0
  %4132 = vmatprep.subr.mxu0 0.0
  %v4133 = vand.u32 %v42, 4294901760
  %v4134 = vsub.f32 %v42, %v4133
  %4135 = vmatpush1.msra.mxu0 %v4134
  %4136 = vmatprep.subr.mxu0 0.0
  %v4137 = vand.u32 %v43, 4294901760
  %v4138 = vsub.f32 %v43, %v4137
  %4139 = vmatpush1.msra.mxu0 %v4138
  %4140 = vmatprep.subr.mxu0 0.0
  %v4141 = vand.u32 %v44, 4294901760
  %v4142 = vsub.f32 %v44, %v4141
  %4143 = vmatpush1.msra.mxu0 %v4142
  %4144 = vmatprep.subr.mxu0 0.0
  %v4145 = vand.u32 %v45, 4294901760
  %v4146 = vsub.f32 %v45, %v4145
  %4147 = vmatpush1.msra.mxu0 %v4146
  %4148 = vmatprep.subr.mxu0 0.0
  %v4149 = vand.u32 %v46, 4294901760
  %v4150 = vsub.f32 %v46, %v4149
  %4151 = vmatpush1.msra.mxu0 %v4150
  %4152 = vmatprep.subr.mxu0 0.0
  %v4153 = vand.u32 %v47, 4294901760
  %v4154 = vsub.f32 %v47, %v4153
  %4155 = vmatpush1.msra.mxu0 %v4154
  %4156 = vmatprep.subr.mxu0 0.0
  %v4157 = vand.u32 %v48, 4294901760
  %v4158 = vsub.f32 %v48, %v4157
  %4159 = vmatpush1.msra.mxu0 %v4158
  %4160 = vmatprep.subr.mxu0 0.0
  %v4161 = vand.u32 %v49, 4294901760
  %v4162 = vsub.f32 %v49, %v4161
  %4163 = vmatpush1.msra.mxu0 %v4162
  %4164 = vmatprep.subr.mxu0 0.0
  %v4165 = vand.u32 %v50, 4294901760
  %v4166 = vsub.f32 %v50, %v4165
  %4167 = vmatpush1.msra.mxu0 %v4166
  %4168 = vmatprep.subr.mxu0 0.0
  %v4169 = vand.u32 %v51, 4294901760
  %v4170 = vsub.f32 %v51, %v4169
  %4171 = vmatpush1.msra.mxu0 %v4170
  %4172 = vmatprep.subr.mxu0 0.0
  %v4173 = vand.u32 %v52, 4294901760
  %v4174 = vsub.f32 %v52, %v4173
  %4175 = vmatpush1.msra.mxu0 %v4174
  %4176 = vmatprep.subr.mxu0 0.0
  %v4177 = vand.u32 %v53, 4294901760
  %v4178 = vsub.f32 %v53, %v4177
  %4179 = vmatpush1.msra.mxu0 %v4178
  %4180 = vmatprep.subr.mxu0 0.0
  %v4181 = vand.u32 %v54, 4294901760
  %v4182 = vsub.f32 %v54, %v4181
  %4183 = vmatpush1.msra.mxu0 %v4182
  %4184 = vmatprep.subr.mxu0 0.0
  %v4185 = vand.u32 %v55, 4294901760
  %v4186 = vsub.f32 %v55, %v4185
  %4187 = vmatpush1.msra.mxu0 %v4186
  %4188 = vmatprep.subr.mxu0 0.0
  %v4189 = vand.u32 %v56, 4294901760
  %v4190 = vsub.f32 %v56, %v4189
  %4191 = vmatpush1.msra.mxu0 %v4190
  %4192 = vmatprep.subr.mxu0 0.0
  %v4193 = vand.u32 %v57, 4294901760
  %v4194 = vsub.f32 %v57, %v4193
  %4195 = vmatpush1.msra.mxu0 %v4194
  %4196 = vmatprep.subr.mxu0 0.0
  %4197 = vmatpush1.msra.mxu0 0.0
  %4198 = vmatprep.subr.mxu0 0.0
  %4199 = vmatpush1.msra.mxu0 0.0
  %4200 = vmatprep.subr.mxu0 0.0
  %4201 = vmatpush1.msra.mxu0 0.0
  %4202 = vmatprep.subr.mxu0 0.0
  %4203 = vmatpush1.msra.mxu0 0.0
  %4204 = vmatprep.subr.mxu0 0.0
  %4205 = vmatpush1.msra.mxu0 0.0
  %4206 = vmatprep.subr.mxu0 0.0
  %4207 = vmatpush1.msra.mxu0 0.0
  %4208 = vmatprep.subr.mxu0 0.0
  %4209 = vmatpush1.msra.mxu0 0.0
  %4210 = vmatprep.subr.mxu0 0.0
  %4211 = vmatpush1.msra.mxu0 0.0
  %4212 = vmatprep.subr.mxu0 0.0
  %4213 = vmatpush1.msra.mxu0 0.0
  %4214 = vmatprep.subr.mxu0 0.0
  %4215 = vmatpush1.msra.mxu0 0.0
  %4216 = vmatprep.subr.mxu0 0.0
  %4217 = vmatpush1.msra.mxu0 0.0
  %4218 = vmatprep.subr.mxu0 0.0
  %4219 = vmatpush1.msra.mxu0 0.0
  %4220 = vmatprep.subr.mxu0 0.0
  %4221 = vmatpush1.msra.mxu0 0.0
  %4222 = vmatprep.subr.mxu0 0.0
  %4223 = vmatpush1.msra.mxu0 0.0
  %4224 = vmatprep.subr.mxu0 0.0
  %4225 = vmatpush1.msra.mxu0 0.0
  %4226 = vmatprep.subr.mxu0 0.0
  %4227 = vmatpush1.msra.mxu0 0.0
  %4228 = vmatprep.mubr.f32.mxu0 0.0
  %v4229 = vand.u32 %v3887, 4294901760
  %v4230 = vsub.f32 %v3887, %v4229
  %4231 = vmatmul.mubr.f32.gmra.mrb[0].mxu0 %v4230
  %v4232 = vpop.f32.mrb[0].mxu0
  %v4233 = vadd.f32 %v4129, %v4232
  %v4234 = vpop.f32.mrb[0].mxu0
  %4235 = vdwg.mxu0
  %4236 = vmatprep.subr.mxu0 0.0
  %v4237 = vand.u32 %v42, 4294901760
  %4238 = vmatpush1.msra.mxu0 %v4237
  %4239 = vmatprep.subr.mxu0 0.0
  %v4240 = vand.u32 %v43, 4294901760
  %4241 = vmatpush1.msra.mxu0 %v4240
  %4242 = vmatprep.subr.mxu0 0.0
  %v4243 = vand.u32 %v44, 4294901760
  %4244 = vmatpush1.msra.mxu0 %v4243
  %4245 = vmatprep.subr.mxu0 0.0
  %v4246 = vand.u32 %v45, 4294901760
  %4247 = vmatpush1.msra.mxu0 %v4246
  %4248 = vmatprep.subr.mxu0 0.0
  %v4249 = vand.u32 %v46, 4294901760
  %4250 = vmatpush1.msra.mxu0 %v4249
  %4251 = vmatprep.subr.mxu0 0.0
  %v4252 = vand.u32 %v47, 4294901760
  %4253 = vmatpush1.msra.mxu0 %v4252
  %4254 = vmatprep.subr.mxu0 0.0
  %v4255 = vand.u32 %v48, 4294901760
  %4256 = vmatpush1.msra.mxu0 %v4255
  %4257 = vmatprep.subr.mxu0 0.0
  %v4258 = vand.u32 %v49, 4294901760
  %4259 = vmatpush1.msra.mxu0 %v4258
  %4260 = vmatprep.subr.mxu0 0.0
  %v4261 = vand.u32 %v50, 4294901760
  %4262 = vmatpush1.msra.mxu0 %v4261
  %4263 = vmatprep.subr.mxu0 0.0
  %v4264 = vand.u32 %v51, 4294901760
  %4265 = vmatpush1.msra.mxu0 %v4264
  %4266 = vmatprep.subr.mxu0 0.0
  %v4267 = vand.u32 %v52, 4294901760
  %4268 = vmatpush1.msra.mxu0 %v4267
  %4269 = vmatprep.subr.mxu0 0.0
  %v4270 = vand.u32 %v53, 4294901760
  %4271 = vmatpush1.msra.mxu0 %v4270
  %4272 = vmatprep.subr.mxu0 0.0
  %v4273 = vand.u32 %v54, 4294901760
  %4274 = vmatpush1.msra.mxu0 %v4273
  %4275 = vmatprep.subr.mxu0 0.0
  %v4276 = vand.u32 %v55, 4294901760
  %4277 = vmatpush1.msra.mxu0 %v4276
  %4278 = vmatprep.subr.mxu0 0.0
  %v4279 = vand.u32 %v56, 4294901760
  %4280 = vmatpush1.msra.mxu0 %v4279
  %4281 = vmatprep.subr.mxu0 0.0
  %v4282 = vand.u32 %v57, 4294901760
  %4283 = vmatpush1.msra.mxu0 %v4282
  %4284 = vmatprep.subr.mxu0 0.0
  %4285 = vmatpush1.msra.mxu0 0.0
  %4286 = vmatprep.subr.mxu0 0.0
  %4287 = vmatpush1.msra.mxu0 0.0
  %4288 = vmatprep.subr.mxu0 0.0
  %4289 = vmatpush1.msra.mxu0 0.0
  %4290 = vmatprep.subr.mxu0 0.0
  %4291 = vmatpush1.msra.mxu0 0.0
  %4292 = vmatprep.subr.mxu0 0.0
  %4293 = vmatpush1.msra.mxu0 0.0
  %4294 = vmatprep.subr.mxu0 0.0
  %4295 = vmatpush1.msra.mxu0 0.0
  %4296 = vmatprep.subr.mxu0 0.0
  %4297 = vmatpush1.msra.mxu0 0.0
  %4298 = vmatprep.subr.mxu0 0.0
  %4299 = vmatpush1.msra.mxu0 0.0
  %4300 = vmatprep.subr.mxu0 0.0
  %4301 = vmatpush1.msra.mxu0 0.0
  %4302 = vmatprep.subr.mxu0 0.0
  %4303 = vmatpush1.msra.mxu0 0.0
  %4304 = vmatprep.subr.mxu0 0.0
  %4305 = vmatpush1.msra.mxu0 0.0
  %4306 = vmatprep.subr.mxu0 0.0
  %4307 = vmatpush1.msra.mxu0 0.0
  %4308 = vmatprep.subr.mxu0 0.0
  %4309 = vmatpush1.msra.mxu0 0.0
  %4310 = vmatprep.subr.mxu0 0.0
  %4311 = vmatpush1.msra.mxu0 0.0
  %4312 = vmatprep.subr.mxu0 0.0
  %4313 = vmatpush1.msra.mxu0 0.0
  %4314 = vmatprep.subr.mxu0 0.0
  %4315 = vmatpush1.msra.mxu0 0.0
  %4316 = vmatprep.mubr.f32.mxu0 0.0
  %v4317 = vand.u32 %v3887, 4294901760
  %v4318 = vsub.f32 %v3887, %v4317
  %v4319 = vand.u32 %v4318, 4294901760
  %4320 = vmatmul.mubr.f32.gmra.mrb[0].mxu0 %v4319
  %v4321 = vpop.f32.mrb[0].mxu0
  %v4322 = vadd.f32 %v4233, %v4321
  %v4323 = vpop.f32.mrb[0].mxu0
  %4324 = vdwg.mxu0
  %4325 = vmatprep.subr.mxu0 0.0
  %v4326 = vand.u32 %v42, 4294901760
  %v4327 = vsub.f32 %v42, %v4326
  %v4328 = vand.u32 %v4327, 4294901760
  %4329 = vmatpush1.msra.mxu0 %v4328
  %4330 = vmatprep.subr.mxu0 0.0
  %v4331 = vand.u32 %v43, 4294901760
  %v4332 = vsub.f32 %v43, %v4331
  %v4333 = vand.u32 %v4332, 4294901760
  %4334 = vmatpush1.msra.mxu0 %v4333
  %4335 = vmatprep.subr.mxu0 0.0
  %v4336 = vand.u32 %v44, 4294901760
  %v4337 = vsub.f32 %v44, %v4336
  %v4338 = vand.u32 %v4337, 4294901760
  %4339 = vmatpush1.msra.mxu0 %v4338
  %4340 = vmatprep.subr.mxu0 0.0
  %v4341 = vand.u32 %v45, 4294901760
  %v4342 = vsub.f32 %v45, %v4341
  %v4343 = vand.u32 %v4342, 4294901760
  %4344 = vmatpush1.msra.mxu0 %v4343
  %4345 = vmatprep.subr.mxu0 0.0
  %v4346 = vand.u32 %v46, 4294901760
  %v4347 = vsub.f32 %v46, %v4346
  %v4348 = vand.u32 %v4347, 4294901760
  %4349 = vmatpush1.msra.mxu0 %v4348
  %4350 = vmatprep.subr.mxu0 0.0
  %v4351 = vand.u32 %v47, 4294901760
  %v4352 = vsub.f32 %v47, %v4351
  %v4353 = vand.u32 %v4352, 4294901760
  %4354 = vmatpush1.msra.mxu0 %v4353
  %4355 = vmatprep.subr.mxu0 0.0
  %v4356 = vand.u32 %v48, 4294901760
  %v4357 = vsub.f32 %v48, %v4356
  %v4358 = vand.u32 %v4357, 4294901760
  %4359 = vmatpush1.msra.mxu0 %v4358
  %4360 = vmatprep.subr.mxu0 0.0
  %v4361 = vand.u32 %v49, 4294901760
  %v4362 = vsub.f32 %v49, %v4361
  %v4363 = vand.u32 %v4362, 4294901760
  %4364 = vmatpush1.msra.mxu0 %v4363
  %4365 = vmatprep.subr.mxu0 0.0
  %v4366 = vand.u32 %v50, 4294901760
  %v4367 = vsub.f32 %v50, %v4366
  %v4368 = vand.u32 %v4367, 4294901760
  %4369 = vmatpush1.msra.mxu0 %v4368
  %4370 = vmatprep.subr.mxu0 0.0
  %v4371 = vand.u32 %v51, 4294901760
  %v4372 = vsub.f32 %v51, %v4371
  %v4373 = vand.u32 %v4372, 4294901760
  %4374 = vmatpush1.msra.mxu0 %v4373
  %4375 = vmatprep.subr.mxu0 0.0
  %v4376 = vand.u32 %v52, 4294901760
  %v4377 = vsub.f32 %v52, %v4376
  %v4378 = vand.u32 %v4377, 4294901760
  %4379 = vmatpush1.msra.mxu0 %v4378
  %4380 = vmatprep.subr.mxu0 0.0
  %v4381 = vand.u32 %v53, 4294901760
  %v4382 = vsub.f32 %v53, %v4381
  %v4383 = vand.u32 %v4382, 4294901760
  %4384 = vmatpush1.msra.mxu0 %v4383
  %4385 = vmatprep.subr.mxu0 0.0
  %v4386 = vand.u32 %v54, 4294901760
  %v4387 = vsub.f32 %v54, %v4386
  %v4388 = vand.u32 %v4387, 4294901760
  %4389 = vmatpush1.msra.mxu0 %v4388
  %4390 = vmatprep.subr.mxu0 0.0
  %v4391 = vand.u32 %v55, 4294901760
  %v4392 = vsub.f32 %v55, %v4391
  %v4393 = vand.u32 %v4392, 4294901760
  %4394 = vmatpush1.msra.mxu0 %v4393
  %4395 = vmatprep.subr.mxu0 0.0
  %v4396 = vand.u32 %v56, 4294901760
  %v4397 = vsub.f32 %v56, %v4396
  %v4398 = vand.u32 %v4397, 4294901760
  %4399 = vmatpush1.msra.mxu0 %v4398
  %4400 = vmatprep.subr.mxu0 0.0
  %v4401 = vand.u32 %v57, 4294901760
  %v4402 = vsub.f32 %v57, %v4401
  %v4403 = vand.u32 %v4402, 4294901760
  %4404 = vmatpush1.msra.mxu0 %v4403
  %4405 = vmatprep.subr.mxu0 0.0
  %4406 = vmatpush1.msra.mxu0 0.0
  %4407 = vmatprep.subr.mxu0 0.0
  %4408 = vmatpush1.msra.mxu0 0.0
  %4409 = vmatprep.subr.mxu0 0.0
  %4410 = vmatpush1.msra.mxu0 0.0
  %4411 = vmatprep.subr.mxu0 0.0
  %4412 = vmatpush1.msra.mxu0 0.0
  %4413 = vmatprep.subr.mxu0 0.0
  %4414 = vmatpush1.msra.mxu0 0.0
  %4415 = vmatprep.subr.mxu0 0.0
  %4416 = vmatpush1.msra.mxu0 0.0
  %4417 = vmatprep.subr.mxu0 0.0
  %4418 = vmatpush1.msra.mxu0 0.0
  %4419 = vmatprep.subr.mxu0 0.0
  %4420 = vmatpush1.msra.mxu0 0.0
  %4421 = vmatprep.subr.mxu0 0.0
  %4422 = vmatpush1.msra.mxu0 0.0
  %4423 = vmatprep.subr.mxu0 0.0
  %4424 = vmatpush1.msra.mxu0 0.0
  %4425 = vmatprep.subr.mxu0 0.0
  %4426 = vmatpush1.msra.mxu0 0.0
  %4427 = vmatprep.subr.mxu0 0.0
  %4428 = vmatpush1.msra.mxu0 0.0
  %4429 = vmatprep.subr.mxu0 0.0
  %4430 = vmatpush1.msra.mxu0 0.0
  %4431 = vmatprep.subr.mxu0 0.0
  %4432 = vmatpush1.msra.mxu0 0.0
  %4433 = vmatprep.subr.mxu0 0.0
  %4434 = vmatpush1.msra.mxu0 0.0
  %4435 = vmatprep.subr.mxu0 0.0
  %4436 = vmatpush1.msra.mxu0 0.0
  %4437 = vmatprep.mubr.f32.mxu0 0.0
  %v4438 = vand.u32 %v3887, 4294901760
  %4439 = vmatmul.mubr.f32.gmra.mrb[0].mxu0 %v4438
  %v4440 = vpop.f32.mrb[0].mxu0
  %v4441 = vadd.f32 %v4322, %v4440
  %v4442 = vpop.f32.mrb[0].mxu0
  %4443 = vdwg.mxu0
  %4444 = vmatprep.subr.mxu0 0.0
  %v4445 = vand.u32 %v42, 4294901760
  %4446 = vmatpush1.msra.mxu0 %v4445
  %4447 = vmatprep.subr.mxu0 0.0
  %v4448 = vand.u32 %v43, 4294901760
  %4449 = vmatpush1.msra.mxu0 %v4448
  %4450 = vmatprep.subr.mxu0 0.0
  %v4451 = vand.u32 %v44, 4294901760
  %4452 = vmatpush1.msra.mxu0 %v4451
  %4453 = vmatprep.subr.mxu0 0.0
  %v4454 = vand.u32 %v45, 4294901760
  %4455 = vmatpush1.msra.mxu0 %v4454
  %4456 = vmatprep.subr.mxu0 0.0
  %v4457 = vand.u32 %v46, 4294901760
  %4458 = vmatpush1.msra.mxu0 %v4457
  %4459 = vmatprep.subr.mxu0 0.0
  %v4460 = vand.u32 %v47, 4294901760
  %4461 = vmatpush1.msra.mxu0 %v4460
  %4462 = vmatprep.subr.mxu0 0.0
  %v4463 = vand.u32 %v48, 4294901760
  %4464 = vmatpush1.msra.mxu0 %v4463
  %4465 = vmatprep.subr.mxu0 0.0
  %v4466 = vand.u32 %v49, 4294901760
  %4467 = vmatpush1.msra.mxu0 %v4466
  %4468 = vmatprep.subr.mxu0 0.0
  %v4469 = vand.u32 %v50, 4294901760
  %4470 = vmatpush1.msra.mxu0 %v4469
  %4471 = vmatprep.subr.mxu0 0.0
  %v4472 = vand.u32 %v51, 4294901760
  %4473 = vmatpush1.msra.mxu0 %v4472
  %4474 = vmatprep.subr.mxu0 0.0
  %v4475 = vand.u32 %v52, 4294901760
  %4476 = vmatpush1.msra.mxu0 %v4475
  %4477 = vmatprep.subr.mxu0 0.0
  %v4478 = vand.u32 %v53, 4294901760
  %4479 = vmatpush1.msra.mxu0 %v4478
  %4480 = vmatprep.subr.mxu0 0.0
  %v4481 = vand.u32 %v54, 4294901760
  %4482 = vmatpush1.msra.mxu0 %v4481
  %4483 = vmatprep.subr.mxu0 0.0
  %v4484 = vand.u32 %v55, 4294901760
  %4485 = vmatpush1.msra.mxu0 %v4484
  %4486 = vmatprep.subr.mxu0 0.0
  %v4487 = vand.u32 %v56, 4294901760
  %4488 = vmatpush1.msra.mxu0 %v4487
  %4489 = vmatprep.subr.mxu0 0.0
  %v4490 = vand.u32 %v57, 4294901760
  %4491 = vmatpush1.msra.mxu0 %v4490
  %4492 = vmatprep.subr.mxu0 0.0
  %4493 = vmatpush1.msra.mxu0 0.0
  %4494 = vmatprep.subr.mxu0 0.0
  %4495 = vmatpush1.msra.mxu0 0.0
  %4496 = vmatprep.subr.mxu0 0.0
  %4497 = vmatpush1.msra.mxu0 0.0
  %4498 = vmatprep.subr.mxu0 0.0
  %4499 = vmatpush1.msra.mxu0 0.0
  %4500 = vmatprep.subr.mxu0 0.0
  %4501 = vmatpush1.msra.mxu0 0.0
  %4502 = vmatprep.subr.mxu0 0.0
  %4503 = vmatpush1.msra.mxu0 0.0
  %4504 = vmatprep.subr.mxu0 0.0
  %4505 = vmatpush1.msra.mxu0 0.0
  %4506 = vmatprep.subr.mxu0 0.0
  %4507 = vmatpush1.msra.mxu0 0.0
  %4508 = vmatprep.subr.mxu0 0.0
  %4509 = vmatpush1.msra.mxu0 0.0
  %4510 = vmatprep.subr.mxu0 0.0
  %4511 = vmatpush1.msra.mxu0 0.0
  %4512 = vmatprep.subr.mxu0 0.0
  %4513 = vmatpush1.msra.mxu0 0.0
  %4514 = vmatprep.subr.mxu0 0.0
  %4515 = vmatpush1.msra.mxu0 0.0
  %4516 = vmatprep.subr.mxu0 0.0
  %4517 = vmatpush1.msra.mxu0 0.0
  %4518 = vmatprep.subr.mxu0 0.0
  %4519 = vmatpush1.msra.mxu0 0.0
  %4520 = vmatprep.subr.mxu0 0.0
  %4521 = vmatpush1.msra.mxu0 0.0
  %4522 = vmatprep.subr.mxu0 0.0
  %4523 = vmatpush1.msra.mxu0 0.0
  %4524 = vmatprep.mubr.f32.mxu0 0.0
  %v4525 = vand.u32 %v3887, 4294901760
  %4526 = vmatmul.mubr.f32.gmra.mrb[0].mxu0 %v4525
  %v4527 = vpop.f32.mrb[0].mxu0
  %v4528 = vadd.f32 %v4441, %v4527
  %v4529 = vpop.f32.mrb[0].mxu0
  %4530 = vdwg.mxu0
  %v4531 = vmul.f32 %v4528, 0.001953125
  %v4532 = vlaneseq
  %v4533 = vshrl.u32 %v4532, 7
  %v4534 = vsub.s32 0, %v4533
  %v4535 = vrot.slane %v4531, %v4534
  %v4536 = vsub.f32 %v3396, %v4535
  %v4537 = vsub.f32 %v3397, %v4535
  %v4538 = vsub.f32 %v3398, %v4535
  %v4539 = vsub.f32 %v3399, %v4535
  %v4540 = vmul.f32 %v4536, %v4536
  %v4541 = vmul.f32 %v4537, %v4537
  %v4542 = vmul.f32 %v4538, %v4538
  %v4543 = vmul.f32 %v4539, %v4539
  %4544 = vmatprep.subr.mxu0 0.0
  %v4545 = vand.u32 %v4540, 4294901760
  %4546 = vmatpush1.msra.mxu0 %v4545
  %4547 = vmatprep.subr.mxu0 0.0
  %v4548 = vand.u32 %v4541, 4294901760
  %4549 = vmatpush1.msra.mxu0 %v4548
  %4550 = vmatprep.subr.mxu0 0.0
  %v4551 = vand.u32 %v4542, 4294901760
  %4552 = vmatpush1.msra.mxu0 %v4551
  %4553 = vmatprep.subr.mxu0 0.0
  %v4554 = vand.u32 %v4543, 4294901760
  %4555 = vmatpush1.msra.mxu0 %v4554
  %4556 = vmatprep.subr.mxu0 0.0
  %4557 = vmatpush1.msra.mxu0 0.0
  %4558 = vmatprep.subr.mxu0 0.0
  %4559 = vmatpush1.msra.mxu0 0.0
  %4560 = vmatprep.subr.mxu0 0.0
  %4561 = vmatpush1.msra.mxu0 0.0
  %4562 = vmatprep.subr.mxu0 0.0
  %4563 = vmatpush1.msra.mxu0 0.0
  %4564 = vmatprep.subr.mxu0 0.0
  %4565 = vmatpush1.msra.mxu0 0.0
  %4566 = vmatprep.subr.mxu0 0.0
  %4567 = vmatpush1.msra.mxu0 0.0
  %4568 = vmatprep.subr.mxu0 0.0
  %4569 = vmatpush1.msra.mxu0 0.0
  %4570 = vmatprep.subr.mxu0 0.0
  %4571 = vmatpush1.msra.mxu0 0.0
  %4572 = vmatprep.subr.mxu0 0.0
  %4573 = vmatpush1.msra.mxu0 0.0
  %4574 = vmatprep.subr.mxu0 0.0
  %4575 = vmatpush1.msra.mxu0 0.0
  %4576 = vmatprep.subr.mxu0 0.0
  %4577 = vmatpush1.msra.mxu0 0.0
  %4578 = vmatprep.subr.mxu0 0.0
  %4579 = vmatpush1.msra.mxu0 0.0
  %4580 = vmatprep.subr.mxu0 0.0
  %4581 = vmatpush1.msra.mxu0 0.0
  %4582 = vmatprep.subr.mxu0 0.0
  %4583 = vmatpush1.msra.mxu0 0.0
  %4584 = vmatprep.subr.mxu0 0.0
  %4585 = vmatpush1.msra.mxu0 0.0
  %4586 = vmatprep.subr.mxu0 0.0
  %4587 = vmatpush1.msra.mxu0 0.0
  %4588 = vmatprep.subr.mxu0 0.0
  %4589 = vmatpush1.msra.mxu0 0.0
  %4590 = vmatprep.subr.mxu0 0.0
  %4591 = vmatpush1.msra.mxu0 0.0
  %4592 = vmatprep.subr.mxu0 0.0
  %4593 = vmatpush1.msra.mxu0 0.0
  %4594 = vmatprep.subr.mxu0 0.0
  %4595 = vmatpush1.msra.mxu0 0.0
  %4596 = vmatprep.subr.mxu0 0.0
  %4597 = vmatpush1.msra.mxu0 0.0
  %4598 = vmatprep.subr.mxu0 0.0
  %4599 = vmatpush1.msra.mxu0 0.0
  %4600 = vmatprep.subr.mxu0 0.0
  %4601 = vmatpush1.msra.mxu0 0.0
  %4602 = vmatprep.subr.mxu0 0.0
  %4603 = vmatpush1.msra.mxu0 0.0
  %4604 = vmatprep.subr.mxu0 0.0
  %4605 = vmatpush1.msra.mxu0 0.0
  %4606 = vmatprep.subr.mxu0 0.0
  %4607 = vmatpush1.msra.mxu0 0.0
  %4608 = vmatprep.subr.mxu0 0.0
  %4609 = vmatpush1.msra.mxu0 0.0
  %4610 = vmatprep.subr.mxu0 0.0
  %4611 = vmatpush1.msra.mxu0 0.0
  %4612 = vmatprep.mubr.f32.mxu0 0.0
  %v4613 = vand.u32 %v3403, 4294901760
  %v4614 = vsub.f32 %v3403, %v4613
  %v4615 = vand.u32 %v4614, 4294901760
  %v4616 = vsub.f32 %v4614, %v4615
  %v4617 = vand.u32 %v4616, 4294901760
  %4618 = vmatmul.mubr.f32.gmra.mrb[0].mxu0 %v4617
  %v4619 = vpop.f32.mrb[0].mxu0
  %v4620 = vadd.f32 0.0, %v4619
  %v4621 = vpop.f32.mrb[0].mxu0
  %4622 = vdwg.mxu0
  %4623 = vmatprep.subr.mxu0 0.0
  %v4624 = vand.u32 %v4540, 4294901760
  %v4625 = vsub.f32 %v4540, %v4624
  %v4626 = vand.u32 %v4625, 4294901760
  %v4627 = vsub.f32 %v4625, %v4626
  %v4628 = vand.u32 %v4627, 4294901760
  %4629 = vmatpush1.msra.mxu0 %v4628
  %4630 = vmatprep.subr.mxu0 0.0
  %v4631 = vand.u32 %v4541, 4294901760
  %v4632 = vsub.f32 %v4541, %v4631
  %v4633 = vand.u32 %v4632, 4294901760
  %v4634 = vsub.f32 %v4632, %v4633
  %v4635 = vand.u32 %v4634, 4294901760
  %4636 = vmatpush1.msra.mxu0 %v4635
  %4637 = vmatprep.subr.mxu0 0.0
  %v4638 = vand.u32 %v4542, 4294901760
  %v4639 = vsub.f32 %v4542, %v4638
  %v4640 = vand.u32 %v4639, 4294901760
  %v4641 = vsub.f32 %v4639, %v4640
  %v4642 = vand.u32 %v4641, 4294901760
  %4643 = vmatpush1.msra.mxu0 %v4642
  %4644 = vmatprep.subr.mxu0 0.0
  %v4645 = vand.u32 %v4543, 4294901760
  %v4646 = vsub.f32 %v4543, %v4645
  %v4647 = vand.u32 %v4646, 4294901760
  %v4648 = vsub.f32 %v4646, %v4647
  %v4649 = vand.u32 %v4648, 4294901760
  %4650 = vmatpush1.msra.mxu0 %v4649
  %4651 = vmatprep.subr.mxu0 0.0
  %4652 = vmatpush1.msra.mxu0 0.0
  %4653 = vmatprep.subr.mxu0 0.0
  %4654 = vmatpush1.msra.mxu0 0.0
  %4655 = vmatprep.subr.mxu0 0.0
  %4656 = vmatpush1.msra.mxu0 0.0
  %4657 = vmatprep.subr.mxu0 0.0
  %4658 = vmatpush1.msra.mxu0 0.0
  %4659 = vmatprep.subr.mxu0 0.0
  %4660 = vmatpush1.msra.mxu0 0.0
  %4661 = vmatprep.subr.mxu0 0.0
  %4662 = vmatpush1.msra.mxu0 0.0
  %4663 = vmatprep.subr.mxu0 0.0
  %4664 = vmatpush1.msra.mxu0 0.0
  %4665 = vmatprep.subr.mxu0 0.0
  %4666 = vmatpush1.msra.mxu0 0.0
  %4667 = vmatprep.subr.mxu0 0.0
  %4668 = vmatpush1.msra.mxu0 0.0
  %4669 = vmatprep.subr.mxu0 0.0
  %4670 = vmatpush1.msra.mxu0 0.0
  %4671 = vmatprep.subr.mxu0 0.0
  %4672 = vmatpush1.msra.mxu0 0.0
  %4673 = vmatprep.subr.mxu0 0.0
  %4674 = vmatpush1.msra.mxu0 0.0
  %4675 = vmatprep.subr.mxu0 0.0
  %4676 = vmatpush1.msra.mxu0 0.0
  %4677 = vmatprep.subr.mxu0 0.0
  %4678 = vmatpush1.msra.mxu0 0.0
  %4679 = vmatprep.subr.mxu0 0.0
  %4680 = vmatpush1.msra.mxu0 0.0
  %4681 = vmatprep.subr.mxu0 0.0
  %4682 = vmatpush1.msra.mxu0 0.0
  %4683 = vmatprep.subr.mxu0 0.0
  %4684 = vmatpush1.msra.mxu0 0.0
  %4685 = vmatprep.subr.mxu0 0.0
  %4686 = vmatpush1.msra.mxu0 0.0
  %4687 = vmatprep.subr.mxu0 0.0
  %4688 = vmatpush1.msra.mxu0 0.0
  %4689 = vmatprep.subr.mxu0 0.0
  %4690 = vmatpush1.msra.mxu0 0.0
  %4691 = vmatprep.subr.mxu0 0.0
  %4692 = vmatpush1.msra.mxu0 0.0
  %4693 = vmatprep.subr.mxu0 0.0
  %4694 = vmatpush1.msra.mxu0 0.0
  %4695 = vmatprep.subr.mxu0 0.0
  %4696 = vmatpush1.msra.mxu0 0.0
  %4697 = vmatprep.subr.mxu0 0.0
  %4698 = vmatpush1.msra.mxu0 0.0
  %4699 = vmatprep.subr.mxu0 0.0
  %4700 = vmatpush1.msra.mxu0 0.0
  %4701 = vmatprep.subr.mxu0 0.0
  %4702 = vmatpush1.msra.mxu0 0.0
  %4703 = vmatprep.subr.mxu0 0.0
  %4704 = vmatpush1.msra.mxu0 0.0
  %4705 = vmatprep.subr.mxu0 0.0
  %4706 = vmatpush1.msra.mxu0 0.0
  %4707 = vmatprep.mubr.f32.mxu0 0.0
  %v4708 = vand.u32 %v3403, 4294901760
  %4709 = vmatmul.mubr.f32.gmra.mrb[0].mxu0 %v4708
  %v4710 = vpop.f32.mrb[0].mxu0
  %v4711 = vadd.f32 %v4620, %v4710
  %v4712 = vpop.f32.mrb[0].mxu0
  %4713 = vdwg.mxu0
  %4714 = vmatprep.subr.mxu0 0.0
  %v4715 = vand.u32 %v4540, 4294901760
  %v4716 = vsub.f32 %v4540, %v4715
  %4717 = vmatpush1.msra.mxu0 %v4716
  %4718 = vmatprep.subr.mxu0 0.0
  %v4719 = vand.u32 %v4541, 4294901760
  %v4720 = vsub.f32 %v4541, %v4719
  %4721 = vmatpush1.msra.mxu0 %v4720
  %4722 = vmatprep.subr.mxu0 0.0
  %v4723 = vand.u32 %v4542, 4294901760
  %v4724 = vsub.f32 %v4542, %v4723
  %4725 = vmatpush1.msra.mxu0 %v4724
  %4726 = vmatprep.subr.mxu0 0.0
  %v4727 = vand.u32 %v4543, 4294901760
  %v4728 = vsub.f32 %v4543, %v4727
  %4729 = vmatpush1.msra.mxu0 %v4728
  %4730 = vmatprep.subr.mxu0 0.0
  %4731 = vmatpush1.msra.mxu0 0.0
  %4732 = vmatprep.subr.mxu0 0.0
  %4733 = vmatpush1.msra.mxu0 0.0
  %4734 = vmatprep.subr.mxu0 0.0
  %4735 = vmatpush1.msra.mxu0 0.0
  %4736 = vmatprep.subr.mxu0 0.0
  %4737 = vmatpush1.msra.mxu0 0.0
  %4738 = vmatprep.subr.mxu0 0.0
  %4739 = vmatpush1.msra.mxu0 0.0
  %4740 = vmatprep.subr.mxu0 0.0
  %4741 = vmatpush1.msra.mxu0 0.0
  %4742 = vmatprep.subr.mxu0 0.0
  %4743 = vmatpush1.msra.mxu0 0.0
  %4744 = vmatprep.subr.mxu0 0.0
  %4745 = vmatpush1.msra.mxu0 0.0
  %4746 = vmatprep.subr.mxu0 0.0
  %4747 = vmatpush1.msra.mxu0 0.0
  %4748 = vmatprep.subr.mxu0 0.0
  %4749 = vmatpush1.msra.mxu0 0.0
  %4750 = vmatprep.subr.mxu0 0.0
  %4751 = vmatpush1.msra.mxu0 0.0
  %4752 = vmatprep.subr.mxu0 0.0
  %4753 = vmatpush1.msra.mxu0 0.0
  %4754 = vmatprep.subr.mxu0 0.0
  %4755 = vmatpush1.msra.mxu0 0.0
  %4756 = vmatprep.subr.mxu0 0.0
  %4757 = vmatpush1.msra.mxu0 0.0
  %4758 = vmatprep.subr.mxu0 0.0
  %4759 = vmatpush1.msra.mxu0 0.0
  %4760 = vmatprep.subr.mxu0 0.0
  %4761 = vmatpush1.msra.mxu0 0.0
  %4762 = vmatprep.subr.mxu0 0.0
  %4763 = vmatpush1.msra.mxu0 0.0
  %4764 = vmatprep.subr.mxu0 0.0
  %4765 = vmatpush1.msra.mxu0 0.0
  %4766 = vmatprep.subr.mxu0 0.0
  %4767 = vmatpush1.msra.mxu0 0.0
  %4768 = vmatprep.subr.mxu0 0.0
  %4769 = vmatpush1.msra.mxu0 0.0
  %4770 = vmatprep.subr.mxu0 0.0
  %4771 = vmatpush1.msra.mxu0 0.0
  %4772 = vmatprep.subr.mxu0 0.0
  %4773 = vmatpush1.msra.mxu0 0.0
  %4774 = vmatprep.subr.mxu0 0.0
  %4775 = vmatpush1.msra.mxu0 0.0
  %4776 = vmatprep.subr.mxu0 0.0
  %4777 = vmatpush1.msra.mxu0 0.0
  %4778 = vmatprep.subr.mxu0 0.0
  %4779 = vmatpush1.msra.mxu0 0.0
  %4780 = vmatprep.subr.mxu0 0.0
  %4781 = vmatpush1.msra.mxu0 0.0
  %4782 = vmatprep.subr.mxu0 0.0
  %4783 = vmatpush1.msra.mxu0 0.0
  %4784 = vmatprep.subr.mxu0 0.0
  %4785 = vmatpush1.msra.mxu0 0.0
  %4786 = vmatprep.mubr.f32.mxu0 0.0
  %v4787 = vand.u32 %v3403, 4294901760
  %v4788 = vsub.f32 %v3403, %v4787
  %4789 = vmatmul.mubr.f32.gmra.mrb[0].mxu0 %v4788
  %v4790 = vpop.f32.mrb[0].mxu0
  %v4791 = vadd.f32 %v4711, %v4790
  %v4792 = vpop.f32.mrb[0].mxu0
  %4793 = vdwg.mxu0
  %4794 = vmatprep.subr.mxu0 0.0
  %v4795 = vand.u32 %v4540, 4294901760
  %4796 = vmatpush1.msra.mxu0 %v4795
  %4797 = vmatprep.subr.mxu0 0.0
  %v4798 = vand.u32 %v4541, 4294901760
  %4799 = vmatpush1.msra.mxu0 %v4798
  %4800 = vmatprep.subr.mxu0 0.0
  %v4801 = vand.u32 %v4542, 4294901760
  %4802 = vmatpush1.msra.mxu0 %v4801
  %4803 = vmatprep.subr.mxu0 0.0
  %v4804 = vand.u32 %v4543, 4294901760
  %4805 = vmatpush1.msra.mxu0 %v4804
  %4806 = vmatprep.subr.mxu0 0.0
  %4807 = vmatpush1.msra.mxu0 0.0
  %4808 = vmatprep.subr.mxu0 0.0
  %4809 = vmatpush1.msra.mxu0 0.0
  %4810 = vmatprep.subr.mxu0 0.0
  %4811 = vmatpush1.msra.mxu0 0.0
  %4812 = vmatprep.subr.mxu0 0.0
  %4813 = vmatpush1.msra.mxu0 0.0
  %4814 = vmatprep.subr.mxu0 0.0
  %4815 = vmatpush1.msra.mxu0 0.0
  %4816 = vmatprep.subr.mxu0 0.0
  %4817 = vmatpush1.msra.mxu0 0.0
  %4818 = vmatprep.subr.mxu0 0.0
  %4819 = vmatpush1.msra.mxu0 0.0
  %4820 = vmatprep.subr.mxu0 0.0
  %4821 = vmatpush1.msra.mxu0 0.0
  %4822 = vmatprep.subr.mxu0 0.0
  %4823 = vmatpush1.msra.mxu0 0.0
  %4824 = vmatprep.subr.mxu0 0.0
  %4825 = vmatpush1.msra.mxu0 0.0
  %4826 = vmatprep.subr.mxu0 0.0
  %4827 = vmatpush1.msra.mxu0 0.0
  %4828 = vmatprep.subr.mxu0 0.0
  %4829 = vmatpush1.msra.mxu0 0.0
  %4830 = vmatprep.subr.mxu0 0.0
  %4831 = vmatpush1.msra.mxu0 0.0
  %4832 = vmatprep.subr.mxu0 0.0
  %4833 = vmatpush1.msra.mxu0 0.0
  %4834 = vmatprep.subr.mxu0 0.0
  %4835 = vmatpush1.msra.mxu0 0.0
  %4836 = vmatprep.subr.mxu0 0.0
  %4837 = vmatpush1.msra.mxu0 0.0
  %4838 = vmatprep.subr.mxu0 0.0
  %4839 = vmatpush1.msra.mxu0 0.0
  %4840 = vmatprep.subr.mxu0 0.0
  %4841 = vmatpush1.msra.mxu0 0.0
  %4842 = vmatprep.subr.mxu0 0.0
  %4843 = vmatpush1.msra.mxu0 0.0
  %4844 = vmatprep.subr.mxu0 0.0
  %4845 = vmatpush1.msra.mxu0 0.0
  %4846 = vmatprep.subr.mxu0 0.0
  %4847 = vmatpush1.msra.mxu0 0.0
  %4848 = vmatprep.subr.mxu0 0.0
  %4849 = vmatpush1.msra.mxu0 0.0
  %4850 = vmatprep.subr.mxu0 0.0
  %4851 = vmatpush1.msra.mxu0 0.0
  %4852 = vmatprep.subr.mxu0 0.0
  %4853 = vmatpush1.msra.mxu0 0.0
  %4854 = vmatprep.subr.mxu0 0.0
  %4855 = vmatpush1.msra.mxu0 0.0
  %4856 = vmatprep.subr.mxu0 0.0
  %4857 = vmatpush1.msra.mxu0 0.0
  %4858 = vmatprep.subr.mxu0 0.0
  %4859 = vmatpush1.msra.mxu0 0.0
  %4860 = vmatprep.subr.mxu0 0.0
  %4861 = vmatpush1.msra.mxu0 0.0
  %4862 = vmatprep.mubr.f32.mxu0 0.0
  %v4863 = vand.u32 %v3403, 4294901760
  %v4864 = vsub.f32 %v3403, %v4863
  %v4865 = vand.u32 %v4864, 4294901760
  %4866 = vmatmul.mubr.f32.gmra.mrb[0].mxu0 %v4865
  %v4867 = vpop.f32.mrb[0].mxu0
  %v4868 = vadd.f32 %v4791, %v4867
  %v4869 = vpop.f32.mrb[0].mxu0
  %4870 = vdwg.mxu0
  %4871 = vmatprep.subr.mxu0 0.0
  %v4872 = vand.u32 %v4540, 4294901760
  %v4873 = vsub.f32 %v4540, %v4872
  %v4874 = vand.u32 %v4873, 4294901760
  %4875 = vmatpush1.msra.mxu0 %v4874
  %4876 = vmatprep.subr.mxu0 0.0
  %v4877 = vand.u32 %v4541, 4294901760
  %v4878 = vsub.f32 %v4541, %v4877
  %v4879 = vand.u32 %v4878, 4294901760
  %4880 = vmatpush1.msra.mxu0 %v4879
  %4881 = vmatprep.subr.mxu0 0.0
  %v4882 = vand.u32 %v4542, 4294901760
  %v4883 = vsub.f32 %v4542, %v4882
  %v4884 = vand.u32 %v4883, 4294901760
  %4885 = vmatpush1.msra.mxu0 %v4884
  %4886 = vmatprep.subr.mxu0 0.0
  %v4887 = vand.u32 %v4543, 4294901760
  %v4888 = vsub.f32 %v4543, %v4887
  %v4889 = vand.u32 %v4888, 4294901760
  %4890 = vmatpush1.msra.mxu0 %v4889
  %4891 = vmatprep.subr.mxu0 0.0
  %4892 = vmatpush1.msra.mxu0 0.0
  %4893 = vmatprep.subr.mxu0 0.0
  %4894 = vmatpush1.msra.mxu0 0.0
  %4895 = vmatprep.subr.mxu0 0.0
  %4896 = vmatpush1.msra.mxu0 0.0
  %4897 = vmatprep.subr.mxu0 0.0
  %4898 = vmatpush1.msra.mxu0 0.0
  %4899 = vmatprep.subr.mxu0 0.0
  %4900 = vmatpush1.msra.mxu0 0.0
  %4901 = vmatprep.subr.mxu0 0.0
  %4902 = vmatpush1.msra.mxu0 0.0
  %4903 = vmatprep.subr.mxu0 0.0
  %4904 = vmatpush1.msra.mxu0 0.0
  %4905 = vmatprep.subr.mxu0 0.0
  %4906 = vmatpush1.msra.mxu0 0.0
  %4907 = vmatprep.subr.mxu0 0.0
  %4908 = vmatpush1.msra.mxu0 0.0
  %4909 = vmatprep.subr.mxu0 0.0
  %4910 = vmatpush1.msra.mxu0 0.0
  %4911 = vmatprep.subr.mxu0 0.0
  %4912 = vmatpush1.msra.mxu0 0.0
  %4913 = vmatprep.subr.mxu0 0.0
  %4914 = vmatpush1.msra.mxu0 0.0
  %4915 = vmatprep.subr.mxu0 0.0
  %4916 = vmatpush1.msra.mxu0 0.0
  %4917 = vmatprep.subr.mxu0 0.0
  %4918 = vmatpush1.msra.mxu0 0.0
  %4919 = vmatprep.subr.mxu0 0.0
  %4920 = vmatpush1.msra.mxu0 0.0
  %4921 = vmatprep.subr.mxu0 0.0
  %4922 = vmatpush1.msra.mxu0 0.0
  %4923 = vmatprep.subr.mxu0 0.0
  %4924 = vmatpush1.msra.mxu0 0.0
  %4925 = vmatprep.subr.mxu0 0.0
  %4926 = vmatpush1.msra.mxu0 0.0
  %4927 = vmatprep.subr.mxu0 0.0
  %4928 = vmatpush1.msra.mxu0 0.0
  %4929 = vmatprep.subr.mxu0 0.0
  %4930 = vmatpush1.msra.mxu0 0.0
  %4931 = vmatprep.subr.mxu0 0.0
  %4932 = vmatpush1.msra.mxu0 0.0
  %4933 = vmatprep.subr.mxu0 0.0
  %4934 = vmatpush1.msra.mxu0 0.0
  %4935 = vmatprep.subr.mxu0 0.0
  %4936 = vmatpush1.msra.mxu0 0.0
  %4937 = vmatprep.subr.mxu0 0.0
  %4938 = vmatpush1.msra.mxu0 0.0
  %4939 = vmatprep.subr.mxu0 0.0
  %4940 = vmatpush1.msra.mxu0 0.0
  %4941 = vmatprep.subr.mxu0 0.0
  %4942 = vmatpush1.msra.mxu0 0.0
  %4943 = vmatprep.subr.mxu0 0.0
  %4944 = vmatpush1.msra.mxu0 0.0
  %4945 = vmatprep.subr.mxu0 0.0
  %4946 = vmatpush1.msra.mxu0 0.0
  %4947 = vmatprep.mubr.f32.mxu0 0.0
  %v4948 = vand.u32 %v3403, 4294901760
  %4949 = vmatmul.mubr.f32.gmra.mrb[0].mxu0 %v4948
  %v4950 = vpop.f32.mrb[0].mxu0
  %v4951 = vadd.f32 %v4868, %v4950
  %v4952 = vpop.f32.mrb[0].mxu0
  %4953 = vdwg.mxu0
  %4954 = vmatprep.subr.mxu0 0.0
  %v4955 = vand.u32 %v4540, 4294901760
  %4956 = vmatpush1.msra.mxu0 %v4955
  %4957 = vmatprep.subr.mxu0 0.0
  %v4958 = vand.u32 %v4541, 4294901760
  %4959 = vmatpush1.msra.mxu0 %v4958
  %4960 = vmatprep.subr.mxu0 0.0
  %v4961 = vand.u32 %v4542, 4294901760
  %4962 = vmatpush1.msra.mxu0 %v4961
  %4963 = vmatprep.subr.mxu0 0.0
  %v4964 = vand.u32 %v4543, 4294901760
  %4965 = vmatpush1.msra.mxu0 %v4964
  %4966 = vmatprep.subr.mxu0 0.0
  %4967 = vmatpush1.msra.mxu0 0.0
  %4968 = vmatprep.subr.mxu0 0.0
  %4969 = vmatpush1.msra.mxu0 0.0
  %4970 = vmatprep.subr.mxu0 0.0
  %4971 = vmatpush1.msra.mxu0 0.0
  %4972 = vmatprep.subr.mxu0 0.0
  %4973 = vmatpush1.msra.mxu0 0.0
  %4974 = vmatprep.subr.mxu0 0.0
  %4975 = vmatpush1.msra.mxu0 0.0
  %4976 = vmatprep.subr.mxu0 0.0
  %4977 = vmatpush1.msra.mxu0 0.0
  %4978 = vmatprep.subr.mxu0 0.0
  %4979 = vmatpush1.msra.mxu0 0.0
  %4980 = vmatprep.subr.mxu0 0.0
  %4981 = vmatpush1.msra.mxu0 0.0
  %4982 = vmatprep.subr.mxu0 0.0
  %4983 = vmatpush1.msra.mxu0 0.0
  %4984 = vmatprep.subr.mxu0 0.0
  %4985 = vmatpush1.msra.mxu0 0.0
  %4986 = vmatprep.subr.mxu0 0.0
  %4987 = vmatpush1.msra.mxu0 0.0
  %4988 = vmatprep.subr.mxu0 0.0
  %4989 = vmatpush1.msra.mxu0 0.0
  %4990 = vmatprep.subr.mxu0 0.0
  %4991 = vmatpush1.msra.mxu0 0.0
  %4992 = vmatprep.subr.mxu0 0.0
  %4993 = vmatpush1.msra.mxu0 0.0
  %4994 = vmatprep.subr.mxu0 0.0
  %4995 = vmatpush1.msra.mxu0 0.0
  %4996 = vmatprep.subr.mxu0 0.0
  %4997 = vmatpush1.msra.mxu0 0.0
  %4998 = vmatprep.subr.mxu0 0.0
  %4999 = vmatpush1.msra.mxu0 0.0
  %5000 = vmatprep.subr.mxu0 0.0
  %5001 = vmatpush1.msra.mxu0 0.0
  %5002 = vmatprep.subr.mxu0 0.0
  %5003 = vmatpush1.msra.mxu0 0.0
  %5004 = vmatprep.subr.mxu0 0.0
  %5005 = vmatpush1.msra.mxu0 0.0
  %5006 = vmatprep.subr.mxu0 0.0
  %5007 = vmatpush1.msra.mxu0 0.0
  %5008 = vmatprep.subr.mxu0 0.0
  %5009 = vmatpush1.msra.mxu0 0.0
  %5010 = vmatprep.subr.mxu0 0.0
  %5011 = vmatpush1.msra.mxu0 0.0
  %5012 = vmatprep.subr.mxu0 0.0
  %5013 = vmatpush1.msra.mxu0 0.0
  %5014 = vmatprep.subr.mxu0 0.0
  %5015 = vmatpush1.msra.mxu0 0.0
  %5016 = vmatprep.subr.mxu0 0.0
  %5017 = vmatpush1.msra.mxu0 0.0
  %5018 = vmatprep.subr.mxu0 0.0
  %5019 = vmatpush1.msra.mxu0 0.0
  %5020 = vmatprep.subr.mxu0 0.0
  %5021 = vmatpush1.msra.mxu0 0.0
  %5022 = vmatprep.mubr.f32.mxu0 0.0
  %v5023 = vand.u32 %v3403, 4294901760
  %5024 = vmatmul.mubr.f32.gmra.mrb[0].mxu0 %v5023
  %v5025 = vpop.f32.mrb[0].mxu0
  %v5026 = vadd.f32 %v4951, %v5025
  %v5027 = vpop.f32.mrb[0].mxu0
  %5028 = vdwg.mxu0
  %5029 = vmatprep.subr.mxu0 0.0
  %v5030 = vand.u32 %v42, 4294901760
  %5031 = vmatpush1.msra.mxu0 %v5030
  %5032 = vmatprep.subr.mxu0 0.0
  %v5033 = vand.u32 %v43, 4294901760
  %5034 = vmatpush1.msra.mxu0 %v5033
  %5035 = vmatprep.subr.mxu0 0.0
  %v5036 = vand.u32 %v44, 4294901760
  %5037 = vmatpush1.msra.mxu0 %v5036
  %5038 = vmatprep.subr.mxu0 0.0
  %v5039 = vand.u32 %v45, 4294901760
  %5040 = vmatpush1.msra.mxu0 %v5039
  %5041 = vmatprep.subr.mxu0 0.0
  %v5042 = vand.u32 %v46, 4294901760
  %5043 = vmatpush1.msra.mxu0 %v5042
  %5044 = vmatprep.subr.mxu0 0.0
  %v5045 = vand.u32 %v47, 4294901760
  %5046 = vmatpush1.msra.mxu0 %v5045
  %5047 = vmatprep.subr.mxu0 0.0
  %v5048 = vand.u32 %v48, 4294901760
  %5049 = vmatpush1.msra.mxu0 %v5048
  %5050 = vmatprep.subr.mxu0 0.0
  %v5051 = vand.u32 %v49, 4294901760
  %5052 = vmatpush1.msra.mxu0 %v5051
  %5053 = vmatprep.subr.mxu0 0.0
  %v5054 = vand.u32 %v50, 4294901760
  %5055 = vmatpush1.msra.mxu0 %v5054
  %5056 = vmatprep.subr.mxu0 0.0
  %v5057 = vand.u32 %v51, 4294901760
  %5058 = vmatpush1.msra.mxu0 %v5057
  %5059 = vmatprep.subr.mxu0 0.0
  %v5060 = vand.u32 %v52, 4294901760
  %5061 = vmatpush1.msra.mxu0 %v5060
  %5062 = vmatprep.subr.mxu0 0.0
  %v5063 = vand.u32 %v53, 4294901760
  %5064 = vmatpush1.msra.mxu0 %v5063
  %5065 = vmatprep.subr.mxu0 0.0
  %v5066 = vand.u32 %v54, 4294901760
  %5067 = vmatpush1.msra.mxu0 %v5066
  %5068 = vmatprep.subr.mxu0 0.0
  %v5069 = vand.u32 %v55, 4294901760
  %5070 = vmatpush1.msra.mxu0 %v5069
  %5071 = vmatprep.subr.mxu0 0.0
  %v5072 = vand.u32 %v56, 4294901760
  %5073 = vmatpush1.msra.mxu0 %v5072
  %5074 = vmatprep.subr.mxu0 0.0
  %v5075 = vand.u32 %v57, 4294901760
  %5076 = vmatpush1.msra.mxu0 %v5075
  %5077 = vmatprep.subr.mxu0 0.0
  %5078 = vmatpush1.msra.mxu0 0.0
  %5079 = vmatprep.subr.mxu0 0.0
  %5080 = vmatpush1.msra.mxu0 0.0
  %5081 = vmatprep.subr.mxu0 0.0
  %5082 = vmatpush1.msra.mxu0 0.0
  %5083 = vmatprep.subr.mxu0 0.0
  %5084 = vmatpush1.msra.mxu0 0.0
  %5085 = vmatprep.subr.mxu0 0.0
  %5086 = vmatpush1.msra.mxu0 0.0
  %5087 = vmatprep.subr.mxu0 0.0
  %5088 = vmatpush1.msra.mxu0 0.0
  %5089 = vmatprep.subr.mxu0 0.0
  %5090 = vmatpush1.msra.mxu0 0.0
  %5091 = vmatprep.subr.mxu0 0.0
  %5092 = vmatpush1.msra.mxu0 0.0
  %5093 = vmatprep.subr.mxu0 0.0
  %5094 = vmatpush1.msra.mxu0 0.0
  %5095 = vmatprep.subr.mxu0 0.0
  %5096 = vmatpush1.msra.mxu0 0.0
  %5097 = vmatprep.subr.mxu0 0.0
  %5098 = vmatpush1.msra.mxu0 0.0
  %5099 = vmatprep.subr.mxu0 0.0
  %5100 = vmatpush1.msra.mxu0 0.0
  %5101 = vmatprep.subr.mxu0 0.0
  %5102 = vmatpush1.msra.mxu0 0.0
  %5103 = vmatprep.subr.mxu0 0.0
  %5104 = vmatpush1.msra.mxu0 0.0
  %5105 = vmatprep.subr.mxu0 0.0
  %5106 = vmatpush1.msra.mxu0 0.0
  %5107 = vmatprep.subr.mxu0 0.0
  %5108 = vmatpush1.msra.mxu0 0.0
  %5109 = vmatprep.mubr.f32.mxu0 0.0
  %v5110 = vand.u32 %v5026, 4294901760
  %v5111 = vsub.f32 %v5026, %v5110
  %v5112 = vand.u32 %v5111, 4294901760
  %v5113 = vsub.f32 %v5111, %v5112
  %v5114 = vand.u32 %v5113, 4294901760
  %5115 = vmatmul.mubr.f32.gmra.mrb[0].mxu0 %v5114
  %v5116 = vpop.f32.mrb[0].mxu0
  %v5117 = vadd.f32 0.0, %v5116
  %v5118 = vpop.f32.mrb[0].mxu0
  %5119 = vdwg.mxu0
  %5120 = vmatprep.subr.mxu0 0.0
  %v5121 = vand.u32 %v42, 4294901760
  %v5122 = vsub.f32 %v42, %v5121
  %v5123 = vand.u32 %v5122, 4294901760
  %v5124 = vsub.f32 %v5122, %v5123
  %v5125 = vand.u32 %v5124, 4294901760
  %5126 = vmatpush1.msra.mxu0 %v5125
  %5127 = vmatprep.subr.mxu0 0.0
  %v5128 = vand.u32 %v43, 4294901760
  %v5129 = vsub.f32 %v43, %v5128
  %v5130 = vand.u32 %v5129, 4294901760
  %v5131 = vsub.f32 %v5129, %v5130
  %v5132 = vand.u32 %v5131, 4294901760
  %5133 = vmatpush1.msra.mxu0 %v5132
  %5134 = vmatprep.subr.mxu0 0.0
  %v5135 = vand.u32 %v44, 4294901760
  %v5136 = vsub.f32 %v44, %v5135
  %v5137 = vand.u32 %v5136, 4294901760
  %v5138 = vsub.f32 %v5136, %v5137
  %v5139 = vand.u32 %v5138, 4294901760
  %5140 = vmatpush1.msra.mxu0 %v5139
  %5141 = vmatprep.subr.mxu0 0.0
  %v5142 = vand.u32 %v45, 4294901760
  %v5143 = vsub.f32 %v45, %v5142
  %v5144 = vand.u32 %v5143, 4294901760
  %v5145 = vsub.f32 %v5143, %v5144
  %v5146 = vand.u32 %v5145, 4294901760
  %5147 = vmatpush1.msra.mxu0 %v5146
  %5148 = vmatprep.subr.mxu0 0.0
  %v5149 = vand.u32 %v46, 4294901760
  %v5150 = vsub.f32 %v46, %v5149
  %v5151 = vand.u32 %v5150, 4294901760
  %v5152 = vsub.f32 %v5150, %v5151
  %v5153 = vand.u32 %v5152, 4294901760
  %5154 = vmatpush1.msra.mxu0 %v5153
  %5155 = vmatprep.subr.mxu0 0.0
  %v5156 = vand.u32 %v47, 4294901760
  %v5157 = vsub.f32 %v47, %v5156
  %v5158 = vand.u32 %v5157, 4294901760
  %v5159 = vsub.f32 %v5157, %v5158
  %v5160 = vand.u32 %v5159, 4294901760
  %5161 = vmatpush1.msra.mxu0 %v5160
  %5162 = vmatprep.subr.mxu0 0.0
  %v5163 = vand.u32 %v48, 4294901760
  %v5164 = vsub.f32 %v48, %v5163
  %v5165 = vand.u32 %v5164, 4294901760
  %v5166 = vsub.f32 %v5164, %v5165
  %v5167 = vand.u32 %v5166, 4294901760
  %5168 = vmatpush1.msra.mxu0 %v5167
  %5169 = vmatprep.subr.mxu0 0.0
  %v5170 = vand.u32 %v49, 4294901760
  %v5171 = vsub.f32 %v49, %v5170
  %v5172 = vand.u32 %v5171, 4294901760
  %v5173 = vsub.f32 %v5171, %v5172
  %v5174 = vand.u32 %v5173, 4294901760
  %5175 = vmatpush1.msra.mxu0 %v5174
  %5176 = vmatprep.subr.mxu0 0.0
  %v5177 = vand.u32 %v50, 4294901760
  %v5178 = vsub.f32 %v50, %v5177
  %v5179 = vand.u32 %v5178, 4294901760
  %v5180 = vsub.f32 %v5178, %v5179
  %v5181 = vand.u32 %v5180, 4294901760
  %5182 = vmatpush1.msra.mxu0 %v5181
  %5183 = vmatprep.subr.mxu0 0.0
  %v5184 = vand.u32 %v51, 4294901760
  %v5185 = vsub.f32 %v51, %v5184
  %v5186 = vand.u32 %v5185, 4294901760
  %v5187 = vsub.f32 %v5185, %v5186
  %v5188 = vand.u32 %v5187, 4294901760
  %5189 = vmatpush1.msra.mxu0 %v5188
  %5190 = vmatprep.subr.mxu0 0.0
  %v5191 = vand.u32 %v52, 4294901760
  %v5192 = vsub.f32 %v52, %v5191
  %v5193 = vand.u32 %v5192, 4294901760
  %v5194 = vsub.f32 %v5192, %v5193
  %v5195 = vand.u32 %v5194, 4294901760
  %5196 = vmatpush1.msra.mxu0 %v5195
  %5197 = vmatprep.subr.mxu0 0.0
  %v5198 = vand.u32 %v53, 4294901760
  %v5199 = vsub.f32 %v53, %v5198
  %v5200 = vand.u32 %v5199, 4294901760
  %v5201 = vsub.f32 %v5199, %v5200
  %v5202 = vand.u32 %v5201, 4294901760
  %5203 = vmatpush1.msra.mxu0 %v5202
  %5204 = vmatprep.subr.mxu0 0.0
  %v5205 = vand.u32 %v54, 4294901760
  %v5206 = vsub.f32 %v54, %v5205
  %v5207 = vand.u32 %v5206, 4294901760
  %v5208 = vsub.f32 %v5206, %v5207
  %v5209 = vand.u32 %v5208, 4294901760
  %5210 = vmatpush1.msra.mxu0 %v5209
  %5211 = vmatprep.subr.mxu0 0.0
  %v5212 = vand.u32 %v55, 4294901760
  %v5213 = vsub.f32 %v55, %v5212
  %v5214 = vand.u32 %v5213, 4294901760
  %v5215 = vsub.f32 %v5213, %v5214
  %v5216 = vand.u32 %v5215, 4294901760
  %5217 = vmatpush1.msra.mxu0 %v5216
  %5218 = vmatprep.subr.mxu0 0.0
  %v5219 = vand.u32 %v56, 4294901760
  %v5220 = vsub.f32 %v56, %v5219
  %v5221 = vand.u32 %v5220, 4294901760
  %v5222 = vsub.f32 %v5220, %v5221
  %v5223 = vand.u32 %v5222, 4294901760
  %5224 = vmatpush1.msra.mxu0 %v5223
  %5225 = vmatprep.subr.mxu0 0.0
  %v5226 = vand.u32 %v57, 4294901760
  %v5227 = vsub.f32 %v57, %v5226
  %v5228 = vand.u32 %v5227, 4294901760
  %v5229 = vsub.f32 %v5227, %v5228
  %v5230 = vand.u32 %v5229, 4294901760
  %5231 = vmatpush1.msra.mxu0 %v5230
  %5232 = vmatprep.subr.mxu0 0.0
  %5233 = vmatpush1.msra.mxu0 0.0
  %5234 = vmatprep.subr.mxu0 0.0
  %5235 = vmatpush1.msra.mxu0 0.0
  %5236 = vmatprep.subr.mxu0 0.0
  %5237 = vmatpush1.msra.mxu0 0.0
  %5238 = vmatprep.subr.mxu0 0.0
  %5239 = vmatpush1.msra.mxu0 0.0
  %5240 = vmatprep.subr.mxu0 0.0
  %5241 = vmatpush1.msra.mxu0 0.0
  %5242 = vmatprep.subr.mxu0 0.0
  %5243 = vmatpush1.msra.mxu0 0.0
  %5244 = vmatprep.subr.mxu0 0.0
  %5245 = vmatpush1.msra.mxu0 0.0
  %5246 = vmatprep.subr.mxu0 0.0
  %5247 = vmatpush1.msra.mxu0 0.0
  %5248 = vmatprep.subr.mxu0 0.0
  %5249 = vmatpush1.msra.mxu0 0.0
  %5250 = vmatprep.subr.mxu0 0.0
  %5251 = vmatpush1.msra.mxu0 0.0
  %5252 = vmatprep.subr.mxu0 0.0
  %5253 = vmatpush1.msra.mxu0 0.0
  %5254 = vmatprep.subr.mxu0 0.0
  %5255 = vmatpush1.msra.mxu0 0.0
  %5256 = vmatprep.subr.mxu0 0.0
  %5257 = vmatpush1.msra.mxu0 0.0
  %5258 = vmatprep.subr.mxu0 0.0
  %5259 = vmatpush1.msra.mxu0 0.0
  %5260 = vmatprep.subr.mxu0 0.0
  %5261 = vmatpush1.msra.mxu0 0.0
  %5262 = vmatprep.subr.mxu0 0.0
  %5263 = vmatpush1.msra.mxu0 0.0
  %5264 = vmatprep.mubr.f32.mxu0 0.0
  %v5265 = vand.u32 %v5026, 4294901760
  %5266 = vmatmul.mubr.f32.gmra.mrb[0].mxu0 %v5265
  %v5267 = vpop.f32.mrb[0].mxu0
  %v5268 = vadd.f32 %v5117, %v5267
  %v5269 = vpop.f32.mrb[0].mxu0
  %5270 = vdwg.mxu0
  %5271 = vmatprep.subr.mxu0 0.0
  %v5272 = vand.u32 %v42, 4294901760
  %v5273 = vsub.f32 %v42, %v5272
  %5274 = vmatpush1.msra.mxu0 %v5273
  %5275 = vmatprep.subr.mxu0 0.0
  %v5276 = vand.u32 %v43, 4294901760
  %v5277 = vsub.f32 %v43, %v5276
  %5278 = vmatpush1.msra.mxu0 %v5277
  %5279 = vmatprep.subr.mxu0 0.0
  %v5280 = vand.u32 %v44, 4294901760
  %v5281 = vsub.f32 %v44, %v5280
  %5282 = vmatpush1.msra.mxu0 %v5281
  %5283 = vmatprep.subr.mxu0 0.0
  %v5284 = vand.u32 %v45, 4294901760
  %v5285 = vsub.f32 %v45, %v5284
  %5286 = vmatpush1.msra.mxu0 %v5285
  %5287 = vmatprep.subr.mxu0 0.0
  %v5288 = vand.u32 %v46, 4294901760
  %v5289 = vsub.f32 %v46, %v5288
  %5290 = vmatpush1.msra.mxu0 %v5289
  %5291 = vmatprep.subr.mxu0 0.0
  %v5292 = vand.u32 %v47, 4294901760
  %v5293 = vsub.f32 %v47, %v5292
  %5294 = vmatpush1.msra.mxu0 %v5293
  %5295 = vmatprep.subr.mxu0 0.0
  %v5296 = vand.u32 %v48, 4294901760
  %v5297 = vsub.f32 %v48, %v5296
  %5298 = vmatpush1.msra.mxu0 %v5297
  %5299 = vmatprep.subr.mxu0 0.0
  %v5300 = vand.u32 %v49, 4294901760
  %v5301 = vsub.f32 %v49, %v5300
  %5302 = vmatpush1.msra.mxu0 %v5301
  %5303 = vmatprep.subr.mxu0 0.0
  %v5304 = vand.u32 %v50, 4294901760
  %v5305 = vsub.f32 %v50, %v5304
  %5306 = vmatpush1.msra.mxu0 %v5305
  %5307 = vmatprep.subr.mxu0 0.0
  %v5308 = vand.u32 %v51, 4294901760
  %v5309 = vsub.f32 %v51, %v5308
  %5310 = vmatpush1.msra.mxu0 %v5309
  %5311 = vmatprep.subr.mxu0 0.0
  %v5312 = vand.u32 %v52, 4294901760
  %v5313 = vsub.f32 %v52, %v5312
  %5314 = vmatpush1.msra.mxu0 %v5313
  %5315 = vmatprep.subr.mxu0 0.0
  %v5316 = vand.u32 %v53, 4294901760
  %v5317 = vsub.f32 %v53, %v5316
  %5318 = vmatpush1.msra.mxu0 %v5317
  %5319 = vmatprep.subr.mxu0 0.0
  %v5320 = vand.u32 %v54, 4294901760
  %v5321 = vsub.f32 %v54, %v5320
  %5322 = vmatpush1.msra.mxu0 %v5321
  %5323 = vmatprep.subr.mxu0 0.0
  %v5324 = vand.u32 %v55, 4294901760
  %v5325 = vsub.f32 %v55, %v5324
  %5326 = vmatpush1.msra.mxu0 %v5325
  %5327 = vmatprep.subr.mxu0 0.0
  %v5328 = vand.u32 %v56, 4294901760
  %v5329 = vsub.f32 %v56, %v5328
  %5330 = vmatpush1.msra.mxu0 %v5329
  %5331 = vmatprep.subr.mxu0 0.0
  %v5332 = vand.u32 %v57, 4294901760
  %v5333 = vsub.f32 %v57, %v5332
  %5334 = vmatpush1.msra.mxu0 %v5333
  %5335 = vmatprep.subr.mxu0 0.0
  %5336 = vmatpush1.msra.mxu0 0.0
  %5337 = vmatprep.subr.mxu0 0.0
  %5338 = vmatpush1.msra.mxu0 0.0
  %5339 = vmatprep.subr.mxu0 0.0
  %5340 = vmatpush1.msra.mxu0 0.0
  %5341 = vmatprep.subr.mxu0 0.0
  %5342 = vmatpush1.msra.mxu0 0.0
  %5343 = vmatprep.subr.mxu0 0.0
  %5344 = vmatpush1.msra.mxu0 0.0
  %5345 = vmatprep.subr.mxu0 0.0
  %5346 = vmatpush1.msra.mxu0 0.0
  %5347 = vmatprep.subr.mxu0 0.0
  %5348 = vmatpush1.msra.mxu0 0.0
  %5349 = vmatprep.subr.mxu0 0.0
  %5350 = vmatpush1.msra.mxu0 0.0
  %5351 = vmatprep.subr.mxu0 0.0
  %5352 = vmatpush1.msra.mxu0 0.0
  %5353 = vmatprep.subr.mxu0 0.0
  %5354 = vmatpush1.msra.mxu0 0.0
  %5355 = vmatprep.subr.mxu0 0.0
  %5356 = vmatpush1.msra.mxu0 0.0
  %5357 = vmatprep.subr.mxu0 0.0
  %5358 = vmatpush1.msra.mxu0 0.0
  %5359 = vmatprep.subr.mxu0 0.0
  %5360 = vmatpush1.msra.mxu0 0.0
  %5361 = vmatprep.subr.mxu0 0.0
  %5362 = vmatpush1.msra.mxu0 0.0
  %5363 = vmatprep.subr.mxu0 0.0
  %5364 = vmatpush1.msra.mxu0 0.0
  %5365 = vmatprep.subr.mxu0 0.0
  %5366 = vmatpush1.msra.mxu0 0.0
  %5367 = vmatprep.mubr.f32.mxu0 0.0
  %v5368 = vand.u32 %v5026, 4294901760
  %v5369 = vsub.f32 %v5026, %v5368
  %5370 = vmatmul.mubr.f32.gmra.mrb[0].mxu0 %v5369
  %v5371 = vpop.f32.mrb[0].mxu0
  %v5372 = vadd.f32 %v5268, %v5371
  %v5373 = vpop.f32.mrb[0].mxu0
  %5374 = vdwg.mxu0
  %5375 = vmatprep.subr.mxu0 0.0
  %v5376 = vand.u32 %v42, 4294901760
  %5377 = vmatpush1.msra.mxu0 %v5376
  %5378 = vmatprep.subr.mxu0 0.0
  %v5379 = vand.u32 %v43, 4294901760
  %5380 = vmatpush1.msra.mxu0 %v5379
  %5381 = vmatprep.subr.mxu0 0.0
  %v5382 = vand.u32 %v44, 4294901760
  %5383 = vmatpush1.msra.mxu0 %v5382
  %5384 = vmatprep.subr.mxu0 0.0
  %v5385 = vand.u32 %v45, 4294901760
  %5386 = vmatpush1.msra.mxu0 %v5385
  %5387 = vmatprep.subr.mxu0 0.0
  %v5388 = vand.u32 %v46, 4294901760
  %5389 = vmatpush1.msra.mxu0 %v5388
  %5390 = vmatprep.subr.mxu0 0.0
  %v5391 = vand.u32 %v47, 4294901760
  %5392 = vmatpush1.msra.mxu0 %v5391
  %5393 = vmatprep.subr.mxu0 0.0
  %v5394 = vand.u32 %v48, 4294901760
  %5395 = vmatpush1.msra.mxu0 %v5394
  %5396 = vmatprep.subr.mxu0 0.0
  %v5397 = vand.u32 %v49, 4294901760
  %5398 = vmatpush1.msra.mxu0 %v5397
  %5399 = vmatprep.subr.mxu0 0.0
  %v5400 = vand.u32 %v50, 4294901760
  %5401 = vmatpush1.msra.mxu0 %v5400
  %5402 = vmatprep.subr.mxu0 0.0
  %v5403 = vand.u32 %v51, 4294901760
  %5404 = vmatpush1.msra.mxu0 %v5403
  %5405 = vmatprep.subr.mxu0 0.0
  %v5406 = vand.u32 %v52, 4294901760
  %5407 = vmatpush1.msra.mxu0 %v5406
  %5408 = vmatprep.subr.mxu0 0.0
  %v5409 = vand.u32 %v53, 4294901760
  %5410 = vmatpush1.msra.mxu0 %v5409
  %5411 = vmatprep.subr.mxu0 0.0
  %v5412 = vand.u32 %v54, 4294901760
  %5413 = vmatpush1.msra.mxu0 %v5412
  %5414 = vmatprep.subr.mxu0 0.0
  %v5415 = vand.u32 %v55, 4294901760
  %5416 = vmatpush1.msra.mxu0 %v5415
  %5417 = vmatprep.subr.mxu0 0.0
  %v5418 = vand.u32 %v56, 4294901760
  %5419 = vmatpush1.msra.mxu0 %v5418
  %5420 = vmatprep.subr.mxu0 0.0
  %v5421 = vand.u32 %v57, 4294901760
  %5422 = vmatpush1.msra.mxu0 %v5421
  %5423 = vmatprep.subr.mxu0 0.0
  %5424 = vmatpush1.msra.mxu0 0.0
  %5425 = vmatprep.subr.mxu0 0.0
  %5426 = vmatpush1.msra.mxu0 0.0
  %5427 = vmatprep.subr.mxu0 0.0
  %5428 = vmatpush1.msra.mxu0 0.0
  %5429 = vmatprep.subr.mxu0 0.0
  %5430 = vmatpush1.msra.mxu0 0.0
  %5431 = vmatprep.subr.mxu0 0.0
  %5432 = vmatpush1.msra.mxu0 0.0
  %5433 = vmatprep.subr.mxu0 0.0
  %5434 = vmatpush1.msra.mxu0 0.0
  %5435 = vmatprep.subr.mxu0 0.0
  %5436 = vmatpush1.msra.mxu0 0.0
  %5437 = vmatprep.subr.mxu0 0.0
  %5438 = vmatpush1.msra.mxu0 0.0
  %5439 = vmatprep.subr.mxu0 0.0
  %5440 = vmatpush1.msra.mxu0 0.0
  %5441 = vmatprep.subr.mxu0 0.0
  %5442 = vmatpush1.msra.mxu0 0.0
  %5443 = vmatprep.subr.mxu0 0.0
  %5444 = vmatpush1.msra.mxu0 0.0
  %5445 = vmatprep.subr.mxu0 0.0
  %5446 = vmatpush1.msra.mxu0 0.0
  %5447 = vmatprep.subr.mxu0 0.0
  %5448 = vmatpush1.msra.mxu0 0.0
  %5449 = vmatprep.subr.mxu0 0.0
  %5450 = vmatpush1.msra.mxu0 0.0
  %5451 = vmatprep.subr.mxu0 0.0
  %5452 = vmatpush1.msra.mxu0 0.0
  %5453 = vmatprep.subr.mxu0 0.0
  %5454 = vmatpush1.msra.mxu0 0.0
  %5455 = vmatprep.mubr.f32.mxu0 0.0
  %v5456 = vand.u32 %v5026, 4294901760
  %v5457 = vsub.f32 %v5026, %v5456
  %v5458 = vand.u32 %v5457, 4294901760
  %5459 = vmatmul.mubr.f32.gmra.mrb[0].mxu0 %v5458
  %v5460 = vpop.f32.mrb[0].mxu0
  %v5461 = vadd.f32 %v5372, %v5460
  %v5462 = vpop.f32.mrb[0].mxu0
  %5463 = vdwg.mxu0
  %5464 = vmatprep.subr.mxu0 0.0
  %v5465 = vand.u32 %v42, 4294901760
  %v5466 = vsub.f32 %v42, %v5465
  %v5467 = vand.u32 %v5466, 4294901760
  %5468 = vmatpush1.msra.mxu0 %v5467
  %5469 = vmatprep.subr.mxu0 0.0
  %v5470 = vand.u32 %v43, 4294901760
  %v5471 = vsub.f32 %v43, %v5470
  %v5472 = vand.u32 %v5471, 4294901760
  %5473 = vmatpush1.msra.mxu0 %v5472
  %5474 = vmatprep.subr.mxu0 0.0
  %v5475 = vand.u32 %v44, 4294901760
  %v5476 = vsub.f32 %v44, %v5475
  %v5477 = vand.u32 %v5476, 4294901760
  %5478 = vmatpush1.msra.mxu0 %v5477
  %5479 = vmatprep.subr.mxu0 0.0
  %v5480 = vand.u32 %v45, 4294901760
  %v5481 = vsub.f32 %v45, %v5480
  %v5482 = vand.u32 %v5481, 4294901760
  %5483 = vmatpush1.msra.mxu0 %v5482
  %5484 = vmatprep.subr.mxu0 0.0
  %v5485 = vand.u32 %v46, 4294901760
  %v5486 = vsub.f32 %v46, %v5485
  %v5487 = vand.u32 %v5486, 4294901760
  %5488 = vmatpush1.msra.mxu0 %v5487
  %5489 = vmatprep.subr.mxu0 0.0
  %v5490 = vand.u32 %v47, 4294901760
  %v5491 = vsub.f32 %v47, %v5490
  %v5492 = vand.u32 %v5491, 4294901760
  %5493 = vmatpush1.msra.mxu0 %v5492
  %5494 = vmatprep.subr.mxu0 0.0
  %v5495 = vand.u32 %v48, 4294901760
  %v5496 = vsub.f32 %v48, %v5495
  %v5497 = vand.u32 %v5496, 4294901760
  %5498 = vmatpush1.msra.mxu0 %v5497
  %5499 = vmatprep.subr.mxu0 0.0
  %v5500 = vand.u32 %v49, 4294901760
  %v5501 = vsub.f32 %v49, %v5500
  %v5502 = vand.u32 %v5501, 4294901760
  %5503 = vmatpush1.msra.mxu0 %v5502
  %5504 = vmatprep.subr.mxu0 0.0
  %v5505 = vand.u32 %v50, 4294901760
  %v5506 = vsub.f32 %v50, %v5505
  %v5507 = vand.u32 %v5506, 4294901760
  %5508 = vmatpush1.msra.mxu0 %v5507
  %5509 = vmatprep.subr.mxu0 0.0
  %v5510 = vand.u32 %v51, 4294901760
  %v5511 = vsub.f32 %v51, %v5510
  %v5512 = vand.u32 %v5511, 4294901760
  %5513 = vmatpush1.msra.mxu0 %v5512
  %5514 = vmatprep.subr.mxu0 0.0
  %v5515 = vand.u32 %v52, 4294901760
  %v5516 = vsub.f32 %v52, %v5515
  %v5517 = vand.u32 %v5516, 4294901760
  %5518 = vmatpush1.msra.mxu0 %v5517
  %5519 = vmatprep.subr.mxu0 0.0
  %v5520 = vand.u32 %v53, 4294901760
  %v5521 = vsub.f32 %v53, %v5520
  %v5522 = vand.u32 %v5521, 4294901760
  %5523 = vmatpush1.msra.mxu0 %v5522
  %5524 = vmatprep.subr.mxu0 0.0
  %v5525 = vand.u32 %v54, 4294901760
  %v5526 = vsub.f32 %v54, %v5525
  %v5527 = vand.u32 %v5526, 4294901760
  %5528 = vmatpush1.msra.mxu0 %v5527
  %5529 = vmatprep.subr.mxu0 0.0
  %v5530 = vand.u32 %v55, 4294901760
  %v5531 = vsub.f32 %v55, %v5530
  %v5532 = vand.u32 %v5531, 4294901760
  %5533 = vmatpush1.msra.mxu0 %v5532
  %5534 = vmatprep.subr.mxu0 0.0
  %v5535 = vand.u32 %v56, 4294901760
  %v5536 = vsub.f32 %v56, %v5535
  %v5537 = vand.u32 %v5536, 4294901760
  %5538 = vmatpush1.msra.mxu0 %v5537
  %5539 = vmatprep.subr.mxu0 0.0
  %v5540 = vand.u32 %v57, 4294901760
  %v5541 = vsub.f32 %v57, %v5540
  %v5542 = vand.u32 %v5541, 4294901760
  %5543 = vmatpush1.msra.mxu0 %v5542
  %5544 = vmatprep.subr.mxu0 0.0
  %5545 = vmatpush1.msra.mxu0 0.0
  %5546 = vmatprep.subr.mxu0 0.0
  %5547 = vmatpush1.msra.mxu0 0.0
  %5548 = vmatprep.subr.mxu0 0.0
  %5549 = vmatpush1.msra.mxu0 0.0
  %5550 = vmatprep.subr.mxu0 0.0
  %5551 = vmatpush1.msra.mxu0 0.0
  %5552 = vmatprep.subr.mxu0 0.0
  %5553 = vmatpush1.msra.mxu0 0.0
  %5554 = vmatprep.subr.mxu0 0.0
  %5555 = vmatpush1.msra.mxu0 0.0
  %5556 = vmatprep.subr.mxu0 0.0
  %5557 = vmatpush1.msra.mxu0 0.0
  %5558 = vmatprep.subr.mxu0 0.0
  %5559 = vmatpush1.msra.mxu0 0.0
  %5560 = vmatprep.subr.mxu0 0.0
  %5561 = vmatpush1.msra.mxu0 0.0
  %5562 = vmatprep.subr.mxu0 0.0
  %5563 = vmatpush1.msra.mxu0 0.0
  %5564 = vmatprep.subr.mxu0 0.0
  %5565 = vmatpush1.msra.mxu0 0.0
  %5566 = vmatprep.subr.mxu0 0.0
  %5567 = vmatpush1.msra.mxu0 0.0
  %5568 = vmatprep.subr.mxu0 0.0
  %5569 = vmatpush1.msra.mxu0 0.0
  %5570 = vmatprep.subr.mxu0 0.0
  %5571 = vmatpush1.msra.mxu0 0.0
  %5572 = vmatprep.subr.mxu0 0.0
  %5573 = vmatpush1.msra.mxu0 0.0
  %5574 = vmatprep.subr.mxu0 0.0
  %5575 = vmatpush1.msra.mxu0 0.0
  %5576 = vmatprep.mubr.f32.mxu0 0.0
  %v5577 = vand.u32 %v5026, 4294901760
  %5578 = vmatmul.mubr.f32.gmra.mrb[0].mxu0 %v5577
  %v5579 = vpop.f32.mrb[0].mxu0
  %v5580 = vadd.f32 %v5461, %v5579
  %v5581 = vpop.f32.mrb[0].mxu0
  %5582 = vdwg.mxu0
  %5583 = vmatprep.subr.mxu0 0.0
  %v5584 = vand.u32 %v42, 4294901760
  %5585 = vmatpush1.msra.mxu0 %v5584
  %5586 = vmatprep.subr.mxu0 0.0
  %v5587 = vand.u32 %v43, 4294901760
  %5588 = vmatpush1.msra.mxu0 %v5587
  %5589 = vmatprep.subr.mxu0 0.0
  %v5590 = vand.u32 %v44, 4294901760
  %5591 = vmatpush1.msra.mxu0 %v5590
  %5592 = vmatprep.subr.mxu0 0.0
  %v5593 = vand.u32 %v45, 4294901760
  %5594 = vmatpush1.msra.mxu0 %v5593
  %5595 = vmatprep.subr.mxu0 0.0
  %v5596 = vand.u32 %v46, 4294901760
  %5597 = vmatpush1.msra.mxu0 %v5596
  %5598 = vmatprep.subr.mxu0 0.0
  %v5599 = vand.u32 %v47, 4294901760
  %5600 = vmatpush1.msra.mxu0 %v5599
  %5601 = vmatprep.subr.mxu0 0.0
  %v5602 = vand.u32 %v48, 4294901760
  %5603 = vmatpush1.msra.mxu0 %v5602
  %5604 = vmatprep.subr.mxu0 0.0
  %v5605 = vand.u32 %v49, 4294901760
  %5606 = vmatpush1.msra.mxu0 %v5605
  %5607 = vmatprep.subr.mxu0 0.0
  %v5608 = vand.u32 %v50, 4294901760
  %5609 = vmatpush1.msra.mxu0 %v5608
  %5610 = vmatprep.subr.mxu0 0.0
  %v5611 = vand.u32 %v51, 4294901760
  %5612 = vmatpush1.msra.mxu0 %v5611
  %5613 = vmatprep.subr.mxu0 0.0
  %v5614 = vand.u32 %v52, 4294901760
  %5615 = vmatpush1.msra.mxu0 %v5614
  %5616 = vmatprep.subr.mxu0 0.0
  %v5617 = vand.u32 %v53, 4294901760
  %5618 = vmatpush1.msra.mxu0 %v5617
  %5619 = vmatprep.subr.mxu0 0.0
  %v5620 = vand.u32 %v54, 4294901760
  %5621 = vmatpush1.msra.mxu0 %v5620
  %5622 = vmatprep.subr.mxu0 0.0
  %v5623 = vand.u32 %v55, 4294901760
  %5624 = vmatpush1.msra.mxu0 %v5623
  %5625 = vmatprep.subr.mxu0 0.0
  %v5626 = vand.u32 %v56, 4294901760
  %5627 = vmatpush1.msra.mxu0 %v5626
  %5628 = vmatprep.subr.mxu0 0.0
  %v5629 = vand.u32 %v57, 4294901760
  %5630 = vmatpush1.msra.mxu0 %v5629
  %5631 = vmatprep.subr.mxu0 0.0
  %5632 = vmatpush1.msra.mxu0 0.0
  %5633 = vmatprep.subr.mxu0 0.0
  %5634 = vmatpush1.msra.mxu0 0.0
  %5635 = vmatprep.subr.mxu0 0.0
  %5636 = vmatpush1.msra.mxu0 0.0
  %5637 = vmatprep.subr.mxu0 0.0
  %5638 = vmatpush1.msra.mxu0 0.0
  %5639 = vmatprep.subr.mxu0 0.0
  %5640 = vmatpush1.msra.mxu0 0.0
  %5641 = vmatprep.subr.mxu0 0.0
  %5642 = vmatpush1.msra.mxu0 0.0
  %5643 = vmatprep.subr.mxu0 0.0
  %5644 = vmatpush1.msra.mxu0 0.0
  %5645 = vmatprep.subr.mxu0 0.0
  %5646 = vmatpush1.msra.mxu0 0.0
  %5647 = vmatprep.subr.mxu0 0.0
  %5648 = vmatpush1.msra.mxu0 0.0
  %5649 = vmatprep.subr.mxu0 0.0
  %5650 = vmatpush1.msra.mxu0 0.0
  %5651 = vmatprep.subr.mxu0 0.0
  %5652 = vmatpush1.msra.mxu0 0.0
  %5653 = vmatprep.subr.mxu0 0.0
  %5654 = vmatpush1.msra.mxu0 0.0
  %5655 = vmatprep.subr.mxu0 0.0
  %5656 = vmatpush1.msra.mxu0 0.0
  %5657 = vmatprep.subr.mxu0 0.0
  %5658 = vmatpush1.msra.mxu0 0.0
  %5659 = vmatprep.subr.mxu0 0.0
  %5660 = vmatpush1.msra.mxu0 0.0
  %5661 = vmatprep.subr.mxu0 0.0
  %5662 = vmatpush1.msra.mxu0 0.0
  %5663 = vmatprep.mubr.f32.mxu0 0.0
  %v5664 = vand.u32 %v5026, 4294901760
  %5665 = vmatmul.mubr.f32.gmra.mrb[0].mxu0 %v5664
  %v5666 = vpop.f32.mrb[0].mxu0
  %v5667 = vadd.f32 %v5580, %v5666
  %v5668 = vpop.f32.mrb[0].mxu0
  %5669 = vdwg.mxu0
  %v5670 = vmul.f32 %v5667, 0.001953125
  %v5671 = vadd.f32 %v5670, 1e-05
  %v5672 = vrsqrt.pop %v5671
  %v5673 = vmul.f32 %v5672, %v3400
  %v5674 = vlaneseq
  %v5675 = vshrl.u32 %v5674, 7
  %v5676 = vsub.s32 0, %v5675
  %v5677 = vrot.slane %v5673, %v5676
  %v5678 = vmul.f32 %v4536, %v5677
  %v5679 = vmul.f32 %v4537, %v5677
  %v5680 = vmul.f32 %v4538, %v5677
  %v5681 = vmul.f32 %v4539, %v5677
  %v5683 = vlaneseq
  %v5684 = vshrl.u32 %v5683, 7
  %v5685 = vsub.s32 0, %v5684
  %v5686 = vrot.slane %v3401, %v5685
  %v5688 = vadd.f32 %v5678, %v5686
  %v5689 = vadd.f32 %v5679, %v5686
  %v5690 = vadd.f32 %v5680, %v5686
  %v5691 = vadd.f32 %v5681, %v5686
  %v5692 = vld [vmem:[%s7] sm:$0x1]
  %s5693 = scalar_lea.vmem %s6, 128
  %v5694 = vld [vmem:[%s5693] sm:$0xff]
  %v5695 = vld [vmem:[%s5693 + $0x8] sm:$0xff]
  %v5696 = vld [vmem:[%s5693 + $0x10] sm:$0xff]
  %v5697 = vld [vmem:[%s5693 + $0x18] sm:$0xff]
  %v5698 = vld [vmem:[%s5693 + $0x20] sm:$0xff]
  %v5699 = vld [vmem:[%s5693 + $0x28] sm:$0xff]
  %v5700 = vld [vmem:[%s5693 + $0x30] sm:$0xff]
  %v5701 = vld [vmem:[%s5693 + $0x38] sm:$0xff]
  %v5702 = vld [vmem:[%s5693 + $0x40] sm:$0xff]
  %v5703 = vld [vmem:[%s5693 + $0x48] sm:$0xff]
  %v5704 = vld [vmem:[%s5693 + $0x50] sm:$0xff]
  %v5705 = vld [vmem:[%s5693 + $0x58] sm:$0xff]
  %v5706 = vld [vmem:[%s5693 + $0x60] sm:$0xff]
  %v5707 = vld [vmem:[%s5693 + $0x68] sm:$0xff]
  %v5708 = vld [vmem:[%s5693 + $0x70] sm:$0xff]
  %v5709 = vld [vmem:[%s5693 + $0x78] sm:$0xff]
  %5710 = vmatprep.subr.mxu0 0.0
  %v5711 = vand.u32 %v5688, 4294901760
  %5712 = vmatpush1.msra.mxu0 %v5711
  %5713 = vmatprep.subr.mxu0 0.0
  %v5714 = vand.u32 %v5689, 4294901760
  %5715 = vmatpush1.msra.mxu0 %v5714
  %5716 = vmatprep.subr.mxu0 0.0
  %v5717 = vand.u32 %v5690, 4294901760
  %5718 = vmatpush1.msra.mxu0 %v5717
  %5719 = vmatprep.subr.mxu0 0.0
  %v5720 = vand.u32 %v5691, 4294901760
  %5721 = vmatpush1.msra.mxu0 %v5720
  %5722 = vmatprep.subr.mxu0 0.0
  %5723 = vmatpush1.msra.mxu0 0.0
  %5724 = vmatprep.subr.mxu0 0.0
  %5725 = vmatpush1.msra.mxu0 0.0
  %5726 = vmatprep.subr.mxu0 0.0
  %5727 = vmatpush1.msra.mxu0 0.0
  %5728 = vmatprep.subr.mxu0 0.0
  %5729 = vmatpush1.msra.mxu0 0.0
  %5730 = vmatprep.subr.mxu0 0.0
  %5731 = vmatpush1.msra.mxu0 0.0
  %5732 = vmatprep.subr.mxu0 0.0
  %5733 = vmatpush1.msra.mxu0 0.0
  %5734 = vmatprep.subr.mxu0 0.0
  %5735 = vmatpush1.msra.mxu0 0.0
  %5736 = vmatprep.subr.mxu0 0.0
  %5737 = vmatpush1.msra.mxu0 0.0
  %5738 = vmatprep.subr.mxu0 0.0
  %5739 = vmatpush1.msra.mxu0 0.0
  %5740 = vmatprep.subr.mxu0 0.0
  %5741 = vmatpush1.msra.mxu0 0.0
  %5742 = vmatprep.subr.mxu0 0.0
  %5743 = vmatpush1.msra.mxu0 0.0
  %5744 = vmatprep.subr.mxu0 0.0
  %5745 = vmatpush1.msra.mxu0 0.0
  %5746 = vmatprep.subr.mxu0 0.0
  %5747 = vmatpush1.msra.mxu0 0.0
  %5748 = vmatprep.subr.mxu0 0.0
  %5749 = vmatpush1.msra.mxu0 0.0
  %5750 = vmatprep.subr.mxu0 0.0
  %5751 = vmatpush1.msra.mxu0 0.0
  %5752 = vmatprep.subr.mxu0 0.0
  %5753 = vmatpush1.msra.mxu0 0.0
  %5754 = vmatprep.subr.mxu0 0.0
  %5755 = vmatpush1.msra.mxu0 0.0
  %5756 = vmatprep.subr.mxu0 0.0
  %5757 = vmatpush1.msra.mxu0 0.0
  %5758 = vmatprep.subr.mxu0 0.0
  %5759 = vmatpush1.msra.mxu0 0.0
  %5760 = vmatprep.subr.mxu0 0.0
  %5761 = vmatpush1.msra.mxu0 0.0
  %5762 = vmatprep.subr.mxu0 0.0
  %5763 = vmatpush1.msra.mxu0 0.0
  %5764 = vmatprep.subr.mxu0 0.0
  %5765 = vmatpush1.msra.mxu0 0.0
  %5766 = vmatprep.subr.mxu0 0.0
  %5767 = vmatpush1.msra.mxu0 0.0
  %5768 = vmatprep.subr.mxu0 0.0
  %5769 = vmatpush1.msra.mxu0 0.0
  %5770 = vmatprep.subr.mxu0 0.0
  %5771 = vmatpush1.msra.mxu0 0.0
  %5772 = vmatprep.subr.mxu0 0.0
  %5773 = vmatpush1.msra.mxu0 0.0
  %5774 = vmatprep.subr.mxu0 0.0
  %5775 = vmatpush1.msra.mxu0 0.0
  %5776 = vmatprep.subr.mxu0 0.0
  %5777 = vmatpush1.msra.mxu0 0.0
  %5778 = vmatprep.mubr.f32.mxu0 0.0
  %v5779 = vand.u32 %v74, 4294901760
  %v5780 = vsub.f32 %v74, %v5779
  %v5781 = vand.u32 %v5780, 4294901760
  %v5782 = vsub.f32 %v5780, %v5781
  %v5783 = vand.u32 %v5782, 4294901760
  %5784 = vmatmul.mubr.f32.gmra.mrb[0].mxu0 %v5783
  %v5785 = vpop.f32.mrb[0].mxu0
  %v5786 = vadd.f32 0.0, %v5785
  %v5787 = vpop.f32.mrb[0].mxu0
  %5788 = vmatprep.mubr.f32.mxu0 0.0
  %v5789 = vand.u32 %v77, 4294901760
  %v5790 = vsub.f32 %v77, %v5789
  %v5791 = vand.u32 %v5790, 4294901760
  %v5792 = vsub.f32 %v5790, %v5791
  %v5793 = vand.u32 %v5792, 4294901760
  %5794 = vmatmul.mubr.f32.gmra.mrb[0].mxu0 %v5793
  %v5795 = vpop.f32.mrb[0].mxu0
  %v5796 = vadd.f32 0.0, %v5795
  %v5797 = vpop.f32.mrb[0].mxu0
  %5798 = vmatprep.mubr.f32.mxu0 0.0
  %v5799 = vand.u32 %v80, 4294901760
  %v5800 = vsub.f32 %v80, %v5799
  %v5801 = vand.u32 %v5800, 4294901760
  %v5802 = vsub.f32 %v5800, %v5801
  %v5803 = vand.u32 %v5802, 4294901760
  %5804 = vmatmul.mubr.f32.gmra.mrb[0].mxu0 %v5803
  %v5805 = vpop.f32.mrb[0].mxu0
  %v5806 = vadd.f32 0.0, %v5805
  %v5807 = vpop.f32.mrb[0].mxu0
  %5808 = vmatprep.mubr.f32.mxu0 0.0
  %v5809 = vand.u32 %v83, 4294901760
  %v5810 = vsub.f32 %v83, %v5809
  %v5811 = vand.u32 %v5810, 4294901760
  %v5812 = vsub.f32 %v5810, %v5811
  %v5813 = vand.u32 %v5812, 4294901760
  %5814 = vmatmul.mubr.f32.gmra.mrb[0].mxu0 %v5813
  %v5815 = vpop.f32.mrb[0].mxu0
  %v5816 = vadd.f32 0.0, %v5815
  %v5817 = vpop.f32.mrb[0].mxu0
  %5818 = vdwg.mxu0
  %5819 = vmatprep.subr.mxu0 0.0
  %v5820 = vand.u32 %v5688, 4294901760
  %v5821 = vsub.f32 %v5688, %v5820
  %v5822 = vand.u32 %v5821, 4294901760
  %v5823 = vsub.f32 %v5821, %v5822
  %v5824 = vand.u32 %v5823, 4294901760
  %5825 = vmatpush1.msra.mxu0 %v5824
  %5826 = vmatprep.subr.mxu0 0.0
  %v5827 = vand.u32 %v5689, 4294901760
  %v5828 = vsub.f32 %v5689, %v5827
  %v5829 = vand.u32 %v5828, 4294901760
  %v5830 = vsub.f32 %v5828, %v5829
  %v5831 = vand.u32 %v5830, 4294901760
  %5832 = vmatpush1.msra.mxu0 %v5831
  %5833 = vmatprep.subr.mxu0 0.0
  %v5834 = vand.u32 %v5690, 4294901760
  %v5835 = vsub.f32 %v5690, %v5834
  %v5836 = vand.u32 %v5835, 4294901760
  %v5837 = vsub.f32 %v5835, %v5836
  %v5838 = vand.u32 %v5837, 4294901760
  %5839 = vmatpush1.msra.mxu0 %v5838
  %5840 = vmatprep.subr.mxu0 0.0
  %v5841 = vand.u32 %v5691, 4294901760
  %v5842 = vsub.f32 %v5691, %v5841
  %v5843 = vand.u32 %v5842, 4294901760
  %v5844 = vsub.f32 %v5842, %v5843
  %v5845 = vand.u32 %v5844, 4294901760
  %5846 = vmatpush1.msra.mxu0 %v5845
  %5847 = vmatprep.subr.mxu0 0.0
  %5848 = vmatpush1.msra.mxu0 0.0
  %5849 = vmatprep.subr.mxu0 0.0
  %5850 = vmatpush1.msra.mxu0 0.0
  %5851 = vmatprep.subr.mxu0 0.0
  %5852 = vmatpush1.msra.mxu0 0.0
  %5853 = vmatprep.subr.mxu0 0.0
  %5854 = vmatpush1.msra.mxu0 0.0
  %5855 = vmatprep.subr.mxu0 0.0
  %5856 = vmatpush1.msra.mxu0 0.0
  %5857 = vmatprep.subr.mxu0 0.0
  %5858 = vmatpush1.msra.mxu0 0.0
  %5859 = vmatprep.subr.mxu0 0.0
  %5860 = vmatpush1.msra.mxu0 0.0
  %5861 = vmatprep.subr.mxu0 0.0
  %5862 = vmatpush1.msra.mxu0 0.0
  %5863 = vmatprep.subr.mxu0 0.0
  %5864 = vmatpush1.msra.mxu0 0.0
  %5865 = vmatprep.subr.mxu0 0.0
  %5866 = vmatpush1.msra.mxu0 0.0
  %5867 = vmatprep.subr.mxu0 0.0
  %5868 = vmatpush1.msra.mxu0 0.0
  %5869 = vmatprep.subr.mxu0 0.0
  %5870 = vmatpush1.msra.mxu0 0.0
  %5871 = vmatprep.subr.mxu0 0.0
  %5872 = vmatpush1.msra.mxu0 0.0
  %5873 = vmatprep.subr.mxu0 0.0
  %5874 = vmatpush1.msra.mxu0 0.0
  %5875 = vmatprep.subr.mxu0 0.0
  %5876 = vmatpush1.msra.mxu0 0.0
  %5877 = vmatprep.subr.mxu0 0.0
  %5878 = vmatpush1.msra.mxu0 0.0
  %5879 = vmatprep.subr.mxu0 0.0
  %5880 = vmatpush1.msra.mxu0 0.0
  %5881 = vmatprep.subr.mxu0 0.0
  %5882 = vmatpush1.msra.mxu0 0.0
  %5883 = vmatprep.subr.mxu0 0.0
  %5884 = vmatpush1.msra.mxu0 0.0
  %5885 = vmatprep.subr.mxu0 0.0
  %5886 = vmatpush1.msra.mxu0 0.0
  %5887 = vmatprep.subr.mxu0 0.0
  %5888 = vmatpush1.msra.mxu0 0.0
  %5889 = vmatprep.subr.mxu0 0.0
  %5890 = vmatpush1.msra.mxu0 0.0
  %5891 = vmatprep.subr.mxu0 0.0
  %5892 = vmatpush1.msra.mxu0 0.0
  %5893 = vmatprep.subr.mxu0 0.0
  %5894 = vmatpush1.msra.mxu0 0.0
  %5895 = vmatprep.subr.mxu0 0.0
  %5896 = vmatpush1.msra.mxu0 0.0
  %5897 = vmatprep.subr.mxu0 0.0
  %5898 = vmatpush1.msra.mxu0 0.0
  %5899 = vmatprep.subr.mxu0 0.0
  %5900 = vmatpush1.msra.mxu0 0.0
  %5901 = vmatprep.subr.mxu0 0.0
  %5902 = vmatpush1.msra.mxu0 0.0
  %5903 = vmatprep.mubr.f32.mxu0 0.0
  %v5904 = vand.u32 %v74, 4294901760
  %5905 = vmatmul.mubr.f32.gmra.mrb[0].mxu0 %v5904
  %v5906 = vpop.f32.mrb[0].mxu0
  %v5907 = vadd.f32 %v5786, %v5906
  %v5908 = vpop.f32.mrb[0].mxu0
  %5909 = vmatprep.mubr.f32.mxu0 0.0
  %v5910 = vand.u32 %v77, 4294901760
  %5911 = vmatmul.mubr.f32.gmra.mrb[0].mxu0 %v5910
  %v5912 = vpop.f32.mrb[0].mxu0
  %v5913 = vadd.f32 %v5796, %v5912
  %v5914 = vpop.f32.mrb[0].mxu0
  %5915 = vmatprep.mubr.f32.mxu0 0.0
  %v5916 = vand.u32 %v80, 4294901760
  %5917 = vmatmul.mubr.f32.gmra.mrb[0].mxu0 %v5916
  %v5918 = vpop.f32.mrb[0].mxu0
  %v5919 = vadd.f32 %v5806, %v5918
  %v5920 = vpop.f32.mrb[0].mxu0
  %5921 = vmatprep.mubr.f32.mxu0 0.0
  %v5922 = vand.u32 %v83, 4294901760
  %5923 = vmatmul.mubr.f32.gmra.mrb[0].mxu0 %v5922
  %v5924 = vpop.f32.mrb[0].mxu0
  %v5925 = vadd.f32 %v5816, %v5924
  %v5926 = vpop.f32.mrb[0].mxu0
  %5927 = vdwg.mxu0
  %5928 = vmatprep.subr.mxu0 0.0
  %v5929 = vand.u32 %v5688, 4294901760
  %v5930 = vsub.f32 %v5688, %v5929
  %5931 = vmatpush1.msra.mxu0 %v5930
  %5932 = vmatprep.subr.mxu0 0.0
  %v5933 = vand.u32 %v5689, 4294901760
  %v5934 = vsub.f32 %v5689, %v5933
  %5935 = vmatpush1.msra.mxu0 %v5934
  %5936 = vmatprep.subr.mxu0 0.0
  %v5937 = vand.u32 %v5690, 4294901760
  %v5938 = vsub.f32 %v5690, %v5937
  %5939 = vmatpush1.msra.mxu0 %v5938
  %5940 = vmatprep.subr.mxu0 0.0
  %v5941 = vand.u32 %v5691, 4294901760
  %v5942 = vsub.f32 %v5691, %v5941
  %5943 = vmatpush1.msra.mxu0 %v5942
  %5944 = vmatprep.subr.mxu0 0.0
  %5945 = vmatpush1.msra.mxu0 0.0
  %5946 = vmatprep.subr.mxu0 0.0
  %5947 = vmatpush1.msra.mxu0 0.0
  %5948 = vmatprep.subr.mxu0 0.0
  %5949 = vmatpush1.msra.mxu0 0.0
  %5950 = vmatprep.subr.mxu0 0.0
  %5951 = vmatpush1.msra.mxu0 0.0
  %5952 = vmatprep.subr.mxu0 0.0
  %5953 = vmatpush1.msra.mxu0 0.0
  %5954 = vmatprep.subr.mxu0 0.0
  %5955 = vmatpush1.msra.mxu0 0.0
  %5956 = vmatprep.subr.mxu0 0.0
  %5957 = vmatpush1.msra.mxu0 0.0
  %5958 = vmatprep.subr.mxu0 0.0
  %5959 = vmatpush1.msra.mxu0 0.0
  %5960 = vmatprep.subr.mxu0 0.0
  %5961 = vmatpush1.msra.mxu0 0.0
  %5962 = vmatprep.subr.mxu0 0.0
  %5963 = vmatpush1.msra.mxu0 0.0
  %5964 = vmatprep.subr.mxu0 0.0
  %5965 = vmatpush1.msra.mxu0 0.0
  %5966 = vmatprep.subr.mxu0 0.0
  %5967 = vmatpush1.msra.mxu0 0.0
  %5968 = vmatprep.subr.mxu0 0.0
  %5969 = vmatpush1.msra.mxu0 0.0
  %5970 = vmatprep.subr.mxu0 0.0
  %5971 = vmatpush1.msra.mxu0 0.0
  %5972 = vmatprep.subr.mxu0 0.0
  %5973 = vmatpush1.msra.mxu0 0.0
  %5974 = vmatprep.subr.mxu0 0.0
  %5975 = vmatpush1.msra.mxu0 0.0
  %5976 = vmatprep.subr.mxu0 0.0
  %5977 = vmatpush1.msra.mxu0 0.0
  %5978 = vmatprep.subr.mxu0 0.0
  %5979 = vmatpush1.msra.mxu0 0.0
  %5980 = vmatprep.subr.mxu0 0.0
  %5981 = vmatpush1.msra.mxu0 0.0
  %5982 = vmatprep.subr.mxu0 0.0
  %5983 = vmatpush1.msra.mxu0 0.0
  %5984 = vmatprep.subr.mxu0 0.0
  %5985 = vmatpush1.msra.mxu0 0.0
  %5986 = vmatprep.subr.mxu0 0.0
  %5987 = vmatpush1.msra.mxu0 0.0
  %5988 = vmatprep.subr.mxu0 0.0
  %5989 = vmatpush1.msra.mxu0 0.0
  %5990 = vmatprep.subr.mxu0 0.0
  %5991 = vmatpush1.msra.mxu0 0.0
  %5992 = vmatprep.subr.mxu0 0.0
  %5993 = vmatpush1.msra.mxu0 0.0
  %5994 = vmatprep.subr.mxu0 0.0
  %5995 = vmatpush1.msra.mxu0 0.0
  %5996 = vmatprep.subr.mxu0 0.0
  %5997 = vmatpush1.msra.mxu0 0.0
  %5998 = vmatprep.subr.mxu0 0.0
  %5999 = vmatpush1.msra.mxu0 0.0
  %6000 = vmatprep.mubr.f32.mxu0 0.0
  %v6001 = vand.u32 %v74, 4294901760
  %v6002 = vsub.f32 %v74, %v6001
  %6003 = vmatmul.mubr.f32.gmra.mrb[0].mxu0 %v6002
  %v6004 = vpop.f32.mrb[0].mxu0
  %v6005 = vadd.f32 %v5907, %v6004
  %v6006 = vpop.f32.mrb[0].mxu0
  %6007 = vmatprep.mubr.f32.mxu0 0.0
  %v6008 = vand.u32 %v77, 4294901760
  %v6009 = vsub.f32 %v77, %v6008
  %6010 = vmatmul.mubr.f32.gmra.mrb[0].mxu0 %v6009
  %v6011 = vpop.f32.mrb[0].mxu0
  %v6012 = vadd.f32 %v5913, %v6011
  %v6013 = vpop.f32.mrb[0].mxu0
  %6014 = vmatprep.mubr.f32.mxu0 0.0
  %v6015 = vand.u32 %v80, 4294901760
  %v6016 = vsub.f32 %v80, %v6015
  %6017 = vmatmul.mubr.f32.gmra.mrb[0].mxu0 %v6016
  %v6018 = vpop.f32.mrb[0].mxu0
  %v6019 = vadd.f32 %v5919, %v6018
  %v6020 = vpop.f32.mrb[0].mxu0
  %6021 = vmatprep.mubr.f32.mxu0 0.0
  %v6022 = vand.u32 %v83, 4294901760
  %v6023 = vsub.f32 %v83, %v6022
  %6024 = vmatmul.mubr.f32.gmra.mrb[0].mxu0 %v6023
  %v6025 = vpop.f32.mrb[0].mxu0
  %v6026 = vadd.f32 %v5925, %v6025
  %v6027 = vpop.f32.mrb[0].mxu0
  %6028 = vdwg.mxu0
  %6029 = vmatprep.subr.mxu0 0.0
  %v6030 = vand.u32 %v5688, 4294901760
  %6031 = vmatpush1.msra.mxu0 %v6030
  %6032 = vmatprep.subr.mxu0 0.0
  %v6033 = vand.u32 %v5689, 4294901760
  %6034 = vmatpush1.msra.mxu0 %v6033
  %6035 = vmatprep.subr.mxu0 0.0
  %v6036 = vand.u32 %v5690, 4294901760
  %6037 = vmatpush1.msra.mxu0 %v6036
  %6038 = vmatprep.subr.mxu0 0.0
  %v6039 = vand.u32 %v5691, 4294901760
  %6040 = vmatpush1.msra.mxu0 %v6039
  %6041 = vmatprep.subr.mxu0 0.0
  %6042 = vmatpush1.msra.mxu0 0.0
  %6043 = vmatprep.subr.mxu0 0.0
  %6044 = vmatpush1.msra.mxu0 0.0
  %6045 = vmatprep.subr.mxu0 0.0
  %6046 = vmatpush1.msra.mxu0 0.0
  %6047 = vmatprep.subr.mxu0 0.0
  %6048 = vmatpush1.msra.mxu0 0.0
  %6049 = vmatprep.subr.mxu0 0.0
  %6050 = vmatpush1.msra.mxu0 0.0
  %6051 = vmatprep.subr.mxu0 0.0
  %6052 = vmatpush1.msra.mxu0 0.0
  %6053 = vmatprep.subr.mxu0 0.0
  %6054 = vmatpush1.msra.mxu0 0.0
  %6055 = vmatprep.subr.mxu0 0.0
  %6056 = vmatpush1.msra.mxu0 0.0
  %6057 = vmatprep.subr.mxu0 0.0
  %6058 = vmatpush1.msra.mxu0 0.0
  %6059 = vmatprep.subr.mxu0 0.0
  %6060 = vmatpush1.msra.mxu0 0.0
  %6061 = vmatprep.subr.mxu0 0.0
  %6062 = vmatpush1.msra.mxu0 0.0
  %6063 = vmatprep.subr.mxu0 0.0
  %6064 = vmatpush1.msra.mxu0 0.0
  %6065 = vmatprep.subr.mxu0 0.0
  %6066 = vmatpush1.msra.mxu0 0.0
  %6067 = vmatprep.subr.mxu0 0.0
  %6068 = vmatpush1.msra.mxu0 0.0
  %6069 = vmatprep.subr.mxu0 0.0
  %6070 = vmatpush1.msra.mxu0 0.0
  %6071 = vmatprep.subr.mxu0 0.0
  %6072 = vmatpush1.msra.mxu0 0.0
  %6073 = vmatprep.subr.mxu0 0.0
  %6074 = vmatpush1.msra.mxu0 0.0
  %6075 = vmatprep.subr.mxu0 0.0
  %6076 = vmatpush1.msra.mxu0 0.0
  %6077 = vmatprep.subr.mxu0 0.0
  %6078 = vmatpush1.msra.mxu0 0.0
  %6079 = vmatprep.subr.mxu0 0.0
  %6080 = vmatpush1.msra.mxu0 0.0
  %6081 = vmatprep.subr.mxu0 0.0
  %6082 = vmatpush1.msra.mxu0 0.0
  %6083 = vmatprep.subr.mxu0 0.0
  %6084 = vmatpush1.msra.mxu0 0.0
  %6085 = vmatprep.subr.mxu0 0.0
  %6086 = vmatpush1.msra.mxu0 0.0
  %6087 = vmatprep.subr.mxu0 0.0
  %6088 = vmatpush1.msra.mxu0 0.0
  %6089 = vmatprep.subr.mxu0 0.0
  %6090 = vmatpush1.msra.mxu0 0.0
  %6091 = vmatprep.subr.mxu0 0.0
  %6092 = vmatpush1.msra.mxu0 0.0
  %6093 = vmatprep.subr.mxu0 0.0
  %6094 = vmatpush1.msra.mxu0 0.0
  %6095 = vmatprep.subr.mxu0 0.0
  %6096 = vmatpush1.msra.mxu0 0.0
  %6097 = vmatprep.mubr.f32.mxu0 0.0
  %v6098 = vand.u32 %v74, 4294901760
  %v6099 = vsub.f32 %v74, %v6098
  %v6100 = vand.u32 %v6099, 4294901760
  %6101 = vmatmul.mubr.f32.gmra.mrb[0].mxu0 %v6100
  %v6102 = vpop.f32.mrb[0].mxu0
  %v6103 = vadd.f32 %v6005, %v6102
  %v6104 = vpop.f32.mrb[0].mxu0
  %6105 = vmatprep.mubr.f32.mxu0 0.0
  %v6106 = vand.u32 %v77, 4294901760
  %v6107 = vsub.f32 %v77, %v6106
  %v6108 = vand.u32 %v6107, 4294901760
  %6109 = vmatmul.mubr.f32.gmra.mrb[0].mxu0 %v6108
  %v6110 = vpop.f32.mrb[0].mxu0
  %v6111 = vadd.f32 %v6012, %v6110
  %v6112 = vpop.f32.mrb[0].mxu0
  %6113 = vmatprep.mubr.f32.mxu0 0.0
  %v6114 = vand.u32 %v80, 4294901760
  %v6115 = vsub.f32 %v80, %v6114
  %v6116 = vand.u32 %v6115, 4294901760
  %6117 = vmatmul.mubr.f32.gmra.mrb[0].mxu0 %v6116
  %v6118 = vpop.f32.mrb[0].mxu0
  %v6119 = vadd.f32 %v6019, %v6118
  %v6120 = vpop.f32.mrb[0].mxu0
  %6121 = vmatprep.mubr.f32.mxu0 0.0
  %v6122 = vand.u32 %v83, 4294901760
  %v6123 = vsub.f32 %v83, %v6122
  %v6124 = vand.u32 %v6123, 4294901760
  %6125 = vmatmul.mubr.f32.gmra.mrb[0].mxu0 %v6124
  %v6126 = vpop.f32.mrb[0].mxu0
  %v6127 = vadd.f32 %v6026, %v6126
  %v6128 = vpop.f32.mrb[0].mxu0
  %6129 = vdwg.mxu0
  %6130 = vmatprep.subr.mxu0 0.0
  %v6131 = vand.u32 %v5688, 4294901760
  %v6132 = vsub.f32 %v5688, %v6131
  %v6133 = vand.u32 %v6132, 4294901760
  %6134 = vmatpush1.msra.mxu0 %v6133
  %6135 = vmatprep.subr.mxu0 0.0
  %v6136 = vand.u32 %v5689, 4294901760
  %v6137 = vsub.f32 %v5689, %v6136
  %v6138 = vand.u32 %v6137, 4294901760
  %6139 = vmatpush1.msra.mxu0 %v6138
  %6140 = vmatprep.subr.mxu0 0.0
  %v6141 = vand.u32 %v5690, 4294901760
  %v6142 = vsub.f32 %v5690, %v6141
  %v6143 = vand.u32 %v6142, 4294901760
  %6144 = vmatpush1.msra.mxu0 %v6143
  %6145 = vmatprep.subr.mxu0 0.0
  %v6146 = vand.u32 %v5691, 4294901760
  %v6147 = vsub.f32 %v5691, %v6146
  %v6148 = vand.u32 %v6147, 4294901760
  %6149 = vmatpush1.msra.mxu0 %v6148
  %6150 = vmatprep.subr.mxu0 0.0
  %6151 = vmatpush1.msra.mxu0 0.0
  %6152 = vmatprep.subr.mxu0 0.0
  %6153 = vmatpush1.msra.mxu0 0.0
  %6154 = vmatprep.subr.mxu0 0.0
  %6155 = vmatpush1.msra.mxu0 0.0
  %6156 = vmatprep.subr.mxu0 0.0
  %6157 = vmatpush1.msra.mxu0 0.0
  %6158 = vmatprep.subr.mxu0 0.0
  %6159 = vmatpush1.msra.mxu0 0.0
  %6160 = vmatprep.subr.mxu0 0.0
  %6161 = vmatpush1.msra.mxu0 0.0
  %6162 = vmatprep.subr.mxu0 0.0
  %6163 = vmatpush1.msra.mxu0 0.0
  %6164 = vmatprep.subr.mxu0 0.0
  %6165 = vmatpush1.msra.mxu0 0.0
  %6166 = vmatprep.subr.mxu0 0.0
  %6167 = vmatpush1.msra.mxu0 0.0
  %6168 = vmatprep.subr.mxu0 0.0
  %6169 = vmatpush1.msra.mxu0 0.0
  %6170 = vmatprep.subr.mxu0 0.0
  %6171 = vmatpush1.msra.mxu0 0.0
  %6172 = vmatprep.subr.mxu0 0.0
  %6173 = vmatpush1.msra.mxu0 0.0
  %6174 = vmatprep.subr.mxu0 0.0
  %6175 = vmatpush1.msra.mxu0 0.0
  %6176 = vmatprep.subr.mxu0 0.0
  %6177 = vmatpush1.msra.mxu0 0.0
  %6178 = vmatprep.subr.mxu0 0.0
  %6179 = vmatpush1.msra.mxu0 0.0
  %6180 = vmatprep.subr.mxu0 0.0
  %6181 = vmatpush1.msra.mxu0 0.0
  %6182 = vmatprep.subr.mxu0 0.0
  %6183 = vmatpush1.msra.mxu0 0.0
  %6184 = vmatprep.subr.mxu0 0.0
  %6185 = vmatpush1.msra.mxu0 0.0
  %6186 = vmatprep.subr.mxu0 0.0
  %6187 = vmatpush1.msra.mxu0 0.0
  %6188 = vmatprep.subr.mxu0 0.0
  %6189 = vmatpush1.msra.mxu0 0.0
  %6190 = vmatprep.subr.mxu0 0.0
  %6191 = vmatpush1.msra.mxu0 0.0
  %6192 = vmatprep.subr.mxu0 0.0
  %6193 = vmatpush1.msra.mxu0 0.0
  %6194 = vmatprep.subr.mxu0 0.0
  %6195 = vmatpush1.msra.mxu0 0.0
  %6196 = vmatprep.subr.mxu0 0.0
  %6197 = vmatpush1.msra.mxu0 0.0
  %6198 = vmatprep.subr.mxu0 0.0
  %6199 = vmatpush1.msra.mxu0 0.0
  %6200 = vmatprep.subr.mxu0 0.0
  %6201 = vmatpush1.msra.mxu0 0.0
  %6202 = vmatprep.subr.mxu0 0.0
  %6203 = vmatpush1.msra.mxu0 0.0
  %6204 = vmatprep.subr.mxu0 0.0
  %6205 = vmatpush1.msra.mxu0 0.0
  %6206 = vmatprep.mubr.f32.mxu0 0.0
  %v6207 = vand.u32 %v74, 4294901760
  %6208 = vmatmul.mubr.f32.gmra.mrb[0].mxu0 %v6207
  %v6209 = vpop.f32.mrb[0].mxu0
  %v6210 = vadd.f32 %v6103, %v6209
  %v6211 = vpop.f32.mrb[0].mxu0
  %6212 = vmatprep.mubr.f32.mxu0 0.0
  %v6213 = vand.u32 %v77, 4294901760
  %6214 = vmatmul.mubr.f32.gmra.mrb[0].mxu0 %v6213
  %v6215 = vpop.f32.mrb[0].mxu0
  %v6216 = vadd.f32 %v6111, %v6215
  %v6217 = vpop.f32.mrb[0].mxu0
  %6218 = vmatprep.mubr.f32.mxu0 0.0
  %v6219 = vand.u32 %v80, 4294901760
  %6220 = vmatmul.mubr.f32.gmra.mrb[0].mxu0 %v6219
  %v6221 = vpop.f32.mrb[0].mxu0
  %v6222 = vadd.f32 %v6119, %v6221
  %v6223 = vpop.f32.mrb[0].mxu0
  %6224 = vmatprep.mubr.f32.mxu0 0.0
  %v6225 = vand.u32 %v83, 4294901760
  %6226 = vmatmul.mubr.f32.gmra.mrb[0].mxu0 %v6225
  %v6227 = vpop.f32.mrb[0].mxu0
  %v6228 = vadd.f32 %v6127, %v6227
  %v6229 = vpop.f32.mrb[0].mxu0
  %6230 = vdwg.mxu0
  %6231 = vmatprep.subr.mxu0 0.0
  %v6232 = vand.u32 %v5688, 4294901760
  %6233 = vmatpush1.msra.mxu0 %v6232
  %6234 = vmatprep.subr.mxu0 0.0
  %v6235 = vand.u32 %v5689, 4294901760
  %6236 = vmatpush1.msra.mxu0 %v6235
  %6237 = vmatprep.subr.mxu0 0.0
  %v6238 = vand.u32 %v5690, 4294901760
  %6239 = vmatpush1.msra.mxu0 %v6238
  %6240 = vmatprep.subr.mxu0 0.0
  %v6241 = vand.u32 %v5691, 4294901760
  %6242 = vmatpush1.msra.mxu0 %v6241
  %6243 = vmatprep.subr.mxu0 0.0
  %6244 = vmatpush1.msra.mxu0 0.0
  %6245 = vmatprep.subr.mxu0 0.0
  %6246 = vmatpush1.msra.mxu0 0.0
  %6247 = vmatprep.subr.mxu0 0.0
  %6248 = vmatpush1.msra.mxu0 0.0
  %6249 = vmatprep.subr.mxu0 0.0
  %6250 = vmatpush1.msra.mxu0 0.0
  %6251 = vmatprep.subr.mxu0 0.0
  %6252 = vmatpush1.msra.mxu0 0.0
  %6253 = vmatprep.subr.mxu0 0.0
  %6254 = vmatpush1.msra.mxu0 0.0
  %6255 = vmatprep.subr.mxu0 0.0
  %6256 = vmatpush1.msra.mxu0 0.0
  %6257 = vmatprep.subr.mxu0 0.0
  %6258 = vmatpush1.msra.mxu0 0.0
  %6259 = vmatprep.subr.mxu0 0.0
  %6260 = vmatpush1.msra.mxu0 0.0
  %6261 = vmatprep.subr.mxu0 0.0
  %6262 = vmatpush1.msra.mxu0 0.0
  %6263 = vmatprep.subr.mxu0 0.0
  %6264 = vmatpush1.msra.mxu0 0.0
  %6265 = vmatprep.subr.mxu0 0.0
  %6266 = vmatpush1.msra.mxu0 0.0
  %6267 = vmatprep.subr.mxu0 0.0
  %6268 = vmatpush1.msra.mxu0 0.0
  %6269 = vmatprep.subr.mxu0 0.0
  %6270 = vmatpush1.msra.mxu0 0.0
  %6271 = vmatprep.subr.mxu0 0.0
  %6272 = vmatpush1.msra.mxu0 0.0
  %6273 = vmatprep.subr.mxu0 0.0
  %6274 = vmatpush1.msra.mxu0 0.0
  %6275 = vmatprep.subr.mxu0 0.0
  %6276 = vmatpush1.msra.mxu0 0.0
  %6277 = vmatprep.subr.mxu0 0.0
  %6278 = vmatpush1.msra.mxu0 0.0
  %6279 = vmatprep.subr.mxu0 0.0
  %6280 = vmatpush1.msra.mxu0 0.0
  %6281 = vmatprep.subr.mxu0 0.0
  %6282 = vmatpush1.msra.mxu0 0.0
  %6283 = vmatprep.subr.mxu0 0.0
  %6284 = vmatpush1.msra.mxu0 0.0
  %6285 = vmatprep.subr.mxu0 0.0
  %6286 = vmatpush1.msra.mxu0 0.0
  %6287 = vmatprep.subr.mxu0 0.0
  %6288 = vmatpush1.msra.mxu0 0.0
  %6289 = vmatprep.subr.mxu0 0.0
  %6290 = vmatpush1.msra.mxu0 0.0
  %6291 = vmatprep.subr.mxu0 0.0
  %6292 = vmatpush1.msra.mxu0 0.0
  %6293 = vmatprep.subr.mxu0 0.0
  %6294 = vmatpush1.msra.mxu0 0.0
  %6295 = vmatprep.subr.mxu0 0.0
  %6296 = vmatpush1.msra.mxu0 0.0
  %6297 = vmatprep.subr.mxu0 0.0
  %6298 = vmatpush1.msra.mxu0 0.0
  %6299 = vmatprep.mubr.f32.mxu0 0.0
  %v6300 = vand.u32 %v74, 4294901760
  %6301 = vmatmul.mubr.f32.gmra.mrb[0].mxu0 %v6300
  %v6302 = vpop.f32.mrb[0].mxu0
  %v6303 = vadd.f32 %v6210, %v6302
  %v6304 = vpop.f32.mrb[0].mxu0
  %6305 = vmatprep.mubr.f32.mxu0 0.0
  %v6306 = vand.u32 %v77, 4294901760
  %6307 = vmatmul.mubr.f32.gmra.mrb[0].mxu0 %v6306
  %v6308 = vpop.f32.mrb[0].mxu0
  %v6309 = vadd.f32 %v6216, %v6308
  %v6310 = vpop.f32.mrb[0].mxu0
  %6311 = vmatprep.mubr.f32.mxu0 0.0
  %v6312 = vand.u32 %v80, 4294901760
  %6313 = vmatmul.mubr.f32.gmra.mrb[0].mxu0 %v6312
  %v6314 = vpop.f32.mrb[0].mxu0
  %v6315 = vadd.f32 %v6222, %v6314
  %v6316 = vpop.f32.mrb[0].mxu0
  %6317 = vmatprep.mubr.f32.mxu0 0.0
  %v6318 = vand.u32 %v83, 4294901760
  %6319 = vmatmul.mubr.f32.gmra.mrb[0].mxu0 %v6318
  %v6320 = vpop.f32.mrb[0].mxu0
  %v6321 = vadd.f32 %v6228, %v6320
  %v6322 = vpop.f32.mrb[0].mxu0
  %6323 = vdwg.mxu0
  %v6324 = vld [vmem:[%s6] sm:$0xff]
  %v6325 = vld [vmem:[%s6 + $0x8] sm:$0xff]
  %v6326 = vld [vmem:[%s6 + $0x10] sm:$0xff]
  %v6327 = vld [vmem:[%s6 + $0x18] sm:$0xff]
  %v6328 = vld [vmem:[%s6 + $0x20] sm:$0xff]
  %v6329 = vld [vmem:[%s6 + $0x28] sm:$0xff]
  %v6330 = vld [vmem:[%s6 + $0x30] sm:$0xff]
  %v6331 = vld [vmem:[%s6 + $0x38] sm:$0xff]
  %v6332 = vld [vmem:[%s6 + $0x40] sm:$0xff]
  %v6333 = vld [vmem:[%s6 + $0x48] sm:$0xff]
  %v6334 = vld [vmem:[%s6 + $0x50] sm:$0xff]
  %v6335 = vld [vmem:[%s6 + $0x58] sm:$0xff]
  %v6336 = vld [vmem:[%s6 + $0x60] sm:$0xff]
  %v6337 = vld [vmem:[%s6 + $0x68] sm:$0xff]
  %v6338 = vld [vmem:[%s6 + $0x70] sm:$0xff]
  %v6339 = vld [vmem:[%s6 + $0x78] sm:$0xff]
  %6340 = vmatprep.subr.mxu0 0.0
  %v6341 = vand.u32 %v6324, 4294901760
  %6342 = vmatpush1.msra.mxu0 %v6341
  %6343 = vmatprep.subr.mxu0 0.0
  %v6344 = vand.u32 %v6325, 4294901760
  %6345 = vmatpush1.msra.mxu0 %v6344
  %6346 = vmatprep.subr.mxu0 0.0
  %v6347 = vand.u32 %v6326, 4294901760
  %6348 = vmatpush1.msra.mxu0 %v6347
  %6349 = vmatprep.subr.mxu0 0.0
  %v6350 = vand.u32 %v6327, 4294901760
  %6351 = vmatpush1.msra.mxu0 %v6350
  %6352 = vmatprep.subr.mxu0 0.0
  %v6353 = vand.u32 %v6328, 4294901760
  %6354 = vmatpush1.msra.mxu0 %v6353
  %6355 = vmatprep.subr.mxu0 0.0
  %v6356 = vand.u32 %v6329, 4294901760
  %6357 = vmatpush1.msra.mxu0 %v6356
  %6358 = vmatprep.subr.mxu0 0.0
  %v6359 = vand.u32 %v6330, 4294901760
  %6360 = vmatpush1.msra.mxu0 %v6359
  %6361 = vmatprep.subr.mxu0 0.0
  %v6362 = vand.u32 %v6331, 4294901760
  %6363 = vmatpush1.msra.mxu0 %v6362
  %6364 = vmatprep.subr.mxu0 0.0
  %v6365 = vand.u32 %v6332, 4294901760
  %6366 = vmatpush1.msra.mxu0 %v6365
  %6367 = vmatprep.subr.mxu0 0.0
  %v6368 = vand.u32 %v6333, 4294901760
  %6369 = vmatpush1.msra.mxu0 %v6368
  %6370 = vmatprep.subr.mxu0 0.0
  %v6371 = vand.u32 %v6334, 4294901760
  %6372 = vmatpush1.msra.mxu0 %v6371
  %6373 = vmatprep.subr.mxu0 0.0
  %v6374 = vand.u32 %v6335, 4294901760
  %6375 = vmatpush1.msra.mxu0 %v6374
  %6376 = vmatprep.subr.mxu0 0.0
  %v6377 = vand.u32 %v6336, 4294901760
  %6378 = vmatpush1.msra.mxu0 %v6377
  %6379 = vmatprep.subr.mxu0 0.0
  %v6380 = vand.u32 %v6337, 4294901760
  %6381 = vmatpush1.msra.mxu0 %v6380
  %6382 = vmatprep.subr.mxu0 0.0
  %v6383 = vand.u32 %v6338, 4294901760
  %6384 = vmatpush1.msra.mxu0 %v6383
  %6385 = vmatprep.subr.mxu0 0.0
  %v6386 = vand.u32 %v6339, 4294901760
  %6387 = vmatpush1.msra.mxu0 %v6386
  %6388 = vmatprep.subr.mxu0 0.0
  %6389 = vmatpush1.msra.mxu0 0.0
  %6390 = vmatprep.subr.mxu0 0.0
  %6391 = vmatpush1.msra.mxu0 0.0
  %6392 = vmatprep.subr.mxu0 0.0
  %6393 = vmatpush1.msra.mxu0 0.0
  %6394 = vmatprep.subr.mxu0 0.0
  %6395 = vmatpush1.msra.mxu0 0.0
  %6396 = vmatprep.subr.mxu0 0.0
  %6397 = vmatpush1.msra.mxu0 0.0
  %6398 = vmatprep.subr.mxu0 0.0
  %6399 = vmatpush1.msra.mxu0 0.0
  %6400 = vmatprep.subr.mxu0 0.0
  %6401 = vmatpush1.msra.mxu0 0.0
  %6402 = vmatprep.subr.mxu0 0.0
  %6403 = vmatpush1.msra.mxu0 0.0
  %6404 = vmatprep.subr.mxu0 0.0
  %6405 = vmatpush1.msra.mxu0 0.0
  %6406 = vmatprep.subr.mxu0 0.0
  %6407 = vmatpush1.msra.mxu0 0.0
  %6408 = vmatprep.subr.mxu0 0.0
  %6409 = vmatpush1.msra.mxu0 0.0
  %6410 = vmatprep.subr.mxu0 0.0
  %6411 = vmatpush1.msra.mxu0 0.0
  %6412 = vmatprep.subr.mxu0 0.0
  %6413 = vmatpush1.msra.mxu0 0.0
  %6414 = vmatprep.subr.mxu0 0.0
  %6415 = vmatpush1.msra.mxu0 0.0
  %6416 = vmatprep.subr.mxu0 0.0
  %6417 = vmatpush1.msra.mxu0 0.0
  %6418 = vmatprep.subr.mxu0 0.0
  %6419 = vmatpush1.msra.mxu0 0.0
  %6420 = vmatprep.mubr.f32.mxu0 0.0
  %v6421 = vand.u32 %v6303, 4294901760
  %v6422 = vsub.f32 %v6303, %v6421
  %v6423 = vand.u32 %v6422, 4294901760
  %v6424 = vsub.f32 %v6422, %v6423
  %v6425 = vand.u32 %v6424, 4294901760
  %6426 = vmatmul.mubr.f32.gmra.mrb[0].mxu0 %v6425
  %v6427 = vpop.f32.mrb[0].mxu0
  %v6428 = vadd.f32 0.0, %v6427
  %v6429 = vpop.f32.mrb[0].mxu0
  %6430 = vmatprep.mubr.f32.mxu0 0.0
  %v6431 = vand.u32 %v6309, 4294901760
  %v6432 = vsub.f32 %v6309, %v6431
  %v6433 = vand.u32 %v6432, 4294901760
  %v6434 = vsub.f32 %v6432, %v6433
  %v6435 = vand.u32 %v6434, 4294901760
  %6436 = vmatmul.mubr.f32.gmra.mrb[0].mxu0 %v6435
  %v6437 = vpop.f32.mrb[0].mxu0
  %v6438 = vadd.f32 0.0, %v6437
  %v6439 = vpop.f32.mrb[0].mxu0
  %6440 = vmatprep.mubr.f32.mxu0 0.0
  %v6441 = vand.u32 %v6315, 4294901760
  %v6442 = vsub.f32 %v6315, %v6441
  %v6443 = vand.u32 %v6442, 4294901760
  %v6444 = vsub.f32 %v6442, %v6443
  %v6445 = vand.u32 %v6444, 4294901760
  %6446 = vmatmul.mubr.f32.gmra.mrb[0].mxu0 %v6445
  %v6447 = vpop.f32.mrb[0].mxu0
  %v6448 = vadd.f32 0.0, %v6447
  %v6449 = vpop.f32.mrb[0].mxu0
  %6450 = vmatprep.mubr.f32.mxu0 0.0
  %v6451 = vand.u32 %v6321, 4294901760
  %v6452 = vsub.f32 %v6321, %v6451
  %v6453 = vand.u32 %v6452, 4294901760
  %v6454 = vsub.f32 %v6452, %v6453
  %v6455 = vand.u32 %v6454, 4294901760
  %6456 = vmatmul.mubr.f32.gmra.mrb[0].mxu0 %v6455
  %v6457 = vpop.f32.mrb[0].mxu0
  %v6458 = vadd.f32 0.0, %v6457
  %v6459 = vpop.f32.mrb[0].mxu0
  %6460 = vdwg.mxu0
  %6461 = vmatprep.subr.mxu0 0.0
  %v6462 = vand.u32 %v6324, 4294901760
  %v6463 = vsub.f32 %v6324, %v6462
  %v6464 = vand.u32 %v6463, 4294901760
  %v6465 = vsub.f32 %v6463, %v6464
  %v6466 = vand.u32 %v6465, 4294901760
  %6467 = vmatpush1.msra.mxu0 %v6466
  %6468 = vmatprep.subr.mxu0 0.0
  %v6469 = vand.u32 %v6325, 4294901760
  %v6470 = vsub.f32 %v6325, %v6469
  %v6471 = vand.u32 %v6470, 4294901760
  %v6472 = vsub.f32 %v6470, %v6471
  %v6473 = vand.u32 %v6472, 4294901760
  %6474 = vmatpush1.msra.mxu0 %v6473
  %6475 = vmatprep.subr.mxu0 0.0
  %v6476 = vand.u32 %v6326, 4294901760
  %v6477 = vsub.f32 %v6326, %v6476
  %v6478 = vand.u32 %v6477, 4294901760
  %v6479 = vsub.f32 %v6477, %v6478
  %v6480 = vand.u32 %v6479, 4294901760
  %6481 = vmatpush1.msra.mxu0 %v6480
  %6482 = vmatprep.subr.mxu0 0.0
  %v6483 = vand.u32 %v6327, 4294901760
  %v6484 = vsub.f32 %v6327, %v6483
  %v6485 = vand.u32 %v6484, 4294901760
  %v6486 = vsub.f32 %v6484, %v6485
  %v6487 = vand.u32 %v6486, 4294901760
  %6488 = vmatpush1.msra.mxu0 %v6487
  %6489 = vmatprep.subr.mxu0 0.0
  %v6490 = vand.u32 %v6328, 4294901760
  %v6491 = vsub.f32 %v6328, %v6490
  %v6492 = vand.u32 %v6491, 4294901760
  %v6493 = vsub.f32 %v6491, %v6492
  %v6494 = vand.u32 %v6493, 4294901760
  %6495 = vmatpush1.msra.mxu0 %v6494
  %6496 = vmatprep.subr.mxu0 0.0
  %v6497 = vand.u32 %v6329, 4294901760
  %v6498 = vsub.f32 %v6329, %v6497
  %v6499 = vand.u32 %v6498, 4294901760
  %v6500 = vsub.f32 %v6498, %v6499
  %v6501 = vand.u32 %v6500, 4294901760
  %6502 = vmatpush1.msra.mxu0 %v6501
  %6503 = vmatprep.subr.mxu0 0.0
  %v6504 = vand.u32 %v6330, 4294901760
  %v6505 = vsub.f32 %v6330, %v6504
  %v6506 = vand.u32 %v6505, 4294901760
  %v6507 = vsub.f32 %v6505, %v6506
  %v6508 = vand.u32 %v6507, 4294901760
  %6509 = vmatpush1.msra.mxu0 %v6508
  %6510 = vmatprep.subr.mxu0 0.0
  %v6511 = vand.u32 %v6331, 4294901760
  %v6512 = vsub.f32 %v6331, %v6511
  %v6513 = vand.u32 %v6512, 4294901760
  %v6514 = vsub.f32 %v6512, %v6513
  %v6515 = vand.u32 %v6514, 4294901760
  %6516 = vmatpush1.msra.mxu0 %v6515
  %6517 = vmatprep.subr.mxu0 0.0
  %v6518 = vand.u32 %v6332, 4294901760
  %v6519 = vsub.f32 %v6332, %v6518
  %v6520 = vand.u32 %v6519, 4294901760
  %v6521 = vsub.f32 %v6519, %v6520
  %v6522 = vand.u32 %v6521, 4294901760
  %6523 = vmatpush1.msra.mxu0 %v6522
  %6524 = vmatprep.subr.mxu0 0.0
  %v6525 = vand.u32 %v6333, 4294901760
  %v6526 = vsub.f32 %v6333, %v6525
  %v6527 = vand.u32 %v6526, 4294901760
  %v6528 = vsub.f32 %v6526, %v6527
  %v6529 = vand.u32 %v6528, 4294901760
  %6530 = vmatpush1.msra.mxu0 %v6529
  %6531 = vmatprep.subr.mxu0 0.0
  %v6532 = vand.u32 %v6334, 4294901760
  %v6533 = vsub.f32 %v6334, %v6532
  %v6534 = vand.u32 %v6533, 4294901760
  %v6535 = vsub.f32 %v6533, %v6534
  %v6536 = vand.u32 %v6535, 4294901760
  %6537 = vmatpush1.msra.mxu0 %v6536
  %6538 = vmatprep.subr.mxu0 0.0
  %v6539 = vand.u32 %v6335, 4294901760
  %v6540 = vsub.f32 %v6335, %v6539
  %v6541 = vand.u32 %v6540, 4294901760
  %v6542 = vsub.f32 %v6540, %v6541
  %v6543 = vand.u32 %v6542, 4294901760
  %6544 = vmatpush1.msra.mxu0 %v6543
  %6545 = vmatprep.subr.mxu0 0.0
  %v6546 = vand.u32 %v6336, 4294901760
  %v6547 = vsub.f32 %v6336, %v6546
  %v6548 = vand.u32 %v6547, 4294901760
  %v6549 = vsub.f32 %v6547, %v6548
  %v6550 = vand.u32 %v6549, 4294901760
  %6551 = vmatpush1.msra.mxu0 %v6550
  %6552 = vmatprep.subr.mxu0 0.0
  %v6553 = vand.u32 %v6337, 4294901760
  %v6554 = vsub.f32 %v6337, %v6553
  %v6555 = vand.u32 %v6554, 4294901760
  %v6556 = vsub.f32 %v6554, %v6555
  %v6557 = vand.u32 %v6556, 4294901760
  %6558 = vmatpush1.msra.mxu0 %v6557
  %6559 = vmatprep.subr.mxu0 0.0
  %v6560 = vand.u32 %v6338, 4294901760
  %v6561 = vsub.f32 %v6338, %v6560
  %v6562 = vand.u32 %v6561, 4294901760
  %v6563 = vsub.f32 %v6561, %v6562
  %v6564 = vand.u32 %v6563, 4294901760
  %6565 = vmatpush1.msra.mxu0 %v6564
  %6566 = vmatprep.subr.mxu0 0.0
  %v6567 = vand.u32 %v6339, 4294901760
  %v6568 = vsub.f32 %v6339, %v6567
  %v6569 = vand.u32 %v6568, 4294901760
  %v6570 = vsub.f32 %v6568, %v6569
  %v6571 = vand.u32 %v6570, 4294901760
  %6572 = vmatpush1.msra.mxu0 %v6571
  %6573 = vmatprep.subr.mxu0 0.0
  %6574 = vmatpush1.msra.mxu0 0.0
  %6575 = vmatprep.subr.mxu0 0.0
  %6576 = vmatpush1.msra.mxu0 0.0
  %6577 = vmatprep.subr.mxu0 0.0
  %6578 = vmatpush1.msra.mxu0 0.0
  %6579 = vmatprep.subr.mxu0 0.0
  %6580 = vmatpush1.msra.mxu0 0.0
  %6581 = vmatprep.subr.mxu0 0.0
  %6582 = vmatpush1.msra.mxu0 0.0
  %6583 = vmatprep.subr.mxu0 0.0
  %6584 = vmatpush1.msra.mxu0 0.0
  %6585 = vmatprep.subr.mxu0 0.0
  %6586 = vmatpush1.msra.mxu0 0.0
  %6587 = vmatprep.subr.mxu0 0.0
  %6588 = vmatpush1.msra.mxu0 0.0
  %6589 = vmatprep.subr.mxu0 0.0
  %6590 = vmatpush1.msra.mxu0 0.0
  %6591 = vmatprep.subr.mxu0 0.0
  %6592 = vmatpush1.msra.mxu0 0.0
  %6593 = vmatprep.subr.mxu0 0.0
  %6594 = vmatpush1.msra.mxu0 0.0
  %6595 = vmatprep.subr.mxu0 0.0
  %6596 = vmatpush1.msra.mxu0 0.0
  %6597 = vmatprep.subr.mxu0 0.0
  %6598 = vmatpush1.msra.mxu0 0.0
  %6599 = vmatprep.subr.mxu0 0.0
  %6600 = vmatpush1.msra.mxu0 0.0
  %6601 = vmatprep.subr.mxu0 0.0
  %6602 = vmatpush1.msra.mxu0 0.0
  %6603 = vmatprep.subr.mxu0 0.0
  %6604 = vmatpush1.msra.mxu0 0.0
  %6605 = vmatprep.mubr.f32.mxu0 0.0
  %v6606 = vand.u32 %v6303, 4294901760
  %6607 = vmatmul.mubr.f32.gmra.mrb[0].mxu0 %v6606
  %v6608 = vpop.f32.mrb[0].mxu0
  %v6609 = vadd.f32 %v6428, %v6608
  %v6610 = vpop.f32.mrb[0].mxu0
  %6611 = vmatprep.mubr.f32.mxu0 0.0
  %v6612 = vand.u32 %v6309, 4294901760
  %6613 = vmatmul.mubr.f32.gmra.mrb[0].mxu0 %v6612
  %v6614 = vpop.f32.mrb[0].mxu0
  %v6615 = vadd.f32 %v6438, %v6614
  %v6616 = vpop.f32.mrb[0].mxu0
  %6617 = vmatprep.mubr.f32.mxu0 0.0
  %v6618 = vand.u32 %v6315, 4294901760
  %6619 = vmatmul.mubr.f32.gmra.mrb[0].mxu0 %v6618
  %v6620 = vpop.f32.mrb[0].mxu0
  %v6621 = vadd.f32 %v6448, %v6620
  %v6622 = vpop.f32.mrb[0].mxu0
  %6623 = vmatprep.mubr.f32.mxu0 0.0
  %v6624 = vand.u32 %v6321, 4294901760
  %6625 = vmatmul.mubr.f32.gmra.mrb[0].mxu0 %v6624
  %v6626 = vpop.f32.mrb[0].mxu0
  %v6627 = vadd.f32 %v6458, %v6626
  %v6628 = vpop.f32.mrb[0].mxu0
  %6629 = vdwg.mxu0
  %6630 = vmatprep.subr.mxu0 0.0
  %v6631 = vand.u32 %v6324, 4294901760
  %v6632 = vsub.f32 %v6324, %v6631
  %6633 = vmatpush1.msra.mxu0 %v6632
  %6634 = vmatprep.subr.mxu0 0.0
  %v6635 = vand.u32 %v6325, 4294901760
  %v6636 = vsub.f32 %v6325, %v6635
  %6637 = vmatpush1.msra.mxu0 %v6636
  %6638 = vmatprep.subr.mxu0 0.0
  %v6639 = vand.u32 %v6326, 4294901760
  %v6640 = vsub.f32 %v6326, %v6639
  %6641 = vmatpush1.msra.mxu0 %v6640
  %6642 = vmatprep.subr.mxu0 0.0
  %v6643 = vand.u32 %v6327, 4294901760
  %v6644 = vsub.f32 %v6327, %v6643
  %6645 = vmatpush1.msra.mxu0 %v6644
  %6646 = vmatprep.subr.mxu0 0.0
  %v6647 = vand.u32 %v6328, 4294901760
  %v6648 = vsub.f32 %v6328, %v6647
  %6649 = vmatpush1.msra.mxu0 %v6648
  %6650 = vmatprep.subr.mxu0 0.0
  %v6651 = vand.u32 %v6329, 4294901760
  %v6652 = vsub.f32 %v6329, %v6651
  %6653 = vmatpush1.msra.mxu0 %v6652
  %6654 = vmatprep.subr.mxu0 0.0
  %v6655 = vand.u32 %v6330, 4294901760
  %v6656 = vsub.f32 %v6330, %v6655
  %6657 = vmatpush1.msra.mxu0 %v6656
  %6658 = vmatprep.subr.mxu0 0.0
  %v6659 = vand.u32 %v6331, 4294901760
  %v6660 = vsub.f32 %v6331, %v6659
  %6661 = vmatpush1.msra.mxu0 %v6660
  %6662 = vmatprep.subr.mxu0 0.0
  %v6663 = vand.u32 %v6332, 4294901760
  %v6664 = vsub.f32 %v6332, %v6663
  %6665 = vmatpush1.msra.mxu0 %v6664
  %6666 = vmatprep.subr.mxu0 0.0
  %v6667 = vand.u32 %v6333, 4294901760
  %v6668 = vsub.f32 %v6333, %v6667
  %6669 = vmatpush1.msra.mxu0 %v6668
  %6670 = vmatprep.subr.mxu0 0.0
  %v6671 = vand.u32 %v6334, 4294901760
  %v6672 = vsub.f32 %v6334, %v6671
  %6673 = vmatpush1.msra.mxu0 %v6672
  %6674 = vmatprep.subr.mxu0 0.0
  %v6675 = vand.u32 %v6335, 4294901760
  %v6676 = vsub.f32 %v6335, %v6675
  %6677 = vmatpush1.msra.mxu0 %v6676
  %6678 = vmatprep.subr.mxu0 0.0
  %v6679 = vand.u32 %v6336, 4294901760
  %v6680 = vsub.f32 %v6336, %v6679
  %6681 = vmatpush1.msra.mxu0 %v6680
  %6682 = vmatprep.subr.mxu0 0.0
  %v6683 = vand.u32 %v6337, 4294901760
  %v6684 = vsub.f32 %v6337, %v6683
  %6685 = vmatpush1.msra.mxu0 %v6684
  %6686 = vmatprep.subr.mxu0 0.0
  %v6687 = vand.u32 %v6338, 4294901760
  %v6688 = vsub.f32 %v6338, %v6687
  %6689 = vmatpush1.msra.mxu0 %v6688
  %6690 = vmatprep.subr.mxu0 0.0
  %v6691 = vand.u32 %v6339, 4294901760
  %v6692 = vsub.f32 %v6339, %v6691
  %6693 = vmatpush1.msra.mxu0 %v6692
  %6694 = vmatprep.subr.mxu0 0.0
  %6695 = vmatpush1.msra.mxu0 0.0
  %6696 = vmatprep.subr.mxu0 0.0
  %6697 = vmatpush1.msra.mxu0 0.0
  %6698 = vmatprep.subr.mxu0 0.0
  %6699 = vmatpush1.msra.mxu0 0.0
  %6700 = vmatprep.subr.mxu0 0.0
  %6701 = vmatpush1.msra.mxu0 0.0
  %6702 = vmatprep.subr.mxu0 0.0
  %6703 = vmatpush1.msra.mxu0 0.0
  %6704 = vmatprep.subr.mxu0 0.0
  %6705 = vmatpush1.msra.mxu0 0.0
  %6706 = vmatprep.subr.mxu0 0.0
  %6707 = vmatpush1.msra.mxu0 0.0
  %6708 = vmatprep.subr.mxu0 0.0
  %6709 = vmatpush1.msra.mxu0 0.0
  %6710 = vmatprep.subr.mxu0 0.0
  %6711 = vmatpush1.msra.mxu0 0.0
  %6712 = vmatprep.subr.mxu0 0.0
  %6713 = vmatpush1.msra.mxu0 0.0
  %6714 = vmatprep.subr.mxu0 0.0
  %6715 = vmatpush1.msra.mxu0 0.0
  %6716 = vmatprep.subr.mxu0 0.0
  %6717 = vmatpush1.msra.mxu0 0.0
  %6718 = vmatprep.subr.mxu0 0.0
  %6719 = vmatpush1.msra.mxu0 0.0
  %6720 = vmatprep.subr.mxu0 0.0
  %6721 = vmatpush1.msra.mxu0 0.0
  %6722 = vmatprep.subr.mxu0 0.0
  %6723 = vmatpush1.msra.mxu0 0.0
  %6724 = vmatprep.subr.mxu0 0.0
  %6725 = vmatpush1.msra.mxu0 0.0
  %6726 = vmatprep.mubr.f32.mxu0 0.0
  %v6727 = vand.u32 %v6303, 4294901760
  %v6728 = vsub.f32 %v6303, %v6727
  %6729 = vmatmul.mubr.f32.gmra.mrb[0].mxu0 %v6728
  %v6730 = vpop.f32.mrb[0].mxu0
  %v6731 = vadd.f32 %v6609, %v6730
  %v6732 = vpop.f32.mrb[0].mxu0
  %6733 = vmatprep.mubr.f32.mxu0 0.0
  %v6734 = vand.u32 %v6309, 4294901760
  %v6735 = vsub.f32 %v6309, %v6734
  %6736 = vmatmul.mubr.f32.gmra.mrb[0].mxu0 %v6735
  %v6737 = vpop.f32.mrb[0].mxu0
  %v6738 = vadd.f32 %v6615, %v6737
  %v6739 = vpop.f32.mrb[0].mxu0
  %6740 = vmatprep.mubr.f32.mxu0 0.0
  %v6741 = vand.u32 %v6315, 4294901760
  %v6742 = vsub.f32 %v6315, %v6741
  %6743 = vmatmul.mubr.f32.gmra.mrb[0].mxu0 %v6742
  %v6744 = vpop.f32.mrb[0].mxu0
  %v6745 = vadd.f32 %v6621, %v6744
  %v6746 = vpop.f32.mrb[0].mxu0
  %6747 = vmatprep.mubr.f32.mxu0 0.0
  %v6748 = vand.u32 %v6321, 4294901760
  %v6749 = vsub.f32 %v6321, %v6748
  %6750 = vmatmul.mubr.f32.gmra.mrb[0].mxu0 %v6749
  %v6751 = vpop.f32.mrb[0].mxu0
  %v6752 = vadd.f32 %v6627, %v6751
  %v6753 = vpop.f32.mrb[0].mxu0
  %6754 = vdwg.mxu0
  %6755 = vmatprep.subr.mxu0 0.0
  %v6756 = vand.u32 %v6324, 4294901760
  %6757 = vmatpush1.msra.mxu0 %v6756
  %6758 = vmatprep.subr.mxu0 0.0
  %v6759 = vand.u32 %v6325, 4294901760
  %6760 = vmatpush1.msra.mxu0 %v6759
  %6761 = vmatprep.subr.mxu0 0.0
  %v6762 = vand.u32 %v6326, 4294901760
  %6763 = vmatpush1.msra.mxu0 %v6762
  %6764 = vmatprep.subr.mxu0 0.0
  %v6765 = vand.u32 %v6327, 4294901760
  %6766 = vmatpush1.msra.mxu0 %v6765
  %6767 = vmatprep.subr.mxu0 0.0
  %v6768 = vand.u32 %v6328, 4294901760
  %6769 = vmatpush1.msra.mxu0 %v6768
  %6770 = vmatprep.subr.mxu0 0.0
  %v6771 = vand.u32 %v6329, 4294901760
  %6772 = vmatpush1.msra.mxu0 %v6771
  %6773 = vmatprep.subr.mxu0 0.0
  %v6774 = vand.u32 %v6330, 4294901760
  %6775 = vmatpush1.msra.mxu0 %v6774
  %6776 = vmatprep.subr.mxu0 0.0
  %v6777 = vand.u32 %v6331, 4294901760
  %6778 = vmatpush1.msra.mxu0 %v6777
  %6779 = vmatprep.subr.mxu0 0.0
  %v6780 = vand.u32 %v6332, 4294901760
  %6781 = vmatpush1.msra.mxu0 %v6780
  %6782 = vmatprep.subr.mxu0 0.0
  %v6783 = vand.u32 %v6333, 4294901760
  %6784 = vmatpush1.msra.mxu0 %v6783
  %6785 = vmatprep.subr.mxu0 0.0
  %v6786 = vand.u32 %v6334, 4294901760
  %6787 = vmatpush1.msra.mxu0 %v6786
  %6788 = vmatprep.subr.mxu0 0.0
  %v6789 = vand.u32 %v6335, 4294901760
  %6790 = vmatpush1.msra.mxu0 %v6789
  %6791 = vmatprep.subr.mxu0 0.0
  %v6792 = vand.u32 %v6336, 4294901760
  %6793 = vmatpush1.msra.mxu0 %v6792
  %6794 = vmatprep.subr.mxu0 0.0
  %v6795 = vand.u32 %v6337, 4294901760
  %6796 = vmatpush1.msra.mxu0 %v6795
  %6797 = vmatprep.subr.mxu0 0.0
  %v6798 = vand.u32 %v6338, 4294901760
  %6799 = vmatpush1.msra.mxu0 %v6798
  %6800 = vmatprep.subr.mxu0 0.0
  %v6801 = vand.u32 %v6339, 4294901760
  %6802 = vmatpush1.msra.mxu0 %v6801
  %6803 = vmatprep.subr.mxu0 0.0
  %6804 = vmatpush1.msra.mxu0 0.0
  %6805 = vmatprep.subr.mxu0 0.0
  %6806 = vmatpush1.msra.mxu0 0.0
  %6807 = vmatprep.subr.mxu0 0.0
  %6808 = vmatpush1.msra.mxu0 0.0
  %6809 = vmatprep.subr.mxu0 0.0
  %6810 = vmatpush1.msra.mxu0 0.0
  %6811 = vmatprep.subr.mxu0 0.0
  %6812 = vmatpush1.msra.mxu0 0.0
  %6813 = vmatprep.subr.mxu0 0.0
  %6814 = vmatpush1.msra.mxu0 0.0
  %6815 = vmatprep.subr.mxu0 0.0
  %6816 = vmatpush1.msra.mxu0 0.0
  %6817 = vmatprep.subr.mxu0 0.0
  %6818 = vmatpush1.msra.mxu0 0.0
  %6819 = vmatprep.subr.mxu0 0.0
  %6820 = vmatpush1.msra.mxu0 0.0
  %6821 = vmatprep.subr.mxu0 0.0
  %6822 = vmatpush1.msra.mxu0 0.0
  %6823 = vmatprep.subr.mxu0 0.0
  %6824 = vmatpush1.msra.mxu0 0.0
  %6825 = vmatprep.subr.mxu0 0.0
  %6826 = vmatpush1.msra.mxu0 0.0
  %6827 = vmatprep.subr.mxu0 0.0
  %6828 = vmatpush1.msra.mxu0 0.0
  %6829 = vmatprep.subr.mxu0 0.0
  %6830 = vmatpush1.msra.mxu0 0.0
  %6831 = vmatprep.subr.mxu0 0.0
  %6832 = vmatpush1.msra.mxu0 0.0
  %6833 = vmatprep.subr.mxu0 0.0
  %6834 = vmatpush1.msra.mxu0 0.0
  %6835 = vmatprep.mubr.f32.mxu0 0.0
  %v6836 = vand.u32 %v6303, 4294901760
  %v6837 = vsub.f32 %v6303, %v6836
  %v6838 = vand.u32 %v6837, 4294901760
  %6839 = vmatmul.mubr.f32.gmra.mrb[0].mxu0 %v6838
  %v6840 = vpop.f32.mrb[0].mxu0
  %v6841 = vadd.f32 %v6731, %v6840
  %v6842 = vpop.f32.mrb[0].mxu0
  %6843 = vmatprep.mubr.f32.mxu0 0.0
  %v6844 = vand.u32 %v6309, 4294901760
  %v6845 = vsub.f32 %v6309, %v6844
  %v6846 = vand.u32 %v6845, 4294901760
  %6847 = vmatmul.mubr.f32.gmra.mrb[0].mxu0 %v6846
  %v6848 = vpop.f32.mrb[0].mxu0
  %v6849 = vadd.f32 %v6738, %v6848
  %v6850 = vpop.f32.mrb[0].mxu0
  %6851 = vmatprep.mubr.f32.mxu0 0.0
  %v6852 = vand.u32 %v6315, 4294901760
  %v6853 = vsub.f32 %v6315, %v6852
  %v6854 = vand.u32 %v6853, 4294901760
  %6855 = vmatmul.mubr.f32.gmra.mrb[0].mxu0 %v6854
  %v6856 = vpop.f32.mrb[0].mxu0
  %v6857 = vadd.f32 %v6745, %v6856
  %v6858 = vpop.f32.mrb[0].mxu0
  %6859 = vmatprep.mubr.f32.mxu0 0.0
  %v6860 = vand.u32 %v6321, 4294901760
  %v6861 = vsub.f32 %v6321, %v6860
  %v6862 = vand.u32 %v6861, 4294901760
  %6863 = vmatmul.mubr.f32.gmra.mrb[0].mxu0 %v6862
  %v6864 = vpop.f32.mrb[0].mxu0
  %v6865 = vadd.f32 %v6752, %v6864
  %v6866 = vpop.f32.mrb[0].mxu0
  %6867 = vdwg.mxu0
  %6868 = vmatprep.subr.mxu0 0.0
  %v6869 = vand.u32 %v6324, 4294901760
  %v6870 = vsub.f32 %v6324, %v6869
  %v6871 = vand.u32 %v6870, 4294901760
  %6872 = vmatpush1.msra.mxu0 %v6871
  %6873 = vmatprep.subr.mxu0 0.0
  %v6874 = vand.u32 %v6325, 4294901760
  %v6875 = vsub.f32 %v6325, %v6874
  %v6876 = vand.u32 %v6875, 4294901760
  %6877 = vmatpush1.msra.mxu0 %v6876
  %6878 = vmatprep.subr.mxu0 0.0
  %v6879 = vand.u32 %v6326, 4294901760
  %v6880 = vsub.f32 %v6326, %v6879
  %v6881 = vand.u32 %v6880, 4294901760
  %6882 = vmatpush1.msra.mxu0 %v6881
  %6883 = vmatprep.subr.mxu0 0.0
  %v6884 = vand.u32 %v6327, 4294901760
  %v6885 = vsub.f32 %v6327, %v6884
  %v6886 = vand.u32 %v6885, 4294901760
  %6887 = vmatpush1.msra.mxu0 %v6886
  %6888 = vmatprep.subr.mxu0 0.0
  %v6889 = vand.u32 %v6328, 4294901760
  %v6890 = vsub.f32 %v6328, %v6889
  %v6891 = vand.u32 %v6890, 4294901760
  %6892 = vmatpush1.msra.mxu0 %v6891
  %6893 = vmatprep.subr.mxu0 0.0
  %v6894 = vand.u32 %v6329, 4294901760
  %v6895 = vsub.f32 %v6329, %v6894
  %v6896 = vand.u32 %v6895, 4294901760
  %6897 = vmatpush1.msra.mxu0 %v6896
  %6898 = vmatprep.subr.mxu0 0.0
  %v6899 = vand.u32 %v6330, 4294901760
  %v6900 = vsub.f32 %v6330, %v6899
  %v6901 = vand.u32 %v6900, 4294901760
  %6902 = vmatpush1.msra.mxu0 %v6901
  %6903 = vmatprep.subr.mxu0 0.0
  %v6904 = vand.u32 %v6331, 4294901760
  %v6905 = vsub.f32 %v6331, %v6904
  %v6906 = vand.u32 %v6905, 4294901760
  %6907 = vmatpush1.msra.mxu0 %v6906
  %6908 = vmatprep.subr.mxu0 0.0
  %v6909 = vand.u32 %v6332, 4294901760
  %v6910 = vsub.f32 %v6332, %v6909
  %v6911 = vand.u32 %v6910, 4294901760
  %6912 = vmatpush1.msra.mxu0 %v6911
  %6913 = vmatprep.subr.mxu0 0.0
  %v6914 = vand.u32 %v6333, 4294901760
  %v6915 = vsub.f32 %v6333, %v6914
  %v6916 = vand.u32 %v6915, 4294901760
  %6917 = vmatpush1.msra.mxu0 %v6916
  %6918 = vmatprep.subr.mxu0 0.0
  %v6919 = vand.u32 %v6334, 4294901760
  %v6920 = vsub.f32 %v6334, %v6919
  %v6921 = vand.u32 %v6920, 4294901760
  %6922 = vmatpush1.msra.mxu0 %v6921
  %6923 = vmatprep.subr.mxu0 0.0
  %v6924 = vand.u32 %v6335, 4294901760
  %v6925 = vsub.f32 %v6335, %v6924
  %v6926 = vand.u32 %v6925, 4294901760
  %6927 = vmatpush1.msra.mxu0 %v6926
  %6928 = vmatprep.subr.mxu0 0.0
  %v6929 = vand.u32 %v6336, 4294901760
  %v6930 = vsub.f32 %v6336, %v6929
  %v6931 = vand.u32 %v6930, 4294901760
  %6932 = vmatpush1.msra.mxu0 %v6931
  %6933 = vmatprep.subr.mxu0 0.0
  %v6934 = vand.u32 %v6337, 4294901760
  %v6935 = vsub.f32 %v6337, %v6934
  %v6936 = vand.u32 %v6935, 4294901760
  %6937 = vmatpush1.msra.mxu0 %v6936
  %6938 = vmatprep.subr.mxu0 0.0
  %v6939 = vand.u32 %v6338, 4294901760
  %v6940 = vsub.f32 %v6338, %v6939
  %v6941 = vand.u32 %v6940, 4294901760
  %6942 = vmatpush1.msra.mxu0 %v6941
  %6943 = vmatprep.subr.mxu0 0.0
  %v6944 = vand.u32 %v6339, 4294901760
  %v6945 = vsub.f32 %v6339, %v6944
  %v6946 = vand.u32 %v6945, 4294901760
  %6947 = vmatpush1.msra.mxu0 %v6946
  %6948 = vmatprep.subr.mxu0 0.0
  %6949 = vmatpush1.msra.mxu0 0.0
  %6950 = vmatprep.subr.mxu0 0.0
  %6951 = vmatpush1.msra.mxu0 0.0
  %6952 = vmatprep.subr.mxu0 0.0
  %6953 = vmatpush1.msra.mxu0 0.0
  %6954 = vmatprep.subr.mxu0 0.0
  %6955 = vmatpush1.msra.mxu0 0.0
  %6956 = vmatprep.subr.mxu0 0.0
  %6957 = vmatpush1.msra.mxu0 0.0
  %6958 = vmatprep.subr.mxu0 0.0
  %6959 = vmatpush1.msra.mxu0 0.0
  %6960 = vmatprep.subr.mxu0 0.0
  %6961 = vmatpush1.msra.mxu0 0.0
  %6962 = vmatprep.subr.mxu0 0.0
  %6963 = vmatpush1.msra.mxu0 0.0
  %6964 = vmatprep.subr.mxu0 0.0
  %6965 = vmatpush1.msra.mxu0 0.0
  %6966 = vmatprep.subr.mxu0 0.0
  %6967 = vmatpush1.msra.mxu0 0.0
  %6968 = vmatprep.subr.mxu0 0.0
  %6969 = vmatpush1.msra.mxu0 0.0
  %6970 = vmatprep.subr.mxu0 0.0
  %6971 = vmatpush1.msra.mxu0 0.0
  %6972 = vmatprep.subr.mxu0 0.0
  %6973 = vmatpush1.msra.mxu0 0.0
  %6974 = vmatprep.subr.mxu0 0.0
  %6975 = vmatpush1.msra.mxu0 0.0
  %6976 = vmatprep.subr.mxu0 0.0
  %6977 = vmatpush1.msra.mxu0 0.0
  %6978 = vmatprep.subr.mxu0 0.0
  %6979 = vmatpush1.msra.mxu0 0.0
  %6980 = vmatprep.mubr.f32.mxu0 0.0
  %v6981 = vand.u32 %v6303, 4294901760
  %6982 = vmatmul.mubr.f32.gmra.mrb[0].mxu0 %v6981
  %v6983 = vpop.f32.mrb[0].mxu0
  %v6984 = vadd.f32 %v6841, %v6983
  %v6985 = vpop.f32.mrb[0].mxu0
  %6986 = vmatprep.mubr.f32.mxu0 0.0
  %v6987 = vand.u32 %v6309, 4294901760
  %6988 = vmatmul.mubr.f32.gmra.mrb[0].mxu0 %v6987
  %v6989 = vpop.f32.mrb[0].mxu0
  %v6990 = vadd.f32 %v6849, %v6989
  %v6991 = vpop.f32.mrb[0].mxu0
  %6992 = vmatprep.mubr.f32.mxu0 0.0
  %v6993 = vand.u32 %v6315, 4294901760
  %6994 = vmatmul.mubr.f32.gmra.mrb[0].mxu0 %v6993
  %v6995 = vpop.f32.mrb[0].mxu0
  %v6996 = vadd.f32 %v6857, %v6995
  %v6997 = vpop.f32.mrb[0].mxu0
  %6998 = vmatprep.mubr.f32.mxu0 0.0
  %v6999 = vand.u32 %v6321, 4294901760
  %7000 = vmatmul.mubr.f32.gmra.mrb[0].mxu0 %v6999
  %v7001 = vpop.f32.mrb[0].mxu0
  %v7002 = vadd.f32 %v6865, %v7001
  %v7003 = vpop.f32.mrb[0].mxu0
  %7004 = vdwg.mxu0
  %7005 = vmatprep.subr.mxu0 0.0
  %v7006 = vand.u32 %v6324, 4294901760
  %7007 = vmatpush1.msra.mxu0 %v7006
  %7008 = vmatprep.subr.mxu0 0.0
  %v7009 = vand.u32 %v6325, 4294901760
  %7010 = vmatpush1.msra.mxu0 %v7009
  %7011 = vmatprep.subr.mxu0 0.0
  %v7012 = vand.u32 %v6326, 4294901760
  %7013 = vmatpush1.msra.mxu0 %v7012
  %7014 = vmatprep.subr.mxu0 0.0
  %v7015 = vand.u32 %v6327, 4294901760
  %7016 = vmatpush1.msra.mxu0 %v7015
  %7017 = vmatprep.subr.mxu0 0.0
  %v7018 = vand.u32 %v6328, 4294901760
  %7019 = vmatpush1.msra.mxu0 %v7018
  %7020 = vmatprep.subr.mxu0 0.0
  %v7021 = vand.u32 %v6329, 4294901760
  %7022 = vmatpush1.msra.mxu0 %v7021
  %7023 = vmatprep.subr.mxu0 0.0
  %v7024 = vand.u32 %v6330, 4294901760
  %7025 = vmatpush1.msra.mxu0 %v7024
  %7026 = vmatprep.subr.mxu0 0.0
  %v7027 = vand.u32 %v6331, 4294901760
  %7028 = vmatpush1.msra.mxu0 %v7027
  %7029 = vmatprep.subr.mxu0 0.0
  %v7030 = vand.u32 %v6332, 4294901760
  %7031 = vmatpush1.msra.mxu0 %v7030
  %7032 = vmatprep.subr.mxu0 0.0
  %v7033 = vand.u32 %v6333, 4294901760
  %7034 = vmatpush1.msra.mxu0 %v7033
  %7035 = vmatprep.subr.mxu0 0.0
  %v7036 = vand.u32 %v6334, 4294901760
  %7037 = vmatpush1.msra.mxu0 %v7036
  %7038 = vmatprep.subr.mxu0 0.0
  %v7039 = vand.u32 %v6335, 4294901760
  %7040 = vmatpush1.msra.mxu0 %v7039
  %7041 = vmatprep.subr.mxu0 0.0
  %v7042 = vand.u32 %v6336, 4294901760
  %7043 = vmatpush1.msra.mxu0 %v7042
  %7044 = vmatprep.subr.mxu0 0.0
  %v7045 = vand.u32 %v6337, 4294901760
  %7046 = vmatpush1.msra.mxu0 %v7045
  %7047 = vmatprep.subr.mxu0 0.0
  %v7048 = vand.u32 %v6338, 4294901760
  %7049 = vmatpush1.msra.mxu0 %v7048
  %7050 = vmatprep.subr.mxu0 0.0
  %v7051 = vand.u32 %v6339, 4294901760
  %7052 = vmatpush1.msra.mxu0 %v7051
  %7053 = vmatprep.subr.mxu0 0.0
  %7054 = vmatpush1.msra.mxu0 0.0
  %7055 = vmatprep.subr.mxu0 0.0
  %7056 = vmatpush1.msra.mxu0 0.0
  %7057 = vmatprep.subr.mxu0 0.0
  %7058 = vmatpush1.msra.mxu0 0.0
  %7059 = vmatprep.subr.mxu0 0.0
  %7060 = vmatpush1.msra.mxu0 0.0
  %7061 = vmatprep.subr.mxu0 0.0
  %7062 = vmatpush1.msra.mxu0 0.0
  %7063 = vmatprep.subr.mxu0 0.0
  %7064 = vmatpush1.msra.mxu0 0.0
  %7065 = vmatprep.subr.mxu0 0.0
  %7066 = vmatpush1.msra.mxu0 0.0
  %7067 = vmatprep.subr.mxu0 0.0
  %7068 = vmatpush1.msra.mxu0 0.0
  %7069 = vmatprep.subr.mxu0 0.0
  %7070 = vmatpush1.msra.mxu0 0.0
  %7071 = vmatprep.subr.mxu0 0.0
  %7072 = vmatpush1.msra.mxu0 0.0
  %7073 = vmatprep.subr.mxu0 0.0
  %7074 = vmatpush1.msra.mxu0 0.0
  %7075 = vmatprep.subr.mxu0 0.0
  %7076 = vmatpush1.msra.mxu0 0.0
  %7077 = vmatprep.subr.mxu0 0.0
  %7078 = vmatpush1.msra.mxu0 0.0
  %7079 = vmatprep.subr.mxu0 0.0
  %7080 = vmatpush1.msra.mxu0 0.0
  %7081 = vmatprep.subr.mxu0 0.0
  %7082 = vmatpush1.msra.mxu0 0.0
  %7083 = vmatprep.subr.mxu0 0.0
  %7084 = vmatpush1.msra.mxu0 0.0
  %7085 = vmatprep.mubr.f32.mxu0 0.0
  %v7086 = vand.u32 %v6303, 4294901760
  %7087 = vmatmul.mubr.f32.gmra.mrb[0].mxu0 %v7086
  %v7088 = vpop.f32.mrb[0].mxu0
  %v7089 = vadd.f32 %v6984, %v7088
  %v7090 = vpop.f32.mrb[0].mxu0
  %7091 = vmatprep.mubr.f32.mxu0 0.0
  %v7092 = vand.u32 %v6309, 4294901760
  %7093 = vmatmul.mubr.f32.gmra.mrb[0].mxu0 %v7092
  %v7094 = vpop.f32.mrb[0].mxu0
  %v7095 = vadd.f32 %v6990, %v7094
  %v7096 = vpop.f32.mrb[0].mxu0
  %7097 = vmatprep.mubr.f32.mxu0 0.0
  %v7098 = vand.u32 %v6315, 4294901760
  %7099 = vmatmul.mubr.f32.gmra.mrb[0].mxu0 %v7098
  %v7100 = vpop.f32.mrb[0].mxu0
  %v7101 = vadd.f32 %v6996, %v7100
  %v7102 = vpop.f32.mrb[0].mxu0
  %7103 = vmatprep.mubr.f32.mxu0 0.0
  %v7104 = vand.u32 %v6321, 4294901760
  %7105 = vmatmul.mubr.f32.gmra.mrb[0].mxu0 %v7104
  %v7106 = vpop.f32.mrb[0].mxu0
  %v7107 = vadd.f32 %v7002, %v7106
  %v7108 = vpop.f32.mrb[0].mxu0
  %7109 = vdwg.mxu0
  %7110 = vmatprep.subr.mxu0 0.0
  %v7111 = vand.u32 %v5694, 4294901760
  %7112 = vmatpush1.msra.mxu0 %v7111
  %7113 = vmatprep.subr.mxu0 0.0
  %v7114 = vand.u32 %v5695, 4294901760
  %7115 = vmatpush1.msra.mxu0 %v7114
  %7116 = vmatprep.subr.mxu0 0.0
  %v7117 = vand.u32 %v5696, 4294901760
  %7118 = vmatpush1.msra.mxu0 %v7117
  %7119 = vmatprep.subr.mxu0 0.0
  %v7120 = vand.u32 %v5697, 4294901760
  %7121 = vmatpush1.msra.mxu0 %v7120
  %7122 = vmatprep.subr.mxu0 0.0
  %v7123 = vand.u32 %v5698, 4294901760
  %7124 = vmatpush1.msra.mxu0 %v7123
  %7125 = vmatprep.subr.mxu0 0.0
  %v7126 = vand.u32 %v5699, 4294901760
  %7127 = vmatpush1.msra.mxu0 %v7126
  %7128 = vmatprep.subr.mxu0 0.0
  %v7129 = vand.u32 %v5700, 4294901760
  %7130 = vmatpush1.msra.mxu0 %v7129
  %7131 = vmatprep.subr.mxu0 0.0
  %v7132 = vand.u32 %v5701, 4294901760
  %7133 = vmatpush1.msra.mxu0 %v7132
  %7134 = vmatprep.subr.mxu0 0.0
  %v7135 = vand.u32 %v5702, 4294901760
  %7136 = vmatpush1.msra.mxu0 %v7135
  %7137 = vmatprep.subr.mxu0 0.0
  %v7138 = vand.u32 %v5703, 4294901760
  %7139 = vmatpush1.msra.mxu0 %v7138
  %7140 = vmatprep.subr.mxu0 0.0
  %v7141 = vand.u32 %v5704, 4294901760
  %7142 = vmatpush1.msra.mxu0 %v7141
  %7143 = vmatprep.subr.mxu0 0.0
  %v7144 = vand.u32 %v5705, 4294901760
  %7145 = vmatpush1.msra.mxu0 %v7144
  %7146 = vmatprep.subr.mxu0 0.0
  %v7147 = vand.u32 %v5706, 4294901760
  %7148 = vmatpush1.msra.mxu0 %v7147
  %7149 = vmatprep.subr.mxu0 0.0
  %v7150 = vand.u32 %v5707, 4294901760
  %7151 = vmatpush1.msra.mxu0 %v7150
  %7152 = vmatprep.subr.mxu0 0.0
  %v7153 = vand.u32 %v5708, 4294901760
  %7154 = vmatpush1.msra.mxu0 %v7153
  %7155 = vmatprep.subr.mxu0 0.0
  %v7156 = vand.u32 %v5709, 4294901760
  %7157 = vmatpush1.msra.mxu0 %v7156
  %7158 = vmatprep.subr.mxu0 0.0
  %7159 = vmatpush1.msra.mxu0 0.0
  %7160 = vmatprep.subr.mxu0 0.0
  %7161 = vmatpush1.msra.mxu0 0.0
  %7162 = vmatprep.subr.mxu0 0.0
  %7163 = vmatpush1.msra.mxu0 0.0
  %7164 = vmatprep.subr.mxu0 0.0
  %7165 = vmatpush1.msra.mxu0 0.0
  %7166 = vmatprep.subr.mxu0 0.0
  %7167 = vmatpush1.msra.mxu0 0.0
  %7168 = vmatprep.subr.mxu0 0.0
  %7169 = vmatpush1.msra.mxu0 0.0
  %7170 = vmatprep.subr.mxu0 0.0
  %7171 = vmatpush1.msra.mxu0 0.0
  %7172 = vmatprep.subr.mxu0 0.0
  %7173 = vmatpush1.msra.mxu0 0.0
  %7174 = vmatprep.subr.mxu0 0.0
  %7175 = vmatpush1.msra.mxu0 0.0
  %7176 = vmatprep.subr.mxu0 0.0
  %7177 = vmatpush1.msra.mxu0 0.0
  %7178 = vmatprep.subr.mxu0 0.0
  %7179 = vmatpush1.msra.mxu0 0.0
  %7180 = vmatprep.subr.mxu0 0.0
  %7181 = vmatpush1.msra.mxu0 0.0
  %7182 = vmatprep.subr.mxu0 0.0
  %7183 = vmatpush1.msra.mxu0 0.0
  %7184 = vmatprep.subr.mxu0 0.0
  %7185 = vmatpush1.msra.mxu0 0.0
  %7186 = vmatprep.subr.mxu0 0.0
  %7187 = vmatpush1.msra.mxu0 0.0
  %7188 = vmatprep.subr.mxu0 0.0
  %7189 = vmatpush1.msra.mxu0 0.0
  %7190 = vmatprep.mubr.f32.mxu0 0.0
  %v7191 = vand.u32 %v5688, 4294901760
  %v7192 = vsub.f32 %v5688, %v7191
  %v7193 = vand.u32 %v7192, 4294901760
  %v7194 = vsub.f32 %v7192, %v7193
  %v7195 = vand.u32 %v7194, 4294901760
  %7196 = vmatmul.mubr.f32.gmra.mrb[0].mxu0 %v7195
  %v7197 = vpop.f32.mrb[0].mxu0
  %v7198 = vadd.f32 %v7089, %v7197
  %v7199 = vpop.f32.mrb[0].mxu0
  %7200 = vmatprep.mubr.f32.mxu0 0.0
  %v7201 = vand.u32 %v5689, 4294901760
  %v7202 = vsub.f32 %v5689, %v7201
  %v7203 = vand.u32 %v7202, 4294901760
  %v7204 = vsub.f32 %v7202, %v7203
  %v7205 = vand.u32 %v7204, 4294901760
  %7206 = vmatmul.mubr.f32.gmra.mrb[0].mxu0 %v7205
  %v7207 = vpop.f32.mrb[0].mxu0
  %v7208 = vadd.f32 %v7095, %v7207
  %v7209 = vpop.f32.mrb[0].mxu0
  %7210 = vmatprep.mubr.f32.mxu0 0.0
  %v7211 = vand.u32 %v5690, 4294901760
  %v7212 = vsub.f32 %v5690, %v7211
  %v7213 = vand.u32 %v7212, 4294901760
  %v7214 = vsub.f32 %v7212, %v7213
  %v7215 = vand.u32 %v7214, 4294901760
  %7216 = vmatmul.mubr.f32.gmra.mrb[0].mxu0 %v7215
  %v7217 = vpop.f32.mrb[0].mxu0
  %v7218 = vadd.f32 %v7101, %v7217
  %v7219 = vpop.f32.mrb[0].mxu0
  %7220 = vmatprep.mubr.f32.mxu0 0.0
  %v7221 = vand.u32 %v5691, 4294901760
  %v7222 = vsub.f32 %v5691, %v7221
  %v7223 = vand.u32 %v7222, 4294901760
  %v7224 = vsub.f32 %v7222, %v7223
  %v7225 = vand.u32 %v7224, 4294901760
  %7226 = vmatmul.mubr.f32.gmra.mrb[0].mxu0 %v7225
  %v7227 = vpop.f32.mrb[0].mxu0
  %v7228 = vadd.f32 %v7107, %v7227
  %v7229 = vpop.f32.mrb[0].mxu0
  %7230 = vdwg.mxu0
  %7231 = vmatprep.subr.mxu0 0.0
  %v7232 = vand.u32 %v5694, 4294901760
  %v7233 = vsub.f32 %v5694, %v7232
  %v7234 = vand.u32 %v7233, 4294901760
  %v7235 = vsub.f32 %v7233, %v7234
  %v7236 = vand.u32 %v7235, 4294901760
  %7237 = vmatpush1.msra.mxu0 %v7236
  %7238 = vmatprep.subr.mxu0 0.0
  %v7239 = vand.u32 %v5695, 4294901760
  %v7240 = vsub.f32 %v5695, %v7239
  %v7241 = vand.u32 %v7240, 4294901760
  %v7242 = vsub.f32 %v7240, %v7241
  %v7243 = vand.u32 %v7242, 4294901760
  %7244 = vmatpush1.msra.mxu0 %v7243
  %7245 = vmatprep.subr.mxu0 0.0
  %v7246 = vand.u32 %v5696, 4294901760
  %v7247 = vsub.f32 %v5696, %v7246
  %v7248 = vand.u32 %v7247, 4294901760
  %v7249 = vsub.f32 %v7247, %v7248
  %v7250 = vand.u32 %v7249, 4294901760
  %7251 = vmatpush1.msra.mxu0 %v7250
  %7252 = vmatprep.subr.mxu0 0.0
  %v7253 = vand.u32 %v5697, 4294901760
  %v7254 = vsub.f32 %v5697, %v7253
  %v7255 = vand.u32 %v7254, 4294901760
  %v7256 = vsub.f32 %v7254, %v7255
  %v7257 = vand.u32 %v7256, 4294901760
  %7258 = vmatpush1.msra.mxu0 %v7257
  %7259 = vmatprep.subr.mxu0 0.0
  %v7260 = vand.u32 %v5698, 4294901760
  %v7261 = vsub.f32 %v5698, %v7260
  %v7262 = vand.u32 %v7261, 4294901760
  %v7263 = vsub.f32 %v7261, %v7262
  %v7264 = vand.u32 %v7263, 4294901760
  %7265 = vmatpush1.msra.mxu0 %v7264
  %7266 = vmatprep.subr.mxu0 0.0
  %v7267 = vand.u32 %v5699, 4294901760
  %v7268 = vsub.f32 %v5699, %v7267
  %v7269 = vand.u32 %v7268, 4294901760
  %v7270 = vsub.f32 %v7268, %v7269
  %v7271 = vand.u32 %v7270, 4294901760
  %7272 = vmatpush1.msra.mxu0 %v7271
  %7273 = vmatprep.subr.mxu0 0.0
  %v7274 = vand.u32 %v5700, 4294901760
  %v7275 = vsub.f32 %v5700, %v7274
  %v7276 = vand.u32 %v7275, 4294901760
  %v7277 = vsub.f32 %v7275, %v7276
  %v7278 = vand.u32 %v7277, 4294901760
  %7279 = vmatpush1.msra.mxu0 %v7278
  %7280 = vmatprep.subr.mxu0 0.0
  %v7281 = vand.u32 %v5701, 4294901760
  %v7282 = vsub.f32 %v5701, %v7281
  %v7283 = vand.u32 %v7282, 4294901760
  %v7284 = vsub.f32 %v7282, %v7283
  %v7285 = vand.u32 %v7284, 4294901760
  %7286 = vmatpush1.msra.mxu0 %v7285
  %7287 = vmatprep.subr.mxu0 0.0
  %v7288 = vand.u32 %v5702, 4294901760
  %v7289 = vsub.f32 %v5702, %v7288
  %v7290 = vand.u32 %v7289, 4294901760
  %v7291 = vsub.f32 %v7289, %v7290
  %v7292 = vand.u32 %v7291, 4294901760
  %7293 = vmatpush1.msra.mxu0 %v7292
  %7294 = vmatprep.subr.mxu0 0.0
  %v7295 = vand.u32 %v5703, 4294901760
  %v7296 = vsub.f32 %v5703, %v7295
  %v7297 = vand.u32 %v7296, 4294901760
  %v7298 = vsub.f32 %v7296, %v7297
  %v7299 = vand.u32 %v7298, 4294901760
  %7300 = vmatpush1.msra.mxu0 %v7299
  %7301 = vmatprep.subr.mxu0 0.0
  %v7302 = vand.u32 %v5704, 4294901760
  %v7303 = vsub.f32 %v5704, %v7302
  %v7304 = vand.u32 %v7303, 4294901760
  %v7305 = vsub.f32 %v7303, %v7304
  %v7306 = vand.u32 %v7305, 4294901760
  %7307 = vmatpush1.msra.mxu0 %v7306
  %7308 = vmatprep.subr.mxu0 0.0
  %v7309 = vand.u32 %v5705, 4294901760
  %v7310 = vsub.f32 %v5705, %v7309
  %v7311 = vand.u32 %v7310, 4294901760
  %v7312 = vsub.f32 %v7310, %v7311
  %v7313 = vand.u32 %v7312, 4294901760
  %7314 = vmatpush1.msra.mxu0 %v7313
  %7315 = vmatprep.subr.mxu0 0.0
  %v7316 = vand.u32 %v5706, 4294901760
  %v7317 = vsub.f32 %v5706, %v7316
  %v7318 = vand.u32 %v7317, 4294901760
  %v7319 = vsub.f32 %v7317, %v7318
  %v7320 = vand.u32 %v7319, 4294901760
  %7321 = vmatpush1.msra.mxu0 %v7320
  %7322 = vmatprep.subr.mxu0 0.0
  %v7323 = vand.u32 %v5707, 4294901760
  %v7324 = vsub.f32 %v5707, %v7323
  %v7325 = vand.u32 %v7324, 4294901760
  %v7326 = vsub.f32 %v7324, %v7325
  %v7327 = vand.u32 %v7326, 4294901760
  %7328 = vmatpush1.msra.mxu0 %v7327
  %7329 = vmatprep.subr.mxu0 0.0
  %v7330 = vand.u32 %v5708, 4294901760
  %v7331 = vsub.f32 %v5708, %v7330
  %v7332 = vand.u32 %v7331, 4294901760
  %v7333 = vsub.f32 %v7331, %v7332
  %v7334 = vand.u32 %v7333, 4294901760
  %7335 = vmatpush1.msra.mxu0 %v7334
  %7336 = vmatprep.subr.mxu0 0.0
  %v7337 = vand.u32 %v5709, 4294901760
  %v7338 = vsub.f32 %v5709, %v7337
  %v7339 = vand.u32 %v7338, 4294901760
  %v7340 = vsub.f32 %v7338, %v7339
  %v7341 = vand.u32 %v7340, 4294901760
  %7342 = vmatpush1.msra.mxu0 %v7341
  %7343 = vmatprep.subr.mxu0 0.0
  %7344 = vmatpush1.msra.mxu0 0.0
  %7345 = vmatprep.subr.mxu0 0.0
  %7346 = vmatpush1.msra.mxu0 0.0
  %7347 = vmatprep.subr.mxu0 0.0
  %7348 = vmatpush1.msra.mxu0 0.0
  %7349 = vmatprep.subr.mxu0 0.0
  %7350 = vmatpush1.msra.mxu0 0.0
  %7351 = vmatprep.subr.mxu0 0.0
  %7352 = vmatpush1.msra.mxu0 0.0
  %7353 = vmatprep.subr.mxu0 0.0
  %7354 = vmatpush1.msra.mxu0 0.0
  %7355 = vmatprep.subr.mxu0 0.0
  %7356 = vmatpush1.msra.mxu0 0.0
  %7357 = vmatprep.subr.mxu0 0.0
  %7358 = vmatpush1.msra.mxu0 0.0
  %7359 = vmatprep.subr.mxu0 0.0
  %7360 = vmatpush1.msra.mxu0 0.0
  %7361 = vmatprep.subr.mxu0 0.0
  %7362 = vmatpush1.msra.mxu0 0.0
  %7363 = vmatprep.subr.mxu0 0.0
  %7364 = vmatpush1.msra.mxu0 0.0
  %7365 = vmatprep.subr.mxu0 0.0
  %7366 = vmatpush1.msra.mxu0 0.0
  %7367 = vmatprep.subr.mxu0 0.0
  %7368 = vmatpush1.msra.mxu0 0.0
  %7369 = vmatprep.subr.mxu0 0.0
  %7370 = vmatpush1.msra.mxu0 0.0
  %7371 = vmatprep.subr.mxu0 0.0
  %7372 = vmatpush1.msra.mxu0 0.0
  %7373 = vmatprep.subr.mxu0 0.0
  %7374 = vmatpush1.msra.mxu0 0.0
  %7375 = vmatprep.mubr.f32.mxu0 0.0
  %v7376 = vand.u32 %v5688, 4294901760
  %7377 = vmatmul.mubr.f32.gmra.mrb[0].mxu0 %v7376
  %v7378 = vpop.f32.mrb[0].mxu0
  %v7379 = vadd.f32 %v7198, %v7378
  %v7380 = vpop.f32.mrb[0].mxu0
  %7381 = vmatprep.mubr.f32.mxu0 0.0
  %v7382 = vand.u32 %v5689, 4294901760
  %7383 = vmatmul.mubr.f32.gmra.mrb[0].mxu0 %v7382
  %v7384 = vpop.f32.mrb[0].mxu0
  %v7385 = vadd.f32 %v7208, %v7384
  %v7386 = vpop.f32.mrb[0].mxu0
  %7387 = vmatprep.mubr.f32.mxu0 0.0
  %v7388 = vand.u32 %v5690, 4294901760
  %7389 = vmatmul.mubr.f32.gmra.mrb[0].mxu0 %v7388
  %v7390 = vpop.f32.mrb[0].mxu0
  %v7391 = vadd.f32 %v7218, %v7390
  %v7392 = vpop.f32.mrb[0].mxu0
  %7393 = vmatprep.mubr.f32.mxu0 0.0
  %v7394 = vand.u32 %v5691, 4294901760
  %7395 = vmatmul.mubr.f32.gmra.mrb[0].mxu0 %v7394
  %v7396 = vpop.f32.mrb[0].mxu0
  %v7397 = vadd.f32 %v7228, %v7396
  %v7398 = vpop.f32.mrb[0].mxu0
  %7399 = vdwg.mxu0
  %7400 = vmatprep.subr.mxu0 0.0
  %v7401 = vand.u32 %v5694, 4294901760
  %v7402 = vsub.f32 %v5694, %v7401
  %7403 = vmatpush1.msra.mxu0 %v7402
  %7404 = vmatprep.subr.mxu0 0.0
  %v7405 = vand.u32 %v5695, 4294901760
  %v7406 = vsub.f32 %v5695, %v7405
  %7407 = vmatpush1.msra.mxu0 %v7406
  %7408 = vmatprep.subr.mxu0 0.0
  %v7409 = vand.u32 %v5696, 4294901760
  %v7410 = vsub.f32 %v5696, %v7409
  %7411 = vmatpush1.msra.mxu0 %v7410
  %7412 = vmatprep.subr.mxu0 0.0
  %v7413 = vand.u32 %v5697, 4294901760
  %v7414 = vsub.f32 %v5697, %v7413
  %7415 = vmatpush1.msra.mxu0 %v7414
  %7416 = vmatprep.subr.mxu0 0.0
  %v7417 = vand.u32 %v5698, 4294901760
  %v7418 = vsub.f32 %v5698, %v7417
  %7419 = vmatpush1.msra.mxu0 %v7418
  %7420 = vmatprep.subr.mxu0 0.0
  %v7421 = vand.u32 %v5699, 4294901760
  %v7422 = vsub.f32 %v5699, %v7421
  %7423 = vmatpush1.msra.mxu0 %v7422
  %7424 = vmatprep.subr.mxu0 0.0
  %v7425 = vand.u32 %v5700, 4294901760
  %v7426 = vsub.f32 %v5700, %v7425
  %7427 = vmatpush1.msra.mxu0 %v7426
  %7428 = vmatprep.subr.mxu0 0.0
  %v7429 = vand.u32 %v5701, 4294901760
  %v7430 = vsub.f32 %v5701, %v7429
  %7431 = vmatpush1.msra.mxu0 %v7430
  %7432 = vmatprep.subr.mxu0 0.0
  %v7433 = vand.u32 %v5702, 4294901760
  %v7434 = vsub.f32 %v5702, %v7433
  %7435 = vmatpush1.msra.mxu0 %v7434
  %7436 = vmatprep.subr.mxu0 0.0
  %v7437 = vand.u32 %v5703, 4294901760
  %v7438 = vsub.f32 %v5703, %v7437
  %7439 = vmatpush1.msra.mxu0 %v7438
  %7440 = vmatprep.subr.mxu0 0.0
  %v7441 = vand.u32 %v5704, 4294901760
  %v7442 = vsub.f32 %v5704, %v7441
  %7443 = vmatpush1.msra.mxu0 %v7442
  %7444 = vmatprep.subr.mxu0 0.0
  %v7445 = vand.u32 %v5705, 4294901760
  %v7446 = vsub.f32 %v5705, %v7445
  %7447 = vmatpush1.msra.mxu0 %v7446
  %7448 = vmatprep.subr.mxu0 0.0
  %v7449 = vand.u32 %v5706, 4294901760
  %v7450 = vsub.f32 %v5706, %v7449
  %7451 = vmatpush1.msra.mxu0 %v7450
  %7452 = vmatprep.subr.mxu0 0.0
  %v7453 = vand.u32 %v5707, 4294901760
  %v7454 = vsub.f32 %v5707, %v7453
  %7455 = vmatpush1.msra.mxu0 %v7454
  %7456 = vmatprep.subr.mxu0 0.0
  %v7457 = vand.u32 %v5708, 4294901760
  %v7458 = vsub.f32 %v5708, %v7457
  %7459 = vmatpush1.msra.mxu0 %v7458
  %7460 = vmatprep.subr.mxu0 0.0
  %v7461 = vand.u32 %v5709, 4294901760
  %v7462 = vsub.f32 %v5709, %v7461
  %7463 = vmatpush1.msra.mxu0 %v7462
  %7464 = vmatprep.subr.mxu0 0.0
  %7465 = vmatpush1.msra.mxu0 0.0
  %7466 = vmatprep.subr.mxu0 0.0
  %7467 = vmatpush1.msra.mxu0 0.0
  %7468 = vmatprep.subr.mxu0 0.0
  %7469 = vmatpush1.msra.mxu0 0.0
  %7470 = vmatprep.subr.mxu0 0.0
  %7471 = vmatpush1.msra.mxu0 0.0
  %7472 = vmatprep.subr.mxu0 0.0
  %7473 = vmatpush1.msra.mxu0 0.0
  %7474 = vmatprep.subr.mxu0 0.0
  %7475 = vmatpush1.msra.mxu0 0.0
  %7476 = vmatprep.subr.mxu0 0.0
  %7477 = vmatpush1.msra.mxu0 0.0
  %7478 = vmatprep.subr.mxu0 0.0
  %7479 = vmatpush1.msra.mxu0 0.0
  %7480 = vmatprep.subr.mxu0 0.0
  %7481 = vmatpush1.msra.mxu0 0.0
  %7482 = vmatprep.subr.mxu0 0.0
  %7483 = vmatpush1.msra.mxu0 0.0
  %7484 = vmatprep.subr.mxu0 0.0
  %7485 = vmatpush1.msra.mxu0 0.0
  %7486 = vmatprep.subr.mxu0 0.0
  %7487 = vmatpush1.msra.mxu0 0.0
  %7488 = vmatprep.subr.mxu0 0.0
  %7489 = vmatpush1.msra.mxu0 0.0
  %7490 = vmatprep.subr.mxu0 0.0
  %7491 = vmatpush1.msra.mxu0 0.0
  %7492 = vmatprep.subr.mxu0 0.0
  %7493 = vmatpush1.msra.mxu0 0.0
  %7494 = vmatprep.subr.mxu0 0.0
  %7495 = vmatpush1.msra.mxu0 0.0
  %7496 = vmatprep.mubr.f32.mxu0 0.0
  %v7497 = vand.u32 %v5688, 4294901760
  %v7498 = vsub.f32 %v5688, %v7497
  %7499 = vmatmul.mubr.f32.gmra.mrb[0].mxu0 %v7498
  %v7500 = vpop.f32.mrb[0].mxu0
  %v7501 = vadd.f32 %v7379, %v7500
  %v7502 = vpop.f32.mrb[0].mxu0
  %7503 = vmatprep.mubr.f32.mxu0 0.0
  %v7504 = vand.u32 %v5689, 4294901760
  %v7505 = vsub.f32 %v5689, %v7504
  %7506 = vmatmul.mubr.f32.gmra.mrb[0].mxu0 %v7505
  %v7507 = vpop.f32.mrb[0].mxu0
  %v7508 = vadd.f32 %v7385, %v7507
  %v7509 = vpop.f32.mrb[0].mxu0
  %7510 = vmatprep.mubr.f32.mxu0 0.0
  %v7511 = vand.u32 %v5690, 4294901760
  %v7512 = vsub.f32 %v5690, %v7511
  %7513 = vmatmul.mubr.f32.gmra.mrb[0].mxu0 %v7512
  %v7514 = vpop.f32.mrb[0].mxu0
  %v7515 = vadd.f32 %v7391, %v7514
  %v7516 = vpop.f32.mrb[0].mxu0
  %7517 = vmatprep.mubr.f32.mxu0 0.0
  %v7518 = vand.u32 %v5691, 4294901760
  %v7519 = vsub.f32 %v5691, %v7518
  %7520 = vmatmul.mubr.f32.gmra.mrb[0].mxu0 %v7519
  %v7521 = vpop.f32.mrb[0].mxu0
  %v7522 = vadd.f32 %v7397, %v7521
  %v7523 = vpop.f32.mrb[0].mxu0
  %7524 = vdwg.mxu0
  %7525 = vmatprep.subr.mxu0 0.0
  %v7526 = vand.u32 %v5694, 4294901760
  %7527 = vmatpush1.msra.mxu0 %v7526
  %7528 = vmatprep.subr.mxu0 0.0
  %v7529 = vand.u32 %v5695, 4294901760
  %7530 = vmatpush1.msra.mxu0 %v7529
  %7531 = vmatprep.subr.mxu0 0.0
  %v7532 = vand.u32 %v5696, 4294901760
  %7533 = vmatpush1.msra.mxu0 %v7532
  %7534 = vmatprep.subr.mxu0 0.0
  %v7535 = vand.u32 %v5697, 4294901760
  %7536 = vmatpush1.msra.mxu0 %v7535
  %7537 = vmatprep.subr.mxu0 0.0
  %v7538 = vand.u32 %v5698, 4294901760
  %7539 = vmatpush1.msra.mxu0 %v7538
  %7540 = vmatprep.subr.mxu0 0.0
  %v7541 = vand.u32 %v5699, 4294901760
  %7542 = vmatpush1.msra.mxu0 %v7541
  %7543 = vmatprep.subr.mxu0 0.0
  %v7544 = vand.u32 %v5700, 4294901760
  %7545 = vmatpush1.msra.mxu0 %v7544
  %7546 = vmatprep.subr.mxu0 0.0
  %v7547 = vand.u32 %v5701, 4294901760
  %7548 = vmatpush1.msra.mxu0 %v7547
  %7549 = vmatprep.subr.mxu0 0.0
  %v7550 = vand.u32 %v5702, 4294901760
  %7551 = vmatpush1.msra.mxu0 %v7550
  %7552 = vmatprep.subr.mxu0 0.0
  %v7553 = vand.u32 %v5703, 4294901760
  %7554 = vmatpush1.msra.mxu0 %v7553
  %7555 = vmatprep.subr.mxu0 0.0
  %v7556 = vand.u32 %v5704, 4294901760
  %7557 = vmatpush1.msra.mxu0 %v7556
  %7558 = vmatprep.subr.mxu0 0.0
  %v7559 = vand.u32 %v5705, 4294901760
  %7560 = vmatpush1.msra.mxu0 %v7559
  %7561 = vmatprep.subr.mxu0 0.0
  %v7562 = vand.u32 %v5706, 4294901760
  %7563 = vmatpush1.msra.mxu0 %v7562
  %7564 = vmatprep.subr.mxu0 0.0
  %v7565 = vand.u32 %v5707, 4294901760
  %7566 = vmatpush1.msra.mxu0 %v7565
  %7567 = vmatprep.subr.mxu0 0.0
  %v7568 = vand.u32 %v5708, 4294901760
  %7569 = vmatpush1.msra.mxu0 %v7568
  %7570 = vmatprep.subr.mxu0 0.0
  %v7571 = vand.u32 %v5709, 4294901760
  %7572 = vmatpush1.msra.mxu0 %v7571
  %7573 = vmatprep.subr.mxu0 0.0
  %7574 = vmatpush1.msra.mxu0 0.0
  %7575 = vmatprep.subr.mxu0 0.0
  %7576 = vmatpush1.msra.mxu0 0.0
  %7577 = vmatprep.subr.mxu0 0.0
  %7578 = vmatpush1.msra.mxu0 0.0
  %7579 = vmatprep.subr.mxu0 0.0
  %7580 = vmatpush1.msra.mxu0 0.0
  %7581 = vmatprep.subr.mxu0 0.0
  %7582 = vmatpush1.msra.mxu0 0.0
  %7583 = vmatprep.subr.mxu0 0.0
  %7584 = vmatpush1.msra.mxu0 0.0
  %7585 = vmatprep.subr.mxu0 0.0
  %7586 = vmatpush1.msra.mxu0 0.0
  %7587 = vmatprep.subr.mxu0 0.0
  %7588 = vmatpush1.msra.mxu0 0.0
  %7589 = vmatprep.subr.mxu0 0.0
  %7590 = vmatpush1.msra.mxu0 0.0
  %7591 = vmatprep.subr.mxu0 0.0
  %7592 = vmatpush1.msra.mxu0 0.0
  %7593 = vmatprep.subr.mxu0 0.0
  %7594 = vmatpush1.msra.mxu0 0.0
  %7595 = vmatprep.subr.mxu0 0.0
  %7596 = vmatpush1.msra.mxu0 0.0
  %7597 = vmatprep.subr.mxu0 0.0
  %7598 = vmatpush1.msra.mxu0 0.0
  %7599 = vmatprep.subr.mxu0 0.0
  %7600 = vmatpush1.msra.mxu0 0.0
  %7601 = vmatprep.subr.mxu0 0.0
  %7602 = vmatpush1.msra.mxu0 0.0
  %7603 = vmatprep.subr.mxu0 0.0
  %7604 = vmatpush1.msra.mxu0 0.0
  %7605 = vmatprep.mubr.f32.mxu0 0.0
  %v7606 = vand.u32 %v5688, 4294901760
  %v7607 = vsub.f32 %v5688, %v7606
  %v7608 = vand.u32 %v7607, 4294901760
  %7609 = vmatmul.mubr.f32.gmra.mrb[0].mxu0 %v7608
  %v7610 = vpop.f32.mrb[0].mxu0
  %v7611 = vadd.f32 %v7501, %v7610
  %v7612 = vpop.f32.mrb[0].mxu0
  %7613 = vmatprep.mubr.f32.mxu0 0.0
  %v7614 = vand.u32 %v5689, 4294901760
  %v7615 = vsub.f32 %v5689, %v7614
  %v7616 = vand.u32 %v7615, 4294901760
  %7617 = vmatmul.mubr.f32.gmra.mrb[0].mxu0 %v7616
  %v7618 = vpop.f32.mrb[0].mxu0
  %v7619 = vadd.f32 %v7508, %v7618
  %v7620 = vpop.f32.mrb[0].mxu0
  %7621 = vmatprep.mubr.f32.mxu0 0.0
  %v7622 = vand.u32 %v5690, 4294901760
  %v7623 = vsub.f32 %v5690, %v7622
  %v7624 = vand.u32 %v7623, 4294901760
  %7625 = vmatmul.mubr.f32.gmra.mrb[0].mxu0 %v7624
  %v7626 = vpop.f32.mrb[0].mxu0
  %v7627 = vadd.f32 %v7515, %v7626
  %v7628 = vpop.f32.mrb[0].mxu0
  %7629 = vmatprep.mubr.f32.mxu0 0.0
  %v7630 = vand.u32 %v5691, 4294901760
  %v7631 = vsub.f32 %v5691, %v7630
  %v7632 = vand.u32 %v7631, 4294901760
  %7633 = vmatmul.mubr.f32.gmra.mrb[0].mxu0 %v7632
  %v7634 = vpop.f32.mrb[0].mxu0
  %v7635 = vadd.f32 %v7522, %v7634
  %v7636 = vpop.f32.mrb[0].mxu0
  %7637 = vdwg.mxu0
  %7638 = vmatprep.subr.mxu0 0.0
  %v7639 = vand.u32 %v5694, 4294901760
  %v7640 = vsub.f32 %v5694, %v7639
  %v7641 = vand.u32 %v7640, 4294901760
  %7642 = vmatpush1.msra.mxu0 %v7641
  %7643 = vmatprep.subr.mxu0 0.0
  %v7644 = vand.u32 %v5695, 4294901760
  %v7645 = vsub.f32 %v5695, %v7644
  %v7646 = vand.u32 %v7645, 4294901760
  %7647 = vmatpush1.msra.mxu0 %v7646
  %7648 = vmatprep.subr.mxu0 0.0
  %v7649 = vand.u32 %v5696, 4294901760
  %v7650 = vsub.f32 %v5696, %v7649
  %v7651 = vand.u32 %v7650, 4294901760
  %7652 = vmatpush1.msra.mxu0 %v7651
  %7653 = vmatprep.subr.mxu0 0.0
  %v7654 = vand.u32 %v5697, 4294901760
  %v7655 = vsub.f32 %v5697, %v7654
  %v7656 = vand.u32 %v7655, 4294901760
  %7657 = vmatpush1.msra.mxu0 %v7656
  %7658 = vmatprep.subr.mxu0 0.0
  %v7659 = vand.u32 %v5698, 4294901760
  %v7660 = vsub.f32 %v5698, %v7659
  %v7661 = vand.u32 %v7660, 4294901760
  %7662 = vmatpush1.msra.mxu0 %v7661
  %7663 = vmatprep.subr.mxu0 0.0
  %v7664 = vand.u32 %v5699, 4294901760
  %v7665 = vsub.f32 %v5699, %v7664
  %v7666 = vand.u32 %v7665, 4294901760
  %7667 = vmatpush1.msra.mxu0 %v7666
  %7668 = vmatprep.subr.mxu0 0.0
  %v7669 = vand.u32 %v5700, 4294901760
  %v7670 = vsub.f32 %v5700, %v7669
  %v7671 = vand.u32 %v7670, 4294901760
  %7672 = vmatpush1.msra.mxu0 %v7671
  %7673 = vmatprep.subr.mxu0 0.0
  %v7674 = vand.u32 %v5701, 4294901760
  %v7675 = vsub.f32 %v5701, %v7674
  %v7676 = vand.u32 %v7675, 4294901760
  %7677 = vmatpush1.msra.mxu0 %v7676
  %7678 = vmatprep.subr.mxu0 0.0
  %v7679 = vand.u32 %v5702, 4294901760
  %v7680 = vsub.f32 %v5702, %v7679
  %v7681 = vand.u32 %v7680, 4294901760
  %7682 = vmatpush1.msra.mxu0 %v7681
  %7683 = vmatprep.subr.mxu0 0.0
  %v7684 = vand.u32 %v5703, 4294901760
  %v7685 = vsub.f32 %v5703, %v7684
  %v7686 = vand.u32 %v7685, 4294901760
  %7687 = vmatpush1.msra.mxu0 %v7686
  %7688 = vmatprep.subr.mxu0 0.0
  %v7689 = vand.u32 %v5704, 4294901760
  %v7690 = vsub.f32 %v5704, %v7689
  %v7691 = vand.u32 %v7690, 4294901760
  %7692 = vmatpush1.msra.mxu0 %v7691
  %7693 = vmatprep.subr.mxu0 0.0
  %v7694 = vand.u32 %v5705, 4294901760
  %v7695 = vsub.f32 %v5705, %v7694
  %v7696 = vand.u32 %v7695, 4294901760
  %7697 = vmatpush1.msra.mxu0 %v7696
  %7698 = vmatprep.subr.mxu0 0.0
  %v7699 = vand.u32 %v5706, 4294901760
  %v7700 = vsub.f32 %v5706, %v7699
  %v7701 = vand.u32 %v7700, 4294901760
  %7702 = vmatpush1.msra.mxu0 %v7701
  %7703 = vmatprep.subr.mxu0 0.0
  %v7704 = vand.u32 %v5707, 4294901760
  %v7705 = vsub.f32 %v5707, %v7704
  %v7706 = vand.u32 %v7705, 4294901760
  %7707 = vmatpush1.msra.mxu0 %v7706
  %7708 = vmatprep.subr.mxu0 0.0
  %v7709 = vand.u32 %v5708, 4294901760
  %v7710 = vsub.f32 %v5708, %v7709
  %v7711 = vand.u32 %v7710, 4294901760
  %7712 = vmatpush1.msra.mxu0 %v7711
  %7713 = vmatprep.subr.mxu0 0.0
  %v7714 = vand.u32 %v5709, 4294901760
  %v7715 = vsub.f32 %v5709, %v7714
  %v7716 = vand.u32 %v7715, 4294901760
  %7717 = vmatpush1.msra.mxu0 %v7716
  %7718 = vmatprep.subr.mxu0 0.0
  %7719 = vmatpush1.msra.mxu0 0.0
  %7720 = vmatprep.subr.mxu0 0.0
  %7721 = vmatpush1.msra.mxu0 0.0
  %7722 = vmatprep.subr.mxu0 0.0
  %7723 = vmatpush1.msra.mxu0 0.0
  %7724 = vmatprep.subr.mxu0 0.0
  %7725 = vmatpush1.msra.mxu0 0.0
  %7726 = vmatprep.subr.mxu0 0.0
  %7727 = vmatpush1.msra.mxu0 0.0
  %7728 = vmatprep.subr.mxu0 0.0
  %7729 = vmatpush1.msra.mxu0 0.0
  %7730 = vmatprep.subr.mxu0 0.0
  %7731 = vmatpush1.msra.mxu0 0.0
  %7732 = vmatprep.subr.mxu0 0.0
  %7733 = vmatpush1.msra.mxu0 0.0
  %7734 = vmatprep.subr.mxu0 0.0
  %7735 = vmatpush1.msra.mxu0 0.0
  %7736 = vmatprep.subr.mxu0 0.0
  %7737 = vmatpush1.msra.mxu0 0.0
  %7738 = vmatprep.subr.mxu0 0.0
  %7739 = vmatpush1.msra.mxu0 0.0
  %7740 = vmatprep.subr.mxu0 0.0
  %7741 = vmatpush1.msra.mxu0 0.0
  %7742 = vmatprep.subr.mxu0 0.0
  %7743 = vmatpush1.msra.mxu0 0.0
  %7744 = vmatprep.subr.mxu0 0.0
  %7745 = vmatpush1.msra.mxu0 0.0
  %7746 = vmatprep.subr.mxu0 0.0
  %7747 = vmatpush1.msra.mxu0 0.0
  %7748 = vmatprep.subr.mxu0 0.0
  %7749 = vmatpush1.msra.mxu0 0.0
  %7750 = vmatprep.mubr.f32.mxu0 0.0
  %v7751 = vand.u32 %v5688, 4294901760
  %7752 = vmatmul.mubr.f32.gmra.mrb[0].mxu0 %v7751
  %v7753 = vpop.f32.mrb[0].mxu0
  %v7754 = vadd.f32 %v7611, %v7753
  %v7755 = vpop.f32.mrb[0].mxu0
  %7756 = vmatprep.mubr.f32.mxu0 0.0
  %v7757 = vand.u32 %v5689, 4294901760
  %7758 = vmatmul.mubr.f32.gmra.mrb[0].mxu0 %v7757
  %v7759 = vpop.f32.mrb[0].mxu0
  %v7760 = vadd.f32 %v7619, %v7759
  %v7761 = vpop.f32.mrb[0].mxu0
  %7762 = vmatprep.mubr.f32.mxu0 0.0
  %v7763 = vand.u32 %v5690, 4294901760
  %7764 = vmatmul.mubr.f32.gmra.mrb[0].mxu0 %v7763
  %v7765 = vpop.f32.mrb[0].mxu0
  %v7766 = vadd.f32 %v7627, %v7765
  %v7767 = vpop.f32.mrb[0].mxu0
  %7768 = vmatprep.mubr.f32.mxu0 0.0
  %v7769 = vand.u32 %v5691, 4294901760
  %7770 = vmatmul.mubr.f32.gmra.mrb[0].mxu0 %v7769
  %v7771 = vpop.f32.mrb[0].mxu0
  %v7772 = vadd.f32 %v7635, %v7771
  %v7773 = vpop.f32.mrb[0].mxu0
  %7774 = vdwg.mxu0
  %7775 = vmatprep.subr.mxu0 0.0
  %v7776 = vand.u32 %v5694, 4294901760
  %7777 = vmatpush1.msra.mxu0 %v7776
  %7778 = vmatprep.subr.mxu0 0.0
  %v7779 = vand.u32 %v5695, 4294901760
  %7780 = vmatpush1.msra.mxu0 %v7779
  %7781 = vmatprep.subr.mxu0 0.0
  %v7782 = vand.u32 %v5696, 4294901760
  %7783 = vmatpush1.msra.mxu0 %v7782
  %7784 = vmatprep.subr.mxu0 0.0
  %v7785 = vand.u32 %v5697, 4294901760
  %7786 = vmatpush1.msra.mxu0 %v7785
  %7787 = vmatprep.subr.mxu0 0.0
  %v7788 = vand.u32 %v5698, 4294901760
  %7789 = vmatpush1.msra.mxu0 %v7788
  %7790 = vmatprep.subr.mxu0 0.0
  %v7791 = vand.u32 %v5699, 4294901760
  %7792 = vmatpush1.msra.mxu0 %v7791
  %7793 = vmatprep.subr.mxu0 0.0
  %v7794 = vand.u32 %v5700, 4294901760
  %7795 = vmatpush1.msra.mxu0 %v7794
  %7796 = vmatprep.subr.mxu0 0.0
  %v7797 = vand.u32 %v5701, 4294901760
  %7798 = vmatpush1.msra.mxu0 %v7797
  %7799 = vmatprep.subr.mxu0 0.0
  %v7800 = vand.u32 %v5702, 4294901760
  %7801 = vmatpush1.msra.mxu0 %v7800
  %7802 = vmatprep.subr.mxu0 0.0
  %v7803 = vand.u32 %v5703, 4294901760
  %7804 = vmatpush1.msra.mxu0 %v7803
  %7805 = vmatprep.subr.mxu0 0.0
  %v7806 = vand.u32 %v5704, 4294901760
  %7807 = vmatpush1.msra.mxu0 %v7806
  %7808 = vmatprep.subr.mxu0 0.0
  %v7809 = vand.u32 %v5705, 4294901760
  %7810 = vmatpush1.msra.mxu0 %v7809
  %7811 = vmatprep.subr.mxu0 0.0
  %v7812 = vand.u32 %v5706, 4294901760
  %7813 = vmatpush1.msra.mxu0 %v7812
  %7814 = vmatprep.subr.mxu0 0.0
  %v7815 = vand.u32 %v5707, 4294901760
  %7816 = vmatpush1.msra.mxu0 %v7815
  %7817 = vmatprep.subr.mxu0 0.0
  %v7818 = vand.u32 %v5708, 4294901760
  %7819 = vmatpush1.msra.mxu0 %v7818
  %7820 = vmatprep.subr.mxu0 0.0
  %v7821 = vand.u32 %v5709, 4294901760
  %7822 = vmatpush1.msra.mxu0 %v7821
  %7823 = vmatprep.subr.mxu0 0.0
  %7824 = vmatpush1.msra.mxu0 0.0
  %7825 = vmatprep.subr.mxu0 0.0
  %7826 = vmatpush1.msra.mxu0 0.0
  %7827 = vmatprep.subr.mxu0 0.0
  %7828 = vmatpush1.msra.mxu0 0.0
  %7829 = vmatprep.subr.mxu0 0.0
  %7830 = vmatpush1.msra.mxu0 0.0
  %7831 = vmatprep.subr.mxu0 0.0
  %7832 = vmatpush1.msra.mxu0 0.0
  %7833 = vmatprep.subr.mxu0 0.0
  %7834 = vmatpush1.msra.mxu0 0.0
  %7835 = vmatprep.subr.mxu0 0.0
  %7836 = vmatpush1.msra.mxu0 0.0
  %7837 = vmatprep.subr.mxu0 0.0
  %7838 = vmatpush1.msra.mxu0 0.0
  %7839 = vmatprep.subr.mxu0 0.0
  %7840 = vmatpush1.msra.mxu0 0.0
  %7841 = vmatprep.subr.mxu0 0.0
  %7842 = vmatpush1.msra.mxu0 0.0
  %7843 = vmatprep.subr.mxu0 0.0
  %7844 = vmatpush1.msra.mxu0 0.0
  %7845 = vmatprep.subr.mxu0 0.0
  %7846 = vmatpush1.msra.mxu0 0.0
  %7847 = vmatprep.subr.mxu0 0.0
  %7848 = vmatpush1.msra.mxu0 0.0
  %7849 = vmatprep.subr.mxu0 0.0
  %7850 = vmatpush1.msra.mxu0 0.0
  %7851 = vmatprep.subr.mxu0 0.0
  %7852 = vmatpush1.msra.mxu0 0.0
  %7853 = vmatprep.subr.mxu0 0.0
  %7854 = vmatpush1.msra.mxu0 0.0
  %7855 = vmatprep.mubr.f32.mxu0 0.0
  %v7856 = vand.u32 %v5688, 4294901760
  %7857 = vmatmul.mubr.f32.gmra.mrb[0].mxu0 %v7856
  %v7858 = vpop.f32.mrb[0].mxu0
  %v7859 = vadd.f32 %v7754, %v7858
  %v7860 = vpop.f32.mrb[0].mxu0
  %7861 = vmatprep.mubr.f32.mxu0 0.0
  %v7862 = vand.u32 %v5689, 4294901760
  %7863 = vmatmul.mubr.f32.gmra.mrb[0].mxu0 %v7862
  %v7864 = vpop.f32.mrb[0].mxu0
  %v7865 = vadd.f32 %v7760, %v7864
  %v7866 = vpop.f32.mrb[0].mxu0
  %7867 = vmatprep.mubr.f32.mxu0 0.0
  %v7868 = vand.u32 %v5690, 4294901760
  %7869 = vmatmul.mubr.f32.gmra.mrb[0].mxu0 %v7868
  %v7870 = vpop.f32.mrb[0].mxu0
  %v7871 = vadd.f32 %v7766, %v7870
  %v7872 = vpop.f32.mrb[0].mxu0
  %7873 = vmatprep.mubr.f32.mxu0 0.0
  %v7874 = vand.u32 %v5691, 4294901760
  %7875 = vmatmul.mubr.f32.gmra.mrb[0].mxu0 %v7874
  %v7876 = vpop.f32.mrb[0].mxu0
  %v7877 = vadd.f32 %v7772, %v7876
  %v7878 = vpop.f32.mrb[0].mxu0
  %7879 = vdwg.mxu0
  %7880 = vmatprep.subr.mxu0 0.0
  %v7881 = vand.u32 %v5688, 4294901760
  %7882 = vmatpush1.msra.mxu0 %v7881
  %7883 = vmatprep.subr.mxu0 0.0
  %v7884 = vand.u32 %v5689, 4294901760
  %7885 = vmatpush1.msra.mxu0 %v7884
  %7886 = vmatprep.subr.mxu0 0.0
  %v7887 = vand.u32 %v5690, 4294901760
  %7888 = vmatpush1.msra.mxu0 %v7887
  %7889 = vmatprep.subr.mxu0 0.0
  %v7890 = vand.u32 %v5691, 4294901760
  %7891 = vmatpush1.msra.mxu0 %v7890
  %7892 = vmatprep.subr.mxu0 0.0
  %7893 = vmatpush1.msra.mxu0 0.0
  %7894 = vmatprep.subr.mxu0 0.0
  %7895 = vmatpush1.msra.mxu0 0.0
  %7896 = vmatprep.subr.mxu0 0.0
  %7897 = vmatpush1.msra.mxu0 0.0
  %7898 = vmatprep.subr.mxu0 0.0
  %7899 = vmatpush1.msra.mxu0 0.0
  %7900 = vmatprep.subr.mxu0 0.0
  %7901 = vmatpush1.msra.mxu0 0.0
  %7902 = vmatprep.subr.mxu0 0.0
  %7903 = vmatpush1.msra.mxu0 0.0
  %7904 = vmatprep.subr.mxu0 0.0
  %7905 = vmatpush1.msra.mxu0 0.0
  %7906 = vmatprep.subr.mxu0 0.0
  %7907 = vmatpush1.msra.mxu0 0.0
  %7908 = vmatprep.subr.mxu0 0.0
  %7909 = vmatpush1.msra.mxu0 0.0
  %7910 = vmatprep.subr.mxu0 0.0
  %7911 = vmatpush1.msra.mxu0 0.0
  %7912 = vmatprep.subr.mxu0 0.0
  %7913 = vmatpush1.msra.mxu0 0.0
  %7914 = vmatprep.subr.mxu0 0.0
  %7915 = vmatpush1.msra.mxu0 0.0
  %7916 = vmatprep.subr.mxu0 0.0
  %7917 = vmatpush1.msra.mxu0 0.0
  %7918 = vmatprep.subr.mxu0 0.0
  %7919 = vmatpush1.msra.mxu0 0.0
  %7920 = vmatprep.subr.mxu0 0.0
  %7921 = vmatpush1.msra.mxu0 0.0
  %7922 = vmatprep.subr.mxu0 0.0
  %7923 = vmatpush1.msra.mxu0 0.0
  %7924 = vmatprep.subr.mxu0 0.0
  %7925 = vmatpush1.msra.mxu0 0.0
  %7926 = vmatprep.subr.mxu0 0.0
  %7927 = vmatpush1.msra.mxu0 0.0
  %7928 = vmatprep.subr.mxu0 0.0
  %7929 = vmatpush1.msra.mxu0 0.0
  %7930 = vmatprep.subr.mxu0 0.0
  %7931 = vmatpush1.msra.mxu0 0.0
  %7932 = vmatprep.subr.mxu0 0.0
  %7933 = vmatpush1.msra.mxu0 0.0
  %7934 = vmatprep.subr.mxu0 0.0
  %7935 = vmatpush1.msra.mxu0 0.0
  %7936 = vmatprep.subr.mxu0 0.0
  %7937 = vmatpush1.msra.mxu0 0.0
  %7938 = vmatprep.subr.mxu0 0.0
  %7939 = vmatpush1.msra.mxu0 0.0
  %7940 = vmatprep.subr.mxu0 0.0
  %7941 = vmatpush1.msra.mxu0 0.0
  %7942 = vmatprep.subr.mxu0 0.0
  %7943 = vmatpush1.msra.mxu0 0.0
  %7944 = vmatprep.subr.mxu0 0.0
  %7945 = vmatpush1.msra.mxu0 0.0
  %7946 = vmatprep.subr.mxu0 0.0
  %7947 = vmatpush1.msra.mxu0 0.0
  %7948 = vmatprep.mubr.f32.mxu0 0.0
  %v7949 = vand.u32 %v2070, 4294901760
  %v7950 = vsub.f32 %v2070, %v7949
  %v7951 = vand.u32 %v7950, 4294901760
  %v7952 = vsub.f32 %v7950, %v7951
  %v7953 = vand.u32 %v7952, 4294901760
  %7954 = vmatmul.mubr.f32.gmra.mrb[0].mxu0 %v7953
  %v7955 = vpop.f32.mrb[0].mxu0
  %v7956 = vadd.f32 0.0, %v7955
  %v7957 = vpop.f32.mrb[0].mxu0
  %7958 = vmatprep.mubr.f32.mxu0 0.0
  %v7959 = vand.u32 %v2073, 4294901760
  %v7960 = vsub.f32 %v2073, %v7959
  %v7961 = vand.u32 %v7960, 4294901760
  %v7962 = vsub.f32 %v7960, %v7961
  %v7963 = vand.u32 %v7962, 4294901760
  %7964 = vmatmul.mubr.f32.gmra.mrb[0].mxu0 %v7963
  %v7965 = vpop.f32.mrb[0].mxu0
  %v7966 = vadd.f32 0.0, %v7965
  %v7967 = vpop.f32.mrb[0].mxu0
  %7968 = vmatprep.mubr.f32.mxu0 0.0
  %v7969 = vand.u32 %v2076, 4294901760
  %v7970 = vsub.f32 %v2076, %v7969
  %v7971 = vand.u32 %v7970, 4294901760
  %v7972 = vsub.f32 %v7970, %v7971
  %v7973 = vand.u32 %v7972, 4294901760
  %7974 = vmatmul.mubr.f32.gmra.mrb[0].mxu0 %v7973
  %v7975 = vpop.f32.mrb[0].mxu0
  %v7976 = vadd.f32 0.0, %v7975
  %v7977 = vpop.f32.mrb[0].mxu0
  %7978 = vmatprep.mubr.f32.mxu0 0.0
  %v7979 = vand.u32 %v2079, 4294901760
  %v7980 = vsub.f32 %v2079, %v7979
  %v7981 = vand.u32 %v7980, 4294901760
  %v7982 = vsub.f32 %v7980, %v7981
  %v7983 = vand.u32 %v7982, 4294901760
  %7984 = vmatmul.mubr.f32.gmra.mrb[0].mxu0 %v7983
  %v7985 = vpop.f32.mrb[0].mxu0
  %v7986 = vadd.f32 0.0, %v7985
  %v7987 = vpop.f32.mrb[0].mxu0
  %7988 = vdwg.mxu0
  %7989 = vmatprep.subr.mxu0 0.0
  %v7990 = vand.u32 %v5688, 4294901760
  %v7991 = vsub.f32 %v5688, %v7990
  %v7992 = vand.u32 %v7991, 4294901760
  %v7993 = vsub.f32 %v7991, %v7992
  %v7994 = vand.u32 %v7993, 4294901760
  %7995 = vmatpush1.msra.mxu0 %v7994
  %7996 = vmatprep.subr.mxu0 0.0
  %v7997 = vand.u32 %v5689, 4294901760
  %v7998 = vsub.f32 %v5689, %v7997
  %v7999 = vand.u32 %v7998, 4294901760
  %v8000 = vsub.f32 %v7998, %v7999
  %v8001 = vand.u32 %v8000, 4294901760
  %8002 = vmatpush1.msra.mxu0 %v8001
  %8003 = vmatprep.subr.mxu0 0.0
  %v8004 = vand.u32 %v5690, 4294901760
  %v8005 = vsub.f32 %v5690, %v8004
  %v8006 = vand.u32 %v8005, 4294901760
  %v8007 = vsub.f32 %v8005, %v8006
  %v8008 = vand.u32 %v8007, 4294901760
  %8009 = vmatpush1.msra.mxu0 %v8008
  %8010 = vmatprep.subr.mxu0 0.0
  %v8011 = vand.u32 %v5691, 4294901760
  %v8012 = vsub.f32 %v5691, %v8011
  %v8013 = vand.u32 %v8012, 4294901760
  %v8014 = vsub.f32 %v8012, %v8013
  %v8015 = vand.u32 %v8014, 4294901760
  %8016 = vmatpush1.msra.mxu0 %v8015
  %8017 = vmatprep.subr.mxu0 0.0
  %8018 = vmatpush1.msra.mxu0 0.0
  %8019 = vmatprep.subr.mxu0 0.0
  %8020 = vmatpush1.msra.mxu0 0.0
  %8021 = vmatprep.subr.mxu0 0.0
  %8022 = vmatpush1.msra.mxu0 0.0
  %8023 = vmatprep.subr.mxu0 0.0
  %8024 = vmatpush1.msra.mxu0 0.0
  %8025 = vmatprep.subr.mxu0 0.0
  %8026 = vmatpush1.msra.mxu0 0.0
  %8027 = vmatprep.subr.mxu0 0.0
  %8028 = vmatpush1.msra.mxu0 0.0
  %8029 = vmatprep.subr.mxu0 0.0
  %8030 = vmatpush1.msra.mxu0 0.0
  %8031 = vmatprep.subr.mxu0 0.0
  %8032 = vmatpush1.msra.mxu0 0.0
  %8033 = vmatprep.subr.mxu0 0.0
  %8034 = vmatpush1.msra.mxu0 0.0
  %8035 = vmatprep.subr.mxu0 0.0
  %8036 = vmatpush1.msra.mxu0 0.0
  %8037 = vmatprep.subr.mxu0 0.0
  %8038 = vmatpush1.msra.mxu0 0.0
  %8039 = vmatprep.subr.mxu0 0.0
  %8040 = vmatpush1.msra.mxu0 0.0
  %8041 = vmatprep.subr.mxu0 0.0
  %8042 = vmatpush1.msra.mxu0 0.0
  %8043 = vmatprep.subr.mxu0 0.0
  %8044 = vmatpush1.msra.mxu0 0.0
  %8045 = vmatprep.subr.mxu0 0.0
  %8046 = vmatpush1.msra.mxu0 0.0
  %8047 = vmatprep.subr.mxu0 0.0
  %8048 = vmatpush1.msra.mxu0 0.0
  %8049 = vmatprep.subr.mxu0 0.0
  %8050 = vmatpush1.msra.mxu0 0.0
  %8051 = vmatprep.subr.mxu0 0.0
  %8052 = vmatpush1.msra.mxu0 0.0
  %8053 = vmatprep.subr.mxu0 0.0
  %8054 = vmatpush1.msra.mxu0 0.0
  %8055 = vmatprep.subr.mxu0 0.0
  %8056 = vmatpush1.msra.mxu0 0.0
  %8057 = vmatprep.subr.mxu0 0.0
  %8058 = vmatpush1.msra.mxu0 0.0
  %8059 = vmatprep.subr.mxu0 0.0
  %8060 = vmatpush1.msra.mxu0 0.0
  %8061 = vmatprep.subr.mxu0 0.0
  %8062 = vmatpush1.msra.mxu0 0.0
  %8063 = vmatprep.subr.mxu0 0.0
  %8064 = vmatpush1.msra.mxu0 0.0
  %8065 = vmatprep.subr.mxu0 0.0
  %8066 = vmatpush1.msra.mxu0 0.0
  %8067 = vmatprep.subr.mxu0 0.0
  %8068 = vmatpush1.msra.mxu0 0.0
  %8069 = vmatprep.subr.mxu0 0.0
  %8070 = vmatpush1.msra.mxu0 0.0
  %8071 = vmatprep.subr.mxu0 0.0
  %8072 = vmatpush1.msra.mxu0 0.0
  %8073 = vmatprep.mubr.f32.mxu0 0.0
  %v8074 = vand.u32 %v2070, 4294901760
  %8075 = vmatmul.mubr.f32.gmra.mrb[0].mxu0 %v8074
  %v8076 = vpop.f32.mrb[0].mxu0
  %v8077 = vadd.f32 %v7956, %v8076
  %v8078 = vpop.f32.mrb[0].mxu0
  %8079 = vmatprep.mubr.f32.mxu0 0.0
  %v8080 = vand.u32 %v2073, 4294901760
  %8081 = vmatmul.mubr.f32.gmra.mrb[0].mxu0 %v8080
  %v8082 = vpop.f32.mrb[0].mxu0
  %v8083 = vadd.f32 %v7966, %v8082
  %v8084 = vpop.f32.mrb[0].mxu0
  %8085 = vmatprep.mubr.f32.mxu0 0.0
  %v8086 = vand.u32 %v2076, 4294901760
  %8087 = vmatmul.mubr.f32.gmra.mrb[0].mxu0 %v8086
  %v8088 = vpop.f32.mrb[0].mxu0
  %v8089 = vadd.f32 %v7976, %v8088
  %v8090 = vpop.f32.mrb[0].mxu0
  %8091 = vmatprep.mubr.f32.mxu0 0.0
  %v8092 = vand.u32 %v2079, 4294901760
  %8093 = vmatmul.mubr.f32.gmra.mrb[0].mxu0 %v8092
  %v8094 = vpop.f32.mrb[0].mxu0
  %v8095 = vadd.f32 %v7986, %v8094
  %v8096 = vpop.f32.mrb[0].mxu0
  %8097 = vdwg.mxu0
  %8098 = vmatprep.subr.mxu0 0.0
  %v8099 = vand.u32 %v5688, 4294901760
  %v8100 = vsub.f32 %v5688, %v8099
  %8101 = vmatpush1.msra.mxu0 %v8100
  %8102 = vmatprep.subr.mxu0 0.0
  %v8103 = vand.u32 %v5689, 4294901760
  %v8104 = vsub.f32 %v5689, %v8103
  %8105 = vmatpush1.msra.mxu0 %v8104
  %8106 = vmatprep.subr.mxu0 0.0
  %v8107 = vand.u32 %v5690, 4294901760
  %v8108 = vsub.f32 %v5690, %v8107
  %8109 = vmatpush1.msra.mxu0 %v8108
  %8110 = vmatprep.subr.mxu0 0.0
  %v8111 = vand.u32 %v5691, 4294901760
  %v8112 = vsub.f32 %v5691, %v8111
  %8113 = vmatpush1.msra.mxu0 %v8112
  %8114 = vmatprep.subr.mxu0 0.0
  %8115 = vmatpush1.msra.mxu0 0.0
  %8116 = vmatprep.subr.mxu0 0.0
  %8117 = vmatpush1.msra.mxu0 0.0
  %8118 = vmatprep.subr.mxu0 0.0
  %8119 = vmatpush1.msra.mxu0 0.0
  %8120 = vmatprep.subr.mxu0 0.0
  %8121 = vmatpush1.msra.mxu0 0.0
  %8122 = vmatprep.subr.mxu0 0.0
  %8123 = vmatpush1.msra.mxu0 0.0
  %8124 = vmatprep.subr.mxu0 0.0
  %8125 = vmatpush1.msra.mxu0 0.0
  %8126 = vmatprep.subr.mxu0 0.0
  %8127 = vmatpush1.msra.mxu0 0.0
  %8128 = vmatprep.subr.mxu0 0.0
  %8129 = vmatpush1.msra.mxu0 0.0
  %8130 = vmatprep.subr.mxu0 0.0
  %8131 = vmatpush1.msra.mxu0 0.0
  %8132 = vmatprep.subr.mxu0 0.0
  %8133 = vmatpush1.msra.mxu0 0.0
  %8134 = vmatprep.subr.mxu0 0.0
  %8135 = vmatpush1.msra.mxu0 0.0
  %8136 = vmatprep.subr.mxu0 0.0
  %8137 = vmatpush1.msra.mxu0 0.0
  %8138 = vmatprep.subr.mxu0 0.0
  %8139 = vmatpush1.msra.mxu0 0.0
  %8140 = vmatprep.subr.mxu0 0.0
  %8141 = vmatpush1.msra.mxu0 0.0
  %8142 = vmatprep.subr.mxu0 0.0
  %8143 = vmatpush1.msra.mxu0 0.0
  %8144 = vmatprep.subr.mxu0 0.0
  %8145 = vmatpush1.msra.mxu0 0.0
  %8146 = vmatprep.subr.mxu0 0.0
  %8147 = vmatpush1.msra.mxu0 0.0
  %8148 = vmatprep.subr.mxu0 0.0
  %8149 = vmatpush1.msra.mxu0 0.0
  %8150 = vmatprep.subr.mxu0 0.0
  %8151 = vmatpush1.msra.mxu0 0.0
  %8152 = vmatprep.subr.mxu0 0.0
  %8153 = vmatpush1.msra.mxu0 0.0
  %8154 = vmatprep.subr.mxu0 0.0
  %8155 = vmatpush1.msra.mxu0 0.0
  %8156 = vmatprep.subr.mxu0 0.0
  %8157 = vmatpush1.msra.mxu0 0.0
  %8158 = vmatprep.subr.mxu0 0.0
  %8159 = vmatpush1.msra.mxu0 0.0
  %8160 = vmatprep.subr.mxu0 0.0
  %8161 = vmatpush1.msra.mxu0 0.0
  %8162 = vmatprep.subr.mxu0 0.0
  %8163 = vmatpush1.msra.mxu0 0.0
  %8164 = vmatprep.subr.mxu0 0.0
  %8165 = vmatpush1.msra.mxu0 0.0
  %8166 = vmatprep.subr.mxu0 0.0
  %8167 = vmatpush1.msra.mxu0 0.0
  %8168 = vmatprep.subr.mxu0 0.0
  %8169 = vmatpush1.msra.mxu0 0.0
  %8170 = vmatprep.mubr.f32.mxu0 0.0
  %v8171 = vand.u32 %v2070, 4294901760
  %v8172 = vsub.f32 %v2070, %v8171
  %8173 = vmatmul.mubr.f32.gmra.mrb[0].mxu0 %v8172
  %v8174 = vpop.f32.mrb[0].mxu0
  %v8175 = vadd.f32 %v8077, %v8174
  %v8176 = vpop.f32.mrb[0].mxu0
  %8177 = vmatprep.mubr.f32.mxu0 0.0
  %v8178 = vand.u32 %v2073, 4294901760
  %v8179 = vsub.f32 %v2073, %v8178
  %8180 = vmatmul.mubr.f32.gmra.mrb[0].mxu0 %v8179
  %v8181 = vpop.f32.mrb[0].mxu0
  %v8182 = vadd.f32 %v8083, %v8181
  %v8183 = vpop.f32.mrb[0].mxu0
  %8184 = vmatprep.mubr.f32.mxu0 0.0
  %v8185 = vand.u32 %v2076, 4294901760
  %v8186 = vsub.f32 %v2076, %v8185
  %8187 = vmatmul.mubr.f32.gmra.mrb[0].mxu0 %v8186
  %v8188 = vpop.f32.mrb[0].mxu0
  %v8189 = vadd.f32 %v8089, %v8188
  %v8190 = vpop.f32.mrb[0].mxu0
  %8191 = vmatprep.mubr.f32.mxu0 0.0
  %v8192 = vand.u32 %v2079, 4294901760
  %v8193 = vsub.f32 %v2079, %v8192
  %8194 = vmatmul.mubr.f32.gmra.mrb[0].mxu0 %v8193
  %v8195 = vpop.f32.mrb[0].mxu0
  %v8196 = vadd.f32 %v8095, %v8195
  %v8197 = vpop.f32.mrb[0].mxu0
  %8198 = vdwg.mxu0
  %8199 = vmatprep.subr.mxu0 0.0
  %v8200 = vand.u32 %v5688, 4294901760
  %8201 = vmatpush1.msra.mxu0 %v8200
  %8202 = vmatprep.subr.mxu0 0.0
  %v8203 = vand.u32 %v5689, 4294901760
  %8204 = vmatpush1.msra.mxu0 %v8203
  %8205 = vmatprep.subr.mxu0 0.0
  %v8206 = vand.u32 %v5690, 4294901760
  %8207 = vmatpush1.msra.mxu0 %v8206
  %8208 = vmatprep.subr.mxu0 0.0
  %v8209 = vand.u32 %v5691, 4294901760
  %8210 = vmatpush1.msra.mxu0 %v8209
  %8211 = vmatprep.subr.mxu0 0.0
  %8212 = vmatpush1.msra.mxu0 0.0
  %8213 = vmatprep.subr.mxu0 0.0
  %8214 = vmatpush1.msra.mxu0 0.0
  %8215 = vmatprep.subr.mxu0 0.0
  %8216 = vmatpush1.msra.mxu0 0.0
  %8217 = vmatprep.subr.mxu0 0.0
  %8218 = vmatpush1.msra.mxu0 0.0
  %8219 = vmatprep.subr.mxu0 0.0
  %8220 = vmatpush1.msra.mxu0 0.0
  %8221 = vmatprep.subr.mxu0 0.0
  %8222 = vmatpush1.msra.mxu0 0.0
  %8223 = vmatprep.subr.mxu0 0.0
  %8224 = vmatpush1.msra.mxu0 0.0
  %8225 = vmatprep.subr.mxu0 0.0
  %8226 = vmatpush1.msra.mxu0 0.0
  %8227 = vmatprep.subr.mxu0 0.0
  %8228 = vmatpush1.msra.mxu0 0.0
  %8229 = vmatprep.subr.mxu0 0.0
  %8230 = vmatpush1.msra.mxu0 0.0
  %8231 = vmatprep.subr.mxu0 0.0
  %8232 = vmatpush1.msra.mxu0 0.0
  %8233 = vmatprep.subr.mxu0 0.0
  %8234 = vmatpush1.msra.mxu0 0.0
  %8235 = vmatprep.subr.mxu0 0.0
  %8236 = vmatpush1.msra.mxu0 0.0
  %8237 = vmatprep.subr.mxu0 0.0
  %8238 = vmatpush1.msra.mxu0 0.0
  %8239 = vmatprep.subr.mxu0 0.0
  %8240 = vmatpush1.msra.mxu0 0.0
  %8241 = vmatprep.subr.mxu0 0.0
  %8242 = vmatpush1.msra.mxu0 0.0
  %8243 = vmatprep.subr.mxu0 0.0
  %8244 = vmatpush1.msra.mxu0 0.0
  %8245 = vmatprep.subr.mxu0 0.0
  %8246 = vmatpush1.msra.mxu0 0.0
  %8247 = vmatprep.subr.mxu0 0.0
  %8248 = vmatpush1.msra.mxu0 0.0
  %8249 = vmatprep.subr.mxu0 0.0
  %8250 = vmatpush1.msra.mxu0 0.0
  %8251 = vmatprep.subr.mxu0 0.0
  %8252 = vmatpush1.msra.mxu0 0.0
  %8253 = vmatprep.subr.mxu0 0.0
  %8254 = vmatpush1.msra.mxu0 0.0
  %8255 = vmatprep.subr.mxu0 0.0
  %8256 = vmatpush1.msra.mxu0 0.0
  %8257 = vmatprep.subr.mxu0 0.0
  %8258 = vmatpush1.msra.mxu0 0.0
  %8259 = vmatprep.subr.mxu0 0.0
  %8260 = vmatpush1.msra.mxu0 0.0
  %8261 = vmatprep.subr.mxu0 0.0
  %8262 = vmatpush1.msra.mxu0 0.0
  %8263 = vmatprep.subr.mxu0 0.0
  %8264 = vmatpush1.msra.mxu0 0.0
  %8265 = vmatprep.subr.mxu0 0.0
  %8266 = vmatpush1.msra.mxu0 0.0
  %8267 = vmatprep.mubr.f32.mxu0 0.0
  %v8268 = vand.u32 %v2070, 4294901760
  %v8269 = vsub.f32 %v2070, %v8268
  %v8270 = vand.u32 %v8269, 4294901760
  %8271 = vmatmul.mubr.f32.gmra.mrb[0].mxu0 %v8270
  %v8272 = vpop.f32.mrb[0].mxu0
  %v8273 = vadd.f32 %v8175, %v8272
  %v8274 = vpop.f32.mrb[0].mxu0
  %8275 = vmatprep.mubr.f32.mxu0 0.0
  %v8276 = vand.u32 %v2073, 4294901760
  %v8277 = vsub.f32 %v2073, %v8276
  %v8278 = vand.u32 %v8277, 4294901760
  %8279 = vmatmul.mubr.f32.gmra.mrb[0].mxu0 %v8278
  %v8280 = vpop.f32.mrb[0].mxu0
  %v8281 = vadd.f32 %v8182, %v8280
  %v8282 = vpop.f32.mrb[0].mxu0
  %8283 = vmatprep.mubr.f32.mxu0 0.0
  %v8284 = vand.u32 %v2076, 4294901760
  %v8285 = vsub.f32 %v2076, %v8284
  %v8286 = vand.u32 %v8285, 4294901760
  %8287 = vmatmul.mubr.f32.gmra.mrb[0].mxu0 %v8286
  %v8288 = vpop.f32.mrb[0].mxu0
  %v8289 = vadd.f32 %v8189, %v8288
  %v8290 = vpop.f32.mrb[0].mxu0
  %8291 = vmatprep.mubr.f32.mxu0 0.0
  %v8292 = vand.u32 %v2079, 4294901760
  %v8293 = vsub.f32 %v2079, %v8292
  %v8294 = vand.u32 %v8293, 4294901760
  %8295 = vmatmul.mubr.f32.gmra.mrb[0].mxu0 %v8294
  %v8296 = vpop.f32.mrb[0].mxu0
  %v8297 = vadd.f32 %v8196, %v8296
  %v8298 = vpop.f32.mrb[0].mxu0
  %8299 = vdwg.mxu0
  %8300 = vmatprep.subr.mxu0 0.0
  %v8301 = vand.u32 %v5688, 4294901760
  %v8302 = vsub.f32 %v5688, %v8301
  %v8303 = vand.u32 %v8302, 4294901760
  %8304 = vmatpush1.msra.mxu0 %v8303
  %8305 = vmatprep.subr.mxu0 0.0
  %v8306 = vand.u32 %v5689, 4294901760
  %v8307 = vsub.f32 %v5689, %v8306
  %v8308 = vand.u32 %v8307, 4294901760
  %8309 = vmatpush1.msra.mxu0 %v8308
  %8310 = vmatprep.subr.mxu0 0.0
  %v8311 = vand.u32 %v5690, 4294901760
  %v8312 = vsub.f32 %v5690, %v8311
  %v8313 = vand.u32 %v8312, 4294901760
  %8314 = vmatpush1.msra.mxu0 %v8313
  %8315 = vmatprep.subr.mxu0 0.0
  %v8316 = vand.u32 %v5691, 4294901760
  %v8317 = vsub.f32 %v5691, %v8316
  %v8318 = vand.u32 %v8317, 4294901760
  %8319 = vmatpush1.msra.mxu0 %v8318
  %8320 = vmatprep.subr.mxu0 0.0
  %8321 = vmatpush1.msra.mxu0 0.0
  %8322 = vmatprep.subr.mxu0 0.0
  %8323 = vmatpush1.msra.mxu0 0.0
  %8324 = vmatprep.subr.mxu0 0.0
  %8325 = vmatpush1.msra.mxu0 0.0
  %8326 = vmatprep.subr.mxu0 0.0
  %8327 = vmatpush1.msra.mxu0 0.0
  %8328 = vmatprep.subr.mxu0 0.0
  %8329 = vmatpush1.msra.mxu0 0.0
  %8330 = vmatprep.subr.mxu0 0.0
  %8331 = vmatpush1.msra.mxu0 0.0
  %8332 = vmatprep.subr.mxu0 0.0
  %8333 = vmatpush1.msra.mxu0 0.0
  %8334 = vmatprep.subr.mxu0 0.0
  %8335 = vmatpush1.msra.mxu0 0.0
  %8336 = vmatprep.subr.mxu0 0.0
  %8337 = vmatpush1.msra.mxu0 0.0
  %8338 = vmatprep.subr.mxu0 0.0
  %8339 = vmatpush1.msra.mxu0 0.0
  %8340 = vmatprep.subr.mxu0 0.0
  %8341 = vmatpush1.msra.mxu0 0.0
  %8342 = vmatprep.subr.mxu0 0.0
  %8343 = vmatpush1.msra.mxu0 0.0
  %8344 = vmatprep.subr.mxu0 0.0
  %8345 = vmatpush1.msra.mxu0 0.0
  %8346 = vmatprep.subr.mxu0 0.0
  %8347 = vmatpush1.msra.mxu0 0.0
  %8348 = vmatprep.subr.mxu0 0.0
  %8349 = vmatpush1.msra.mxu0 0.0
  %8350 = vmatprep.subr.mxu0 0.0
  %8351 = vmatpush1.msra.mxu0 0.0
  %8352 = vmatprep.subr.mxu0 0.0
  %8353 = vmatpush1.msra.mxu0 0.0
  %8354 = vmatprep.subr.mxu0 0.0
  %8355 = vmatpush1.msra.mxu0 0.0
  %8356 = vmatprep.subr.mxu0 0.0
  %8357 = vmatpush1.msra.mxu0 0.0
  %8358 = vmatprep.subr.mxu0 0.0
  %8359 = vmatpush1.msra.mxu0 0.0
  %8360 = vmatprep.subr.mxu0 0.0
  %8361 = vmatpush1.msra.mxu0 0.0
  %8362 = vmatprep.subr.mxu0 0.0
  %8363 = vmatpush1.msra.mxu0 0.0
  %8364 = vmatprep.subr.mxu0 0.0
  %8365 = vmatpush1.msra.mxu0 0.0
  %8366 = vmatprep.subr.mxu0 0.0
  %8367 = vmatpush1.msra.mxu0 0.0
  %8368 = vmatprep.subr.mxu0 0.0
  %8369 = vmatpush1.msra.mxu0 0.0
  %8370 = vmatprep.subr.mxu0 0.0
  %8371 = vmatpush1.msra.mxu0 0.0
  %8372 = vmatprep.subr.mxu0 0.0
  %8373 = vmatpush1.msra.mxu0 0.0
  %8374 = vmatprep.subr.mxu0 0.0
  %8375 = vmatpush1.msra.mxu0 0.0
  %8376 = vmatprep.mubr.f32.mxu0 0.0
  %v8377 = vand.u32 %v2070, 4294901760
  %8378 = vmatmul.mubr.f32.gmra.mrb[0].mxu0 %v8377
  %v8379 = vpop.f32.mrb[0].mxu0
  %v8380 = vadd.f32 %v8273, %v8379
  %v8381 = vpop.f32.mrb[0].mxu0
  %8382 = vmatprep.mubr.f32.mxu0 0.0
  %v8383 = vand.u32 %v2073, 4294901760
  %8384 = vmatmul.mubr.f32.gmra.mrb[0].mxu0 %v8383
  %v8385 = vpop.f32.mrb[0].mxu0
  %v8386 = vadd.f32 %v8281, %v8385
  %v8387 = vpop.f32.mrb[0].mxu0
  %8388 = vmatprep.mubr.f32.mxu0 0.0
  %v8389 = vand.u32 %v2076, 4294901760
  %8390 = vmatmul.mubr.f32.gmra.mrb[0].mxu0 %v8389
  %v8391 = vpop.f32.mrb[0].mxu0
  %v8392 = vadd.f32 %v8289, %v8391
  %v8393 = vpop.f32.mrb[0].mxu0
  %8394 = vmatprep.mubr.f32.mxu0 0.0
  %v8395 = vand.u32 %v2079, 4294901760
  %8396 = vmatmul.mubr.f32.gmra.mrb[0].mxu0 %v8395
  %v8397 = vpop.f32.mrb[0].mxu0
  %v8398 = vadd.f32 %v8297, %v8397
  %v8399 = vpop.f32.mrb[0].mxu0
  %8400 = vdwg.mxu0
  %8401 = vmatprep.subr.mxu0 0.0
  %v8402 = vand.u32 %v5688, 4294901760
  %8403 = vmatpush1.msra.mxu0 %v8402
  %8404 = vmatprep.subr.mxu0 0.0
  %v8405 = vand.u32 %v5689, 4294901760
  %8406 = vmatpush1.msra.mxu0 %v8405
  %8407 = vmatprep.subr.mxu0 0.0
  %v8408 = vand.u32 %v5690, 4294901760
  %8409 = vmatpush1.msra.mxu0 %v8408
  %8410 = vmatprep.subr.mxu0 0.0
  %v8411 = vand.u32 %v5691, 4294901760
  %8412 = vmatpush1.msra.mxu0 %v8411
  %8413 = vmatprep.subr.mxu0 0.0
  %8414 = vmatpush1.msra.mxu0 0.0
  %8415 = vmatprep.subr.mxu0 0.0
  %8416 = vmatpush1.msra.mxu0 0.0
  %8417 = vmatprep.subr.mxu0 0.0
  %8418 = vmatpush1.msra.mxu0 0.0
  %8419 = vmatprep.subr.mxu0 0.0
  %8420 = vmatpush1.msra.mxu0 0.0
  %8421 = vmatprep.subr.mxu0 0.0
  %8422 = vmatpush1.msra.mxu0 0.0
  %8423 = vmatprep.subr.mxu0 0.0
  %8424 = vmatpush1.msra.mxu0 0.0
  %8425 = vmatprep.subr.mxu0 0.0
  %8426 = vmatpush1.msra.mxu0 0.0
  %8427 = vmatprep.subr.mxu0 0.0
  %8428 = vmatpush1.msra.mxu0 0.0
  %8429 = vmatprep.subr.mxu0 0.0
  %8430 = vmatpush1.msra.mxu0 0.0
  %8431 = vmatprep.subr.mxu0 0.0
  %8432 = vmatpush1.msra.mxu0 0.0
  %8433 = vmatprep.subr.mxu0 0.0
  %8434 = vmatpush1.msra.mxu0 0.0
  %8435 = vmatprep.subr.mxu0 0.0
  %8436 = vmatpush1.msra.mxu0 0.0
  %8437 = vmatprep.subr.mxu0 0.0
  %8438 = vmatpush1.msra.mxu0 0.0
  %8439 = vmatprep.subr.mxu0 0.0
  %8440 = vmatpush1.msra.mxu0 0.0
  %8441 = vmatprep.subr.mxu0 0.0
  %8442 = vmatpush1.msra.mxu0 0.0
  %8443 = vmatprep.subr.mxu0 0.0
  %8444 = vmatpush1.msra.mxu0 0.0
  %8445 = vmatprep.subr.mxu0 0.0
  %8446 = vmatpush1.msra.mxu0 0.0
  %8447 = vmatprep.subr.mxu0 0.0
  %8448 = vmatpush1.msra.mxu0 0.0
  %8449 = vmatprep.subr.mxu0 0.0
  %8450 = vmatpush1.msra.mxu0 0.0
  %8451 = vmatprep.subr.mxu0 0.0
  %8452 = vmatpush1.msra.mxu0 0.0
  %8453 = vmatprep.subr.mxu0 0.0
  %8454 = vmatpush1.msra.mxu0 0.0
  %8455 = vmatprep.subr.mxu0 0.0
  %8456 = vmatpush1.msra.mxu0 0.0
  %8457 = vmatprep.subr.mxu0 0.0
  %8458 = vmatpush1.msra.mxu0 0.0
  %8459 = vmatprep.subr.mxu0 0.0
  %8460 = vmatpush1.msra.mxu0 0.0
  %8461 = vmatprep.subr.mxu0 0.0
  %8462 = vmatpush1.msra.mxu0 0.0
  %8463 = vmatprep.subr.mxu0 0.0
  %8464 = vmatpush1.msra.mxu0 0.0
  %8465 = vmatprep.subr.mxu0 0.0
  %8466 = vmatpush1.msra.mxu0 0.0
  %8467 = vmatprep.subr.mxu0 0.0
  %8468 = vmatpush1.msra.mxu0 0.0
  %8469 = vmatprep.mubr.f32.mxu0 0.0
  %v8470 = vand.u32 %v2070, 4294901760
  %8471 = vmatmul.mubr.f32.gmra.mrb[0].mxu0 %v8470
  %v8472 = vpop.f32.mrb[0].mxu0
  %v8473 = vadd.f32 %v8380, %v8472
  %v8474 = vpop.f32.mrb[0].mxu0
  %8475 = vmatprep.mubr.f32.mxu0 0.0
  %v8476 = vand.u32 %v2073, 4294901760
  %8477 = vmatmul.mubr.f32.gmra.mrb[0].mxu0 %v8476
  %v8478 = vpop.f32.mrb[0].mxu0
  %v8479 = vadd.f32 %v8386, %v8478
  %v8480 = vpop.f32.mrb[0].mxu0
  %8481 = vmatprep.mubr.f32.mxu0 0.0
  %v8482 = vand.u32 %v2076, 4294901760
  %8483 = vmatmul.mubr.f32.gmra.mrb[0].mxu0 %v8482
  %v8484 = vpop.f32.mrb[0].mxu0
  %v8485 = vadd.f32 %v8392, %v8484
  %v8486 = vpop.f32.mrb[0].mxu0
  %8487 = vmatprep.mubr.f32.mxu0 0.0
  %v8488 = vand.u32 %v2079, 4294901760
  %8489 = vmatmul.mubr.f32.gmra.mrb[0].mxu0 %v8488
  %v8490 = vpop.f32.mrb[0].mxu0
  %v8491 = vadd.f32 %v8398, %v8490
  %v8492 = vpop.f32.mrb[0].mxu0
  %8493 = vdwg.mxu0
  %s8494 = scalar_lea.vmem %s6, 256
  %v8495 = vld [vmem:[%s8494] sm:$0xff]
  %v8496 = vld [vmem:[%s8494 + $0x8] sm:$0xff]
  %v8497 = vld [vmem:[%s8494 + $0x10] sm:$0xff]
  %v8498 = vld [vmem:[%s8494 + $0x18] sm:$0xff]
  %v8499 = vld [vmem:[%s8494 + $0x20] sm:$0xff]
  %v8500 = vld [vmem:[%s8494 + $0x28] sm:$0xff]
  %v8501 = vld [vmem:[%s8494 + $0x30] sm:$0xff]
  %v8502 = vld [vmem:[%s8494 + $0x38] sm:$0xff]
  %v8503 = vld [vmem:[%s8494 + $0x40] sm:$0xff]
  %v8504 = vld [vmem:[%s8494 + $0x48] sm:$0xff]
  %v8505 = vld [vmem:[%s8494 + $0x50] sm:$0xff]
  %v8506 = vld [vmem:[%s8494 + $0x58] sm:$0xff]
  %v8507 = vld [vmem:[%s8494 + $0x60] sm:$0xff]
  %v8508 = vld [vmem:[%s8494 + $0x68] sm:$0xff]
  %v8509 = vld [vmem:[%s8494 + $0x70] sm:$0xff]
  %v8510 = vld [vmem:[%s8494 + $0x78] sm:$0xff]
  %8511 = vmatprep.subr.mxu0 0.0
  %v8512 = vand.u32 %v8495, 4294901760
  %8513 = vmatpush1.msra.mxu0 %v8512
  %8514 = vmatprep.subr.mxu0 0.0
  %v8515 = vand.u32 %v8496, 4294901760
  %8516 = vmatpush1.msra.mxu0 %v8515
  %8517 = vmatprep.subr.mxu0 0.0
  %v8518 = vand.u32 %v8497, 4294901760
  %8519 = vmatpush1.msra.mxu0 %v8518
  %8520 = vmatprep.subr.mxu0 0.0
  %v8521 = vand.u32 %v8498, 4294901760
  %8522 = vmatpush1.msra.mxu0 %v8521
  %8523 = vmatprep.subr.mxu0 0.0
  %v8524 = vand.u32 %v8499, 4294901760
  %8525 = vmatpush1.msra.mxu0 %v8524
  %8526 = vmatprep.subr.mxu0 0.0
  %v8527 = vand.u32 %v8500, 4294901760
  %8528 = vmatpush1.msra.mxu0 %v8527
  %8529 = vmatprep.subr.mxu0 0.0
  %v8530 = vand.u32 %v8501, 4294901760
  %8531 = vmatpush1.msra.mxu0 %v8530
  %8532 = vmatprep.subr.mxu0 0.0
  %v8533 = vand.u32 %v8502, 4294901760
  %8534 = vmatpush1.msra.mxu0 %v8533
  %8535 = vmatprep.subr.mxu0 0.0
  %v8536 = vand.u32 %v8503, 4294901760
  %8537 = vmatpush1.msra.mxu0 %v8536
  %8538 = vmatprep.subr.mxu0 0.0
  %v8539 = vand.u32 %v8504, 4294901760
  %8540 = vmatpush1.msra.mxu0 %v8539
  %8541 = vmatprep.subr.mxu0 0.0
  %v8542 = vand.u32 %v8505, 4294901760
  %8543 = vmatpush1.msra.mxu0 %v8542
  %8544 = vmatprep.subr.mxu0 0.0
  %v8545 = vand.u32 %v8506, 4294901760
  %8546 = vmatpush1.msra.mxu0 %v8545
  %8547 = vmatprep.subr.mxu0 0.0
  %v8548 = vand.u32 %v8507, 4294901760
  %8549 = vmatpush1.msra.mxu0 %v8548
  %8550 = vmatprep.subr.mxu0 0.0
  %v8551 = vand.u32 %v8508, 4294901760
  %8552 = vmatpush1.msra.mxu0 %v8551
  %8553 = vmatprep.subr.mxu0 0.0
  %v8554 = vand.u32 %v8509, 4294901760
  %8555 = vmatpush1.msra.mxu0 %v8554
  %8556 = vmatprep.subr.mxu0 0.0
  %v8557 = vand.u32 %v8510, 4294901760
  %8558 = vmatpush1.msra.mxu0 %v8557
  %8559 = vmatprep.subr.mxu0 0.0
  %8560 = vmatpush1.msra.mxu0 0.0
  %8561 = vmatprep.subr.mxu0 0.0
  %8562 = vmatpush1.msra.mxu0 0.0
  %8563 = vmatprep.subr.mxu0 0.0
  %8564 = vmatpush1.msra.mxu0 0.0
  %8565 = vmatprep.subr.mxu0 0.0
  %8566 = vmatpush1.msra.mxu0 0.0
  %8567 = vmatprep.subr.mxu0 0.0
  %8568 = vmatpush1.msra.mxu0 0.0
  %8569 = vmatprep.subr.mxu0 0.0
  %8570 = vmatpush1.msra.mxu0 0.0
  %8571 = vmatprep.subr.mxu0 0.0
  %8572 = vmatpush1.msra.mxu0 0.0
  %8573 = vmatprep.subr.mxu0 0.0
  %8574 = vmatpush1.msra.mxu0 0.0
  %8575 = vmatprep.subr.mxu0 0.0
  %8576 = vmatpush1.msra.mxu0 0.0
  %8577 = vmatprep.subr.mxu0 0.0
  %8578 = vmatpush1.msra.mxu0 0.0
  %8579 = vmatprep.subr.mxu0 0.0
  %8580 = vmatpush1.msra.mxu0 0.0
  %8581 = vmatprep.subr.mxu0 0.0
  %8582 = vmatpush1.msra.mxu0 0.0
  %8583 = vmatprep.subr.mxu0 0.0
  %8584 = vmatpush1.msra.mxu0 0.0
  %8585 = vmatprep.subr.mxu0 0.0
  %8586 = vmatpush1.msra.mxu0 0.0
  %8587 = vmatprep.subr.mxu0 0.0
  %8588 = vmatpush1.msra.mxu0 0.0
  %8589 = vmatprep.subr.mxu0 0.0
  %8590 = vmatpush1.msra.mxu0 0.0
  %8591 = vmatprep.mubr.f32.mxu0 0.0
  %v8592 = vand.u32 %v8473, 4294901760
  %v8593 = vsub.f32 %v8473, %v8592
  %v8594 = vand.u32 %v8593, 4294901760
  %v8595 = vsub.f32 %v8593, %v8594
  %v8596 = vand.u32 %v8595, 4294901760
  %8597 = vmatmul.mubr.f32.gmra.mrb[0].mxu0 %v8596
  %v8598 = vpop.f32.mrb[0].mxu0
  %v8599 = vadd.f32 0.0, %v8598
  %v8600 = vpop.f32.mrb[0].mxu0
  %8601 = vmatprep.mubr.f32.mxu0 0.0
  %v8602 = vand.u32 %v8479, 4294901760
  %v8603 = vsub.f32 %v8479, %v8602
  %v8604 = vand.u32 %v8603, 4294901760
  %v8605 = vsub.f32 %v8603, %v8604
  %v8606 = vand.u32 %v8605, 4294901760
  %8607 = vmatmul.mubr.f32.gmra.mrb[0].mxu0 %v8606
  %v8608 = vpop.f32.mrb[0].mxu0
  %v8609 = vadd.f32 0.0, %v8608
  %v8610 = vpop.f32.mrb[0].mxu0
  %8611 = vmatprep.mubr.f32.mxu0 0.0
  %v8612 = vand.u32 %v8485, 4294901760
  %v8613 = vsub.f32 %v8485, %v8612
  %v8614 = vand.u32 %v8613, 4294901760
  %v8615 = vsub.f32 %v8613, %v8614
  %v8616 = vand.u32 %v8615, 4294901760
  %8617 = vmatmul.mubr.f32.gmra.mrb[0].mxu0 %v8616
  %v8618 = vpop.f32.mrb[0].mxu0
  %v8619 = vadd.f32 0.0, %v8618
  %v8620 = vpop.f32.mrb[0].mxu0
  %8621 = vmatprep.mubr.f32.mxu0 0.0
  %v8622 = vand.u32 %v8491, 4294901760
  %v8623 = vsub.f32 %v8491, %v8622
  %v8624 = vand.u32 %v8623, 4294901760
  %v8625 = vsub.f32 %v8623, %v8624
  %v8626 = vand.u32 %v8625, 4294901760
  %8627 = vmatmul.mubr.f32.gmra.mrb[0].mxu0 %v8626
  %v8628 = vpop.f32.mrb[0].mxu0
  %v8629 = vadd.f32 0.0, %v8628
  %v8630 = vpop.f32.mrb[0].mxu0
  %8631 = vdwg.mxu0
  %8632 = vmatprep.subr.mxu0 0.0
  %v8633 = vand.u32 %v8495, 4294901760
  %v8634 = vsub.f32 %v8495, %v8633
  %v8635 = vand.u32 %v8634, 4294901760
  %v8636 = vsub.f32 %v8634, %v8635
  %v8637 = vand.u32 %v8636, 4294901760
  %8638 = vmatpush1.msra.mxu0 %v8637
  %8639 = vmatprep.subr.mxu0 0.0
  %v8640 = vand.u32 %v8496, 4294901760
  %v8641 = vsub.f32 %v8496, %v8640
  %v8642 = vand.u32 %v8641, 4294901760
  %v8643 = vsub.f32 %v8641, %v8642
  %v8644 = vand.u32 %v8643, 4294901760
  %8645 = vmatpush1.msra.mxu0 %v8644
  %8646 = vmatprep.subr.mxu0 0.0
  %v8647 = vand.u32 %v8497, 4294901760
  %v8648 = vsub.f32 %v8497, %v8647
  %v8649 = vand.u32 %v8648, 4294901760
  %v8650 = vsub.f32 %v8648, %v8649
  %v8651 = vand.u32 %v8650, 4294901760
  %8652 = vmatpush1.msra.mxu0 %v8651
  %8653 = vmatprep.subr.mxu0 0.0
  %v8654 = vand.u32 %v8498, 4294901760
  %v8655 = vsub.f32 %v8498, %v8654
  %v8656 = vand.u32 %v8655, 4294901760
  %v8657 = vsub.f32 %v8655, %v8656
  %v8658 = vand.u32 %v8657, 4294901760
  %8659 = vmatpush1.msra.mxu0 %v8658
  %8660 = vmatprep.subr.mxu0 0.0
  %v8661 = vand.u32 %v8499, 4294901760
  %v8662 = vsub.f32 %v8499, %v8661
  %v8663 = vand.u32 %v8662, 4294901760
  %v8664 = vsub.f32 %v8662, %v8663
  %v8665 = vand.u32 %v8664, 4294901760
  %8666 = vmatpush1.msra.mxu0 %v8665
  %8667 = vmatprep.subr.mxu0 0.0
  %v8668 = vand.u32 %v8500, 4294901760
  %v8669 = vsub.f32 %v8500, %v8668
  %v8670 = vand.u32 %v8669, 4294901760
  %v8671 = vsub.f32 %v8669, %v8670
  %v8672 = vand.u32 %v8671, 4294901760
  %8673 = vmatpush1.msra.mxu0 %v8672
  %8674 = vmatprep.subr.mxu0 0.0
  %v8675 = vand.u32 %v8501, 4294901760
  %v8676 = vsub.f32 %v8501, %v8675
  %v8677 = vand.u32 %v8676, 4294901760
  %v8678 = vsub.f32 %v8676, %v8677
  %v8679 = vand.u32 %v8678, 4294901760
  %8680 = vmatpush1.msra.mxu0 %v8679
  %8681 = vmatprep.subr.mxu0 0.0
  %v8682 = vand.u32 %v8502, 4294901760
  %v8683 = vsub.f32 %v8502, %v8682
  %v8684 = vand.u32 %v8683, 4294901760
  %v8685 = vsub.f32 %v8683, %v8684
  %v8686 = vand.u32 %v8685, 4294901760
  %8687 = vmatpush1.msra.mxu0 %v8686
  %8688 = vmatprep.subr.mxu0 0.0
  %v8689 = vand.u32 %v8503, 4294901760
  %v8690 = vsub.f32 %v8503, %v8689
  %v8691 = vand.u32 %v8690, 4294901760
  %v8692 = vsub.f32 %v8690, %v8691
  %v8693 = vand.u32 %v8692, 4294901760
  %8694 = vmatpush1.msra.mxu0 %v8693
  %8695 = vmatprep.subr.mxu0 0.0
  %v8696 = vand.u32 %v8504, 4294901760
  %v8697 = vsub.f32 %v8504, %v8696
  %v8698 = vand.u32 %v8697, 4294901760
  %v8699 = vsub.f32 %v8697, %v8698
  %v8700 = vand.u32 %v8699, 4294901760
  %8701 = vmatpush1.msra.mxu0 %v8700
  %8702 = vmatprep.subr.mxu0 0.0
  %v8703 = vand.u32 %v8505, 4294901760
  %v8704 = vsub.f32 %v8505, %v8703
  %v8705 = vand.u32 %v8704, 4294901760
  %v8706 = vsub.f32 %v8704, %v8705
  %v8707 = vand.u32 %v8706, 4294901760
  %8708 = vmatpush1.msra.mxu0 %v8707
  %8709 = vmatprep.subr.mxu0 0.0
  %v8710 = vand.u32 %v8506, 4294901760
  %v8711 = vsub.f32 %v8506, %v8710
  %v8712 = vand.u32 %v8711, 4294901760
  %v8713 = vsub.f32 %v8711, %v8712
  %v8714 = vand.u32 %v8713, 4294901760
  %8715 = vmatpush1.msra.mxu0 %v8714
  %8716 = vmatprep.subr.mxu0 0.0
  %v8717 = vand.u32 %v8507, 4294901760
  %v8718 = vsub.f32 %v8507, %v8717
  %v8719 = vand.u32 %v8718, 4294901760
  %v8720 = vsub.f32 %v8718, %v8719
  %v8721 = vand.u32 %v8720, 4294901760
  %8722 = vmatpush1.msra.mxu0 %v8721
  %8723 = vmatprep.subr.mxu0 0.0
  %v8724 = vand.u32 %v8508, 4294901760
  %v8725 = vsub.f32 %v8508, %v8724
  %v8726 = vand.u32 %v8725, 4294901760
  %v8727 = vsub.f32 %v8725, %v8726
  %v8728 = vand.u32 %v8727, 4294901760
  %8729 = vmatpush1.msra.mxu0 %v8728
  %8730 = vmatprep.subr.mxu0 0.0
  %v8731 = vand.u32 %v8509, 4294901760
  %v8732 = vsub.f32 %v8509, %v8731
  %v8733 = vand.u32 %v8732, 4294901760
  %v8734 = vsub.f32 %v8732, %v8733
  %v8735 = vand.u32 %v8734, 4294901760
  %8736 = vmatpush1.msra.mxu0 %v8735
  %8737 = vmatprep.subr.mxu0 0.0
  %v8738 = vand.u32 %v8510, 4294901760
  %v8739 = vsub.f32 %v8510, %v8738
  %v8740 = vand.u32 %v8739, 4294901760
  %v8741 = vsub.f32 %v8739, %v8740
  %v8742 = vand.u32 %v8741, 4294901760
  %8743 = vmatpush1.msra.mxu0 %v8742
  %8744 = vmatprep.subr.mxu0 0.0
  %8745 = vmatpush1.msra.mxu0 0.0
  %8746 = vmatprep.subr.mxu0 0.0
  %8747 = vmatpush1.msra.mxu0 0.0
  %8748 = vmatprep.subr.mxu0 0.0
  %8749 = vmatpush1.msra.mxu0 0.0
  %8750 = vmatprep.subr.mxu0 0.0
  %8751 = vmatpush1.msra.mxu0 0.0
  %8752 = vmatprep.subr.mxu0 0.0
  %8753 = vmatpush1.msra.mxu0 0.0
  %8754 = vmatprep.subr.mxu0 0.0
  %8755 = vmatpush1.msra.mxu0 0.0
  %8756 = vmatprep.subr.mxu0 0.0
  %8757 = vmatpush1.msra.mxu0 0.0
  %8758 = vmatprep.subr.mxu0 0.0
  %8759 = vmatpush1.msra.mxu0 0.0
  %8760 = vmatprep.subr.mxu0 0.0
  %8761 = vmatpush1.msra.mxu0 0.0
  %8762 = vmatprep.subr.mxu0 0.0
  %8763 = vmatpush1.msra.mxu0 0.0
  %8764 = vmatprep.subr.mxu0 0.0
  %8765 = vmatpush1.msra.mxu0 0.0
  %8766 = vmatprep.subr.mxu0 0.0
  %8767 = vmatpush1.msra.mxu0 0.0
  %8768 = vmatprep.subr.mxu0 0.0
  %8769 = vmatpush1.msra.mxu0 0.0
  %8770 = vmatprep.subr.mxu0 0.0
  %8771 = vmatpush1.msra.mxu0 0.0
  %8772 = vmatprep.subr.mxu0 0.0
  %8773 = vmatpush1.msra.mxu0 0.0
  %8774 = vmatprep.subr.mxu0 0.0
  %8775 = vmatpush1.msra.mxu0 0.0
  %8776 = vmatprep.mubr.f32.mxu0 0.0
  %v8777 = vand.u32 %v8473, 4294901760
  %8778 = vmatmul.mubr.f32.gmra.mrb[0].mxu0 %v8777
  %v8779 = vpop.f32.mrb[0].mxu0
  %v8780 = vadd.f32 %v8599, %v8779
  %v8781 = vpop.f32.mrb[0].mxu0
  %8782 = vmatprep.mubr.f32.mxu0 0.0
  %v8783 = vand.u32 %v8479, 4294901760
  %8784 = vmatmul.mubr.f32.gmra.mrb[0].mxu0 %v8783
  %v8785 = vpop.f32.mrb[0].mxu0
  %v8786 = vadd.f32 %v8609, %v8785
  %v8787 = vpop.f32.mrb[0].mxu0
  %8788 = vmatprep.mubr.f32.mxu0 0.0
  %v8789 = vand.u32 %v8485, 4294901760
  %8790 = vmatmul.mubr.f32.gmra.mrb[0].mxu0 %v8789
  %v8791 = vpop.f32.mrb[0].mxu0
  %v8792 = vadd.f32 %v8619, %v8791
  %v8793 = vpop.f32.mrb[0].mxu0
  %8794 = vmatprep.mubr.f32.mxu0 0.0
  %v8795 = vand.u32 %v8491, 4294901760
  %8796 = vmatmul.mubr.f32.gmra.mrb[0].mxu0 %v8795
  %v8797 = vpop.f32.mrb[0].mxu0
  %v8798 = vadd.f32 %v8629, %v8797
  %v8799 = vpop.f32.mrb[0].mxu0
  %8800 = vdwg.mxu0
  %8801 = vmatprep.subr.mxu0 0.0
  %v8802 = vand.u32 %v8495, 4294901760
  %v8803 = vsub.f32 %v8495, %v8802
  %8804 = vmatpush1.msra.mxu0 %v8803
  %8805 = vmatprep.subr.mxu0 0.0
  %v8806 = vand.u32 %v8496, 4294901760
  %v8807 = vsub.f32 %v8496, %v8806
  %8808 = vmatpush1.msra.mxu0 %v8807
  %8809 = vmatprep.subr.mxu0 0.0
  %v8810 = vand.u32 %v8497, 4294901760
  %v8811 = vsub.f32 %v8497, %v8810
  %8812 = vmatpush1.msra.mxu0 %v8811
  %8813 = vmatprep.subr.mxu0 0.0
  %v8814 = vand.u32 %v8498, 4294901760
  %v8815 = vsub.f32 %v8498, %v8814
  %8816 = vmatpush1.msra.mxu0 %v8815
  %8817 = vmatprep.subr.mxu0 0.0
  %v8818 = vand.u32 %v8499, 4294901760
  %v8819 = vsub.f32 %v8499, %v8818
  %8820 = vmatpush1.msra.mxu0 %v8819
  %8821 = vmatprep.subr.mxu0 0.0
  %v8822 = vand.u32 %v8500, 4294901760
  %v8823 = vsub.f32 %v8500, %v8822
  %8824 = vmatpush1.msra.mxu0 %v8823
  %8825 = vmatprep.subr.mxu0 0.0
  %v8826 = vand.u32 %v8501, 4294901760
  %v8827 = vsub.f32 %v8501, %v8826
  %8828 = vmatpush1.msra.mxu0 %v8827
  %8829 = vmatprep.subr.mxu0 0.0
  %v8830 = vand.u32 %v8502, 4294901760
  %v8831 = vsub.f32 %v8502, %v8830
  %8832 = vmatpush1.msra.mxu0 %v8831
  %8833 = vmatprep.subr.mxu0 0.0
  %v8834 = vand.u32 %v8503, 4294901760
  %v8835 = vsub.f32 %v8503, %v8834
  %8836 = vmatpush1.msra.mxu0 %v8835
  %8837 = vmatprep.subr.mxu0 0.0
  %v8838 = vand.u32 %v8504, 4294901760
  %v8839 = vsub.f32 %v8504, %v8838
  %8840 = vmatpush1.msra.mxu0 %v8839
  %8841 = vmatprep.subr.mxu0 0.0
  %v8842 = vand.u32 %v8505, 4294901760
  %v8843 = vsub.f32 %v8505, %v8842
  %8844 = vmatpush1.msra.mxu0 %v8843
  %8845 = vmatprep.subr.mxu0 0.0
  %v8846 = vand.u32 %v8506, 4294901760
  %v8847 = vsub.f32 %v8506, %v8846
  %8848 = vmatpush1.msra.mxu0 %v8847
  %8849 = vmatprep.subr.mxu0 0.0
  %v8850 = vand.u32 %v8507, 4294901760
  %v8851 = vsub.f32 %v8507, %v8850
  %8852 = vmatpush1.msra.mxu0 %v8851
  %8853 = vmatprep.subr.mxu0 0.0
  %v8854 = vand.u32 %v8508, 4294901760
  %v8855 = vsub.f32 %v8508, %v8854
  %8856 = vmatpush1.msra.mxu0 %v8855
  %8857 = vmatprep.subr.mxu0 0.0
  %v8858 = vand.u32 %v8509, 4294901760
  %v8859 = vsub.f32 %v8509, %v8858
  %8860 = vmatpush1.msra.mxu0 %v8859
  %8861 = vmatprep.subr.mxu0 0.0
  %v8862 = vand.u32 %v8510, 4294901760
  %v8863 = vsub.f32 %v8510, %v8862
  %8864 = vmatpush1.msra.mxu0 %v8863
  %8865 = vmatprep.subr.mxu0 0.0
  %8866 = vmatpush1.msra.mxu0 0.0
  %8867 = vmatprep.subr.mxu0 0.0
  %8868 = vmatpush1.msra.mxu0 0.0
  %8869 = vmatprep.subr.mxu0 0.0
  %8870 = vmatpush1.msra.mxu0 0.0
  %8871 = vmatprep.subr.mxu0 0.0
  %8872 = vmatpush1.msra.mxu0 0.0
  %8873 = vmatprep.subr.mxu0 0.0
  %8874 = vmatpush1.msra.mxu0 0.0
  %8875 = vmatprep.subr.mxu0 0.0
  %8876 = vmatpush1.msra.mxu0 0.0
  %8877 = vmatprep.subr.mxu0 0.0
  %8878 = vmatpush1.msra.mxu0 0.0
  %8879 = vmatprep.subr.mxu0 0.0
  %8880 = vmatpush1.msra.mxu0 0.0
  %8881 = vmatprep.subr.mxu0 0.0
  %8882 = vmatpush1.msra.mxu0 0.0
  %8883 = vmatprep.subr.mxu0 0.0
  %8884 = vmatpush1.msra.mxu0 0.0
  %8885 = vmatprep.subr.mxu0 0.0
  %8886 = vmatpush1.msra.mxu0 0.0
  %8887 = vmatprep.subr.mxu0 0.0
  %8888 = vmatpush1.msra.mxu0 0.0
  %8889 = vmatprep.subr.mxu0 0.0
  %8890 = vmatpush1.msra.mxu0 0.0
  %8891 = vmatprep.subr.mxu0 0.0
  %8892 = vmatpush1.msra.mxu0 0.0
  %8893 = vmatprep.subr.mxu0 0.0
  %8894 = vmatpush1.msra.mxu0 0.0
  %8895 = vmatprep.subr.mxu0 0.0
  %8896 = vmatpush1.msra.mxu0 0.0
  %8897 = vmatprep.mubr.f32.mxu0 0.0
  %v8898 = vand.u32 %v8473, 4294901760
  %v8899 = vsub.f32 %v8473, %v8898
  %8900 = vmatmul.mubr.f32.gmra.mrb[0].mxu0 %v8899
  %v8901 = vpop.f32.mrb[0].mxu0
  %v8902 = vadd.f32 %v8780, %v8901
  %v8903 = vpop.f32.mrb[0].mxu0
  %8904 = vmatprep.mubr.f32.mxu0 0.0
  %v8905 = vand.u32 %v8479, 4294901760
  %v8906 = vsub.f32 %v8479, %v8905
  %8907 = vmatmul.mubr.f32.gmra.mrb[0].mxu0 %v8906
  %v8908 = vpop.f32.mrb[0].mxu0
  %v8909 = vadd.f32 %v8786, %v8908
  %v8910 = vpop.f32.mrb[0].mxu0
  %8911 = vmatprep.mubr.f32.mxu0 0.0
  %v8912 = vand.u32 %v8485, 4294901760
  %v8913 = vsub.f32 %v8485, %v8912
  %8914 = vmatmul.mubr.f32.gmra.mrb[0].mxu0 %v8913
  %v8915 = vpop.f32.mrb[0].mxu0
  %v8916 = vadd.f32 %v8792, %v8915
  %v8917 = vpop.f32.mrb[0].mxu0
  %8918 = vmatprep.mubr.f32.mxu0 0.0
  %v8919 = vand.u32 %v8491, 4294901760
  %v8920 = vsub.f32 %v8491, %v8919
  %8921 = vmatmul.mubr.f32.gmra.mrb[0].mxu0 %v8920
  %v8922 = vpop.f32.mrb[0].mxu0
  %v8923 = vadd.f32 %v8798, %v8922
  %v8924 = vpop.f32.mrb[0].mxu0
  %8925 = vdwg.mxu0
  %8926 = vmatprep.subr.mxu0 0.0
  %v8927 = vand.u32 %v8495, 4294901760
  %8928 = vmatpush1.msra.mxu0 %v8927
  %8929 = vmatprep.subr.mxu0 0.0
  %v8930 = vand.u32 %v8496, 4294901760
  %8931 = vmatpush1.msra.mxu0 %v8930
  %8932 = vmatprep.subr.mxu0 0.0
  %v8933 = vand.u32 %v8497, 4294901760
  %8934 = vmatpush1.msra.mxu0 %v8933
  %8935 = vmatprep.subr.mxu0 0.0
  %v8936 = vand.u32 %v8498, 4294901760
  %8937 = vmatpush1.msra.mxu0 %v8936
  %8938 = vmatprep.subr.mxu0 0.0
  %v8939 = vand.u32 %v8499, 4294901760
  %8940 = vmatpush1.msra.mxu0 %v8939
  %8941 = vmatprep.subr.mxu0 0.0
  %v8942 = vand.u32 %v8500, 4294901760
  %8943 = vmatpush1.msra.mxu0 %v8942
  %8944 = vmatprep.subr.mxu0 0.0
  %v8945 = vand.u32 %v8501, 4294901760
  %8946 = vmatpush1.msra.mxu0 %v8945
  %8947 = vmatprep.subr.mxu0 0.0
  %v8948 = vand.u32 %v8502, 4294901760
  %8949 = vmatpush1.msra.mxu0 %v8948
  %8950 = vmatprep.subr.mxu0 0.0
  %v8951 = vand.u32 %v8503, 4294901760
  %8952 = vmatpush1.msra.mxu0 %v8951
  %8953 = vmatprep.subr.mxu0 0.0
  %v8954 = vand.u32 %v8504, 4294901760
  %8955 = vmatpush1.msra.mxu0 %v8954
  %8956 = vmatprep.subr.mxu0 0.0
  %v8957 = vand.u32 %v8505, 4294901760
  %8958 = vmatpush1.msra.mxu0 %v8957
  %8959 = vmatprep.subr.mxu0 0.0
  %v8960 = vand.u32 %v8506, 4294901760
  %8961 = vmatpush1.msra.mxu0 %v8960
  %8962 = vmatprep.subr.mxu0 0.0
  %v8963 = vand.u32 %v8507, 4294901760
  %8964 = vmatpush1.msra.mxu0 %v8963
  %8965 = vmatprep.subr.mxu0 0.0
  %v8966 = vand.u32 %v8508, 4294901760
  %8967 = vmatpush1.msra.mxu0 %v8966
  %8968 = vmatprep.subr.mxu0 0.0
  %v8969 = vand.u32 %v8509, 4294901760
  %8970 = vmatpush1.msra.mxu0 %v8969
  %8971 = vmatprep.subr.mxu0 0.0
  %v8972 = vand.u32 %v8510, 4294901760
  %8973 = vmatpush1.msra.mxu0 %v8972
  %8974 = vmatprep.subr.mxu0 0.0
  %8975 = vmatpush1.msra.mxu0 0.0
  %8976 = vmatprep.subr.mxu0 0.0
  %8977 = vmatpush1.msra.mxu0 0.0
  %8978 = vmatprep.subr.mxu0 0.0
  %8979 = vmatpush1.msra.mxu0 0.0
  %8980 = vmatprep.subr.mxu0 0.0
  %8981 = vmatpush1.msra.mxu0 0.0
  %8982 = vmatprep.subr.mxu0 0.0
  %8983 = vmatpush1.msra.mxu0 0.0
  %8984 = vmatprep.subr.mxu0 0.0
  %8985 = vmatpush1.msra.mxu0 0.0
  %8986 = vmatprep.subr.mxu0 0.0
  %8987 = vmatpush1.msra.mxu0 0.0
  %8988 = vmatprep.subr.mxu0 0.0
  %8989 = vmatpush1.msra.mxu0 0.0
  %8990 = vmatprep.subr.mxu0 0.0
  %8991 = vmatpush1.msra.mxu0 0.0
  %8992 = vmatprep.subr.mxu0 0.0
  %8993 = vmatpush1.msra.mxu0 0.0
  %8994 = vmatprep.subr.mxu0 0.0
  %8995 = vmatpush1.msra.mxu0 0.0
  %8996 = vmatprep.subr.mxu0 0.0
  %8997 = vmatpush1.msra.mxu0 0.0
  %8998 = vmatprep.subr.mxu0 0.0
  %8999 = vmatpush1.msra.mxu0 0.0
  %9000 = vmatprep.subr.mxu0 0.0
  %9001 = vmatpush1.msra.mxu0 0.0
  %9002 = vmatprep.subr.mxu0 0.0
  %9003 = vmatpush1.msra.mxu0 0.0
  %9004 = vmatprep.subr.mxu0 0.0
  %9005 = vmatpush1.msra.mxu0 0.0
  %9006 = vmatprep.mubr.f32.mxu0 0.0
  %v9007 = vand.u32 %v8473, 4294901760
  %v9008 = vsub.f32 %v8473, %v9007
  %v9009 = vand.u32 %v9008, 4294901760
  %9010 = vmatmul.mubr.f32.gmra.mrb[0].mxu0 %v9009
  %v9011 = vpop.f32.mrb[0].mxu0
  %v9012 = vadd.f32 %v8902, %v9011
  %v9013 = vpop.f32.mrb[0].mxu0
  %9014 = vmatprep.mubr.f32.mxu0 0.0
  %v9015 = vand.u32 %v8479, 4294901760
  %v9016 = vsub.f32 %v8479, %v9015
  %v9017 = vand.u32 %v9016, 4294901760
  %9018 = vmatmul.mubr.f32.gmra.mrb[0].mxu0 %v9017
  %v9019 = vpop.f32.mrb[0].mxu0
  %v9020 = vadd.f32 %v8909, %v9019
  %v9021 = vpop.f32.mrb[0].mxu0
  %9022 = vmatprep.mubr.f32.mxu0 0.0
  %v9023 = vand.u32 %v8485, 4294901760
  %v9024 = vsub.f32 %v8485, %v9023
  %v9025 = vand.u32 %v9024, 4294901760
  %9026 = vmatmul.mubr.f32.gmra.mrb[0].mxu0 %v9025
  %v9027 = vpop.f32.mrb[0].mxu0
  %v9028 = vadd.f32 %v8916, %v9027
  %v9029 = vpop.f32.mrb[0].mxu0
  %9030 = vmatprep.mubr.f32.mxu0 0.0
  %v9031 = vand.u32 %v8491, 4294901760
  %v9032 = vsub.f32 %v8491, %v9031
  %v9033 = vand.u32 %v9032, 4294901760
  %9034 = vmatmul.mubr.f32.gmra.mrb[0].mxu0 %v9033
  %v9035 = vpop.f32.mrb[0].mxu0
  %v9036 = vadd.f32 %v8923, %v9035
  %v9037 = vpop.f32.mrb[0].mxu0
  %9038 = vdwg.mxu0
  %9039 = vmatprep.subr.mxu0 0.0
  %v9040 = vand.u32 %v8495, 4294901760
  %v9041 = vsub.f32 %v8495, %v9040
  %v9042 = vand.u32 %v9041, 4294901760
  %9043 = vmatpush1.msra.mxu0 %v9042
  %9044 = vmatprep.subr.mxu0 0.0
  %v9045 = vand.u32 %v8496, 4294901760
  %v9046 = vsub.f32 %v8496, %v9045
  %v9047 = vand.u32 %v9046, 4294901760
  %9048 = vmatpush1.msra.mxu0 %v9047
  %9049 = vmatprep.subr.mxu0 0.0
  %v9050 = vand.u32 %v8497, 4294901760
  %v9051 = vsub.f32 %v8497, %v9050
  %v9052 = vand.u32 %v9051, 4294901760
  %9053 = vmatpush1.msra.mxu0 %v9052
  %9054 = vmatprep.subr.mxu0 0.0
  %v9055 = vand.u32 %v8498, 4294901760
  %v9056 = vsub.f32 %v8498, %v9055
  %v9057 = vand.u32 %v9056, 4294901760
  %9058 = vmatpush1.msra.mxu0 %v9057
  %9059 = vmatprep.subr.mxu0 0.0
  %v9060 = vand.u32 %v8499, 4294901760
  %v9061 = vsub.f32 %v8499, %v9060
  %v9062 = vand.u32 %v9061, 4294901760
  %9063 = vmatpush1.msra.mxu0 %v9062
  %9064 = vmatprep.subr.mxu0 0.0
  %v9065 = vand.u32 %v8500, 4294901760
  %v9066 = vsub.f32 %v8500, %v9065
  %v9067 = vand.u32 %v9066, 4294901760
  %9068 = vmatpush1.msra.mxu0 %v9067
  %9069 = vmatprep.subr.mxu0 0.0
  %v9070 = vand.u32 %v8501, 4294901760
  %v9071 = vsub.f32 %v8501, %v9070
  %v9072 = vand.u32 %v9071, 4294901760
  %9073 = vmatpush1.msra.mxu0 %v9072
  %9074 = vmatprep.subr.mxu0 0.0
  %v9075 = vand.u32 %v8502, 4294901760
  %v9076 = vsub.f32 %v8502, %v9075
  %v9077 = vand.u32 %v9076, 4294901760
  %9078 = vmatpush1.msra.mxu0 %v9077
  %9079 = vmatprep.subr.mxu0 0.0
  %v9080 = vand.u32 %v8503, 4294901760
  %v9081 = vsub.f32 %v8503, %v9080
  %v9082 = vand.u32 %v9081, 4294901760
  %9083 = vmatpush1.msra.mxu0 %v9082
  %9084 = vmatprep.subr.mxu0 0.0
  %v9085 = vand.u32 %v8504, 4294901760
  %v9086 = vsub.f32 %v8504, %v9085
  %v9087 = vand.u32 %v9086, 4294901760
  %9088 = vmatpush1.msra.mxu0 %v9087
  %9089 = vmatprep.subr.mxu0 0.0
  %v9090 = vand.u32 %v8505, 4294901760
  %v9091 = vsub.f32 %v8505, %v9090
  %v9092 = vand.u32 %v9091, 4294901760
  %9093 = vmatpush1.msra.mxu0 %v9092
  %9094 = vmatprep.subr.mxu0 0.0
  %v9095 = vand.u32 %v8506, 4294901760
  %v9096 = vsub.f32 %v8506, %v9095
  %v9097 = vand.u32 %v9096, 4294901760
  %9098 = vmatpush1.msra.mxu0 %v9097
  %9099 = vmatprep.subr.mxu0 0.0
  %v9100 = vand.u32 %v8507, 4294901760
  %v9101 = vsub.f32 %v8507, %v9100
  %v9102 = vand.u32 %v9101, 4294901760
  %9103 = vmatpush1.msra.mxu0 %v9102
  %9104 = vmatprep.subr.mxu0 0.0
  %v9105 = vand.u32 %v8508, 4294901760
  %v9106 = vsub.f32 %v8508, %v9105
  %v9107 = vand.u32 %v9106, 4294901760
  %9108 = vmatpush1.msra.mxu0 %v9107
  %9109 = vmatprep.subr.mxu0 0.0
  %v9110 = vand.u32 %v8509, 4294901760
  %v9111 = vsub.f32 %v8509, %v9110
  %v9112 = vand.u32 %v9111, 4294901760
  %9113 = vmatpush1.msra.mxu0 %v9112
  %9114 = vmatprep.subr.mxu0 0.0
  %v9115 = vand.u32 %v8510, 4294901760
  %v9116 = vsub.f32 %v8510, %v9115
  %v9117 = vand.u32 %v9116, 4294901760
  %9118 = vmatpush1.msra.mxu0 %v9117
  %9119 = vmatprep.subr.mxu0 0.0
  %9120 = vmatpush1.msra.mxu0 0.0
  %9121 = vmatprep.subr.mxu0 0.0
  %9122 = vmatpush1.msra.mxu0 0.0
  %9123 = vmatprep.subr.mxu0 0.0
  %9124 = vmatpush1.msra.mxu0 0.0
  %9125 = vmatprep.subr.mxu0 0.0
  %9126 = vmatpush1.msra.mxu0 0.0
  %9127 = vmatprep.subr.mxu0 0.0
  %9128 = vmatpush1.msra.mxu0 0.0
  %9129 = vmatprep.subr.mxu0 0.0
  %9130 = vmatpush1.msra.mxu0 0.0
  %9131 = vmatprep.subr.mxu0 0.0
  %9132 = vmatpush1.msra.mxu0 0.0
  %9133 = vmatprep.subr.mxu0 0.0
  %9134 = vmatpush1.msra.mxu0 0.0
  %9135 = vmatprep.subr.mxu0 0.0
  %9136 = vmatpush1.msra.mxu0 0.0
  %9137 = vmatprep.subr.mxu0 0.0
  %9138 = vmatpush1.msra.mxu0 0.0
  %9139 = vmatprep.subr.mxu0 0.0
  %9140 = vmatpush1.msra.mxu0 0.0
  %9141 = vmatprep.subr.mxu0 0.0
  %9142 = vmatpush1.msra.mxu0 0.0
  %9143 = vmatprep.subr.mxu0 0.0
  %9144 = vmatpush1.msra.mxu0 0.0
  %9145 = vmatprep.subr.mxu0 0.0
  %9146 = vmatpush1.msra.mxu0 0.0
  %9147 = vmatprep.subr.mxu0 0.0
  %9148 = vmatpush1.msra.mxu0 0.0
  %9149 = vmatprep.subr.mxu0 0.0
  %9150 = vmatpush1.msra.mxu0 0.0
  %9151 = vmatprep.mubr.f32.mxu0 0.0
  %v9152 = vand.u32 %v8473, 4294901760
  %9153 = vmatmul.mubr.f32.gmra.mrb[0].mxu0 %v9152
  %v9154 = vpop.f32.mrb[0].mxu0
  %v9155 = vadd.f32 %v9012, %v9154
  %v9156 = vpop.f32.mrb[0].mxu0
  %9157 = vmatprep.mubr.f32.mxu0 0.0
  %v9158 = vand.u32 %v8479, 4294901760
  %9159 = vmatmul.mubr.f32.gmra.mrb[0].mxu0 %v9158
  %v9160 = vpop.f32.mrb[0].mxu0
  %v9161 = vadd.f32 %v9020, %v9160
  %v9162 = vpop.f32.mrb[0].mxu0
  %9163 = vmatprep.mubr.f32.mxu0 0.0
  %v9164 = vand.u32 %v8485, 4294901760
  %9165 = vmatmul.mubr.f32.gmra.mrb[0].mxu0 %v9164
  %v9166 = vpop.f32.mrb[0].mxu0
  %v9167 = vadd.f32 %v9028, %v9166
  %v9168 = vpop.f32.mrb[0].mxu0
  %9169 = vmatprep.mubr.f32.mxu0 0.0
  %v9170 = vand.u32 %v8491, 4294901760
  %9171 = vmatmul.mubr.f32.gmra.mrb[0].mxu0 %v9170
  %v9172 = vpop.f32.mrb[0].mxu0
  %v9173 = vadd.f32 %v9036, %v9172
  %v9174 = vpop.f32.mrb[0].mxu0
  %9175 = vdwg.mxu0
  %9176 = vmatprep.subr.mxu0 0.0
  %v9177 = vand.u32 %v8495, 4294901760
  %9178 = vmatpush1.msra.mxu0 %v9177
  %9179 = vmatprep.subr.mxu0 0.0
  %v9180 = vand.u32 %v8496, 4294901760
  %9181 = vmatpush1.msra.mxu0 %v9180
  %9182 = vmatprep.subr.mxu0 0.0
  %v9183 = vand.u32 %v8497, 4294901760
  %9184 = vmatpush1.msra.mxu0 %v9183
  %9185 = vmatprep.subr.mxu0 0.0
  %v9186 = vand.u32 %v8498, 4294901760
  %9187 = vmatpush1.msra.mxu0 %v9186
  %9188 = vmatprep.subr.mxu0 0.0
  %v9189 = vand.u32 %v8499, 4294901760
  %9190 = vmatpush1.msra.mxu0 %v9189
  %9191 = vmatprep.subr.mxu0 0.0
  %v9192 = vand.u32 %v8500, 4294901760
  %9193 = vmatpush1.msra.mxu0 %v9192
  %9194 = vmatprep.subr.mxu0 0.0
  %v9195 = vand.u32 %v8501, 4294901760
  %9196 = vmatpush1.msra.mxu0 %v9195
  %9197 = vmatprep.subr.mxu0 0.0
  %v9198 = vand.u32 %v8502, 4294901760
  %9199 = vmatpush1.msra.mxu0 %v9198
  %9200 = vmatprep.subr.mxu0 0.0
  %v9201 = vand.u32 %v8503, 4294901760
  %9202 = vmatpush1.msra.mxu0 %v9201
  %9203 = vmatprep.subr.mxu0 0.0
  %v9204 = vand.u32 %v8504, 4294901760
  %9205 = vmatpush1.msra.mxu0 %v9204
  %9206 = vmatprep.subr.mxu0 0.0
  %v9207 = vand.u32 %v8505, 4294901760
  %9208 = vmatpush1.msra.mxu0 %v9207
  %9209 = vmatprep.subr.mxu0 0.0
  %v9210 = vand.u32 %v8506, 4294901760
  %9211 = vmatpush1.msra.mxu0 %v9210
  %9212 = vmatprep.subr.mxu0 0.0
  %v9213 = vand.u32 %v8507, 4294901760
  %9214 = vmatpush1.msra.mxu0 %v9213
  %9215 = vmatprep.subr.mxu0 0.0
  %v9216 = vand.u32 %v8508, 4294901760
  %9217 = vmatpush1.msra.mxu0 %v9216
  %9218 = vmatprep.subr.mxu0 0.0
  %v9219 = vand.u32 %v8509, 4294901760
  %9220 = vmatpush1.msra.mxu0 %v9219
  %9221 = vmatprep.subr.mxu0 0.0
  %v9222 = vand.u32 %v8510, 4294901760
  %9223 = vmatpush1.msra.mxu0 %v9222
  %9224 = vmatprep.subr.mxu0 0.0
  %9225 = vmatpush1.msra.mxu0 0.0
  %9226 = vmatprep.subr.mxu0 0.0
  %9227 = vmatpush1.msra.mxu0 0.0
  %9228 = vmatprep.subr.mxu0 0.0
  %9229 = vmatpush1.msra.mxu0 0.0
  %9230 = vmatprep.subr.mxu0 0.0
  %9231 = vmatpush1.msra.mxu0 0.0
  %9232 = vmatprep.subr.mxu0 0.0
  %9233 = vmatpush1.msra.mxu0 0.0
  %9234 = vmatprep.subr.mxu0 0.0
  %9235 = vmatpush1.msra.mxu0 0.0
  %9236 = vmatprep.subr.mxu0 0.0
  %9237 = vmatpush1.msra.mxu0 0.0
  %9238 = vmatprep.subr.mxu0 0.0
  %9239 = vmatpush1.msra.mxu0 0.0
  %9240 = vmatprep.subr.mxu0 0.0
  %9241 = vmatpush1.msra.mxu0 0.0
  %9242 = vmatprep.subr.mxu0 0.0
  %9243 = vmatpush1.msra.mxu0 0.0
  %9244 = vmatprep.subr.mxu0 0.0
  %9245 = vmatpush1.msra.mxu0 0.0
  %9246 = vmatprep.subr.mxu0 0.0
  %9247 = vmatpush1.msra.mxu0 0.0
  %9248 = vmatprep.subr.mxu0 0.0
  %9249 = vmatpush1.msra.mxu0 0.0
  %9250 = vmatprep.subr.mxu0 0.0
  %9251 = vmatpush1.msra.mxu0 0.0
  %9252 = vmatprep.subr.mxu0 0.0
  %9253 = vmatpush1.msra.mxu0 0.0
  %9254 = vmatprep.subr.mxu0 0.0
  %9255 = vmatpush1.msra.mxu0 0.0
  %9256 = vmatprep.mubr.f32.mxu0 0.0
  %v9257 = vand.u32 %v8473, 4294901760
  %9258 = vmatmul.mubr.f32.gmra.mrb[0].mxu0 %v9257
  %v9259 = vpop.f32.mrb[0].mxu0
  %v9260 = vadd.f32 %v9155, %v9259
  %v9261 = vpop.f32.mrb[0].mxu0
  %9262 = vmatprep.mubr.f32.mxu0 0.0
  %v9263 = vand.u32 %v8479, 4294901760
  %9264 = vmatmul.mubr.f32.gmra.mrb[0].mxu0 %v9263
  %v9265 = vpop.f32.mrb[0].mxu0
  %v9266 = vadd.f32 %v9161, %v9265
  %v9267 = vpop.f32.mrb[0].mxu0
  %9268 = vmatprep.mubr.f32.mxu0 0.0
  %v9269 = vand.u32 %v8485, 4294901760
  %9270 = vmatmul.mubr.f32.gmra.mrb[0].mxu0 %v9269
  %v9271 = vpop.f32.mrb[0].mxu0
  %v9272 = vadd.f32 %v9167, %v9271
  %v9273 = vpop.f32.mrb[0].mxu0
  %9274 = vmatprep.mubr.f32.mxu0 0.0
  %v9275 = vand.u32 %v8491, 4294901760
  %9276 = vmatmul.mubr.f32.gmra.mrb[0].mxu0 %v9275
  %v9277 = vpop.f32.mrb[0].mxu0
  %v9278 = vadd.f32 %v9173, %v9277
  %v9279 = vpop.f32.mrb[0].mxu0
  %9280 = vdwg.mxu0
  %v9281 = vadd.f32 %v7859, %v9260
  %v9282 = vadd.f32 %v7865, %v9266
  %v9283 = vadd.f32 %v7871, %v9272
  %v9284 = vadd.f32 %v7877, %v9278
  %v9286 = vlaneseq
  %v9287 = vshrl.u32 %v9286, 7
  %v9288 = vsub.s32 0, %v9287
  %v9289 = vrot.slane %v5692, %v9288
  %v9291 = vadd.f32 %v9281, %v9289
  %v9292 = vadd.f32 %v9282, %v9289
  %v9293 = vadd.f32 %v9283, %v9289
  %v9294 = vadd.f32 %v9284, %v9289
  %v9295 = vmax.f32 %v9291, 0.0
  %v9296 = vmax.f32 %v9292, 0.0
  %v9297 = vmax.f32 %v9293, 0.0
  %v9298 = vmax.f32 %v9294, 0.0
  %v9299 = vld [vmem:[%s8] sm:$0x1]
  %v9300 = vld [vmem:[%s9] sm:$0x1]
  %9301 = vmatprep.subr.mxu0 0.0
  %v9302 = vand.u32 %v9295, 4294901760
  %9303 = vmatpush1.msra.mxu0 %v9302
  %9304 = vmatprep.subr.mxu0 0.0
  %v9305 = vand.u32 %v9296, 4294901760
  %9306 = vmatpush1.msra.mxu0 %v9305
  %9307 = vmatprep.subr.mxu0 0.0
  %v9308 = vand.u32 %v9297, 4294901760
  %9309 = vmatpush1.msra.mxu0 %v9308
  %9310 = vmatprep.subr.mxu0 0.0
  %v9311 = vand.u32 %v9298, 4294901760
  %9312 = vmatpush1.msra.mxu0 %v9311
  %9313 = vmatprep.subr.mxu0 0.0
  %9314 = vmatpush1.msra.mxu0 0.0
  %9315 = vmatprep.subr.mxu0 0.0
  %9316 = vmatpush1.msra.mxu0 0.0
  %9317 = vmatprep.subr.mxu0 0.0
  %9318 = vmatpush1.msra.mxu0 0.0
  %9319 = vmatprep.subr.mxu0 0.0
  %9320 = vmatpush1.msra.mxu0 0.0
  %9321 = vmatprep.subr.mxu0 0.0
  %9322 = vmatpush1.msra.mxu0 0.0
  %9323 = vmatprep.subr.mxu0 0.0
  %9324 = vmatpush1.msra.mxu0 0.0
  %9325 = vmatprep.subr.mxu0 0.0
  %9326 = vmatpush1.msra.mxu0 0.0
  %9327 = vmatprep.subr.mxu0 0.0
  %9328 = vmatpush1.msra.mxu0 0.0
  %9329 = vmatprep.subr.mxu0 0.0
  %9330 = vmatpush1.msra.mxu0 0.0
  %9331 = vmatprep.subr.mxu0 0.0
  %9332 = vmatpush1.msra.mxu0 0.0
  %9333 = vmatprep.subr.mxu0 0.0
  %9334 = vmatpush1.msra.mxu0 0.0
  %9335 = vmatprep.subr.mxu0 0.0
  %9336 = vmatpush1.msra.mxu0 0.0
  %9337 = vmatprep.subr.mxu0 0.0
  %9338 = vmatpush1.msra.mxu0 0.0
  %9339 = vmatprep.subr.mxu0 0.0
  %9340 = vmatpush1.msra.mxu0 0.0
  %9341 = vmatprep.subr.mxu0 0.0
  %9342 = vmatpush1.msra.mxu0 0.0
  %9343 = vmatprep.subr.mxu0 0.0
  %9344 = vmatpush1.msra.mxu0 0.0
  %9345 = vmatprep.subr.mxu0 0.0
  %9346 = vmatpush1.msra.mxu0 0.0
  %9347 = vmatprep.subr.mxu0 0.0
  %9348 = vmatpush1.msra.mxu0 0.0
  %9349 = vmatprep.subr.mxu0 0.0
  %9350 = vmatpush1.msra.mxu0 0.0
  %9351 = vmatprep.subr.mxu0 0.0
  %9352 = vmatpush1.msra.mxu0 0.0
  %9353 = vmatprep.subr.mxu0 0.0
  %9354 = vmatpush1.msra.mxu0 0.0
  %9355 = vmatprep.subr.mxu0 0.0
  %9356 = vmatpush1.msra.mxu0 0.0
  %9357 = vmatprep.subr.mxu0 0.0
  %9358 = vmatpush1.msra.mxu0 0.0
  %9359 = vmatprep.subr.mxu0 0.0
  %9360 = vmatpush1.msra.mxu0 0.0
  %9361 = vmatprep.subr.mxu0 0.0
  %9362 = vmatpush1.msra.mxu0 0.0
  %9363 = vmatprep.subr.mxu0 0.0
  %9364 = vmatpush1.msra.mxu0 0.0
  %9365 = vmatprep.subr.mxu0 0.0
  %9366 = vmatpush1.msra.mxu0 0.0
  %9367 = vmatprep.subr.mxu0 0.0
  %9368 = vmatpush1.msra.mxu0 0.0
  %9369 = vmatprep.mubr.f32.mxu0 0.0
  %v9370 = vand.u32 %v3403, 4294901760
  %v9371 = vsub.f32 %v3403, %v9370
  %v9372 = vand.u32 %v9371, 4294901760
  %v9373 = vsub.f32 %v9371, %v9372
  %v9374 = vand.u32 %v9373, 4294901760
  %9375 = vmatmul.mubr.f32.gmra.mrb[0].mxu0 %v9374
  %v9376 = vpop.f32.mrb[0].mxu0
  %v9377 = vadd.f32 0.0, %v9376
  %v9378 = vpop.f32.mrb[0].mxu0
  %9379 = vdwg.mxu0
  %9380 = vmatprep.subr.mxu0 0.0
  %v9381 = vand.u32 %v9295, 4294901760
  %v9382 = vsub.f32 %v9295, %v9381
  %v9383 = vand.u32 %v9382, 4294901760
  %v9384 = vsub.f32 %v9382, %v9383
  %v9385 = vand.u32 %v9384, 4294901760
  %9386 = vmatpush1.msra.mxu0 %v9385
  %9387 = vmatprep.subr.mxu0 0.0
  %v9388 = vand.u32 %v9296, 4294901760
  %v9389 = vsub.f32 %v9296, %v9388
  %v9390 = vand.u32 %v9389, 4294901760
  %v9391 = vsub.f32 %v9389, %v9390
  %v9392 = vand.u32 %v9391, 4294901760
  %9393 = vmatpush1.msra.mxu0 %v9392
  %9394 = vmatprep.subr.mxu0 0.0
  %v9395 = vand.u32 %v9297, 4294901760
  %v9396 = vsub.f32 %v9297, %v9395
  %v9397 = vand.u32 %v9396, 4294901760
  %v9398 = vsub.f32 %v9396, %v9397
  %v9399 = vand.u32 %v9398, 4294901760
  %9400 = vmatpush1.msra.mxu0 %v9399
  %9401 = vmatprep.subr.mxu0 0.0
  %v9402 = vand.u32 %v9298, 4294901760
  %v9403 = vsub.f32 %v9298, %v9402
  %v9404 = vand.u32 %v9403, 4294901760
  %v9405 = vsub.f32 %v9403, %v9404
  %v9406 = vand.u32 %v9405, 4294901760
  %9407 = vmatpush1.msra.mxu0 %v9406
  %9408 = vmatprep.subr.mxu0 0.0
  %9409 = vmatpush1.msra.mxu0 0.0
  %9410 = vmatprep.subr.mxu0 0.0
  %9411 = vmatpush1.msra.mxu0 0.0
  %9412 = vmatprep.subr.mxu0 0.0
  %9413 = vmatpush1.msra.mxu0 0.0
  %9414 = vmatprep.subr.mxu0 0.0
  %9415 = vmatpush1.msra.mxu0 0.0
  %9416 = vmatprep.subr.mxu0 0.0
  %9417 = vmatpush1.msra.mxu0 0.0
  %9418 = vmatprep.subr.mxu0 0.0
  %9419 = vmatpush1.msra.mxu0 0.0
  %9420 = vmatprep.subr.mxu0 0.0
  %9421 = vmatpush1.msra.mxu0 0.0
  %9422 = vmatprep.subr.mxu0 0.0
  %9423 = vmatpush1.msra.mxu0 0.0
  %9424 = vmatprep.subr.mxu0 0.0
  %9425 = vmatpush1.msra.mxu0 0.0
  %9426 = vmatprep.subr.mxu0 0.0
  %9427 = vmatpush1.msra.mxu0 0.0
  %9428 = vmatprep.subr.mxu0 0.0
  %9429 = vmatpush1.msra.mxu0 0.0
  %9430 = vmatprep.subr.mxu0 0.0
  %9431 = vmatpush1.msra.mxu0 0.0
  %9432 = vmatprep.subr.mxu0 0.0
  %9433 = vmatpush1.msra.mxu0 0.0
  %9434 = vmatprep.subr.mxu0 0.0
  %9435 = vmatpush1.msra.mxu0 0.0
  %9436 = vmatprep.subr.mxu0 0.0
  %9437 = vmatpush1.msra.mxu0 0.0
  %9438 = vmatprep.subr.mxu0 0.0
  %9439 = vmatpush1.msra.mxu0 0.0
  %9440 = vmatprep.subr.mxu0 0.0
  %9441 = vmatpush1.msra.mxu0 0.0
  %9442 = vmatprep.subr.mxu0 0.0
  %9443 = vmatpush1.msra.mxu0 0.0
  %9444 = vmatprep.subr.mxu0 0.0
  %9445 = vmatpush1.msra.mxu0 0.0
  %9446 = vmatprep.subr.mxu0 0.0
  %9447 = vmatpush1.msra.mxu0 0.0
  %9448 = vmatprep.subr.mxu0 0.0
  %9449 = vmatpush1.msra.mxu0 0.0
  %9450 = vmatprep.subr.mxu0 0.0
  %9451 = vmatpush1.msra.mxu0 0.0
  %9452 = vmatprep.subr.mxu0 0.0
  %9453 = vmatpush1.msra.mxu0 0.0
  %9454 = vmatprep.subr.mxu0 0.0
  %9455 = vmatpush1.msra.mxu0 0.0
  %9456 = vmatprep.subr.mxu0 0.0
  %9457 = vmatpush1.msra.mxu0 0.0
  %9458 = vmatprep.subr.mxu0 0.0
  %9459 = vmatpush1.msra.mxu0 0.0
  %9460 = vmatprep.subr.mxu0 0.0
  %9461 = vmatpush1.msra.mxu0 0.0
  %9462 = vmatprep.subr.mxu0 0.0
  %9463 = vmatpush1.msra.mxu0 0.0
  %9464 = vmatprep.mubr.f32.mxu0 0.0
  %v9465 = vand.u32 %v3403, 4294901760
  %9466 = vmatmul.mubr.f32.gmra.mrb[0].mxu0 %v9465
  %v9467 = vpop.f32.mrb[0].mxu0
  %v9468 = vadd.f32 %v9377, %v9467
  %v9469 = vpop.f32.mrb[0].mxu0
  %9470 = vdwg.mxu0
  %9471 = vmatprep.subr.mxu0 0.0
  %v9472 = vand.u32 %v9295, 4294901760
  %v9473 = vsub.f32 %v9295, %v9472
  %9474 = vmatpush1.msra.mxu0 %v9473
  %9475 = vmatprep.subr.mxu0 0.0
  %v9476 = vand.u32 %v9296, 4294901760
  %v9477 = vsub.f32 %v9296, %v9476
  %9478 = vmatpush1.msra.mxu0 %v9477
  %9479 = vmatprep.subr.mxu0 0.0
  %v9480 = vand.u32 %v9297, 4294901760
  %v9481 = vsub.f32 %v9297, %v9480
  %9482 = vmatpush1.msra.mxu0 %v9481
  %9483 = vmatprep.subr.mxu0 0.0
  %v9484 = vand.u32 %v9298, 4294901760
  %v9485 = vsub.f32 %v9298, %v9484
  %9486 = vmatpush1.msra.mxu0 %v9485
  %9487 = vmatprep.subr.mxu0 0.0
  %9488 = vmatpush1.msra.mxu0 0.0
  %9489 = vmatprep.subr.mxu0 0.0
  %9490 = vmatpush1.msra.mxu0 0.0
  %9491 = vmatprep.subr.mxu0 0.0
  %9492 = vmatpush1.msra.mxu0 0.0
  %9493 = vmatprep.subr.mxu0 0.0
  %9494 = vmatpush1.msra.mxu0 0.0
  %9495 = vmatprep.subr.mxu0 0.0
  %9496 = vmatpush1.msra.mxu0 0.0
  %9497 = vmatprep.subr.mxu0 0.0
  %9498 = vmatpush1.msra.mxu0 0.0
  %9499 = vmatprep.subr.mxu0 0.0
  %9500 = vmatpush1.msra.mxu0 0.0
  %9501 = vmatprep.subr.mxu0 0.0
  %9502 = vmatpush1.msra.mxu0 0.0
  %9503 = vmatprep.subr.mxu0 0.0
  %9504 = vmatpush1.msra.mxu0 0.0
  %9505 = vmatprep.subr.mxu0 0.0
  %9506 = vmatpush1.msra.mxu0 0.0
  %9507 = vmatprep.subr.mxu0 0.0
  %9508 = vmatpush1.msra.mxu0 0.0
  %9509 = vmatprep.subr.mxu0 0.0
  %9510 = vmatpush1.msra.mxu0 0.0
  %9511 = vmatprep.subr.mxu0 0.0
  %9512 = vmatpush1.msra.mxu0 0.0
  %9513 = vmatprep.subr.mxu0 0.0
  %9514 = vmatpush1.msra.mxu0 0.0
  %9515 = vmatprep.subr.mxu0 0.0
  %9516 = vmatpush1.msra.mxu0 0.0
  %9517 = vmatprep.subr.mxu0 0.0
  %9518 = vmatpush1.msra.mxu0 0.0
  %9519 = vmatprep.subr.mxu0 0.0
  %9520 = vmatpush1.msra.mxu0 0.0
  %9521 = vmatprep.subr.mxu0 0.0
  %9522 = vmatpush1.msra.mxu0 0.0
  %9523 = vmatprep.subr.mxu0 0.0
  %9524 = vmatpush1.msra.mxu0 0.0
  %9525 = vmatprep.subr.mxu0 0.0
  %9526 = vmatpush1.msra.mxu0 0.0
  %9527 = vmatprep.subr.mxu0 0.0
  %9528 = vmatpush1.msra.mxu0 0.0
  %9529 = vmatprep.subr.mxu0 0.0
  %9530 = vmatpush1.msra.mxu0 0.0
  %9531 = vmatprep.subr.mxu0 0.0
  %9532 = vmatpush1.msra.mxu0 0.0
  %9533 = vmatprep.subr.mxu0 0.0
  %9534 = vmatpush1.msra.mxu0 0.0
  %9535 = vmatprep.subr.mxu0 0.0
  %9536 = vmatpush1.msra.mxu0 0.0
  %9537 = vmatprep.subr.mxu0 0.0
  %9538 = vmatpush1.msra.mxu0 0.0
  %9539 = vmatprep.subr.mxu0 0.0
  %9540 = vmatpush1.msra.mxu0 0.0
  %9541 = vmatprep.subr.mxu0 0.0
  %9542 = vmatpush1.msra.mxu0 0.0
  %9543 = vmatprep.mubr.f32.mxu0 0.0
  %v9544 = vand.u32 %v3403, 4294901760
  %v9545 = vsub.f32 %v3403, %v9544
  %9546 = vmatmul.mubr.f32.gmra.mrb[0].mxu0 %v9545
  %v9547 = vpop.f32.mrb[0].mxu0
  %v9548 = vadd.f32 %v9468, %v9547
  %v9549 = vpop.f32.mrb[0].mxu0
  %9550 = vdwg.mxu0
  %9551 = vmatprep.subr.mxu0 0.0
  %v9552 = vand.u32 %v9295, 4294901760
  %9553 = vmatpush1.msra.mxu0 %v9552
  %9554 = vmatprep.subr.mxu0 0.0
  %v9555 = vand.u32 %v9296, 4294901760
  %9556 = vmatpush1.msra.mxu0 %v9555
  %9557 = vmatprep.subr.mxu0 0.0
  %v9558 = vand.u32 %v9297, 4294901760
  %9559 = vmatpush1.msra.mxu0 %v9558
  %9560 = vmatprep.subr.mxu0 0.0
  %v9561 = vand.u32 %v9298, 4294901760
  %9562 = vmatpush1.msra.mxu0 %v9561
  %9563 = vmatprep.subr.mxu0 0.0
  %9564 = vmatpush1.msra.mxu0 0.0
  %9565 = vmatprep.subr.mxu0 0.0
  %9566 = vmatpush1.msra.mxu0 0.0
  %9567 = vmatprep.subr.mxu0 0.0
  %9568 = vmatpush1.msra.mxu0 0.0
  %9569 = vmatprep.subr.mxu0 0.0
  %9570 = vmatpush1.msra.mxu0 0.0
  %9571 = vmatprep.subr.mxu0 0.0
  %9572 = vmatpush1.msra.mxu0 0.0
  %9573 = vmatprep.subr.mxu0 0.0
  %9574 = vmatpush1.msra.mxu0 0.0
  %9575 = vmatprep.subr.mxu0 0.0
  %9576 = vmatpush1.msra.mxu0 0.0
  %9577 = vmatprep.subr.mxu0 0.0
  %9578 = vmatpush1.msra.mxu0 0.0
  %9579 = vmatprep.subr.mxu0 0.0
  %9580 = vmatpush1.msra.mxu0 0.0
  %9581 = vmatprep.subr.mxu0 0.0
  %9582 = vmatpush1.msra.mxu0 0.0
  %9583 = vmatprep.subr.mxu0 0.0
  %9584 = vmatpush1.msra.mxu0 0.0
  %9585 = vmatprep.subr.mxu0 0.0
  %9586 = vmatpush1.msra.mxu0 0.0
  %9587 = vmatprep.subr.mxu0 0.0
  %9588 = vmatpush1.msra.mxu0 0.0
  %9589 = vmatprep.subr.mxu0 0.0
  %9590 = vmatpush1.msra.mxu0 0.0
  %9591 = vmatprep.subr.mxu0 0.0
  %9592 = vmatpush1.msra.mxu0 0.0
  %9593 = vmatprep.subr.mxu0 0.0
  %9594 = vmatpush1.msra.mxu0 0.0
  %9595 = vmatprep.subr.mxu0 0.0
  %9596 = vmatpush1.msra.mxu0 0.0
  %9597 = vmatprep.subr.mxu0 0.0
  %9598 = vmatpush1.msra.mxu0 0.0
  %9599 = vmatprep.subr.mxu0 0.0
  %9600 = vmatpush1.msra.mxu0 0.0
  %9601 = vmatprep.subr.mxu0 0.0
  %9602 = vmatpush1.msra.mxu0 0.0
  %9603 = vmatprep.subr.mxu0 0.0
  %9604 = vmatpush1.msra.mxu0 0.0
  %9605 = vmatprep.subr.mxu0 0.0
  %9606 = vmatpush1.msra.mxu0 0.0
  %9607 = vmatprep.subr.mxu0 0.0
  %9608 = vmatpush1.msra.mxu0 0.0
  %9609 = vmatprep.subr.mxu0 0.0
  %9610 = vmatpush1.msra.mxu0 0.0
  %9611 = vmatprep.subr.mxu0 0.0
  %9612 = vmatpush1.msra.mxu0 0.0
  %9613 = vmatprep.subr.mxu0 0.0
  %9614 = vmatpush1.msra.mxu0 0.0
  %9615 = vmatprep.subr.mxu0 0.0
  %9616 = vmatpush1.msra.mxu0 0.0
  %9617 = vmatprep.subr.mxu0 0.0
  %9618 = vmatpush1.msra.mxu0 0.0
  %9619 = vmatprep.mubr.f32.mxu0 0.0
  %v9620 = vand.u32 %v3403, 4294901760
  %v9621 = vsub.f32 %v3403, %v9620
  %v9622 = vand.u32 %v9621, 4294901760
  %9623 = vmatmul.mubr.f32.gmra.mrb[0].mxu0 %v9622
  %v9624 = vpop.f32.mrb[0].mxu0
  %v9625 = vadd.f32 %v9548, %v9624
  %v9626 = vpop.f32.mrb[0].mxu0
  %9627 = vdwg.mxu0
  %9628 = vmatprep.subr.mxu0 0.0
  %v9629 = vand.u32 %v9295, 4294901760
  %v9630 = vsub.f32 %v9295, %v9629
  %v9631 = vand.u32 %v9630, 4294901760
  %9632 = vmatpush1.msra.mxu0 %v9631
  %9633 = vmatprep.subr.mxu0 0.0
  %v9634 = vand.u32 %v9296, 4294901760
  %v9635 = vsub.f32 %v9296, %v9634
  %v9636 = vand.u32 %v9635, 4294901760
  %9637 = vmatpush1.msra.mxu0 %v9636
  %9638 = vmatprep.subr.mxu0 0.0
  %v9639 = vand.u32 %v9297, 4294901760
  %v9640 = vsub.f32 %v9297, %v9639
  %v9641 = vand.u32 %v9640, 4294901760
  %9642 = vmatpush1.msra.mxu0 %v9641
  %9643 = vmatprep.subr.mxu0 0.0
  %v9644 = vand.u32 %v9298, 4294901760
  %v9645 = vsub.f32 %v9298, %v9644
  %v9646 = vand.u32 %v9645, 4294901760
  %9647 = vmatpush1.msra.mxu0 %v9646
  %9648 = vmatprep.subr.mxu0 0.0
  %9649 = vmatpush1.msra.mxu0 0.0
  %9650 = vmatprep.subr.mxu0 0.0
  %9651 = vmatpush1.msra.mxu0 0.0
  %9652 = vmatprep.subr.mxu0 0.0
  %9653 = vmatpush1.msra.mxu0 0.0
  %9654 = vmatprep.subr.mxu0 0.0
  %9655 = vmatpush1.msra.mxu0 0.0
  %9656 = vmatprep.subr.mxu0 0.0
  %9657 = vmatpush1.msra.mxu0 0.0
  %9658 = vmatprep.subr.mxu0 0.0
  %9659 = vmatpush1.msra.mxu0 0.0
  %9660 = vmatprep.subr.mxu0 0.0
  %9661 = vmatpush1.msra.mxu0 0.0
  %9662 = vmatprep.subr.mxu0 0.0
  %9663 = vmatpush1.msra.mxu0 0.0
  %9664 = vmatprep.subr.mxu0 0.0
  %9665 = vmatpush1.msra.mxu0 0.0
  %9666 = vmatprep.subr.mxu0 0.0
  %9667 = vmatpush1.msra.mxu0 0.0
  %9668 = vmatprep.subr.mxu0 0.0
  %9669 = vmatpush1.msra.mxu0 0.0
  %9670 = vmatprep.subr.mxu0 0.0
  %9671 = vmatpush1.msra.mxu0 0.0
  %9672 = vmatprep.subr.mxu0 0.0
  %9673 = vmatpush1.msra.mxu0 0.0
  %9674 = vmatprep.subr.mxu0 0.0
  %9675 = vmatpush1.msra.mxu0 0.0
  %9676 = vmatprep.subr.mxu0 0.0
  %9677 = vmatpush1.msra.mxu0 0.0
  %9678 = vmatprep.subr.mxu0 0.0
  %9679 = vmatpush1.msra.mxu0 0.0
  %9680 = vmatprep.subr.mxu0 0.0
  %9681 = vmatpush1.msra.mxu0 0.0
  %9682 = vmatprep.subr.mxu0 0.0
  %9683 = vmatpush1.msra.mxu0 0.0
  %9684 = vmatprep.subr.mxu0 0.0
  %9685 = vmatpush1.msra.mxu0 0.0
  %9686 = vmatprep.subr.mxu0 0.0
  %9687 = vmatpush1.msra.mxu0 0.0
  %9688 = vmatprep.subr.mxu0 0.0
  %9689 = vmatpush1.msra.mxu0 0.0
  %9690 = vmatprep.subr.mxu0 0.0
  %9691 = vmatpush1.msra.mxu0 0.0
  %9692 = vmatprep.subr.mxu0 0.0
  %9693 = vmatpush1.msra.mxu0 0.0
  %9694 = vmatprep.subr.mxu0 0.0
  %9695 = vmatpush1.msra.mxu0 0.0
  %9696 = vmatprep.subr.mxu0 0.0
  %9697 = vmatpush1.msra.mxu0 0.0
  %9698 = vmatprep.subr.mxu0 0.0
  %9699 = vmatpush1.msra.mxu0 0.0
  %9700 = vmatprep.subr.mxu0 0.0
  %9701 = vmatpush1.msra.mxu0 0.0
  %9702 = vmatprep.subr.mxu0 0.0
  %9703 = vmatpush1.msra.mxu0 0.0
  %9704 = vmatprep.mubr.f32.mxu0 0.0
  %v9705 = vand.u32 %v3403, 4294901760
  %9706 = vmatmul.mubr.f32.gmra.mrb[0].mxu0 %v9705
  %v9707 = vpop.f32.mrb[0].mxu0
  %v9708 = vadd.f32 %v9625, %v9707
  %v9709 = vpop.f32.mrb[0].mxu0
  %9710 = vdwg.mxu0
  %9711 = vmatprep.subr.mxu0 0.0
  %v9712 = vand.u32 %v9295, 4294901760
  %9713 = vmatpush1.msra.mxu0 %v9712
  %9714 = vmatprep.subr.mxu0 0.0
  %v9715 = vand.u32 %v9296, 4294901760
  %9716 = vmatpush1.msra.mxu0 %v9715
  %9717 = vmatprep.subr.mxu0 0.0
  %v9718 = vand.u32 %v9297, 4294901760
  %9719 = vmatpush1.msra.mxu0 %v9718
  %9720 = vmatprep.subr.mxu0 0.0
  %v9721 = vand.u32 %v9298, 4294901760
  %9722 = vmatpush1.msra.mxu0 %v9721
  %9723 = vmatprep.subr.mxu0 0.0
  %9724 = vmatpush1.msra.mxu0 0.0
  %9725 = vmatprep.subr.mxu0 0.0
  %9726 = vmatpush1.msra.mxu0 0.0
  %9727 = vmatprep.subr.mxu0 0.0
  %9728 = vmatpush1.msra.mxu0 0.0
  %9729 = vmatprep.subr.mxu0 0.0
  %9730 = vmatpush1.msra.mxu0 0.0
  %9731 = vmatprep.subr.mxu0 0.0
  %9732 = vmatpush1.msra.mxu0 0.0
  %9733 = vmatprep.subr.mxu0 0.0
  %9734 = vmatpush1.msra.mxu0 0.0
  %9735 = vmatprep.subr.mxu0 0.0
  %9736 = vmatpush1.msra.mxu0 0.0
  %9737 = vmatprep.subr.mxu0 0.0
  %9738 = vmatpush1.msra.mxu0 0.0
  %9739 = vmatprep.subr.mxu0 0.0
  %9740 = vmatpush1.msra.mxu0 0.0
  %9741 = vmatprep.subr.mxu0 0.0
  %9742 = vmatpush1.msra.mxu0 0.0
  %9743 = vmatprep.subr.mxu0 0.0
  %9744 = vmatpush1.msra.mxu0 0.0
  %9745 = vmatprep.subr.mxu0 0.0
  %9746 = vmatpush1.msra.mxu0 0.0
  %9747 = vmatprep.subr.mxu0 0.0
  %9748 = vmatpush1.msra.mxu0 0.0
  %9749 = vmatprep.subr.mxu0 0.0
  %9750 = vmatpush1.msra.mxu0 0.0
  %9751 = vmatprep.subr.mxu0 0.0
  %9752 = vmatpush1.msra.mxu0 0.0
  %9753 = vmatprep.subr.mxu0 0.0
  %9754 = vmatpush1.msra.mxu0 0.0
  %9755 = vmatprep.subr.mxu0 0.0
  %9756 = vmatpush1.msra.mxu0 0.0
  %9757 = vmatprep.subr.mxu0 0.0
  %9758 = vmatpush1.msra.mxu0 0.0
  %9759 = vmatprep.subr.mxu0 0.0
  %9760 = vmatpush1.msra.mxu0 0.0
  %9761 = vmatprep.subr.mxu0 0.0
  %9762 = vmatpush1.msra.mxu0 0.0
  %9763 = vmatprep.subr.mxu0 0.0
  %9764 = vmatpush1.msra.mxu0 0.0
  %9765 = vmatprep.subr.mxu0 0.0
  %9766 = vmatpush1.msra.mxu0 0.0
  %9767 = vmatprep.subr.mxu0 0.0
  %9768 = vmatpush1.msra.mxu0 0.0
  %9769 = vmatprep.subr.mxu0 0.0
  %9770 = vmatpush1.msra.mxu0 0.0
  %9771 = vmatprep.subr.mxu0 0.0
  %9772 = vmatpush1.msra.mxu0 0.0
  %9773 = vmatprep.subr.mxu0 0.0
  %9774 = vmatpush1.msra.mxu0 0.0
  %9775 = vmatprep.subr.mxu0 0.0
  %9776 = vmatpush1.msra.mxu0 0.0
  %9777 = vmatprep.subr.mxu0 0.0
  %9778 = vmatpush1.msra.mxu0 0.0
  %9779 = vmatprep.mubr.f32.mxu0 0.0
  %v9780 = vand.u32 %v3403, 4294901760
  %9781 = vmatmul.mubr.f32.gmra.mrb[0].mxu0 %v9780
  %v9782 = vpop.f32.mrb[0].mxu0
  %v9783 = vadd.f32 %v9708, %v9782
  %v9784 = vpop.f32.mrb[0].mxu0
  %9785 = vdwg.mxu0
  %9786 = vmatprep.subr.mxu0 0.0
  %v9787 = vand.u32 %v42, 4294901760
  %9788 = vmatpush1.msra.mxu0 %v9787
  %9789 = vmatprep.subr.mxu0 0.0
  %v9790 = vand.u32 %v43, 4294901760
  %9791 = vmatpush1.msra.mxu0 %v9790
  %9792 = vmatprep.subr.mxu0 0.0
  %v9793 = vand.u32 %v44, 4294901760
  %9794 = vmatpush1.msra.mxu0 %v9793
  %9795 = vmatprep.subr.mxu0 0.0
  %v9796 = vand.u32 %v45, 4294901760
  %9797 = vmatpush1.msra.mxu0 %v9796
  %9798 = vmatprep.subr.mxu0 0.0
  %v9799 = vand.u32 %v46, 4294901760
  %9800 = vmatpush1.msra.mxu0 %v9799
  %9801 = vmatprep.subr.mxu0 0.0
  %v9802 = vand.u32 %v47, 4294901760
  %9803 = vmatpush1.msra.mxu0 %v9802
  %9804 = vmatprep.subr.mxu0 0.0
  %v9805 = vand.u32 %v48, 4294901760
  %9806 = vmatpush1.msra.mxu0 %v9805
  %9807 = vmatprep.subr.mxu0 0.0
  %v9808 = vand.u32 %v49, 4294901760
  %9809 = vmatpush1.msra.mxu0 %v9808
  %9810 = vmatprep.subr.mxu0 0.0
  %v9811 = vand.u32 %v50, 4294901760
  %9812 = vmatpush1.msra.mxu0 %v9811
  %9813 = vmatprep.subr.mxu0 0.0
  %v9814 = vand.u32 %v51, 4294901760
  %9815 = vmatpush1.msra.mxu0 %v9814
  %9816 = vmatprep.subr.mxu0 0.0
  %v9817 = vand.u32 %v52, 4294901760
  %9818 = vmatpush1.msra.mxu0 %v9817
  %9819 = vmatprep.subr.mxu0 0.0
  %v9820 = vand.u32 %v53, 4294901760
  %9821 = vmatpush1.msra.mxu0 %v9820
  %9822 = vmatprep.subr.mxu0 0.0
  %v9823 = vand.u32 %v54, 4294901760
  %9824 = vmatpush1.msra.mxu0 %v9823
  %9825 = vmatprep.subr.mxu0 0.0
  %v9826 = vand.u32 %v55, 4294901760
  %9827 = vmatpush1.msra.mxu0 %v9826
  %9828 = vmatprep.subr.mxu0 0.0
  %v9829 = vand.u32 %v56, 4294901760
  %9830 = vmatpush1.msra.mxu0 %v9829
  %9831 = vmatprep.subr.mxu0 0.0
  %v9832 = vand.u32 %v57, 4294901760
  %9833 = vmatpush1.msra.mxu0 %v9832
  %9834 = vmatprep.subr.mxu0 0.0
  %9835 = vmatpush1.msra.mxu0 0.0
  %9836 = vmatprep.subr.mxu0 0.0
  %9837 = vmatpush1.msra.mxu0 0.0
  %9838 = vmatprep.subr.mxu0 0.0
  %9839 = vmatpush1.msra.mxu0 0.0
  %9840 = vmatprep.subr.mxu0 0.0
  %9841 = vmatpush1.msra.mxu0 0.0
  %9842 = vmatprep.subr.mxu0 0.0
  %9843 = vmatpush1.msra.mxu0 0.0
  %9844 = vmatprep.subr.mxu0 0.0
  %9845 = vmatpush1.msra.mxu0 0.0
  %9846 = vmatprep.subr.mxu0 0.0
  %9847 = vmatpush1.msra.mxu0 0.0
  %9848 = vmatprep.subr.mxu0 0.0
  %9849 = vmatpush1.msra.mxu0 0.0
  %9850 = vmatprep.subr.mxu0 0.0
  %9851 = vmatpush1.msra.mxu0 0.0
  %9852 = vmatprep.subr.mxu0 0.0
  %9853 = vmatpush1.msra.mxu0 0.0
  %9854 = vmatprep.subr.mxu0 0.0
  %9855 = vmatpush1.msra.mxu0 0.0
  %9856 = vmatprep.subr.mxu0 0.0
  %9857 = vmatpush1.msra.mxu0 0.0
  %9858 = vmatprep.subr.mxu0 0.0
  %9859 = vmatpush1.msra.mxu0 0.0
  %9860 = vmatprep.subr.mxu0 0.0
  %9861 = vmatpush1.msra.mxu0 0.0
  %9862 = vmatprep.subr.mxu0 0.0
  %9863 = vmatpush1.msra.mxu0 0.0
  %9864 = vmatprep.subr.mxu0 0.0
  %9865 = vmatpush1.msra.mxu0 0.0
  %9866 = vmatprep.mubr.f32.mxu0 0.0
  %v9867 = vand.u32 %v9783, 4294901760
  %v9868 = vsub.f32 %v9783, %v9867
  %v9869 = vand.u32 %v9868, 4294901760
  %v9870 = vsub.f32 %v9868, %v9869
  %v9871 = vand.u32 %v9870, 4294901760
  %9872 = vmatmul.mubr.f32.gmra.mrb[0].mxu0 %v9871
  %v9873 = vpop.f32.mrb[0].mxu0
  %v9874 = vadd.f32 0.0, %v9873
  %v9875 = vpop.f32.mrb[0].mxu0
  %9876 = vdwg.mxu0
  %9877 = vmatprep.subr.mxu0 0.0
  %v9878 = vand.u32 %v42, 4294901760
  %v9879 = vsub.f32 %v42, %v9878
  %v9880 = vand.u32 %v9879, 4294901760
  %v9881 = vsub.f32 %v9879, %v9880
  %v9882 = vand.u32 %v9881, 4294901760
  %9883 = vmatpush1.msra.mxu0 %v9882
  %9884 = vmatprep.subr.mxu0 0.0
  %v9885 = vand.u32 %v43, 4294901760
  %v9886 = vsub.f32 %v43, %v9885
  %v9887 = vand.u32 %v9886, 4294901760
  %v9888 = vsub.f32 %v9886, %v9887
  %v9889 = vand.u32 %v9888, 4294901760
  %9890 = vmatpush1.msra.mxu0 %v9889
  %9891 = vmatprep.subr.mxu0 0.0
  %v9892 = vand.u32 %v44, 4294901760
  %v9893 = vsub.f32 %v44, %v9892
  %v9894 = vand.u32 %v9893, 4294901760
  %v9895 = vsub.f32 %v9893, %v9894
  %v9896 = vand.u32 %v9895, 4294901760
  %9897 = vmatpush1.msra.mxu0 %v9896
  %9898 = vmatprep.subr.mxu0 0.0
  %v9899 = vand.u32 %v45, 4294901760
  %v9900 = vsub.f32 %v45, %v9899
  %v9901 = vand.u32 %v9900, 4294901760
  %v9902 = vsub.f32 %v9900, %v9901
  %v9903 = vand.u32 %v9902, 4294901760
  %9904 = vmatpush1.msra.mxu0 %v9903
  %9905 = vmatprep.subr.mxu0 0.0
  %v9906 = vand.u32 %v46, 4294901760
  %v9907 = vsub.f32 %v46, %v9906
  %v9908 = vand.u32 %v9907, 4294901760
  %v9909 = vsub.f32 %v9907, %v9908
  %v9910 = vand.u32 %v9909, 4294901760
  %9911 = vmatpush1.msra.mxu0 %v9910
  %9912 = vmatprep.subr.mxu0 0.0
  %v9913 = vand.u32 %v47, 4294901760
  %v9914 = vsub.f32 %v47, %v9913
  %v9915 = vand.u32 %v9914, 4294901760
  %v9916 = vsub.f32 %v9914, %v9915
  %v9917 = vand.u32 %v9916, 4294901760
  %9918 = vmatpush1.msra.mxu0 %v9917
  %9919 = vmatprep.subr.mxu0 0.0
  %v9920 = vand.u32 %v48, 4294901760
  %v9921 = vsub.f32 %v48, %v9920
  %v9922 = vand.u32 %v9921, 4294901760
  %v9923 = vsub.f32 %v9921, %v9922
  %v9924 = vand.u32 %v9923, 4294901760
  %9925 = vmatpush1.msra.mxu0 %v9924
  %9926 = vmatprep.subr.mxu0 0.0
  %v9927 = vand.u32 %v49, 4294901760
  %v9928 = vsub.f32 %v49, %v9927
  %v9929 = vand.u32 %v9928, 4294901760
  %v9930 = vsub.f32 %v9928, %v9929
  %v9931 = vand.u32 %v9930, 4294901760
  %9932 = vmatpush1.msra.mxu0 %v9931
  %9933 = vmatprep.subr.mxu0 0.0
  %v9934 = vand.u32 %v50, 4294901760
  %v9935 = vsub.f32 %v50, %v9934
  %v9936 = vand.u32 %v9935, 4294901760
  %v9937 = vsub.f32 %v9935, %v9936
  %v9938 = vand.u32 %v9937, 4294901760
  %9939 = vmatpush1.msra.mxu0 %v9938
  %9940 = vmatprep.subr.mxu0 0.0
  %v9941 = vand.u32 %v51, 4294901760
  %v9942 = vsub.f32 %v51, %v9941
  %v9943 = vand.u32 %v9942, 4294901760
  %v9944 = vsub.f32 %v9942, %v9943
  %v9945 = vand.u32 %v9944, 4294901760
  %9946 = vmatpush1.msra.mxu0 %v9945
  %9947 = vmatprep.subr.mxu0 0.0
  %v9948 = vand.u32 %v52, 4294901760
  %v9949 = vsub.f32 %v52, %v9948
  %v9950 = vand.u32 %v9949, 4294901760
  %v9951 = vsub.f32 %v9949, %v9950
  %v9952 = vand.u32 %v9951, 4294901760
  %9953 = vmatpush1.msra.mxu0 %v9952
  %9954 = vmatprep.subr.mxu0 0.0
  %v9955 = vand.u32 %v53, 4294901760
  %v9956 = vsub.f32 %v53, %v9955
  %v9957 = vand.u32 %v9956, 4294901760
  %v9958 = vsub.f32 %v9956, %v9957
  %v9959 = vand.u32 %v9958, 4294901760
  %9960 = vmatpush1.msra.mxu0 %v9959
  %9961 = vmatprep.subr.mxu0 0.0
  %v9962 = vand.u32 %v54, 4294901760
  %v9963 = vsub.f32 %v54, %v9962
  %v9964 = vand.u32 %v9963, 4294901760
  %v9965 = vsub.f32 %v9963, %v9964
  %v9966 = vand.u32 %v9965, 4294901760
  %9967 = vmatpush1.msra.mxu0 %v9966
  %9968 = vmatprep.subr.mxu0 0.0
  %v9969 = vand.u32 %v55, 4294901760
  %v9970 = vsub.f32 %v55, %v9969
  %v9971 = vand.u32 %v9970, 4294901760
  %v9972 = vsub.f32 %v9970, %v9971
  %v9973 = vand.u32 %v9972, 4294901760
  %9974 = vmatpush1.msra.mxu0 %v9973
  %9975 = vmatprep.subr.mxu0 0.0
  %v9976 = vand.u32 %v56, 4294901760
  %v9977 = vsub.f32 %v56, %v9976
  %v9978 = vand.u32 %v9977, 4294901760
  %v9979 = vsub.f32 %v9977, %v9978
  %v9980 = vand.u32 %v9979, 4294901760
  %9981 = vmatpush1.msra.mxu0 %v9980
  %9982 = vmatprep.subr.mxu0 0.0
  %v9983 = vand.u32 %v57, 4294901760
  %v9984 = vsub.f32 %v57, %v9983
  %v9985 = vand.u32 %v9984, 4294901760
  %v9986 = vsub.f32 %v9984, %v9985
  %v9987 = vand.u32 %v9986, 4294901760
  %9988 = vmatpush1.msra.mxu0 %v9987
  %9989 = vmatprep.subr.mxu0 0.0
  %9990 = vmatpush1.msra.mxu0 0.0
  %9991 = vmatprep.subr.mxu0 0.0
  %9992 = vmatpush1.msra.mxu0 0.0
  %9993 = vmatprep.subr.mxu0 0.0
  %9994 = vmatpush1.msra.mxu0 0.0
  %9995 = vmatprep.subr.mxu0 0.0
  %9996 = vmatpush1.msra.mxu0 0.0
  %9997 = vmatprep.subr.mxu0 0.0
  %9998 = vmatpush1.msra.mxu0 0.0
  %9999 = vmatprep.subr.mxu0 0.0
  %10000 = vmatpush1.msra.mxu0 0.0
  %10001 = vmatprep.subr.mxu0 0.0
  %10002 = vmatpush1.msra.mxu0 0.0
  %10003 = vmatprep.subr.mxu0 0.0
  %10004 = vmatpush1.msra.mxu0 0.0
  %10005 = vmatprep.subr.mxu0 0.0
  %10006 = vmatpush1.msra.mxu0 0.0
  %10007 = vmatprep.subr.mxu0 0.0
  %10008 = vmatpush1.msra.mxu0 0.0
  %10009 = vmatprep.subr.mxu0 0.0
  %10010 = vmatpush1.msra.mxu0 0.0
  %10011 = vmatprep.subr.mxu0 0.0
  %10012 = vmatpush1.msra.mxu0 0.0
  %10013 = vmatprep.subr.mxu0 0.0
  %10014 = vmatpush1.msra.mxu0 0.0
  %10015 = vmatprep.subr.mxu0 0.0
  %10016 = vmatpush1.msra.mxu0 0.0
  %10017 = vmatprep.subr.mxu0 0.0
  %10018 = vmatpush1.msra.mxu0 0.0
  %10019 = vmatprep.subr.mxu0 0.0
  %10020 = vmatpush1.msra.mxu0 0.0
  %10021 = vmatprep.mubr.f32.mxu0 0.0
  %v10022 = vand.u32 %v9783, 4294901760
  %10023 = vmatmul.mubr.f32.gmra.mrb[0].mxu0 %v10022
  %v10024 = vpop.f32.mrb[0].mxu0
  %v10025 = vadd.f32 %v9874, %v10024
  %v10026 = vpop.f32.mrb[0].mxu0
  %10027 = vdwg.mxu0
  %10028 = vmatprep.subr.mxu0 0.0
  %v10029 = vand.u32 %v42, 4294901760
  %v10030 = vsub.f32 %v42, %v10029
  %10031 = vmatpush1.msra.mxu0 %v10030
  %10032 = vmatprep.subr.mxu0 0.0
  %v10033 = vand.u32 %v43, 4294901760
  %v10034 = vsub.f32 %v43, %v10033
  %10035 = vmatpush1.msra.mxu0 %v10034
  %10036 = vmatprep.subr.mxu0 0.0
  %v10037 = vand.u32 %v44, 4294901760
  %v10038 = vsub.f32 %v44, %v10037
  %10039 = vmatpush1.msra.mxu0 %v10038
  %10040 = vmatprep.subr.mxu0 0.0
  %v10041 = vand.u32 %v45, 4294901760
  %v10042 = vsub.f32 %v45, %v10041
  %10043 = vmatpush1.msra.mxu0 %v10042
  %10044 = vmatprep.subr.mxu0 0.0
  %v10045 = vand.u32 %v46, 4294901760
  %v10046 = vsub.f32 %v46, %v10045
  %10047 = vmatpush1.msra.mxu0 %v10046
  %10048 = vmatprep.subr.mxu0 0.0
  %v10049 = vand.u32 %v47, 4294901760
  %v10050 = vsub.f32 %v47, %v10049
  %10051 = vmatpush1.msra.mxu0 %v10050
  %10052 = vmatprep.subr.mxu0 0.0
  %v10053 = vand.u32 %v48, 4294901760
  %v10054 = vsub.f32 %v48, %v10053
  %10055 = vmatpush1.msra.mxu0 %v10054
  %10056 = vmatprep.subr.mxu0 0.0
  %v10057 = vand.u32 %v49, 4294901760
  %v10058 = vsub.f32 %v49, %v10057
  %10059 = vmatpush1.msra.mxu0 %v10058
  %10060 = vmatprep.subr.mxu0 0.0
  %v10061 = vand.u32 %v50, 4294901760
  %v10062 = vsub.f32 %v50, %v10061
  %10063 = vmatpush1.msra.mxu0 %v10062
  %10064 = vmatprep.subr.mxu0 0.0
  %v10065 = vand.u32 %v51, 4294901760
  %v10066 = vsub.f32 %v51, %v10065
  %10067 = vmatpush1.msra.mxu0 %v10066
  %10068 = vmatprep.subr.mxu0 0.0
  %v10069 = vand.u32 %v52, 4294901760
  %v10070 = vsub.f32 %v52, %v10069
  %10071 = vmatpush1.msra.mxu0 %v10070
  %10072 = vmatprep.subr.mxu0 0.0
  %v10073 = vand.u32 %v53, 4294901760
  %v10074 = vsub.f32 %v53, %v10073
  %10075 = vmatpush1.msra.mxu0 %v10074
  %10076 = vmatprep.subr.mxu0 0.0
  %v10077 = vand.u32 %v54, 4294901760
  %v10078 = vsub.f32 %v54, %v10077
  %10079 = vmatpush1.msra.mxu0 %v10078
  %10080 = vmatprep.subr.mxu0 0.0
  %v10081 = vand.u32 %v55, 4294901760
  %v10082 = vsub.f32 %v55, %v10081
  %10083 = vmatpush1.msra.mxu0 %v10082
  %10084 = vmatprep.subr.mxu0 0.0
  %v10085 = vand.u32 %v56, 4294901760
  %v10086 = vsub.f32 %v56, %v10085
  %10087 = vmatpush1.msra.mxu0 %v10086
  %10088 = vmatprep.subr.mxu0 0.0
  %v10089 = vand.u32 %v57, 4294901760
  %v10090 = vsub.f32 %v57, %v10089
  %10091 = vmatpush1.msra.mxu0 %v10090
  %10092 = vmatprep.subr.mxu0 0.0
  %10093 = vmatpush1.msra.mxu0 0.0
  %10094 = vmatprep.subr.mxu0 0.0
  %10095 = vmatpush1.msra.mxu0 0.0
  %10096 = vmatprep.subr.mxu0 0.0
  %10097 = vmatpush1.msra.mxu0 0.0
  %10098 = vmatprep.subr.mxu0 0.0
  %10099 = vmatpush1.msra.mxu0 0.0
  %10100 = vmatprep.subr.mxu0 0.0
  %10101 = vmatpush1.msra.mxu0 0.0
  %10102 = vmatprep.subr.mxu0 0.0
  %10103 = vmatpush1.msra.mxu0 0.0
  %10104 = vmatprep.subr.mxu0 0.0
  %10105 = vmatpush1.msra.mxu0 0.0
  %10106 = vmatprep.subr.mxu0 0.0
  %10107 = vmatpush1.msra.mxu0 0.0
  %10108 = vmatprep.subr.mxu0 0.0
  %10109 = vmatpush1.msra.mxu0 0.0
  %10110 = vmatprep.subr.mxu0 0.0
  %10111 = vmatpush1.msra.mxu0 0.0
  %10112 = vmatprep.subr.mxu0 0.0
  %10113 = vmatpush1.msra.mxu0 0.0
  %10114 = vmatprep.subr.mxu0 0.0
  %10115 = vmatpush1.msra.mxu0 0.0
  %10116 = vmatprep.subr.mxu0 0.0
  %10117 = vmatpush1.msra.mxu0 0.0
  %10118 = vmatprep.subr.mxu0 0.0
  %10119 = vmatpush1.msra.mxu0 0.0
  %10120 = vmatprep.subr.mxu0 0.0
  %10121 = vmatpush1.msra.mxu0 0.0
  %10122 = vmatprep.subr.mxu0 0.0
  %10123 = vmatpush1.msra.mxu0 0.0
  %10124 = vmatprep.mubr.f32.mxu0 0.0
  %v10125 = vand.u32 %v9783, 4294901760
  %v10126 = vsub.f32 %v9783, %v10125
  %10127 = vmatmul.mubr.f32.gmra.mrb[0].mxu0 %v10126
  %v10128 = vpop.f32.mrb[0].mxu0
  %v10129 = vadd.f32 %v10025, %v10128
  %v10130 = vpop.f32.mrb[0].mxu0
  %10131 = vdwg.mxu0
  %10132 = vmatprep.subr.mxu0 0.0
  %v10133 = vand.u32 %v42, 4294901760
  %10134 = vmatpush1.msra.mxu0 %v10133
  %10135 = vmatprep.subr.mxu0 0.0
  %v10136 = vand.u32 %v43, 4294901760
  %10137 = vmatpush1.msra.mxu0 %v10136
  %10138 = vmatprep.subr.mxu0 0.0
  %v10139 = vand.u32 %v44, 4294901760
  %10140 = vmatpush1.msra.mxu0 %v10139
  %10141 = vmatprep.subr.mxu0 0.0
  %v10142 = vand.u32 %v45, 4294901760
  %10143 = vmatpush1.msra.mxu0 %v10142
  %10144 = vmatprep.subr.mxu0 0.0
  %v10145 = vand.u32 %v46, 4294901760
  %10146 = vmatpush1.msra.mxu0 %v10145
  %10147 = vmatprep.subr.mxu0 0.0
  %v10148 = vand.u32 %v47, 4294901760
  %10149 = vmatpush1.msra.mxu0 %v10148
  %10150 = vmatprep.subr.mxu0 0.0
  %v10151 = vand.u32 %v48, 4294901760
  %10152 = vmatpush1.msra.mxu0 %v10151
  %10153 = vmatprep.subr.mxu0 0.0
  %v10154 = vand.u32 %v49, 4294901760
  %10155 = vmatpush1.msra.mxu0 %v10154
  %10156 = vmatprep.subr.mxu0 0.0
  %v10157 = vand.u32 %v50, 4294901760
  %10158 = vmatpush1.msra.mxu0 %v10157
  %10159 = vmatprep.subr.mxu0 0.0
  %v10160 = vand.u32 %v51, 4294901760
  %10161 = vmatpush1.msra.mxu0 %v10160
  %10162 = vmatprep.subr.mxu0 0.0
  %v10163 = vand.u32 %v52, 4294901760
  %10164 = vmatpush1.msra.mxu0 %v10163
  %10165 = vmatprep.subr.mxu0 0.0
  %v10166 = vand.u32 %v53, 4294901760
  %10167 = vmatpush1.msra.mxu0 %v10166
  %10168 = vmatprep.subr.mxu0 0.0
  %v10169 = vand.u32 %v54, 4294901760
  %10170 = vmatpush1.msra.mxu0 %v10169
  %10171 = vmatprep.subr.mxu0 0.0
  %v10172 = vand.u32 %v55, 4294901760
  %10173 = vmatpush1.msra.mxu0 %v10172
  %10174 = vmatprep.subr.mxu0 0.0
  %v10175 = vand.u32 %v56, 4294901760
  %10176 = vmatpush1.msra.mxu0 %v10175
  %10177 = vmatprep.subr.mxu0 0.0
  %v10178 = vand.u32 %v57, 4294901760
  %10179 = vmatpush1.msra.mxu0 %v10178
  %10180 = vmatprep.subr.mxu0 0.0
  %10181 = vmatpush1.msra.mxu0 0.0
  %10182 = vmatprep.subr.mxu0 0.0
  %10183 = vmatpush1.msra.mxu0 0.0
  %10184 = vmatprep.subr.mxu0 0.0
  %10185 = vmatpush1.msra.mxu0 0.0
  %10186 = vmatprep.subr.mxu0 0.0
  %10187 = vmatpush1.msra.mxu0 0.0
  %10188 = vmatprep.subr.mxu0 0.0
  %10189 = vmatpush1.msra.mxu0 0.0
  %10190 = vmatprep.subr.mxu0 0.0
  %10191 = vmatpush1.msra.mxu0 0.0
  %10192 = vmatprep.subr.mxu0 0.0
  %10193 = vmatpush1.msra.mxu0 0.0
  %10194 = vmatprep.subr.mxu0 0.0
  %10195 = vmatpush1.msra.mxu0 0.0
  %10196 = vmatprep.subr.mxu0 0.0
  %10197 = vmatpush1.msra.mxu0 0.0
  %10198 = vmatprep.subr.mxu0 0.0
  %10199 = vmatpush1.msra.mxu0 0.0
  %10200 = vmatprep.subr.mxu0 0.0
  %10201 = vmatpush1.msra.mxu0 0.0
  %10202 = vmatprep.subr.mxu0 0.0
  %10203 = vmatpush1.msra.mxu0 0.0
  %10204 = vmatprep.subr.mxu0 0.0
  %10205 = vmatpush1.msra.mxu0 0.0
  %10206 = vmatprep.subr.mxu0 0.0
  %10207 = vmatpush1.msra.mxu0 0.0
  %10208 = vmatprep.subr.mxu0 0.0
  %10209 = vmatpush1.msra.mxu0 0.0
  %10210 = vmatprep.subr.mxu0 0.0
  %10211 = vmatpush1.msra.mxu0 0.0
  %10212 = vmatprep.mubr.f32.mxu0 0.0
  %v10213 = vand.u32 %v9783, 4294901760
  %v10214 = vsub.f32 %v9783, %v10213
  %v10215 = vand.u32 %v10214, 4294901760
  %10216 = vmatmul.mubr.f32.gmra.mrb[0].mxu0 %v10215
  %v10217 = vpop.f32.mrb[0].mxu0
  %v10218 = vadd.f32 %v10129, %v10217
  %v10219 = vpop.f32.mrb[0].mxu0
  %10220 = vdwg.mxu0
  %10221 = vmatprep.subr.mxu0 0.0
  %v10222 = vand.u32 %v42, 4294901760
  %v10223 = vsub.f32 %v42, %v10222
  %v10224 = vand.u32 %v10223, 4294901760
  %10225 = vmatpush1.msra.mxu0 %v10224
  %10226 = vmatprep.subr.mxu0 0.0
  %v10227 = vand.u32 %v43, 4294901760
  %v10228 = vsub.f32 %v43, %v10227
  %v10229 = vand.u32 %v10228, 4294901760
  %10230 = vmatpush1.msra.mxu0 %v10229
  %10231 = vmatprep.subr.mxu0 0.0
  %v10232 = vand.u32 %v44, 4294901760
  %v10233 = vsub.f32 %v44, %v10232
  %v10234 = vand.u32 %v10233, 4294901760
  %10235 = vmatpush1.msra.mxu0 %v10234
  %10236 = vmatprep.subr.mxu0 0.0
  %v10237 = vand.u32 %v45, 4294901760
  %v10238 = vsub.f32 %v45, %v10237
  %v10239 = vand.u32 %v10238, 4294901760
  %10240 = vmatpush1.msra.mxu0 %v10239
  %10241 = vmatprep.subr.mxu0 0.0
  %v10242 = vand.u32 %v46, 4294901760
  %v10243 = vsub.f32 %v46, %v10242
  %v10244 = vand.u32 %v10243, 4294901760
  %10245 = vmatpush1.msra.mxu0 %v10244
  %10246 = vmatprep.subr.mxu0 0.0
  %v10247 = vand.u32 %v47, 4294901760
  %v10248 = vsub.f32 %v47, %v10247
  %v10249 = vand.u32 %v10248, 4294901760
  %10250 = vmatpush1.msra.mxu0 %v10249
  %10251 = vmatprep.subr.mxu0 0.0
  %v10252 = vand.u32 %v48, 4294901760
  %v10253 = vsub.f32 %v48, %v10252
  %v10254 = vand.u32 %v10253, 4294901760
  %10255 = vmatpush1.msra.mxu0 %v10254
  %10256 = vmatprep.subr.mxu0 0.0
  %v10257 = vand.u32 %v49, 4294901760
  %v10258 = vsub.f32 %v49, %v10257
  %v10259 = vand.u32 %v10258, 4294901760
  %10260 = vmatpush1.msra.mxu0 %v10259
  %10261 = vmatprep.subr.mxu0 0.0
  %v10262 = vand.u32 %v50, 4294901760
  %v10263 = vsub.f32 %v50, %v10262
  %v10264 = vand.u32 %v10263, 4294901760
  %10265 = vmatpush1.msra.mxu0 %v10264
  %10266 = vmatprep.subr.mxu0 0.0
  %v10267 = vand.u32 %v51, 4294901760
  %v10268 = vsub.f32 %v51, %v10267
  %v10269 = vand.u32 %v10268, 4294901760
  %10270 = vmatpush1.msra.mxu0 %v10269
  %10271 = vmatprep.subr.mxu0 0.0
  %v10272 = vand.u32 %v52, 4294901760
  %v10273 = vsub.f32 %v52, %v10272
  %v10274 = vand.u32 %v10273, 4294901760
  %10275 = vmatpush1.msra.mxu0 %v10274
  %10276 = vmatprep.subr.mxu0 0.0
  %v10277 = vand.u32 %v53, 4294901760
  %v10278 = vsub.f32 %v53, %v10277
  %v10279 = vand.u32 %v10278, 4294901760
  %10280 = vmatpush1.msra.mxu0 %v10279
  %10281 = vmatprep.subr.mxu0 0.0
  %v10282 = vand.u32 %v54, 4294901760
  %v10283 = vsub.f32 %v54, %v10282
  %v10284 = vand.u32 %v10283, 4294901760
  %10285 = vmatpush1.msra.mxu0 %v10284
  %10286 = vmatprep.subr.mxu0 0.0
  %v10287 = vand.u32 %v55, 4294901760
  %v10288 = vsub.f32 %v55, %v10287
  %v10289 = vand.u32 %v10288, 4294901760
  %10290 = vmatpush1.msra.mxu0 %v10289
  %10291 = vmatprep.subr.mxu0 0.0
  %v10292 = vand.u32 %v56, 4294901760
  %v10293 = vsub.f32 %v56, %v10292
  %v10294 = vand.u32 %v10293, 4294901760
  %10295 = vmatpush1.msra.mxu0 %v10294
  %10296 = vmatprep.subr.mxu0 0.0
  %v10297 = vand.u32 %v57, 4294901760
  %v10298 = vsub.f32 %v57, %v10297
  %v10299 = vand.u32 %v10298, 4294901760
  %10300 = vmatpush1.msra.mxu0 %v10299
  %10301 = vmatprep.subr.mxu0 0.0
  %10302 = vmatpush1.msra.mxu0 0.0
  %10303 = vmatprep.subr.mxu0 0.0
  %10304 = vmatpush1.msra.mxu0 0.0
  %10305 = vmatprep.subr.mxu0 0.0
  %10306 = vmatpush1.msra.mxu0 0.0
  %10307 = vmatprep.subr.mxu0 0.0
  %10308 = vmatpush1.msra.mxu0 0.0
  %10309 = vmatprep.subr.mxu0 0.0
  %10310 = vmatpush1.msra.mxu0 0.0
  %10311 = vmatprep.subr.mxu0 0.0
  %10312 = vmatpush1.msra.mxu0 0.0
  %10313 = vmatprep.subr.mxu0 0.0
  %10314 = vmatpush1.msra.mxu0 0.0
  %10315 = vmatprep.subr.mxu0 0.0
  %10316 = vmatpush1.msra.mxu0 0.0
  %10317 = vmatprep.subr.mxu0 0.0
  %10318 = vmatpush1.msra.mxu0 0.0
  %10319 = vmatprep.subr.mxu0 0.0
  %10320 = vmatpush1.msra.mxu0 0.0
  %10321 = vmatprep.subr.mxu0 0.0
  %10322 = vmatpush1.msra.mxu0 0.0
  %10323 = vmatprep.subr.mxu0 0.0
  %10324 = vmatpush1.msra.mxu0 0.0
  %10325 = vmatprep.subr.mxu0 0.0
  %10326 = vmatpush1.msra.mxu0 0.0
  %10327 = vmatprep.subr.mxu0 0.0
  %10328 = vmatpush1.msra.mxu0 0.0
  %10329 = vmatprep.subr.mxu0 0.0
  %10330 = vmatpush1.msra.mxu0 0.0
  %10331 = vmatprep.subr.mxu0 0.0
  %10332 = vmatpush1.msra.mxu0 0.0
  %10333 = vmatprep.mubr.f32.mxu0 0.0
  %v10334 = vand.u32 %v9783, 4294901760
  %10335 = vmatmul.mubr.f32.gmra.mrb[0].mxu0 %v10334
  %v10336 = vpop.f32.mrb[0].mxu0
  %v10337 = vadd.f32 %v10218, %v10336
  %v10338 = vpop.f32.mrb[0].mxu0
  %10339 = vdwg.mxu0
  %10340 = vmatprep.subr.mxu0 0.0
  %v10341 = vand.u32 %v42, 4294901760
  %10342 = vmatpush1.msra.mxu0 %v10341
  %10343 = vmatprep.subr.mxu0 0.0
  %v10344 = vand.u32 %v43, 4294901760
  %10345 = vmatpush1.msra.mxu0 %v10344
  %10346 = vmatprep.subr.mxu0 0.0
  %v10347 = vand.u32 %v44, 4294901760
  %10348 = vmatpush1.msra.mxu0 %v10347
  %10349 = vmatprep.subr.mxu0 0.0
  %v10350 = vand.u32 %v45, 4294901760
  %10351 = vmatpush1.msra.mxu0 %v10350
  %10352 = vmatprep.subr.mxu0 0.0
  %v10353 = vand.u32 %v46, 4294901760
  %10354 = vmatpush1.msra.mxu0 %v10353
  %10355 = vmatprep.subr.mxu0 0.0
  %v10356 = vand.u32 %v47, 4294901760
  %10357 = vmatpush1.msra.mxu0 %v10356
  %10358 = vmatprep.subr.mxu0 0.0
  %v10359 = vand.u32 %v48, 4294901760
  %10360 = vmatpush1.msra.mxu0 %v10359
  %10361 = vmatprep.subr.mxu0 0.0
  %v10362 = vand.u32 %v49, 4294901760
  %10363 = vmatpush1.msra.mxu0 %v10362
  %10364 = vmatprep.subr.mxu0 0.0
  %v10365 = vand.u32 %v50, 4294901760
  %10366 = vmatpush1.msra.mxu0 %v10365
  %10367 = vmatprep.subr.mxu0 0.0
  %v10368 = vand.u32 %v51, 4294901760
  %10369 = vmatpush1.msra.mxu0 %v10368
  %10370 = vmatprep.subr.mxu0 0.0
  %v10371 = vand.u32 %v52, 4294901760
  %10372 = vmatpush1.msra.mxu0 %v10371
  %10373 = vmatprep.subr.mxu0 0.0
  %v10374 = vand.u32 %v53, 4294901760
  %10375 = vmatpush1.msra.mxu0 %v10374
  %10376 = vmatprep.subr.mxu0 0.0
  %v10377 = vand.u32 %v54, 4294901760
  %10378 = vmatpush1.msra.mxu0 %v10377
  %10379 = vmatprep.subr.mxu0 0.0
  %v10380 = vand.u32 %v55, 4294901760
  %10381 = vmatpush1.msra.mxu0 %v10380
  %10382 = vmatprep.subr.mxu0 0.0
  %v10383 = vand.u32 %v56, 4294901760
  %10384 = vmatpush1.msra.mxu0 %v10383
  %10385 = vmatprep.subr.mxu0 0.0
  %v10386 = vand.u32 %v57, 4294901760
  %10387 = vmatpush1.msra.mxu0 %v10386
  %10388 = vmatprep.subr.mxu0 0.0
  %10389 = vmatpush1.msra.mxu0 0.0
  %10390 = vmatprep.subr.mxu0 0.0
  %10391 = vmatpush1.msra.mxu0 0.0
  %10392 = vmatprep.subr.mxu0 0.0
  %10393 = vmatpush1.msra.mxu0 0.0
  %10394 = vmatprep.subr.mxu0 0.0
  %10395 = vmatpush1.msra.mxu0 0.0
  %10396 = vmatprep.subr.mxu0 0.0
  %10397 = vmatpush1.msra.mxu0 0.0
  %10398 = vmatprep.subr.mxu0 0.0
  %10399 = vmatpush1.msra.mxu0 0.0
  %10400 = vmatprep.subr.mxu0 0.0
  %10401 = vmatpush1.msra.mxu0 0.0
  %10402 = vmatprep.subr.mxu0 0.0
  %10403 = vmatpush1.msra.mxu0 0.0
  %10404 = vmatprep.subr.mxu0 0.0
  %10405 = vmatpush1.msra.mxu0 0.0
  %10406 = vmatprep.subr.mxu0 0.0
  %10407 = vmatpush1.msra.mxu0 0.0
  %10408 = vmatprep.subr.mxu0 0.0
  %10409 = vmatpush1.msra.mxu0 0.0
  %10410 = vmatprep.subr.mxu0 0.0
  %10411 = vmatpush1.msra.mxu0 0.0
  %10412 = vmatprep.subr.mxu0 0.0
  %10413 = vmatpush1.msra.mxu0 0.0
  %10414 = vmatprep.subr.mxu0 0.0
  %10415 = vmatpush1.msra.mxu0 0.0
  %10416 = vmatprep.subr.mxu0 0.0
  %10417 = vmatpush1.msra.mxu0 0.0
  %10418 = vmatprep.subr.mxu0 0.0
  %10419 = vmatpush1.msra.mxu0 0.0
  %10420 = vmatprep.mubr.f32.mxu0 0.0
  %v10421 = vand.u32 %v9783, 4294901760
  %10422 = vmatmul.mubr.f32.gmra.mrb[0].mxu0 %v10421
  %v10423 = vpop.f32.mrb[0].mxu0
  %v10424 = vadd.f32 %v10337, %v10423
  %v10425 = vpop.f32.mrb[0].mxu0
  %10426 = vdwg.mxu0
  %v10427 = vmul.f32 %v10424, 0.001953125
  %v10428 = vlaneseq
  %v10429 = vshrl.u32 %v10428, 7
  %v10430 = vsub.s32 0, %v10429
  %v10431 = vrot.slane %v10427, %v10430
  %v10432 = vsub.f32 %v9295, %v10431
  %v10433 = vsub.f32 %v9296, %v10431
  %v10434 = vsub.f32 %v9297, %v10431
  %v10435 = vsub.f32 %v9298, %v10431
  %v10436 = vmul.f32 %v10432, %v10432
  %v10437 = vmul.f32 %v10433, %v10433
  %v10438 = vmul.f32 %v10434, %v10434
  %v10439 = vmul.f32 %v10435, %v10435
  %10440 = vmatprep.subr.mxu0 0.0
  %v10441 = vand.u32 %v10436, 4294901760
  %10442 = vmatpush1.msra.mxu0 %v10441
  %10443 = vmatprep.subr.mxu0 0.0
  %v10444 = vand.u32 %v10437, 4294901760
  %10445 = vmatpush1.msra.mxu0 %v10444
  %10446 = vmatprep.subr.mxu0 0.0
  %v10447 = vand.u32 %v10438, 4294901760
  %10448 = vmatpush1.msra.mxu0 %v10447
  %10449 = vmatprep.subr.mxu0 0.0
  %v10450 = vand.u32 %v10439, 4294901760
  %10451 = vmatpush1.msra.mxu0 %v10450
  %10452 = vmatprep.subr.mxu0 0.0
  %10453 = vmatpush1.msra.mxu0 0.0
  %10454 = vmatprep.subr.mxu0 0.0
  %10455 = vmatpush1.msra.mxu0 0.0
  %10456 = vmatprep.subr.mxu0 0.0
  %10457 = vmatpush1.msra.mxu0 0.0
  %10458 = vmatprep.subr.mxu0 0.0
  %10459 = vmatpush1.msra.mxu0 0.0
  %10460 = vmatprep.subr.mxu0 0.0
  %10461 = vmatpush1.msra.mxu0 0.0
  %10462 = vmatprep.subr.mxu0 0.0
  %10463 = vmatpush1.msra.mxu0 0.0
  %10464 = vmatprep.subr.mxu0 0.0
  %10465 = vmatpush1.msra.mxu0 0.0
  %10466 = vmatprep.subr.mxu0 0.0
  %10467 = vmatpush1.msra.mxu0 0.0
  %10468 = vmatprep.subr.mxu0 0.0
  %10469 = vmatpush1.msra.mxu0 0.0
  %10470 = vmatprep.subr.mxu0 0.0
  %10471 = vmatpush1.msra.mxu0 0.0
  %10472 = vmatprep.subr.mxu0 0.0
  %10473 = vmatpush1.msra.mxu0 0.0
  %10474 = vmatprep.subr.mxu0 0.0
  %10475 = vmatpush1.msra.mxu0 0.0
  %10476 = vmatprep.subr.mxu0 0.0
  %10477 = vmatpush1.msra.mxu0 0.0
  %10478 = vmatprep.subr.mxu0 0.0
  %10479 = vmatpush1.msra.mxu0 0.0
  %10480 = vmatprep.subr.mxu0 0.0
  %10481 = vmatpush1.msra.mxu0 0.0
  %10482 = vmatprep.subr.mxu0 0.0
  %10483 = vmatpush1.msra.mxu0 0.0
  %10484 = vmatprep.subr.mxu0 0.0
  %10485 = vmatpush1.msra.mxu0 0.0
  %10486 = vmatprep.subr.mxu0 0.0
  %10487 = vmatpush1.msra.mxu0 0.0
  %10488 = vmatprep.subr.mxu0 0.0
  %10489 = vmatpush1.msra.mxu0 0.0
  %10490 = vmatprep.subr.mxu0 0.0
  %10491 = vmatpush1.msra.mxu0 0.0
  %10492 = vmatprep.subr.mxu0 0.0
  %10493 = vmatpush1.msra.mxu0 0.0
  %10494 = vmatprep.subr.mxu0 0.0
  %10495 = vmatpush1.msra.mxu0 0.0
  %10496 = vmatprep.subr.mxu0 0.0
  %10497 = vmatpush1.msra.mxu0 0.0
  %10498 = vmatprep.subr.mxu0 0.0
  %10499 = vmatpush1.msra.mxu0 0.0
  %10500 = vmatprep.subr.mxu0 0.0
  %10501 = vmatpush1.msra.mxu0 0.0
  %10502 = vmatprep.subr.mxu0 0.0
  %10503 = vmatpush1.msra.mxu0 0.0
  %10504 = vmatprep.subr.mxu0 0.0
  %10505 = vmatpush1.msra.mxu0 0.0
  %10506 = vmatprep.subr.mxu0 0.0
  %10507 = vmatpush1.msra.mxu0 0.0
  %10508 = vmatprep.mubr.f32.mxu0 0.0
  %v10509 = vand.u32 %v3403, 4294901760
  %v10510 = vsub.f32 %v3403, %v10509
  %v10511 = vand.u32 %v10510, 4294901760
  %v10512 = vsub.f32 %v10510, %v10511
  %v10513 = vand.u32 %v10512, 4294901760
  %10514 = vmatmul.mubr.f32.gmra.mrb[0].mxu0 %v10513
  %v10515 = vpop.f32.mrb[0].mxu0
  %v10516 = vadd.f32 0.0, %v10515
  %v10517 = vpop.f32.mrb[0].mxu0
  %10518 = vdwg.mxu0
  %10519 = vmatprep.subr.mxu0 0.0
  %v10520 = vand.u32 %v10436, 4294901760
  %v10521 = vsub.f32 %v10436, %v10520
  %v10522 = vand.u32 %v10521, 4294901760
  %v10523 = vsub.f32 %v10521, %v10522
  %v10524 = vand.u32 %v10523, 4294901760
  %10525 = vmatpush1.msra.mxu0 %v10524
  %10526 = vmatprep.subr.mxu0 0.0
  %v10527 = vand.u32 %v10437, 4294901760
  %v10528 = vsub.f32 %v10437, %v10527
  %v10529 = vand.u32 %v10528, 4294901760
  %v10530 = vsub.f32 %v10528, %v10529
  %v10531 = vand.u32 %v10530, 4294901760
  %10532 = vmatpush1.msra.mxu0 %v10531
  %10533 = vmatprep.subr.mxu0 0.0
  %v10534 = vand.u32 %v10438, 4294901760
  %v10535 = vsub.f32 %v10438, %v10534
  %v10536 = vand.u32 %v10535, 4294901760
  %v10537 = vsub.f32 %v10535, %v10536
  %v10538 = vand.u32 %v10537, 4294901760
  %10539 = vmatpush1.msra.mxu0 %v10538
  %10540 = vmatprep.subr.mxu0 0.0
  %v10541 = vand.u32 %v10439, 4294901760
  %v10542 = vsub.f32 %v10439, %v10541
  %v10543 = vand.u32 %v10542, 4294901760
  %v10544 = vsub.f32 %v10542, %v10543
  %v10545 = vand.u32 %v10544, 4294901760
  %10546 = vmatpush1.msra.mxu0 %v10545
  %10547 = vmatprep.subr.mxu0 0.0
  %10548 = vmatpush1.msra.mxu0 0.0
  %10549 = vmatprep.subr.mxu0 0.0
  %10550 = vmatpush1.msra.mxu0 0.0
  %10551 = vmatprep.subr.mxu0 0.0
  %10552 = vmatpush1.msra.mxu0 0.0
  %10553 = vmatprep.subr.mxu0 0.0
  %10554 = vmatpush1.msra.mxu0 0.0
  %10555 = vmatprep.subr.mxu0 0.0
  %10556 = vmatpush1.msra.mxu0 0.0
  %10557 = vmatprep.subr.mxu0 0.0
  %10558 = vmatpush1.msra.mxu0 0.0
  %10559 = vmatprep.subr.mxu0 0.0
  %10560 = vmatpush1.msra.mxu0 0.0
  %10561 = vmatprep.subr.mxu0 0.0
  %10562 = vmatpush1.msra.mxu0 0.0
  %10563 = vmatprep.subr.mxu0 0.0
  %10564 = vmatpush1.msra.mxu0 0.0
  %10565 = vmatprep.subr.mxu0 0.0
  %10566 = vmatpush1.msra.mxu0 0.0
  %10567 = vmatprep.subr.mxu0 0.0
  %10568 = vmatpush1.msra.mxu0 0.0
  %10569 = vmatprep.subr.mxu0 0.0
  %10570 = vmatpush1.msra.mxu0 0.0
  %10571 = vmatprep.subr.mxu0 0.0
  %10572 = vmatpush1.msra.mxu0 0.0
  %10573 = vmatprep.subr.mxu0 0.0
  %10574 = vmatpush1.msra.mxu0 0.0
  %10575 = vmatprep.subr.mxu0 0.0
  %10576 = vmatpush1.msra.mxu0 0.0
  %10577 = vmatprep.subr.mxu0 0.0
  %10578 = vmatpush1.msra.mxu0 0.0
  %10579 = vmatprep.subr.mxu0 0.0
  %10580 = vmatpush1.msra.mxu0 0.0
  %10581 = vmatprep.subr.mxu0 0.0
  %10582 = vmatpush1.msra.mxu0 0.0
  %10583 = vmatprep.subr.mxu0 0.0
  %10584 = vmatpush1.msra.mxu0 0.0
  %10585 = vmatprep.subr.mxu0 0.0
  %10586 = vmatpush1.msra.mxu0 0.0
  %10587 = vmatprep.subr.mxu0 0.0
  %10588 = vmatpush1.msra.mxu0 0.0
  %10589 = vmatprep.subr.mxu0 0.0
  %10590 = vmatpush1.msra.mxu0 0.0
  %10591 = vmatprep.subr.mxu0 0.0
  %10592 = vmatpush1.msra.mxu0 0.0
  %10593 = vmatprep.subr.mxu0 0.0
  %10594 = vmatpush1.msra.mxu0 0.0
  %10595 = vmatprep.subr.mxu0 0.0
  %10596 = vmatpush1.msra.mxu0 0.0
  %10597 = vmatprep.subr.mxu0 0.0
  %10598 = vmatpush1.msra.mxu0 0.0
  %10599 = vmatprep.subr.mxu0 0.0
  %10600 = vmatpush1.msra.mxu0 0.0
  %10601 = vmatprep.subr.mxu0 0.0
  %10602 = vmatpush1.msra.mxu0 0.0
  %10603 = vmatprep.mubr.f32.mxu0 0.0
  %v10604 = vand.u32 %v3403, 4294901760
  %10605 = vmatmul.mubr.f32.gmra.mrb[0].mxu0 %v10604
  %v10606 = vpop.f32.mrb[0].mxu0
  %v10607 = vadd.f32 %v10516, %v10606
  %v10608 = vpop.f32.mrb[0].mxu0
  %10609 = vdwg.mxu0
  %10610 = vmatprep.subr.mxu0 0.0
  %v10611 = vand.u32 %v10436, 4294901760
  %v10612 = vsub.f32 %v10436, %v10611
  %10613 = vmatpush1.msra.mxu0 %v10612
  %10614 = vmatprep.subr.mxu0 0.0
  %v10615 = vand.u32 %v10437, 4294901760
  %v10616 = vsub.f32 %v10437, %v10615
  %10617 = vmatpush1.msra.mxu0 %v10616
  %10618 = vmatprep.subr.mxu0 0.0
  %v10619 = vand.u32 %v10438, 4294901760
  %v10620 = vsub.f32 %v10438, %v10619
  %10621 = vmatpush1.msra.mxu0 %v10620
  %10622 = vmatprep.subr.mxu0 0.0
  %v10623 = vand.u32 %v10439, 4294901760
  %v10624 = vsub.f32 %v10439, %v10623
  %10625 = vmatpush1.msra.mxu0 %v10624
  %10626 = vmatprep.subr.mxu0 0.0
  %10627 = vmatpush1.msra.mxu0 0.0
  %10628 = vmatprep.subr.mxu0 0.0
  %10629 = vmatpush1.msra.mxu0 0.0
  %10630 = vmatprep.subr.mxu0 0.0
  %10631 = vmatpush1.msra.mxu0 0.0
  %10632 = vmatprep.subr.mxu0 0.0
  %10633 = vmatpush1.msra.mxu0 0.0
  %10634 = vmatprep.subr.mxu0 0.0
  %10635 = vmatpush1.msra.mxu0 0.0
  %10636 = vmatprep.subr.mxu0 0.0
  %10637 = vmatpush1.msra.mxu0 0.0
  %10638 = vmatprep.subr.mxu0 0.0
  %10639 = vmatpush1.msra.mxu0 0.0
  %10640 = vmatprep.subr.mxu0 0.0
  %10641 = vmatpush1.msra.mxu0 0.0
  %10642 = vmatprep.subr.mxu0 0.0
  %10643 = vmatpush1.msra.mxu0 0.0
  %10644 = vmatprep.subr.mxu0 0.0
  %10645 = vmatpush1.msra.mxu0 0.0
  %10646 = vmatprep.subr.mxu0 0.0
  %10647 = vmatpush1.msra.mxu0 0.0
  %10648 = vmatprep.subr.mxu0 0.0
  %10649 = vmatpush1.msra.mxu0 0.0
  %10650 = vmatprep.subr.mxu0 0.0
  %10651 = vmatpush1.msra.mxu0 0.0
  %10652 = vmatprep.subr.mxu0 0.0
  %10653 = vmatpush1.msra.mxu0 0.0
  %10654 = vmatprep.subr.mxu0 0.0
  %10655 = vmatpush1.msra.mxu0 0.0
  %10656 = vmatprep.subr.mxu0 0.0
  %10657 = vmatpush1.msra.mxu0 0.0
  %10658 = vmatprep.subr.mxu0 0.0
  %10659 = vmatpush1.msra.mxu0 0.0
  %10660 = vmatprep.subr.mxu0 0.0
  %10661 = vmatpush1.msra.mxu0 0.0
  %10662 = vmatprep.subr.mxu0 0.0
  %10663 = vmatpush1.msra.mxu0 0.0
  %10664 = vmatprep.subr.mxu0 0.0
  %10665 = vmatpush1.msra.mxu0 0.0
  %10666 = vmatprep.subr.mxu0 0.0
  %10667 = vmatpush1.msra.mxu0 0.0
  %10668 = vmatprep.subr.mxu0 0.0
  %10669 = vmatpush1.msra.mxu0 0.0
  %10670 = vmatprep.subr.mxu0 0.0
  %10671 = vmatpush1.msra.mxu0 0.0
  %10672 = vmatprep.subr.mxu0 0.0
  %10673 = vmatpush1.msra.mxu0 0.0
  %10674 = vmatprep.subr.mxu0 0.0
  %10675 = vmatpush1.msra.mxu0 0.0
  %10676 = vmatprep.subr.mxu0 0.0
  %10677 = vmatpush1.msra.mxu0 0.0
  %10678 = vmatprep.subr.mxu0 0.0
  %10679 = vmatpush1.msra.mxu0 0.0
  %10680 = vmatprep.subr.mxu0 0.0
  %10681 = vmatpush1.msra.mxu0 0.0
  %10682 = vmatprep.mubr.f32.mxu0 0.0
  %v10683 = vand.u32 %v3403, 4294901760
  %v10684 = vsub.f32 %v3403, %v10683
  %10685 = vmatmul.mubr.f32.gmra.mrb[0].mxu0 %v10684
  %v10686 = vpop.f32.mrb[0].mxu0
  %v10687 = vadd.f32 %v10607, %v10686
  %v10688 = vpop.f32.mrb[0].mxu0
  %10689 = vdwg.mxu0
  %10690 = vmatprep.subr.mxu0 0.0
  %v10691 = vand.u32 %v10436, 4294901760
  %10692 = vmatpush1.msra.mxu0 %v10691
  %10693 = vmatprep.subr.mxu0 0.0
  %v10694 = vand.u32 %v10437, 4294901760
  %10695 = vmatpush1.msra.mxu0 %v10694
  %10696 = vmatprep.subr.mxu0 0.0
  %v10697 = vand.u32 %v10438, 4294901760
  %10698 = vmatpush1.msra.mxu0 %v10697
  %10699 = vmatprep.subr.mxu0 0.0
  %v10700 = vand.u32 %v10439, 4294901760
  %10701 = vmatpush1.msra.mxu0 %v10700
  %10702 = vmatprep.subr.mxu0 0.0
  %10703 = vmatpush1.msra.mxu0 0.0
  %10704 = vmatprep.subr.mxu0 0.0
  %10705 = vmatpush1.msra.mxu0 0.0
  %10706 = vmatprep.subr.mxu0 0.0
  %10707 = vmatpush1.msra.mxu0 0.0
  %10708 = vmatprep.subr.mxu0 0.0
  %10709 = vmatpush1.msra.mxu0 0.0
  %10710 = vmatprep.subr.mxu0 0.0
  %10711 = vmatpush1.msra.mxu0 0.0
  %10712 = vmatprep.subr.mxu0 0.0
  %10713 = vmatpush1.msra.mxu0 0.0
  %10714 = vmatprep.subr.mxu0 0.0
  %10715 = vmatpush1.msra.mxu0 0.0
  %10716 = vmatprep.subr.mxu0 0.0
  %10717 = vmatpush1.msra.mxu0 0.0
  %10718 = vmatprep.subr.mxu0 0.0
  %10719 = vmatpush1.msra.mxu0 0.0
  %10720 = vmatprep.subr.mxu0 0.0
  %10721 = vmatpush1.msra.mxu0 0.0
  %10722 = vmatprep.subr.mxu0 0.0
  %10723 = vmatpush1.msra.mxu0 0.0
  %10724 = vmatprep.subr.mxu0 0.0
  %10725 = vmatpush1.msra.mxu0 0.0
  %10726 = vmatprep.subr.mxu0 0.0
  %10727 = vmatpush1.msra.mxu0 0.0
  %10728 = vmatprep.subr.mxu0 0.0
  %10729 = vmatpush1.msra.mxu0 0.0
  %10730 = vmatprep.subr.mxu0 0.0
  %10731 = vmatpush1.msra.mxu0 0.0
  %10732 = vmatprep.subr.mxu0 0.0
  %10733 = vmatpush1.msra.mxu0 0.0
  %10734 = vmatprep.subr.mxu0 0.0
  %10735 = vmatpush1.msra.mxu0 0.0
  %10736 = vmatprep.subr.mxu0 0.0
  %10737 = vmatpush1.msra.mxu0 0.0
  %10738 = vmatprep.subr.mxu0 0.0
  %10739 = vmatpush1.msra.mxu0 0.0
  %10740 = vmatprep.subr.mxu0 0.0
  %10741 = vmatpush1.msra.mxu0 0.0
  %10742 = vmatprep.subr.mxu0 0.0
  %10743 = vmatpush1.msra.mxu0 0.0
  %10744 = vmatprep.subr.mxu0 0.0
  %10745 = vmatpush1.msra.mxu0 0.0
  %10746 = vmatprep.subr.mxu0 0.0
  %10747 = vmatpush1.msra.mxu0 0.0
  %10748 = vmatprep.subr.mxu0 0.0
  %10749 = vmatpush1.msra.mxu0 0.0
  %10750 = vmatprep.subr.mxu0 0.0
  %10751 = vmatpush1.msra.mxu0 0.0
  %10752 = vmatprep.subr.mxu0 0.0
  %10753 = vmatpush1.msra.mxu0 0.0
  %10754 = vmatprep.subr.mxu0 0.0
  %10755 = vmatpush1.msra.mxu0 0.0
  %10756 = vmatprep.subr.mxu0 0.0
  %10757 = vmatpush1.msra.mxu0 0.0
  %10758 = vmatprep.mubr.f32.mxu0 0.0
  %v10759 = vand.u32 %v3403, 4294901760
  %v10760 = vsub.f32 %v3403, %v10759
  %v10761 = vand.u32 %v10760, 4294901760
  %10762 = vmatmul.mubr.f32.gmra.mrb[0].mxu0 %v10761
  %v10763 = vpop.f32.mrb[0].mxu0
  %v10764 = vadd.f32 %v10687, %v10763
  %v10765 = vpop.f32.mrb[0].mxu0
  %10766 = vdwg.mxu0
  %10767 = vmatprep.subr.mxu0 0.0
  %v10768 = vand.u32 %v10436, 4294901760
  %v10769 = vsub.f32 %v10436, %v10768
  %v10770 = vand.u32 %v10769, 4294901760
  %10771 = vmatpush1.msra.mxu0 %v10770
  %10772 = vmatprep.subr.mxu0 0.0
  %v10773 = vand.u32 %v10437, 4294901760
  %v10774 = vsub.f32 %v10437, %v10773
  %v10775 = vand.u32 %v10774, 4294901760
  %10776 = vmatpush1.msra.mxu0 %v10775
  %10777 = vmatprep.subr.mxu0 0.0
  %v10778 = vand.u32 %v10438, 4294901760
  %v10779 = vsub.f32 %v10438, %v10778
  %v10780 = vand.u32 %v10779, 4294901760
  %10781 = vmatpush1.msra.mxu0 %v10780
  %10782 = vmatprep.subr.mxu0 0.0
  %v10783 = vand.u32 %v10439, 4294901760
  %v10784 = vsub.f32 %v10439, %v10783
  %v10785 = vand.u32 %v10784, 4294901760
  %10786 = vmatpush1.msra.mxu0 %v10785
  %10787 = vmatprep.subr.mxu0 0.0
  %10788 = vmatpush1.msra.mxu0 0.0
  %10789 = vmatprep.subr.mxu0 0.0
  %10790 = vmatpush1.msra.mxu0 0.0
  %10791 = vmatprep.subr.mxu0 0.0
  %10792 = vmatpush1.msra.mxu0 0.0
  %10793 = vmatprep.subr.mxu0 0.0
  %10794 = vmatpush1.msra.mxu0 0.0
  %10795 = vmatprep.subr.mxu0 0.0
  %10796 = vmatpush1.msra.mxu0 0.0
  %10797 = vmatprep.subr.mxu0 0.0
  %10798 = vmatpush1.msra.mxu0 0.0
  %10799 = vmatprep.subr.mxu0 0.0
  %10800 = vmatpush1.msra.mxu0 0.0
  %10801 = vmatprep.subr.mxu0 0.0
  %10802 = vmatpush1.msra.mxu0 0.0
  %10803 = vmatprep.subr.mxu0 0.0
  %10804 = vmatpush1.msra.mxu0 0.0
  %10805 = vmatprep.subr.mxu0 0.0
  %10806 = vmatpush1.msra.mxu0 0.0
  %10807 = vmatprep.subr.mxu0 0.0
  %10808 = vmatpush1.msra.mxu0 0.0
  %10809 = vmatprep.subr.mxu0 0.0
  %10810 = vmatpush1.msra.mxu0 0.0
  %10811 = vmatprep.subr.mxu0 0.0
  %10812 = vmatpush1.msra.mxu0 0.0
  %10813 = vmatprep.subr.mxu0 0.0
  %10814 = vmatpush1.msra.mxu0 0.0
  %10815 = vmatprep.subr.mxu0 0.0
  %10816 = vmatpush1.msra.mxu0 0.0
  %10817 = vmatprep.subr.mxu0 0.0
  %10818 = vmatpush1.msra.mxu0 0.0
  %10819 = vmatprep.subr.mxu0 0.0
  %10820 = vmatpush1.msra.mxu0 0.0
  %10821 = vmatprep.subr.mxu0 0.0
  %10822 = vmatpush1.msra.mxu0 0.0
  %10823 = vmatprep.subr.mxu0 0.0
  %10824 = vmatpush1.msra.mxu0 0.0
  %10825 = vmatprep.subr.mxu0 0.0
  %10826 = vmatpush1.msra.mxu0 0.0
  %10827 = vmatprep.subr.mxu0 0.0
  %10828 = vmatpush1.msra.mxu0 0.0
  %10829 = vmatprep.subr.mxu0 0.0
  %10830 = vmatpush1.msra.mxu0 0.0
  %10831 = vmatprep.subr.mxu0 0.0
  %10832 = vmatpush1.msra.mxu0 0.0
  %10833 = vmatprep.subr.mxu0 0.0
  %10834 = vmatpush1.msra.mxu0 0.0
  %10835 = vmatprep.subr.mxu0 0.0
  %10836 = vmatpush1.msra.mxu0 0.0
  %10837 = vmatprep.subr.mxu0 0.0
  %10838 = vmatpush1.msra.mxu0 0.0
  %10839 = vmatprep.subr.mxu0 0.0
  %10840 = vmatpush1.msra.mxu0 0.0
  %10841 = vmatprep.subr.mxu0 0.0
  %10842 = vmatpush1.msra.mxu0 0.0
  %10843 = vmatprep.mubr.f32.mxu0 0.0
  %v10844 = vand.u32 %v3403, 4294901760
  %10845 = vmatmul.mubr.f32.gmra.mrb[0].mxu0 %v10844
  %v10846 = vpop.f32.mrb[0].mxu0
  %v10847 = vadd.f32 %v10764, %v10846
  %v10848 = vpop.f32.mrb[0].mxu0
  %10849 = vdwg.mxu0
  %10850 = vmatprep.subr.mxu0 0.0
  %v10851 = vand.u32 %v10436, 4294901760
  %10852 = vmatpush1.msra.mxu0 %v10851
  %10853 = vmatprep.subr.mxu0 0.0
  %v10854 = vand.u32 %v10437, 4294901760
  %10855 = vmatpush1.msra.mxu0 %v10854
  %10856 = vmatprep.subr.mxu0 0.0
  %v10857 = vand.u32 %v10438, 4294901760
  %10858 = vmatpush1.msra.mxu0 %v10857
  %10859 = vmatprep.subr.mxu0 0.0
  %v10860 = vand.u32 %v10439, 4294901760
  %10861 = vmatpush1.msra.mxu0 %v10860
  %10862 = vmatprep.subr.mxu0 0.0
  %10863 = vmatpush1.msra.mxu0 0.0
  %10864 = vmatprep.subr.mxu0 0.0
  %10865 = vmatpush1.msra.mxu0 0.0
  %10866 = vmatprep.subr.mxu0 0.0
  %10867 = vmatpush1.msra.mxu0 0.0
  %10868 = vmatprep.subr.mxu0 0.0
  %10869 = vmatpush1.msra.mxu0 0.0
  %10870 = vmatprep.subr.mxu0 0.0
  %10871 = vmatpush1.msra.mxu0 0.0
  %10872 = vmatprep.subr.mxu0 0.0
  %10873 = vmatpush1.msra.mxu0 0.0
  %10874 = vmatprep.subr.mxu0 0.0
  %10875 = vmatpush1.msra.mxu0 0.0
  %10876 = vmatprep.subr.mxu0 0.0
  %10877 = vmatpush1.msra.mxu0 0.0
  %10878 = vmatprep.subr.mxu0 0.0
  %10879 = vmatpush1.msra.mxu0 0.0
  %10880 = vmatprep.subr.mxu0 0.0
  %10881 = vmatpush1.msra.mxu0 0.0
  %10882 = vmatprep.subr.mxu0 0.0
  %10883 = vmatpush1.msra.mxu0 0.0
  %10884 = vmatprep.subr.mxu0 0.0
  %10885 = vmatpush1.msra.mxu0 0.0
  %10886 = vmatprep.subr.mxu0 0.0
  %10887 = vmatpush1.msra.mxu0 0.0
  %10888 = vmatprep.subr.mxu0 0.0
  %10889 = vmatpush1.msra.mxu0 0.0
  %10890 = vmatprep.subr.mxu0 0.0
  %10891 = vmatpush1.msra.mxu0 0.0
  %10892 = vmatprep.subr.mxu0 0.0
  %10893 = vmatpush1.msra.mxu0 0.0
  %10894 = vmatprep.subr.mxu0 0.0
  %10895 = vmatpush1.msra.mxu0 0.0
  %10896 = vmatprep.subr.mxu0 0.0
  %10897 = vmatpush1.msra.mxu0 0.0
  %10898 = vmatprep.subr.mxu0 0.0
  %10899 = vmatpush1.msra.mxu0 0.0
  %10900 = vmatprep.subr.mxu0 0.0
  %10901 = vmatpush1.msra.mxu0 0.0
  %10902 = vmatprep.subr.mxu0 0.0
  %10903 = vmatpush1.msra.mxu0 0.0
  %10904 = vmatprep.subr.mxu0 0.0
  %10905 = vmatpush1.msra.mxu0 0.0
  %10906 = vmatprep.subr.mxu0 0.0
  %10907 = vmatpush1.msra.mxu0 0.0
  %10908 = vmatprep.subr.mxu0 0.0
  %10909 = vmatpush1.msra.mxu0 0.0
  %10910 = vmatprep.subr.mxu0 0.0
  %10911 = vmatpush1.msra.mxu0 0.0
  %10912 = vmatprep.subr.mxu0 0.0
  %10913 = vmatpush1.msra.mxu0 0.0
  %10914 = vmatprep.subr.mxu0 0.0
  %10915 = vmatpush1.msra.mxu0 0.0
  %10916 = vmatprep.subr.mxu0 0.0
  %10917 = vmatpush1.msra.mxu0 0.0
  %10918 = vmatprep.mubr.f32.mxu0 0.0
  %v10919 = vand.u32 %v3403, 4294901760
  %10920 = vmatmul.mubr.f32.gmra.mrb[0].mxu0 %v10919
  %v10921 = vpop.f32.mrb[0].mxu0
  %v10922 = vadd.f32 %v10847, %v10921
  %v10923 = vpop.f32.mrb[0].mxu0
  %10924 = vdwg.mxu0
  %10925 = vmatprep.subr.mxu0 0.0
  %v10926 = vand.u32 %v42, 4294901760
  %10927 = vmatpush1.msra.mxu0 %v10926
  %10928 = vmatprep.subr.mxu0 0.0
  %v10929 = vand.u32 %v43, 4294901760
  %10930 = vmatpush1.msra.mxu0 %v10929
  %10931 = vmatprep.subr.mxu0 0.0
  %v10932 = vand.u32 %v44, 4294901760
  %10933 = vmatpush1.msra.mxu0 %v10932
  %10934 = vmatprep.subr.mxu0 0.0
  %v10935 = vand.u32 %v45, 4294901760
  %10936 = vmatpush1.msra.mxu0 %v10935
  %10937 = vmatprep.subr.mxu0 0.0
  %v10938 = vand.u32 %v46, 4294901760
  %10939 = vmatpush1.msra.mxu0 %v10938
  %10940 = vmatprep.subr.mxu0 0.0
  %v10941 = vand.u32 %v47, 4294901760
  %10942 = vmatpush1.msra.mxu0 %v10941
  %10943 = vmatprep.subr.mxu0 0.0
  %v10944 = vand.u32 %v48, 4294901760
  %10945 = vmatpush1.msra.mxu0 %v10944
  %10946 = vmatprep.subr.mxu0 0.0
  %v10947 = vand.u32 %v49, 4294901760
  %10948 = vmatpush1.msra.mxu0 %v10947
  %10949 = vmatprep.subr.mxu0 0.0
  %v10950 = vand.u32 %v50, 4294901760
  %10951 = vmatpush1.msra.mxu0 %v10950
  %10952 = vmatprep.subr.mxu0 0.0
  %v10953 = vand.u32 %v51, 4294901760
  %10954 = vmatpush1.msra.mxu0 %v10953
  %10955 = vmatprep.subr.mxu0 0.0
  %v10956 = vand.u32 %v52, 4294901760
  %10957 = vmatpush1.msra.mxu0 %v10956
  %10958 = vmatprep.subr.mxu0 0.0
  %v10959 = vand.u32 %v53, 4294901760
  %10960 = vmatpush1.msra.mxu0 %v10959
  %10961 = vmatprep.subr.mxu0 0.0
  %v10962 = vand.u32 %v54, 4294901760
  %10963 = vmatpush1.msra.mxu0 %v10962
  %10964 = vmatprep.subr.mxu0 0.0
  %v10965 = vand.u32 %v55, 4294901760
  %10966 = vmatpush1.msra.mxu0 %v10965
  %10967 = vmatprep.subr.mxu0 0.0
  %v10968 = vand.u32 %v56, 4294901760
  %10969 = vmatpush1.msra.mxu0 %v10968
  %10970 = vmatprep.subr.mxu0 0.0
  %v10971 = vand.u32 %v57, 4294901760
  %10972 = vmatpush1.msra.mxu0 %v10971
  %10973 = vmatprep.subr.mxu0 0.0
  %10974 = vmatpush1.msra.mxu0 0.0
  %10975 = vmatprep.subr.mxu0 0.0
  %10976 = vmatpush1.msra.mxu0 0.0
  %10977 = vmatprep.subr.mxu0 0.0
  %10978 = vmatpush1.msra.mxu0 0.0
  %10979 = vmatprep.subr.mxu0 0.0
  %10980 = vmatpush1.msra.mxu0 0.0
  %10981 = vmatprep.subr.mxu0 0.0
  %10982 = vmatpush1.msra.mxu0 0.0
  %10983 = vmatprep.subr.mxu0 0.0
  %10984 = vmatpush1.msra.mxu0 0.0
  %10985 = vmatprep.subr.mxu0 0.0
  %10986 = vmatpush1.msra.mxu0 0.0
  %10987 = vmatprep.subr.mxu0 0.0
  %10988 = vmatpush1.msra.mxu0 0.0
  %10989 = vmatprep.subr.mxu0 0.0
  %10990 = vmatpush1.msra.mxu0 0.0
  %10991 = vmatprep.subr.mxu0 0.0
  %10992 = vmatpush1.msra.mxu0 0.0
  %10993 = vmatprep.subr.mxu0 0.0
  %10994 = vmatpush1.msra.mxu0 0.0
  %10995 = vmatprep.subr.mxu0 0.0
  %10996 = vmatpush1.msra.mxu0 0.0
  %10997 = vmatprep.subr.mxu0 0.0
  %10998 = vmatpush1.msra.mxu0 0.0
  %10999 = vmatprep.subr.mxu0 0.0
  %11000 = vmatpush1.msra.mxu0 0.0
  %11001 = vmatprep.subr.mxu0 0.0
  %11002 = vmatpush1.msra.mxu0 0.0
  %11003 = vmatprep.subr.mxu0 0.0
  %11004 = vmatpush1.msra.mxu0 0.0
  %11005 = vmatprep.mubr.f32.mxu0 0.0
  %v11006 = vand.u32 %v10922, 4294901760
  %v11007 = vsub.f32 %v10922, %v11006
  %v11008 = vand.u32 %v11007, 4294901760
  %v11009 = vsub.f32 %v11007, %v11008
  %v11010 = vand.u32 %v11009, 4294901760
  %11011 = vmatmul.mubr.f32.gmra.mrb[0].mxu0 %v11010
  %v11012 = vpop.f32.mrb[0].mxu0
  %v11013 = vadd.f32 0.0, %v11012
  %v11014 = vpop.f32.mrb[0].mxu0
  %11015 = vdwg.mxu0
  %11016 = vmatprep.subr.mxu0 0.0
  %v11017 = vand.u32 %v42, 4294901760
  %v11018 = vsub.f32 %v42, %v11017
  %v11019 = vand.u32 %v11018, 4294901760
  %v11020 = vsub.f32 %v11018, %v11019
  %v11021 = vand.u32 %v11020, 4294901760
  %11022 = vmatpush1.msra.mxu0 %v11021
  %11023 = vmatprep.subr.mxu0 0.0
  %v11024 = vand.u32 %v43, 4294901760
  %v11025 = vsub.f32 %v43, %v11024
  %v11026 = vand.u32 %v11025, 4294901760
  %v11027 = vsub.f32 %v11025, %v11026
  %v11028 = vand.u32 %v11027, 4294901760
  %11029 = vmatpush1.msra.mxu0 %v11028
  %11030 = vmatprep.subr.mxu0 0.0
  %v11031 = vand.u32 %v44, 4294901760
  %v11032 = vsub.f32 %v44, %v11031
  %v11033 = vand.u32 %v11032, 4294901760
  %v11034 = vsub.f32 %v11032, %v11033
  %v11035 = vand.u32 %v11034, 4294901760
  %11036 = vmatpush1.msra.mxu0 %v11035
  %11037 = vmatprep.subr.mxu0 0.0
  %v11038 = vand.u32 %v45, 4294901760
  %v11039 = vsub.f32 %v45, %v11038
  %v11040 = vand.u32 %v11039, 4294901760
  %v11041 = vsub.f32 %v11039, %v11040
  %v11042 = vand.u32 %v11041, 4294901760
  %11043 = vmatpush1.msra.mxu0 %v11042
  %11044 = vmatprep.subr.mxu0 0.0
  %v11045 = vand.u32 %v46, 4294901760
  %v11046 = vsub.f32 %v46, %v11045
  %v11047 = vand.u32 %v11046, 4294901760
  %v11048 = vsub.f32 %v11046, %v11047
  %v11049 = vand.u32 %v11048, 4294901760
  %11050 = vmatpush1.msra.mxu0 %v11049
  %11051 = vmatprep.subr.mxu0 0.0
  %v11052 = vand.u32 %v47, 4294901760
  %v11053 = vsub.f32 %v47, %v11052
  %v11054 = vand.u32 %v11053, 4294901760
  %v11055 = vsub.f32 %v11053, %v11054
  %v11056 = vand.u32 %v11055, 4294901760
  %11057 = vmatpush1.msra.mxu0 %v11056
  %11058 = vmatprep.subr.mxu0 0.0
  %v11059 = vand.u32 %v48, 4294901760
  %v11060 = vsub.f32 %v48, %v11059
  %v11061 = vand.u32 %v11060, 4294901760
  %v11062 = vsub.f32 %v11060, %v11061
  %v11063 = vand.u32 %v11062, 4294901760
  %11064 = vmatpush1.msra.mxu0 %v11063
  %11065 = vmatprep.subr.mxu0 0.0
  %v11066 = vand.u32 %v49, 4294901760
  %v11067 = vsub.f32 %v49, %v11066
  %v11068 = vand.u32 %v11067, 4294901760
  %v11069 = vsub.f32 %v11067, %v11068
  %v11070 = vand.u32 %v11069, 4294901760
  %11071 = vmatpush1.msra.mxu0 %v11070
  %11072 = vmatprep.subr.mxu0 0.0
  %v11073 = vand.u32 %v50, 4294901760
  %v11074 = vsub.f32 %v50, %v11073
  %v11075 = vand.u32 %v11074, 4294901760
  %v11076 = vsub.f32 %v11074, %v11075
  %v11077 = vand.u32 %v11076, 4294901760
  %11078 = vmatpush1.msra.mxu0 %v11077
  %11079 = vmatprep.subr.mxu0 0.0
  %v11080 = vand.u32 %v51, 4294901760
  %v11081 = vsub.f32 %v51, %v11080
  %v11082 = vand.u32 %v11081, 4294901760
  %v11083 = vsub.f32 %v11081, %v11082
  %v11084 = vand.u32 %v11083, 4294901760
  %11085 = vmatpush1.msra.mxu0 %v11084
  %11086 = vmatprep.subr.mxu0 0.0
  %v11087 = vand.u32 %v52, 4294901760
  %v11088 = vsub.f32 %v52, %v11087
  %v11089 = vand.u32 %v11088, 4294901760
  %v11090 = vsub.f32 %v11088, %v11089
  %v11091 = vand.u32 %v11090, 4294901760
  %11092 = vmatpush1.msra.mxu0 %v11091
  %11093 = vmatprep.subr.mxu0 0.0
  %v11094 = vand.u32 %v53, 4294901760
  %v11095 = vsub.f32 %v53, %v11094
  %v11096 = vand.u32 %v11095, 4294901760
  %v11097 = vsub.f32 %v11095, %v11096
  %v11098 = vand.u32 %v11097, 4294901760
  %11099 = vmatpush1.msra.mxu0 %v11098
  %11100 = vmatprep.subr.mxu0 0.0
  %v11101 = vand.u32 %v54, 4294901760
  %v11102 = vsub.f32 %v54, %v11101
  %v11103 = vand.u32 %v11102, 4294901760
  %v11104 = vsub.f32 %v11102, %v11103
  %v11105 = vand.u32 %v11104, 4294901760
  %11106 = vmatpush1.msra.mxu0 %v11105
  %11107 = vmatprep.subr.mxu0 0.0
  %v11108 = vand.u32 %v55, 4294901760
  %v11109 = vsub.f32 %v55, %v11108
  %v11110 = vand.u32 %v11109, 4294901760
  %v11111 = vsub.f32 %v11109, %v11110
  %v11112 = vand.u32 %v11111, 4294901760
  %11113 = vmatpush1.msra.mxu0 %v11112
  %11114 = vmatprep.subr.mxu0 0.0
  %v11115 = vand.u32 %v56, 4294901760
  %v11116 = vsub.f32 %v56, %v11115
  %v11117 = vand.u32 %v11116, 4294901760
  %v11118 = vsub.f32 %v11116, %v11117
  %v11119 = vand.u32 %v11118, 4294901760
  %11120 = vmatpush1.msra.mxu0 %v11119
  %11121 = vmatprep.subr.mxu0 0.0
  %v11122 = vand.u32 %v57, 4294901760
  %v11123 = vsub.f32 %v57, %v11122
  %v11124 = vand.u32 %v11123, 4294901760
  %v11125 = vsub.f32 %v11123, %v11124
  %v11126 = vand.u32 %v11125, 4294901760
  %11127 = vmatpush1.msra.mxu0 %v11126
  %11128 = vmatprep.subr.mxu0 0.0
  %11129 = vmatpush1.msra.mxu0 0.0
  %11130 = vmatprep.subr.mxu0 0.0
  %11131 = vmatpush1.msra.mxu0 0.0
  %11132 = vmatprep.subr.mxu0 0.0
  %11133 = vmatpush1.msra.mxu0 0.0
  %11134 = vmatprep.subr.mxu0 0.0
  %11135 = vmatpush1.msra.mxu0 0.0
  %11136 = vmatprep.subr.mxu0 0.0
  %11137 = vmatpush1.msra.mxu0 0.0
  %11138 = vmatprep.subr.mxu0 0.0
  %11139 = vmatpush1.msra.mxu0 0.0
  %11140 = vmatprep.subr.mxu0 0.0
  %11141 = vmatpush1.msra.mxu0 0.0
  %11142 = vmatprep.subr.mxu0 0.0
  %11143 = vmatpush1.msra.mxu0 0.0
  %11144 = vmatprep.subr.mxu0 0.0
  %11145 = vmatpush1.msra.mxu0 0.0
  %11146 = vmatprep.subr.mxu0 0.0
  %11147 = vmatpush1.msra.mxu0 0.0
  %11148 = vmatprep.subr.mxu0 0.0
  %11149 = vmatpush1.msra.mxu0 0.0
  %11150 = vmatprep.subr.mxu0 0.0
  %11151 = vmatpush1.msra.mxu0 0.0
  %11152 = vmatprep.subr.mxu0 0.0
  %11153 = vmatpush1.msra.mxu0 0.0
  %11154 = vmatprep.subr.mxu0 0.0
  %11155 = vmatpush1.msra.mxu0 0.0
  %11156 = vmatprep.subr.mxu0 0.0
  %11157 = vmatpush1.msra.mxu0 0.0
  %11158 = vmatprep.subr.mxu0 0.0
  %11159 = vmatpush1.msra.mxu0 0.0
  %11160 = vmatprep.mubr.f32.mxu0 0.0
  %v11161 = vand.u32 %v10922, 4294901760
  %11162 = vmatmul.mubr.f32.gmra.mrb[0].mxu0 %v11161
  %v11163 = vpop.f32.mrb[0].mxu0
  %v11164 = vadd.f32 %v11013, %v11163
  %v11165 = vpop.f32.mrb[0].mxu0
  %11166 = vdwg.mxu0
  %11167 = vmatprep.subr.mxu0 0.0
  %v11168 = vand.u32 %v42, 4294901760
  %v11169 = vsub.f32 %v42, %v11168
  %11170 = vmatpush1.msra.mxu0 %v11169
  %11171 = vmatprep.subr.mxu0 0.0
  %v11172 = vand.u32 %v43, 4294901760
  %v11173 = vsub.f32 %v43, %v11172
  %11174 = vmatpush1.msra.mxu0 %v11173
  %11175 = vmatprep.subr.mxu0 0.0
  %v11176 = vand.u32 %v44, 4294901760
  %v11177 = vsub.f32 %v44, %v11176
  %11178 = vmatpush1.msra.mxu0 %v11177
  %11179 = vmatprep.subr.mxu0 0.0
  %v11180 = vand.u32 %v45, 4294901760
  %v11181 = vsub.f32 %v45, %v11180
  %11182 = vmatpush1.msra.mxu0 %v11181
  %11183 = vmatprep.subr.mxu0 0.0
  %v11184 = vand.u32 %v46, 4294901760
  %v11185 = vsub.f32 %v46, %v11184
  %11186 = vmatpush1.msra.mxu0 %v11185
  %11187 = vmatprep.subr.mxu0 0.0
  %v11188 = vand.u32 %v47, 4294901760
  %v11189 = vsub.f32 %v47, %v11188
  %11190 = vmatpush1.msra.mxu0 %v11189
  %11191 = vmatprep.subr.mxu0 0.0
  %v11192 = vand.u32 %v48, 4294901760
  %v11193 = vsub.f32 %v48, %v11192
  %11194 = vmatpush1.msra.mxu0 %v11193
  %11195 = vmatprep.subr.mxu0 0.0
  %v11196 = vand.u32 %v49, 4294901760
  %v11197 = vsub.f32 %v49, %v11196
  %11198 = vmatpush1.msra.mxu0 %v11197
  %11199 = vmatprep.subr.mxu0 0.0
  %v11200 = vand.u32 %v50, 4294901760
  %v11201 = vsub.f32 %v50, %v11200
  %11202 = vmatpush1.msra.mxu0 %v11201
  %11203 = vmatprep.subr.mxu0 0.0
  %v11204 = vand.u32 %v51, 4294901760
  %v11205 = vsub.f32 %v51, %v11204
  %11206 = vmatpush1.msra.mxu0 %v11205
  %11207 = vmatprep.subr.mxu0 0.0
  %v11208 = vand.u32 %v52, 4294901760
  %v11209 = vsub.f32 %v52, %v11208
  %11210 = vmatpush1.msra.mxu0 %v11209
  %11211 = vmatprep.subr.mxu0 0.0
  %v11212 = vand.u32 %v53, 4294901760
  %v11213 = vsub.f32 %v53, %v11212
  %11214 = vmatpush1.msra.mxu0 %v11213
  %11215 = vmatprep.subr.mxu0 0.0
  %v11216 = vand.u32 %v54, 4294901760
  %v11217 = vsub.f32 %v54, %v11216
  %11218 = vmatpush1.msra.mxu0 %v11217
  %11219 = vmatprep.subr.mxu0 0.0
  %v11220 = vand.u32 %v55, 4294901760
  %v11221 = vsub.f32 %v55, %v11220
  %11222 = vmatpush1.msra.mxu0 %v11221
  %11223 = vmatprep.subr.mxu0 0.0
  %v11224 = vand.u32 %v56, 4294901760
  %v11225 = vsub.f32 %v56, %v11224
  %11226 = vmatpush1.msra.mxu0 %v11225
  %11227 = vmatprep.subr.mxu0 0.0
  %v11228 = vand.u32 %v57, 4294901760
  %v11229 = vsub.f32 %v57, %v11228
  %11230 = vmatpush1.msra.mxu0 %v11229
  %11231 = vmatprep.subr.mxu0 0.0
  %11232 = vmatpush1.msra.mxu0 0.0
  %11233 = vmatprep.subr.mxu0 0.0
  %11234 = vmatpush1.msra.mxu0 0.0
  %11235 = vmatprep.subr.mxu0 0.0
  %11236 = vmatpush1.msra.mxu0 0.0
  %11237 = vmatprep.subr.mxu0 0.0
  %11238 = vmatpush1.msra.mxu0 0.0
  %11239 = vmatprep.subr.mxu0 0.0
  %11240 = vmatpush1.msra.mxu0 0.0
  %11241 = vmatprep.subr.mxu0 0.0
  %11242 = vmatpush1.msra.mxu0 0.0
  %11243 = vmatprep.subr.mxu0 0.0
  %11244 = vmatpush1.msra.mxu0 0.0
  %11245 = vmatprep.subr.mxu0 0.0
  %11246 = vmatpush1.msra.mxu0 0.0
  %11247 = vmatprep.subr.mxu0 0.0
  %11248 = vmatpush1.msra.mxu0 0.0
  %11249 = vmatprep.subr.mxu0 0.0
  %11250 = vmatpush1.msra.mxu0 0.0
  %11251 = vmatprep.subr.mxu0 0.0
  %11252 = vmatpush1.msra.mxu0 0.0
  %11253 = vmatprep.subr.mxu0 0.0
  %11254 = vmatpush1.msra.mxu0 0.0
  %11255 = vmatprep.subr.mxu0 0.0
  %11256 = vmatpush1.msra.mxu0 0.0
  %11257 = vmatprep.subr.mxu0 0.0
  %11258 = vmatpush1.msra.mxu0 0.0
  %11259 = vmatprep.subr.mxu0 0.0
  %11260 = vmatpush1.msra.mxu0 0.0
  %11261 = vmatprep.subr.mxu0 0.0
  %11262 = vmatpush1.msra.mxu0 0.0
  %11263 = vmatprep.mubr.f32.mxu0 0.0
  %v11264 = vand.u32 %v10922, 4294901760
  %v11265 = vsub.f32 %v10922, %v11264
  %11266 = vmatmul.mubr.f32.gmra.mrb[0].mxu0 %v11265
  %v11267 = vpop.f32.mrb[0].mxu0
  %v11268 = vadd.f32 %v11164, %v11267
  %v11269 = vpop.f32.mrb[0].mxu0
  %11270 = vdwg.mxu0
  %11271 = vmatprep.subr.mxu0 0.0
  %v11272 = vand.u32 %v42, 4294901760
  %11273 = vmatpush1.msra.mxu0 %v11272
  %11274 = vmatprep.subr.mxu0 0.0
  %v11275 = vand.u32 %v43, 4294901760
  %11276 = vmatpush1.msra.mxu0 %v11275
  %11277 = vmatprep.subr.mxu0 0.0
  %v11278 = vand.u32 %v44, 4294901760
  %11279 = vmatpush1.msra.mxu0 %v11278
  %11280 = vmatprep.subr.mxu0 0.0
  %v11281 = vand.u32 %v45, 4294901760
  %11282 = vmatpush1.msra.mxu0 %v11281
  %11283 = vmatprep.subr.mxu0 0.0
  %v11284 = vand.u32 %v46, 4294901760
  %11285 = vmatpush1.msra.mxu0 %v11284
  %11286 = vmatprep.subr.mxu0 0.0
  %v11287 = vand.u32 %v47, 4294901760
  %11288 = vmatpush1.msra.mxu0 %v11287
  %11289 = vmatprep.subr.mxu0 0.0
  %v11290 = vand.u32 %v48, 4294901760
  %11291 = vmatpush1.msra.mxu0 %v11290
  %11292 = vmatprep.subr.mxu0 0.0
  %v11293 = vand.u32 %v49, 4294901760
  %11294 = vmatpush1.msra.mxu0 %v11293
  %11295 = vmatprep.subr.mxu0 0.0
  %v11296 = vand.u32 %v50, 4294901760
  %11297 = vmatpush1.msra.mxu0 %v11296
  %11298 = vmatprep.subr.mxu0 0.0
  %v11299 = vand.u32 %v51, 4294901760
  %11300 = vmatpush1.msra.mxu0 %v11299
  %11301 = vmatprep.subr.mxu0 0.0
  %v11302 = vand.u32 %v52, 4294901760
  %11303 = vmatpush1.msra.mxu0 %v11302
  %11304 = vmatprep.subr.mxu0 0.0
  %v11305 = vand.u32 %v53, 4294901760
  %11306 = vmatpush1.msra.mxu0 %v11305
  %11307 = vmatprep.subr.mxu0 0.0
  %v11308 = vand.u32 %v54, 4294901760
  %11309 = vmatpush1.msra.mxu0 %v11308
  %11310 = vmatprep.subr.mxu0 0.0
  %v11311 = vand.u32 %v55, 4294901760
  %11312 = vmatpush1.msra.mxu0 %v11311
  %11313 = vmatprep.subr.mxu0 0.0
  %v11314 = vand.u32 %v56, 4294901760
  %11315 = vmatpush1.msra.mxu0 %v11314
  %11316 = vmatprep.subr.mxu0 0.0
  %v11317 = vand.u32 %v57, 4294901760
  %11318 = vmatpush1.msra.mxu0 %v11317
  %11319 = vmatprep.subr.mxu0 0.0
  %11320 = vmatpush1.msra.mxu0 0.0
  %11321 = vmatprep.subr.mxu0 0.0
  %11322 = vmatpush1.msra.mxu0 0.0
  %11323 = vmatprep.subr.mxu0 0.0
  %11324 = vmatpush1.msra.mxu0 0.0
  %11325 = vmatprep.subr.mxu0 0.0
  %11326 = vmatpush1.msra.mxu0 0.0
  %11327 = vmatprep.subr.mxu0 0.0
  %11328 = vmatpush1.msra.mxu0 0.0
  %11329 = vmatprep.subr.mxu0 0.0
  %11330 = vmatpush1.msra.mxu0 0.0
  %11331 = vmatprep.subr.mxu0 0.0
  %11332 = vmatpush1.msra.mxu0 0.0
  %11333 = vmatprep.subr.mxu0 0.0
  %11334 = vmatpush1.msra.mxu0 0.0
  %11335 = vmatprep.subr.mxu0 0.0
  %11336 = vmatpush1.msra.mxu0 0.0
  %11337 = vmatprep.subr.mxu0 0.0
  %11338 = vmatpush1.msra.mxu0 0.0
  %11339 = vmatprep.subr.mxu0 0.0
  %11340 = vmatpush1.msra.mxu0 0.0
  %11341 = vmatprep.subr.mxu0 0.0
  %11342 = vmatpush1.msra.mxu0 0.0
  %11343 = vmatprep.subr.mxu0 0.0
  %11344 = vmatpush1.msra.mxu0 0.0
  %11345 = vmatprep.subr.mxu0 0.0
  %11346 = vmatpush1.msra.mxu0 0.0
  %11347 = vmatprep.subr.mxu0 0.0
  %11348 = vmatpush1.msra.mxu0 0.0
  %11349 = vmatprep.subr.mxu0 0.0
  %11350 = vmatpush1.msra.mxu0 0.0
  %11351 = vmatprep.mubr.f32.mxu0 0.0
  %v11352 = vand.u32 %v10922, 4294901760
  %v11353 = vsub.f32 %v10922, %v11352
  %v11354 = vand.u32 %v11353, 4294901760
  %11355 = vmatmul.mubr.f32.gmra.mrb[0].mxu0 %v11354
  %v11356 = vpop.f32.mrb[0].mxu0
  %v11357 = vadd.f32 %v11268, %v11356
  %v11358 = vpop.f32.mrb[0].mxu0
  %11359 = vdwg.mxu0
  %11360 = vmatprep.subr.mxu0 0.0
  %v11361 = vand.u32 %v42, 4294901760
  %v11362 = vsub.f32 %v42, %v11361
  %v11363 = vand.u32 %v11362, 4294901760
  %11364 = vmatpush1.msra.mxu0 %v11363
  %11365 = vmatprep.subr.mxu0 0.0
  %v11366 = vand.u32 %v43, 4294901760
  %v11367 = vsub.f32 %v43, %v11366
  %v11368 = vand.u32 %v11367, 4294901760
  %11369 = vmatpush1.msra.mxu0 %v11368
  %11370 = vmatprep.subr.mxu0 0.0
  %v11371 = vand.u32 %v44, 4294901760
  %v11372 = vsub.f32 %v44, %v11371
  %v11373 = vand.u32 %v11372, 4294901760
  %11374 = vmatpush1.msra.mxu0 %v11373
  %11375 = vmatprep.subr.mxu0 0.0
  %v11376 = vand.u32 %v45, 4294901760
  %v11377 = vsub.f32 %v45, %v11376
  %v11378 = vand.u32 %v11377, 4294901760
  %11379 = vmatpush1.msra.mxu0 %v11378
  %11380 = vmatprep.subr.mxu0 0.0
  %v11381 = vand.u32 %v46, 4294901760
  %v11382 = vsub.f32 %v46, %v11381
  %v11383 = vand.u32 %v11382, 4294901760
  %11384 = vmatpush1.msra.mxu0 %v11383
  %11385 = vmatprep.subr.mxu0 0.0
  %v11386 = vand.u32 %v47, 4294901760
  %v11387 = vsub.f32 %v47, %v11386
  %v11388 = vand.u32 %v11387, 4294901760
  %11389 = vmatpush1.msra.mxu0 %v11388
  %11390 = vmatprep.subr.mxu0 0.0
  %v11391 = vand.u32 %v48, 4294901760
  %v11392 = vsub.f32 %v48, %v11391
  %v11393 = vand.u32 %v11392, 4294901760
  %11394 = vmatpush1.msra.mxu0 %v11393
  %11395 = vmatprep.subr.mxu0 0.0
  %v11396 = vand.u32 %v49, 4294901760
  %v11397 = vsub.f32 %v49, %v11396
  %v11398 = vand.u32 %v11397, 4294901760
  %11399 = vmatpush1.msra.mxu0 %v11398
  %11400 = vmatprep.subr.mxu0 0.0
  %v11401 = vand.u32 %v50, 4294901760
  %v11402 = vsub.f32 %v50, %v11401
  %v11403 = vand.u32 %v11402, 4294901760
  %11404 = vmatpush1.msra.mxu0 %v11403
  %11405 = vmatprep.subr.mxu0 0.0
  %v11406 = vand.u32 %v51, 4294901760
  %v11407 = vsub.f32 %v51, %v11406
  %v11408 = vand.u32 %v11407, 4294901760
  %11409 = vmatpush1.msra.mxu0 %v11408
  %11410 = vmatprep.subr.mxu0 0.0
  %v11411 = vand.u32 %v52, 4294901760
  %v11412 = vsub.f32 %v52, %v11411
  %v11413 = vand.u32 %v11412, 4294901760
  %11414 = vmatpush1.msra.mxu0 %v11413
  %11415 = vmatprep.subr.mxu0 0.0
  %v11416 = vand.u32 %v53, 4294901760
  %v11417 = vsub.f32 %v53, %v11416
  %v11418 = vand.u32 %v11417, 4294901760
  %11419 = vmatpush1.msra.mxu0 %v11418
  %11420 = vmatprep.subr.mxu0 0.0
  %v11421 = vand.u32 %v54, 4294901760
  %v11422 = vsub.f32 %v54, %v11421
  %v11423 = vand.u32 %v11422, 4294901760
  %11424 = vmatpush1.msra.mxu0 %v11423
  %11425 = vmatprep.subr.mxu0 0.0
  %v11426 = vand.u32 %v55, 4294901760
  %v11427 = vsub.f32 %v55, %v11426
  %v11428 = vand.u32 %v11427, 4294901760
  %11429 = vmatpush1.msra.mxu0 %v11428
  %11430 = vmatprep.subr.mxu0 0.0
  %v11431 = vand.u32 %v56, 4294901760
  %v11432 = vsub.f32 %v56, %v11431
  %v11433 = vand.u32 %v11432, 4294901760
  %11434 = vmatpush1.msra.mxu0 %v11433
  %11435 = vmatprep.subr.mxu0 0.0
  %v11436 = vand.u32 %v57, 4294901760
  %v11437 = vsub.f32 %v57, %v11436
  %v11438 = vand.u32 %v11437, 4294901760
  %11439 = vmatpush1.msra.mxu0 %v11438
  %11440 = vmatprep.subr.mxu0 0.0
  %11441 = vmatpush1.msra.mxu0 0.0
  %11442 = vmatprep.subr.mxu0 0.0
  %11443 = vmatpush1.msra.mxu0 0.0
  %11444 = vmatprep.subr.mxu0 0.0
  %11445 = vmatpush1.msra.mxu0 0.0
  %11446 = vmatprep.subr.mxu0 0.0
  %11447 = vmatpush1.msra.mxu0 0.0
  %11448 = vmatprep.subr.mxu0 0.0
  %11449 = vmatpush1.msra.mxu0 0.0
  %11450 = vmatprep.subr.mxu0 0.0
  %11451 = vmatpush1.msra.mxu0 0.0
  %11452 = vmatprep.subr.mxu0 0.0
  %11453 = vmatpush1.msra.mxu0 0.0
  %11454 = vmatprep.subr.mxu0 0.0
  %11455 = vmatpush1.msra.mxu0 0.0
  %11456 = vmatprep.subr.mxu0 0.0
  %11457 = vmatpush1.msra.mxu0 0.0
  %11458 = vmatprep.subr.mxu0 0.0
  %11459 = vmatpush1.msra.mxu0 0.0
  %11460 = vmatprep.subr.mxu0 0.0
  %11461 = vmatpush1.msra.mxu0 0.0
  %11462 = vmatprep.subr.mxu0 0.0
  %11463 = vmatpush1.msra.mxu0 0.0
  %11464 = vmatprep.subr.mxu0 0.0
  %11465 = vmatpush1.msra.mxu0 0.0
  %11466 = vmatprep.subr.mxu0 0.0
  %11467 = vmatpush1.msra.mxu0 0.0
  %11468 = vmatprep.subr.mxu0 0.0
  %11469 = vmatpush1.msra.mxu0 0.0
  %11470 = vmatprep.subr.mxu0 0.0
  %11471 = vmatpush1.msra.mxu0 0.0
  %11472 = vmatprep.mubr.f32.mxu0 0.0
  %v11473 = vand.u32 %v10922, 4294901760
  %11474 = vmatmul.mubr.f32.gmra.mrb[0].mxu0 %v11473
  %v11475 = vpop.f32.mrb[0].mxu0
  %v11476 = vadd.f32 %v11357, %v11475
  %v11477 = vpop.f32.mrb[0].mxu0
  %11478 = vdwg.mxu0
  %11479 = vmatprep.subr.mxu0 0.0
  %v11480 = vand.u32 %v42, 4294901760
  %11481 = vmatpush1.msra.mxu0 %v11480
  %11482 = vmatprep.subr.mxu0 0.0
  %v11483 = vand.u32 %v43, 4294901760
  %11484 = vmatpush1.msra.mxu0 %v11483
  %11485 = vmatprep.subr.mxu0 0.0
  %v11486 = vand.u32 %v44, 4294901760
  %11487 = vmatpush1.msra.mxu0 %v11486
  %11488 = vmatprep.subr.mxu0 0.0
  %v11489 = vand.u32 %v45, 4294901760
  %11490 = vmatpush1.msra.mxu0 %v11489
  %11491 = vmatprep.subr.mxu0 0.0
  %v11492 = vand.u32 %v46, 4294901760
  %11493 = vmatpush1.msra.mxu0 %v11492
  %11494 = vmatprep.subr.mxu0 0.0
  %v11495 = vand.u32 %v47, 4294901760
  %11496 = vmatpush1.msra.mxu0 %v11495
  %11497 = vmatprep.subr.mxu0 0.0
  %v11498 = vand.u32 %v48, 4294901760
  %11499 = vmatpush1.msra.mxu0 %v11498
  %11500 = vmatprep.subr.mxu0 0.0
  %v11501 = vand.u32 %v49, 4294901760
  %11502 = vmatpush1.msra.mxu0 %v11501
  %11503 = vmatprep.subr.mxu0 0.0
  %v11504 = vand.u32 %v50, 4294901760
  %11505 = vmatpush1.msra.mxu0 %v11504
  %11506 = vmatprep.subr.mxu0 0.0
  %v11507 = vand.u32 %v51, 4294901760
  %11508 = vmatpush1.msra.mxu0 %v11507
  %11509 = vmatprep.subr.mxu0 0.0
  %v11510 = vand.u32 %v52, 4294901760
  %11511 = vmatpush1.msra.mxu0 %v11510
  %11512 = vmatprep.subr.mxu0 0.0
  %v11513 = vand.u32 %v53, 4294901760
  %11514 = vmatpush1.msra.mxu0 %v11513
  %11515 = vmatprep.subr.mxu0 0.0
  %v11516 = vand.u32 %v54, 4294901760
  %11517 = vmatpush1.msra.mxu0 %v11516
  %11518 = vmatprep.subr.mxu0 0.0
  %v11519 = vand.u32 %v55, 4294901760
  %11520 = vmatpush1.msra.mxu0 %v11519
  %11521 = vmatprep.subr.mxu0 0.0
  %v11522 = vand.u32 %v56, 4294901760
  %11523 = vmatpush1.msra.mxu0 %v11522
  %11524 = vmatprep.subr.mxu0 0.0
  %v11525 = vand.u32 %v57, 4294901760
  %11526 = vmatpush1.msra.mxu0 %v11525
  %11527 = vmatprep.subr.mxu0 0.0
  %11528 = vmatpush1.msra.mxu0 0.0
  %11529 = vmatprep.subr.mxu0 0.0
  %11530 = vmatpush1.msra.mxu0 0.0
  %11531 = vmatprep.subr.mxu0 0.0
  %11532 = vmatpush1.msra.mxu0 0.0
  %11533 = vmatprep.subr.mxu0 0.0
  %11534 = vmatpush1.msra.mxu0 0.0
  %11535 = vmatprep.subr.mxu0 0.0
  %11536 = vmatpush1.msra.mxu0 0.0
  %11537 = vmatprep.subr.mxu0 0.0
  %11538 = vmatpush1.msra.mxu0 0.0
  %11539 = vmatprep.subr.mxu0 0.0
  %11540 = vmatpush1.msra.mxu0 0.0
  %11541 = vmatprep.subr.mxu0 0.0
  %11542 = vmatpush1.msra.mxu0 0.0
  %11543 = vmatprep.subr.mxu0 0.0
  %11544 = vmatpush1.msra.mxu0 0.0
  %11545 = vmatprep.subr.mxu0 0.0
  %11546 = vmatpush1.msra.mxu0 0.0
  %11547 = vmatprep.subr.mxu0 0.0
  %11548 = vmatpush1.msra.mxu0 0.0
  %11549 = vmatprep.subr.mxu0 0.0
  %11550 = vmatpush1.msra.mxu0 0.0
  %11551 = vmatprep.subr.mxu0 0.0
  %11552 = vmatpush1.msra.mxu0 0.0
  %11553 = vmatprep.subr.mxu0 0.0
  %11554 = vmatpush1.msra.mxu0 0.0
  %11555 = vmatprep.subr.mxu0 0.0
  %11556 = vmatpush1.msra.mxu0 0.0
  %11557 = vmatprep.subr.mxu0 0.0
  %11558 = vmatpush1.msra.mxu0 0.0
  %11559 = vmatprep.mubr.f32.mxu0 0.0
  %v11560 = vand.u32 %v10922, 4294901760
  %11561 = vmatmul.mubr.f32.gmra.mrb[0].mxu0 %v11560
  %v11562 = vpop.f32.mrb[0].mxu0
  %v11563 = vadd.f32 %v11476, %v11562
  %v11564 = vpop.f32.mrb[0].mxu0
  %11565 = vdwg.mxu0
  %v11566 = vmul.f32 %v11563, 0.001953125
  %v11567 = vadd.f32 %v11566, 1e-05
  %v11568 = vrsqrt.pop %v11567
  %v11569 = vmul.f32 %v11568, %v9299
  %v11570 = vlaneseq
  %v11571 = vshrl.u32 %v11570, 7
  %v11572 = vsub.s32 0, %v11571
  %v11573 = vrot.slane %v11569, %v11572
  %v11574 = vmul.f32 %v10432, %v11573
  %v11575 = vmul.f32 %v10433, %v11573
  %v11576 = vmul.f32 %v10434, %v11573
  %v11577 = vmul.f32 %v10435, %v11573
  %v11579 = vlaneseq
  %v11580 = vshrl.u32 %v11579, 7
  %v11581 = vsub.s32 0, %v11580
  %v11582 = vrot.slane %v9300, %v11581
  %v11584 = vadd.f32 %v11574, %v11582
  %v11585 = vadd.f32 %v11575, %v11582
  %v11586 = vadd.f32 %v11576, %v11582
  %v11587 = vadd.f32 %v11577, %v11582
  %11588 = vst [vmem:[%s11] sm:$0xff] %v11584
  %11589 = vst [vmem:[%s11 + $0x8] sm:$0xff] %v11585
  %11590 = vst [vmem:[%s11 + $0x10] sm:$0xff] %v11586
  %11591 = vst [vmem:[%s11 + $0x18] sm:$0xff] %v11587
  // Predicated region
  $region46: #{unet_conv_block.1} parent=0 // pred_check
    _
  $region47: #{unet_conv_block.1} parent=0 // pred_check_branch
    %11593 = sbr.rel (0) target = $region49
  $region48: #{unet_conv_block.1} parent=0 // pred_region
    _
  $region49: #{unet_conv_block.1} parent=0 // pred_fallthru
    _
  // Predicated region
  $region50: #{unet_conv_block.1} parent=0 // pred_check
    _
  $region51: #{unet_conv_block.1} parent=0 // pred_check_branch
    %11595 = sbr.rel (0) target = $region53
  $region52: #{unet_conv_block.1} parent=0 // pred_region
    _
  $region53: #{unet_conv_block.1} parent=0 // pred_fallthru
    _

</llo_original>
